<compile_context>
chip_gen: v6e
topology: v6e:2x2x1
jax: 0.10.0
libtpu: 0.0.40
codegen_flags: <defaults>
</compile_context>

<pallas_src>
import functools

import numpy as np
import jax
import jax.numpy as jnp
from jax import lax
from jax.experimental import pallas as pl
from jax.experimental.pallas import tpu as pltpu

_EPS = 1e-5
_VMEM_LIMIT = 32 * 1024 * 1024          # <= v7x physical VMEM (64 MiB)


def _cparams(n_inputs, fuse_first):
    allow = ([True] + [False] * (n_inputs - 1)) if fuse_first else None
    return pltpu.CompilerParams(
        dimension_semantics=("parallel",),
        vmem_limit_bytes=_VMEM_LIMIT,
        allow_input_fusion=allow,
    )


# ----------------------------------------------------------------------------
# Host-side im2col (XLA glue; only for the two large-spatial layers)
# ----------------------------------------------------------------------------
def _im2col_nchw(x, kh, kw, stride, padding):
    """[N,C,H,W] -> patches [N, C*kh*kw, Ho*Wo], K ordered (c, ki, kj)."""
    N, C, H, W = x.shape
    if padding:
        x = jnp.pad(x, ((0, 0), (0, 0), (padding, padding), (padding, padding)))
    Hp, Wp = H + 2 * padding, W + 2 * padding
    Ho = (Hp - kh) // stride + 1
    Wo = (Wp - kw) // stride + 1
    cols = [x[:, :, ki:ki + stride * Ho:stride, kj:kj + stride * Wo:stride]
            for ki in range(kh) for kj in range(kw)]
    p = jnp.stack(cols, axis=2)                           # [N, C, kh*kw, Ho, Wo]
    return p.reshape(N, C * kh * kw, Ho * Wo), Ho, Wo


# ----------------------------------------------------------------------------
# One-hot gather matrices for the IN-KERNEL im2col of blocks 2 and 3
# (built with numpy at trace time -> baked-in constants; padding handled by
#  all-zero rows, so no explicit pad op is needed inside the kernel)
# ----------------------------------------------------------------------------
def _gather_matrices(H, W, kh, kw, stride, padding):
    Ho = (H + 2 * padding - kh) // stride + 1
    Wo = (W + 2 * padding - kw) // stride + 1
    S = np.zeros((kh * kw, H * W, Ho * Wo), np.float32)
    for ki in range(kh):
        for kj in range(kw):
            t = ki * kw + kj
            for oh in range(Ho):
                h = stride * oh + ki - padding
                if not 0 <= h < H:
                    continue
                for ow in range(Wo):
                    w = stride * ow + kj - padding
                    if 0 <= w < W:
                        S[t, h * W + w, oh * Wo + ow] = 1.0
    return jnp.asarray(S), Ho, Wo


# ----------------------------------------------------------------------------
# Kernels
# ----------------------------------------------------------------------------
def _conv1_kernel(p_ref, w_ref, b_ref, o_ref):
    """One image: y = LeakyReLU_0.2(W @ patches + b). Spatial (4096) on lanes."""
    y = jnp.dot(w_ref[...], p_ref[...], preferred_element_type=jnp.float32)
    y = y + b_ref[...]
    o_ref[...] = jnp.where(y > 0.0, y, 0.2 * y)


def _fused_tail_kernel(p1_ref, w1_ref, g1_ref, b1_ref,
                       s2_ref, w2_ref, g2_ref, b2_ref,
                       s3_ref, w3_ref, g3_ref, b3_ref,
                       w5_ref, b5_ref, o_ref, *, eps, n_taps):
    """One image: block1 -> block2 -> block3 -> 4x4 conv -> sigmoid, all in VMEM.

    Each block = conv (as [Cout,K] @ [K, S_out]) -> InstanceNorm(affine) ->
    LeakyReLU(0.2).  Blocks 2/3 build their patches in-kernel with one-hot
    gather matmuls (MXU), tap-major row order (weights pre-reordered on host).
    """
    def in_lrelu(y, g_ref, b_ref):
        mean = jnp.mean(y, axis=1, keepdims=True)              # per channel
        yc = y - mean
        var = jnp.mean(yc * yc, axis=1, keepdims=True)         # biased (PyTorch)
        z = yc * lax.rsqrt(var + eps) * g_ref[...] + b_ref[...]
        return jnp.where(z > 0.0, z, 0.2 * z)

    def conv_in_lrelu(a, s_ref, w_ref, g_ref, b_ref):
        # a: [C, S_in]; s_ref: [n_taps, S_in, S_out]; w_ref: [Cout, n_taps*C]
        taps = [jnp.dot(a, s_ref[t], preferred_element_type=jnp.float32)
                for t in range(n_taps)]
        patches = jnp.concatenate(taps, axis=0)                # [n_taps*C, S_out]
        y = jnp.dot(w_ref[...], patches, preferred_element_type=jnp.float32)
        return in_lrelu(y, g_ref, b_ref)

    # block 1 (patches provided by host im2col of the conv1 output)
    y1 = jnp.dot(w1_ref[...], p1_ref[...], preferred_element_type=jnp.float32)
    y1 = in_lrelu(y1, g1_ref, b1_ref)                          # [2fd, 256]
    # blocks 2 / 3 with in-kernel im2col
    y2 = conv_in_lrelu(y1, s2_ref, w2_ref, g2_ref, b2_ref)     # [4fd, 64]
    y3 = conv_in_lrelu(y2, s3_ref, w3_ref, g3_ref, b3_ref)     # [8fd, 16]
    # head: 4x4 valid conv (full reduce) + bias + sigmoid, single store
    r = jnp.sum(y3 * w5_ref[...], axis=1, keepdims=True)       # [8fd, 1]
    logit = jnp.sum(r, axis=0, keepdims=True) + b5_ref[...]    # [1, 1]
    o_ref[...] = jax.nn.sigmoid(logit)


# ----------------------------------------------------------------------------
# pallas_call wrappers
# ----------------------------------------------------------------------------
def conv1_pallas(x, w, b, *, stride, padding):
    N = x.shape[0]
    Cout = w.shape[0]
    p, Ho, Wo = _im2col_nchw(x, 4, 4, stride, padding)
    K, M = p.shape[1], p.shape[2]
    w2d = w.reshape(Cout, K)
    y = pl.pallas_call(
        _conv1_kernel,
        out_shape=jax.ShapeDtypeStruct((N, Cout, M), jnp.float32),
        grid=(N,),
        in_specs=[
            pl.BlockSpec((None, K, M), lambda n: (n, 0, 0)),
            pl.BlockSpec((Cout, K), lambda n: (0, 0)),
            pl.BlockSpec((Cout, 1), lambda n: (0, 0)),
        ],
        out_specs=pl.BlockSpec((None, Cout, M), lambda n: (n, 0, 0)),
        compiler_params=_cparams(3, fuse_first=True),
    )(p, w2d, b.reshape(Cout, 1))
    return y.reshape(N, Cout, Ho, Wo)


def fused_tail_pallas(a1, params):
    """a1: [N, fd, 64, 64] = conv1 stage output.  Returns [N] probabilities."""
    N = a1.shape[0]
    C2 = params["b1_w"].shape[0]
    C3 = params["b2_w"].shape[0]
    C4 = params["b3_w"].shape[0]

    # block-1 patches on the host (largest spatial layer; one XLA fusion)
    p1, Ho1, Wo1 = _im2col_nchw(a1, 4, 4, 4, 1)              # [N, fd*16, 256]
    K1, M1 = p1.shape[1], p1.shape[2]

    # weights: block1 uses (c,ki,kj) K-order (host im2col), blocks 2/3 use the
    # tap-major order produced by the in-kernel concat -> reorder on host.
    w1 = params["b1_w"].reshape(C2, K1)
    w2 = jnp.transpose(params["b2_w"], (0, 2, 3, 1)).reshape(C3, 16 * C2)
    w3 = jnp.transpose(params["b3_w"], (0, 2, 3, 1)).reshape(C4, 16 * C3)
    w5 = params["c5_w"].reshape(C4, 16)                      # final 4x4 valid conv
    b5 = params["c5_b"].reshape(1, 1)

    s2, Ho2, Wo2 = _gather_matrices(Ho1, Wo1, 4, 4, 2, 1)    # [16, 256, 64]
    s3, Ho3, Wo3 = _gather_matrices(Ho2, Wo2, 4, 4, 2, 1)    # [16, 64, 16]
    assert (Ho3, Wo3) == (4, 4), (Ho3, Wo3)                  # head is 4x4 valid

    out = pl.pallas_call(
        functools.partial(_fused_tail_kernel, eps=_EPS, n_taps=16),
        out_shape=jax.ShapeDtypeStruct((N, 1, 1), jnp.float32),
        grid=(N,),
        in_specs=[
            pl.BlockSpec((None, K1, M1), lambda n: (n, 0, 0)),                 # p1
            pl.BlockSpec((C2, K1), lambda n: (0, 0)),                          # w1
            pl.BlockSpec((C2, 1), lambda n: (0, 0)),                           # g1
            pl.BlockSpec((C2, 1), lambda n: (0, 0)),                           # b1
            pl.BlockSpec((16, Ho1 * Wo1, Ho2 * Wo2), lambda n: (0, 0, 0)),     # s2
            pl.BlockSpec((C3, 16 * C2), lambda n: (0, 0)),                     # w2
            pl.BlockSpec((C3, 1), lambda n: (0, 0)),                           # g2
            pl.BlockSpec((C3, 1), lambda n: (0, 0)),                           # b2
            pl.BlockSpec((16, Ho2 * Wo2, Ho3 * Wo3), lambda n: (0, 0, 0)),     # s3
            pl.BlockSpec((C4, 16 * C3), lambda n: (0, 0)),                     # w3
            pl.BlockSpec((C4, 1), lambda n: (0, 0)),                           # g3
            pl.BlockSpec((C4, 1), lambda n: (0, 0)),                           # b3
            pl.BlockSpec((C4, 16), lambda n: (0, 0)),                          # w5
            pl.BlockSpec((1, 1), lambda n: (0, 0)),                            # b5
        ],
        out_specs=pl.BlockSpec((None, 1, 1), lambda n: (n, 0, 0)),
        compiler_params=_cparams(14, fuse_first=True),
    )(p1, w1, params["b1_g"].reshape(C2, 1), params["b1_b"].reshape(C2, 1),
      s2, w2, params["b2_g"].reshape(C3, 1), params["b2_b"].reshape(C3, 1),
      s3, w3, params["b3_g"].reshape(C4, 1), params["b3_b"].reshape(C4, 1),
      w5, b5)
    return out.reshape(-1)                                   # matches .view(-1)


# ----------------------------------------------------------------------------
# Discriminator forward + params
# ----------------------------------------------------------------------------
def init_params(key, channels_img=1, features_d=16):
    fd = features_d
    k = jax.random.split(key, 6)

    def conv_w(kk, cout, cin):
        return jax.random.normal(kk, (cout, cin, 4, 4), jnp.float32) * 0.02

    return {
        # Conv2d(channels_img, fd, 4, 4, 1) + bias
        "c1_w": conv_w(k[0], fd, channels_img),
        "c1_b": jax.random.normal(k[5], (fd,), jnp.float32) * 0.02,
        # _block(fd, fd*2, 4, 4, 1): conv(bias=False) + InstanceNorm(affine)
        "b1_w": conv_w(k[1], fd * 2, fd),
        "b1_g": jnp.ones((fd * 2,), jnp.float32),
        "b1_b": jnp.zeros((fd * 2,), jnp.float32),
        # _block(fd*2, fd*4, 4, 2, 1)
        "b2_w": conv_w(k[2], fd * 4, fd * 2),
        "b2_g": jnp.ones((fd * 4,), jnp.float32),
        "b2_b": jnp.zeros((fd * 4,), jnp.float32),
        # _block(fd*4, fd*8, 4, 2, 1)
        "b3_w": conv_w(k[3], fd * 8, fd * 4),
        "b3_g": jnp.ones((fd * 8,), jnp.float32),
        "b3_b": jnp.zeros((fd * 8,), jnp.float32),
        # Conv2d(fd*8, 1, 4, 1, 0) + bias
        "c5_w": conv_w(k[4], 1, fd * 8),
        "c5_b": jnp.zeros((1,), jnp.float32),
    }


def discriminator_forward(params, x):
    # Conv -> LeakyReLU(0.2)
    a1 = conv1_pallas(x, params["c1_w"], params["c1_b"], stride=4, padding=1)
    # block1 + block2 + block3 + final Conv + Sigmoid, fused in one call
    return fused_tail_pallas(a1, params)


if __name__ == "__main__":
    key = jax.random.PRNGKey(0)
    pkey, xkey = jax.random.split(key)

    # 256x256 single-channel input is the smallest spatial size this
    # stride/padding stack supports (final 4x4 valid conv). features_d=16
    # keeps the synthetic test small (module default is 64).
    params = init_params(pkey, channels_img=1, features_d=16)
    x = jax.random.normal(xkey, (2, 1, 256, 256), jnp.float32)

    fwd = jax.jit(discriminator_forward)
    out = jax.block_until_ready(fwd(params, x))

    assert out.shape == (2,), out.shape
    assert bool(jnp.all(jnp.isfinite(out)))
    assert bool(jnp.all((out >= 0.0) & (out <= 1.0)))   # sigmoid range
    print("KERNEL_OK")
</pallas_src>

<mosaic_0001>
module attributes {stable_mosaic.version = 11 : i64} {
  func.func @_conv1_kernel(%arg0: i32, %arg1: memref<1x16x4096xf32, #tpu.memory_space<vmem>>, %arg2: memref<16x16xf32, #tpu.memory_space<vmem>>, %arg3: memref<16x1xf32, #tpu.memory_space<vmem>>, %arg4: memref<1x16x4096xf32, #tpu.memory_space<vmem>>) attributes {dimension_semantics = [#tpu.dimension_semantics<parallel>], iteration_bounds = array<i64: 2>, scalar_prefetch = 0 : i64, scratch_operands = 0 : i64, tpu.core_type = #tpu.core_type<tc>, window_params = [{transform_indices = @transform_0, window_bounds = array<i64: 1, 16, 4096>}, {pipeline_mode = #tpu.pipeline_mode<synchronous>, transform_indices = @transform_1, window_bounds = array<i64: 16, 16>}, {pipeline_mode = #tpu.pipeline_mode<synchronous>, transform_indices = @transform_2, window_bounds = array<i64: 16, 1>}, {transform_indices = @transform_3, window_bounds = array<i64: 1, 16, 4096>}]} {
    %c0 = arith.constant 0 : index
    %c0_0 = arith.constant 0 : index
    %0 = vector.load %arg2[%c0, %c0_0] : memref<16x16xf32, #tpu.memory_space<vmem>>, vector<16x16xf32>
    %c0_1 = arith.constant 0 : index
    %c0_2 = arith.constant 0 : index
    %c0_3 = arith.constant 0 : index
    %1 = vector.load %arg1[%c0_1, %c0_2, %c0_3] : memref<1x16x4096xf32, #tpu.memory_space<vmem>>, vector<1x16x4096xf32>
    %2 = vector.shape_cast %1 : vector<1x16x4096xf32> to vector<16x4096xf32>
    %cst = arith.constant dense<0.000000e+00> : vector<16x4096xf32>
    %3 = tpu.matmul %0, %2, %cst {dimension_numbers = #tpu.dot_dimension_numbers<[1], [0], [0], [1], [0, 0, 1, 1], [], []>} : vector<16x16xf32>, vector<16x4096xf32>, vector<16x4096xf32> -> vector<16x4096xf32>
    %c0_4 = arith.constant 0 : index
    %c0_5 = arith.constant 0 : index
    %4 = vector.load %arg3[%c0_4, %c0_5] : memref<16x1xf32, #tpu.memory_space<vmem>>, vector<16x1xf32>
    %5 = vector.broadcast %4 : vector<16x1xf32> to vector<16x4096xf32>
    %6 = arith.addf %3, %5 : vector<16x4096xf32>
    %cst_6 = arith.constant 0.000000e+00 : f32
    %7 = vector.broadcast %cst_6 : f32 to vector<16x4096xf32>
    %8 = arith.cmpf ogt, %6, %7 : vector<16x4096xf32>
    %cst_7 = arith.constant 2.000000e-01 : f32
    %9 = vector.broadcast %cst_7 : f32 to vector<16x4096xf32>
    %10 = arith.mulf %9, %6 : vector<16x4096xf32>
    %11 = arith.select %8, %6, %10 : vector<16x4096xi1>, vector<16x4096xf32>
    %c0_8 = arith.constant 0 : index
    %c0_9 = arith.constant 0 : index
    %c0_10 = arith.constant 0 : index
    %12 = vector.load %arg4[%c0_8, %c0_9, %c0_10] : memref<1x16x4096xf32, #tpu.memory_space<vmem>>, vector<1x16x4096xf32>
    %13 = vector.shape_cast %12 : vector<1x16x4096xf32> to vector<16x4096xf32>
    %14 = vector.shape_cast %11 : vector<16x4096xf32> to vector<1x16x4096xf32>
    tpu.vector_store %arg4[%c0_8, %c0_9, %c0_10], %14 {strides = array<i32>} : memref<1x16x4096xf32, #tpu.memory_space<vmem>>, vector<1x16x4096xf32>,
    return
  }
  func.func @transform_0(%arg0: i32) -> (i32, i32, i32) {
    %c0_i32 = arith.constant 0 : i32
    %c0_i32_0 = arith.constant 0 : i32
    %c0_i32_1 = arith.constant 0 : i32
    return %arg0, %c0_i32, %c0_i32_0 : i32, i32, i32
  }
  func.func @transform_1(%arg0: i32) -> (i32, i32) {
    %c0_i32 = arith.constant 0 : i32
    %c0_i32_0 = arith.constant 0 : i32
    %c0_i32_1 = arith.constant 0 : i32
    return %c0_i32, %c0_i32_0 : i32, i32
  }
  func.func @transform_2(%arg0: i32) -> (i32, i32) {
    %c0_i32 = arith.constant 0 : i32
    %c0_i32_0 = arith.constant 0 : i32
    %c0_i32_1 = arith.constant 0 : i32
    return %c0_i32, %c0_i32_0 : i32, i32
  }
  func.func @transform_3(%arg0: i32) -> (i32, i32, i32) {
    %c0_i32 = arith.constant 0 : i32
    %c0_i32_0 = arith.constant 0 : i32
    %c0_i32_1 = arith.constant 0 : i32
    return %arg0, %c0_i32, %c0_i32_0 : i32, i32, i32
  }
}

module attributes {stable_mosaic.version = 11 : i64} {
  func.func @_fused_tail_kernel(%arg0: i32, %arg1: memref<1x256x256xf32, #tpu.memory_space<vmem>>, %arg2: memref<32x256xf32, #tpu.memory_space<vmem>>, %arg3: memref<32x1xf32, #tpu.memory_space<vmem>>, %arg4: memref<32x1xf32, #tpu.memory_space<vmem>>, %arg5: memref<16x256x64xf32, #tpu.memory_space<vmem>>, %arg6: memref<64x512xf32, #tpu.memory_space<vmem>>, %arg7: memref<64x1xf32, #tpu.memory_space<vmem>>, %arg8: memref<64x1xf32, #tpu.memory_space<vmem>>, %arg9: memref<16x64x16xf32, #tpu.memory_space<vmem>>, %arg10: memref<128x1024xf32, #tpu.memory_space<vmem>>, %arg11: memref<128x1xf32, #tpu.memory_space<vmem>>, %arg12: memref<128x1xf32, #tpu.memory_space<vmem>>, %arg13: memref<128x16xf32, #tpu.memory_space<vmem>>, %arg14: memref<1x1xf32, #tpu.memory_space<vmem>>, %arg15: memref<1x1x1xf32, #tpu.memory_space<vmem>>) attributes {dimension_semantics = [#tpu.dimension_semantics<parallel>], iteration_bounds = array<i64: 2>, scalar_prefetch = 0 : i64, scratch_operands = 0 : i64, tpu.core_type = #tpu.core_type<tc>, window_params = [{transform_indices = @transform_0, window_bounds = array<i64: 1, 256, 256>}, {pipeline_mode = #tpu.pipeline_mode<synchronous>, transform_indices = @transform_1, window_bounds = array<i64: 32, 256>}, {pipeline_mode = #tpu.pipeline_mode<synchronous>, transform_indices = @transform_2, window_bounds = array<i64: 32, 1>}, {pipeline_mode = #tpu.pipeline_mode<synchronous>, transform_indices = @transform_3, window_bounds = array<i64: 32, 1>}, {pipeline_mode = #tpu.pipeline_mode<synchronous>, transform_indices = @transform_4, window_bounds = array<i64: 16, 256, 64>}, {pipeline_mode = #tpu.pipeline_mode<synchronous>, transform_indices = @transform_5, window_bounds = array<i64: 64, 512>}, {pipeline_mode = #tpu.pipeline_mode<synchronous>, transform_indices = @transform_6, window_bounds = array<i64: 64, 1>}, {pipeline_mode = #tpu.pipeline_mode<synchronous>, transform_indices = @transform_7, window_bounds = array<i64: 64, 1>}, {pipeline_mode = #tpu.pipeline_mode<synchronous>, transform_indices = @transform_8, window_bounds = array<i64: 16, 64, 16>}, {pipeline_mode = #tpu.pipeline_mode<synchronous>, transform_indices = @transform_9, window_bounds = array<i64: 128, 1024>}, {pipeline_mode = #tpu.pipeline_mode<synchronous>, transform_indices = @transform_10, window_bounds = array<i64: 128, 1>}, {pipeline_mode = #tpu.pipeline_mode<synchronous>, transform_indices = @transform_11, window_bounds = array<i64: 128, 1>}, {pipeline_mode = #tpu.pipeline_mode<synchronous>, transform_indices = @transform_12, window_bounds = array<i64: 128, 16>}, {pipeline_mode = #tpu.pipeline_mode<synchronous>, transform_indices = @transform_13, window_bounds = array<i64: 1, 1>}, {transform_indices = @transform_14, window_bounds = array<i64: 1, 1, 1>}]} {
    %c0 = arith.constant 0 : index
    %c0_0 = arith.constant 0 : index
    %0 = vector.load %arg2[%c0, %c0_0] : memref<32x256xf32, #tpu.memory_space<vmem>>, vector<32x256xf32>
    %c0_1 = arith.constant 0 : index
    %c0_2 = arith.constant 0 : index
    %c0_3 = arith.constant 0 : index
    %1 = vector.load %arg1[%c0_1, %c0_2, %c0_3] : memref<1x256x256xf32, #tpu.memory_space<vmem>>, vector<1x256x256xf32>
    %2 = vector.shape_cast %1 : vector<1x256x256xf32> to vector<256x256xf32>
    %cst = arith.constant dense<0.000000e+00> : vector<32x256xf32>
    %3 = tpu.matmul %0, %2, %cst {dimension_numbers = #tpu.dot_dimension_numbers<[1], [0], [0], [1], [0, 0, 1, 1], [], []>} : vector<32x256xf32>, vector<256x256xf32>, vector<32x256xf32> -> vector<32x256xf32>
    %cst_4 = arith.constant dense<0.000000e+00> : vector<32xf32>
    %4 = vector.multi_reduction <add>, %3, %cst_4 [1] : vector<32x256xf32> to vector<32xf32>
    %5 = vector.shape_cast %4 : vector<32xf32> to vector<32x1xf32>
    %cst_5 = arith.constant 2.560000e+02 : f32
    %6 = vector.broadcast %cst_5 : f32 to vector<32x1xf32>
    %7 = arith.divf %5, %6 : vector<32x1xf32>
    %8 = vector.broadcast %7 : vector<32x1xf32> to vector<32x256xf32>
    %9 = arith.subf %3, %8 : vector<32x256xf32>
    %10 = arith.mulf %9, %9 : vector<32x256xf32>
    %cst_6 = arith.constant dense<0.000000e+00> : vector<32xf32>
    %11 = vector.multi_reduction <add>, %10, %cst_6 [1] : vector<32x256xf32> to vector<32xf32>
    %12 = vector.shape_cast %11 : vector<32xf32> to vector<32x1xf32>
    %cst_7 = arith.constant 2.560000e+02 : f32
    %13 = vector.broadcast %cst_7 : f32 to vector<32x1xf32>
    %14 = arith.divf %12, %13 : vector<32x1xf32>
    %cst_8 = arith.constant 9.99999974E-6 : f32
    %15 = vector.broadcast %cst_8 : f32 to vector<32x1xf32>
    %16 = arith.addf %14, %15 : vector<32x1xf32>
    %17 = math.rsqrt %16 : vector<32x1xf32>
    %18 = vector.broadcast %17 : vector<32x1xf32> to vector<32x256xf32>
    %19 = arith.mulf %9, %18 : vector<32x256xf32>
    %c0_9 = arith.constant 0 : index
    %c0_10 = arith.constant 0 : index
    %20 = vector.load %arg3[%c0_9, %c0_10] : memref<32x1xf32, #tpu.memory_space<vmem>>, vector<32x1xf32>
    %21 = vector.broadcast %20 : vector<32x1xf32> to vector<32x256xf32>
    %22 = arith.mulf %19, %21 : vector<32x256xf32>
    %c0_11 = arith.constant 0 : index
    %c0_12 = arith.constant 0 : index
    %23 = vector.load %arg4[%c0_11, %c0_12] : memref<32x1xf32, #tpu.memory_space<vmem>>, vector<32x1xf32>
    %24 = vector.broadcast %23 : vector<32x1xf32> to vector<32x256xf32>
    %25 = arith.addf %22, %24 : vector<32x256xf32>
    %cst_13 = arith.constant 0.000000e+00 : f32
    %26 = vector.broadcast %cst_13 : f32 to vector<32x256xf32>
    %27 = arith.cmpf ogt, %25, %26 : vector<32x256xf32>
    %cst_14 = arith.constant 2.000000e-01 : f32
    %28 = vector.broadcast %cst_14 : f32 to vector<32x256xf32>
    %29 = arith.mulf %28, %25 : vector<32x256xf32>
    %30 = arith.select %27, %25, %29 : vector<32x256xi1>, vector<32x256xf32>
    %c0_15 = arith.constant 0 : index
    %c0_16 = arith.constant 0 : index
    %c0_17 = arith.constant 0 : index
    %31 = vector.load %arg5[%c0_15, %c0_16, %c0_17] : memref<16x256x64xf32, #tpu.memory_space<vmem>>, vector<1x256x64xf32>
    %32 = vector.shape_cast %31 : vector<1x256x64xf32> to vector<256x64xf32>
    %cst_18 = arith.constant dense<0.000000e+00> : vector<32x64xf32>
    %33 = tpu.matmul %30, %32, %cst_18 {dimension_numbers = #tpu.dot_dimension_numbers<[1], [0], [0], [1], [0, 0, 1, 1], [], []>} : vector<32x256xf32>, vector<256x64xf32>, vector<32x64xf32> -> vector<32x64xf32>
    %c1 = arith.constant 1 : index
    %c0_19 = arith.constant 0 : index
    %c0_20 = arith.constant 0 : index
    %34 = vector.load %arg5[%c1, %c0_19, %c0_20] : memref<16x256x64xf32, #tpu.memory_space<vmem>>, vector<1x256x64xf32>
    %35 = vector.shape_cast %34 : vector<1x256x64xf32> to vector<256x64xf32>
    %cst_21 = arith.constant dense<0.000000e+00> : vector<32x64xf32>
    %36 = tpu.matmul %30, %35, %cst_21 {dimension_numbers = #tpu.dot_dimension_numbers<[1], [0], [0], [1], [0, 0, 1, 1], [], []>} : vector<32x256xf32>, vector<256x64xf32>, vector<32x64xf32> -> vector<32x64xf32>
    %c2 = arith.constant 2 : index
    %c0_22 = arith.constant 0 : index
    %c0_23 = arith.constant 0 : index
    %37 = vector.load %arg5[%c2, %c0_22, %c0_23] : memref<16x256x64xf32, #tpu.memory_space<vmem>>, vector<1x256x64xf32>
    %38 = vector.shape_cast %37 : vector<1x256x64xf32> to vector<256x64xf32>
    %cst_24 = arith.constant dense<0.000000e+00> : vector<32x64xf32>
    %39 = tpu.matmul %30, %38, %cst_24 {dimension_numbers = #tpu.dot_dimension_numbers<[1], [0], [0], [1], [0, 0, 1, 1], [], []>} : vector<32x256xf32>, vector<256x64xf32>, vector<32x64xf32> -> vector<32x64xf32>
    %c3 = arith.constant 3 : index
    %c0_25 = arith.constant 0 : index
    %c0_26 = arith.constant 0 : index
    %40 = vector.load %arg5[%c3, %c0_25, %c0_26] : memref<16x256x64xf32, #tpu.memory_space<vmem>>, vector<1x256x64xf32>
    %41 = vector.shape_cast %40 : vector<1x256x64xf32> to vector<256x64xf32>
    %cst_27 = arith.constant dense<0.000000e+00> : vector<32x64xf32>
    %42 = tpu.matmul %30, %41, %cst_27 {dimension_numbers = #tpu.dot_dimension_numbers<[1], [0], [0], [1], [0, 0, 1, 1], [], []>} : vector<32x256xf32>, vector<256x64xf32>, vector<32x64xf32> -> vector<32x64xf32>
    %c4 = arith.constant 4 : index
    %c0_28 = arith.constant 0 : index
    %c0_29 = arith.constant 0 : index
    %43 = vector.load %arg5[%c4, %c0_28, %c0_29] : memref<16x256x64xf32, #tpu.memory_space<vmem>>, vector<1x256x64xf32>
    %44 = vector.shape_cast %43 : vector<1x256x64xf32> to vector<256x64xf32>
    %cst_30 = arith.constant dense<0.000000e+00> : vector<32x64xf32>
    %45 = tpu.matmul %30, %44, %cst_30 {dimension_numbers = #tpu.dot_dimension_numbers<[1], [0], [0], [1], [0, 0, 1, 1], [], []>} : vector<32x256xf32>, vector<256x64xf32>, vector<32x64xf32> -> vector<32x64xf32>
    %c5 = arith.constant 5 : index
    %c0_31 = arith.constant 0 : index
    %c0_32 = arith.constant 0 : index
    %46 = vector.load %arg5[%c5, %c0_31, %c0_32] : memref<16x256x64xf32, #tpu.memory_space<vmem>>, vector<1x256x64xf32>
    %47 = vector.shape_cast %46 : vector<1x256x64xf32> to vector<256x64xf32>
    %cst_33 = arith.constant dense<0.000000e+00> : vector<32x64xf32>
    %48 = tpu.matmul %30, %47, %cst_33 {dimension_numbers = #tpu.dot_dimension_numbers<[1], [0], [0], [1], [0, 0, 1, 1], [], []>} : vector<32x256xf32>, vector<256x64xf32>, vector<32x64xf32> -> vector<32x64xf32>
    %c6 = arith.constant 6 : index
    %c0_34 = arith.constant 0 : index
    %c0_35 = arith.constant 0 : index
    %49 = vector.load %arg5[%c6, %c0_34, %c0_35] : memref<16x256x64xf32, #tpu.memory_space<vmem>>, vector<1x256x64xf32>
    %50 = vector.shape_cast %49 : vector<1x256x64xf32> to vector<256x64xf32>
    %cst_36 = arith.constant dense<0.000000e+00> : vector<32x64xf32>
    %51 = tpu.matmul %30, %50, %cst_36 {dimension_numbers = #tpu.dot_dimension_numbers<[1], [0], [0], [1], [0, 0, 1, 1], [], []>} : vector<32x256xf32>, vector<256x64xf32>, vector<32x64xf32> -> vector<32x64xf32>
    %c7 = arith.constant 7 : index
    %c0_37 = arith.constant 0 : index
    %c0_38 = arith.constant 0 : index
    %52 = vector.load %arg5[%c7, %c0_37, %c0_38] : memref<16x256x64xf32, #tpu.memory_space<vmem>>, vector<1x256x64xf32>
    %53 = vector.shape_cast %52 : vector<1x256x64xf32> to vector<256x64xf32>
    %cst_39 = arith.constant dense<0.000000e+00> : vector<32x64xf32>
    %54 = tpu.matmul %30, %53, %cst_39 {dimension_numbers = #tpu.dot_dimension_numbers<[1], [0], [0], [1], [0, 0, 1, 1], [], []>} : vector<32x256xf32>, vector<256x64xf32>, vector<32x64xf32> -> vector<32x64xf32>
    %c8 = arith.constant 8 : index
    %c0_40 = arith.constant 0 : index
    %c0_41 = arith.constant 0 : index
    %55 = vector.load %arg5[%c8, %c0_40, %c0_41] : memref<16x256x64xf32, #tpu.memory_space<vmem>>, vector<1x256x64xf32>
    %56 = vector.shape_cast %55 : vector<1x256x64xf32> to vector<256x64xf32>
    %cst_42 = arith.constant dense<0.000000e+00> : vector<32x64xf32>
    %57 = tpu.matmul %30, %56, %cst_42 {dimension_numbers = #tpu.dot_dimension_numbers<[1], [0], [0], [1], [0, 0, 1, 1], [], []>} : vector<32x256xf32>, vector<256x64xf32>, vector<32x64xf32> -> vector<32x64xf32>
    %c9 = arith.constant 9 : index
    %c0_43 = arith.constant 0 : index
    %c0_44 = arith.constant 0 : index
    %58 = vector.load %arg5[%c9, %c0_43, %c0_44] : memref<16x256x64xf32, #tpu.memory_space<vmem>>, vector<1x256x64xf32>
    %59 = vector.shape_cast %58 : vector<1x256x64xf32> to vector<256x64xf32>
    %cst_45 = arith.constant dense<0.000000e+00> : vector<32x64xf32>
    %60 = tpu.matmul %30, %59, %cst_45 {dimension_numbers = #tpu.dot_dimension_numbers<[1], [0], [0], [1], [0, 0, 1, 1], [], []>} : vector<32x256xf32>, vector<256x64xf32>, vector<32x64xf32> -> vector<32x64xf32>
    %c10 = arith.constant 10 : index
    %c0_46 = arith.constant 0 : index
    %c0_47 = arith.constant 0 : index
    %61 = vector.load %arg5[%c10, %c0_46, %c0_47] : memref<16x256x64xf32, #tpu.memory_space<vmem>>, vector<1x256x64xf32>
    %62 = vector.shape_cast %61 : vector<1x256x64xf32> to vector<256x64xf32>
    %cst_48 = arith.constant dense<0.000000e+00> : vector<32x64xf32>
    %63 = tpu.matmul %30, %62, %cst_48 {dimension_numbers = #tpu.dot_dimension_numbers<[1], [0], [0], [1], [0, 0, 1, 1], [], []>} : vector<32x256xf32>, vector<256x64xf32>, vector<32x64xf32> -> vector<32x64xf32>
    %c11 = arith.constant 11 : index
    %c0_49 = arith.constant 0 : index
    %c0_50 = arith.constant 0 : index
    %64 = vector.load %arg5[%c11, %c0_49, %c0_50] : memref<16x256x64xf32, #tpu.memory_space<vmem>>, vector<1x256x64xf32>
    %65 = vector.shape_cast %64 : vector<1x256x64xf32> to vector<256x64xf32>
    %cst_51 = arith.constant dense<0.000000e+00> : vector<32x64xf32>
    %66 = tpu.matmul %30, %65, %cst_51 {dimension_numbers = #tpu.dot_dimension_numbers<[1], [0], [0], [1], [0, 0, 1, 1], [], []>} : vector<32x256xf32>, vector<256x64xf32>, vector<32x64xf32> -> vector<32x64xf32>
    %c12 = arith.constant 12 : index
    %c0_52 = arith.constant 0 : index
    %c0_53 = arith.constant 0 : index
    %67 = vector.load %arg5[%c12, %c0_52, %c0_53] : memref<16x256x64xf32, #tpu.memory_space<vmem>>, vector<1x256x64xf32>
    %68 = vector.shape_cast %67 : vector<1x256x64xf32> to vector<256x64xf32>
    %cst_54 = arith.constant dense<0.000000e+00> : vector<32x64xf32>
    %69 = tpu.matmul %30, %68, %cst_54 {dimension_numbers = #tpu.dot_dimension_numbers<[1], [0], [0], [1], [0, 0, 1, 1], [], []>} : vector<32x256xf32>, vector<256x64xf32>, vector<32x64xf32> -> vector<32x64xf32>
    %c13 = arith.constant 13 : index
    %c0_55 = arith.constant 0 : index
    %c0_56 = arith.constant 0 : index
    %70 = vector.load %arg5[%c13, %c0_55, %c0_56] : memref<16x256x64xf32, #tpu.memory_space<vmem>>, vector<1x256x64xf32>
    %71 = vector.shape_cast %70 : vector<1x256x64xf32> to vector<256x64xf32>
    %cst_57 = arith.constant dense<0.000000e+00> : vector<32x64xf32>
    %72 = tpu.matmul %30, %71, %cst_57 {dimension_numbers = #tpu.dot_dimension_numbers<[1], [0], [0], [1], [0, 0, 1, 1], [], []>} : vector<32x256xf32>, vector<256x64xf32>, vector<32x64xf32> -> vector<32x64xf32>
    %c14 = arith.constant 14 : index
    %c0_58 = arith.constant 0 : index
    %c0_59 = arith.constant 0 : index
    %73 = vector.load %arg5[%c14, %c0_58, %c0_59] : memref<16x256x64xf32, #tpu.memory_space<vmem>>, vector<1x256x64xf32>
    %74 = vector.shape_cast %73 : vector<1x256x64xf32> to vector<256x64xf32>
    %cst_60 = arith.constant dense<0.000000e+00> : vector<32x64xf32>
    %75 = tpu.matmul %30, %74, %cst_60 {dimension_numbers = #tpu.dot_dimension_numbers<[1], [0], [0], [1], [0, 0, 1, 1], [], []>} : vector<32x256xf32>, vector<256x64xf32>, vector<32x64xf32> -> vector<32x64xf32>
    %c15 = arith.constant 15 : index
    %c0_61 = arith.constant 0 : index
    %c0_62 = arith.constant 0 : index
    %76 = vector.load %arg5[%c15, %c0_61, %c0_62] : memref<16x256x64xf32, #tpu.memory_space<vmem>>, vector<1x256x64xf32>
    %77 = vector.shape_cast %76 : vector<1x256x64xf32> to vector<256x64xf32>
    %cst_63 = arith.constant dense<0.000000e+00> : vector<32x64xf32>
    %78 = tpu.matmul %30, %77, %cst_63 {dimension_numbers = #tpu.dot_dimension_numbers<[1], [0], [0], [1], [0, 0, 1, 1], [], []>} : vector<32x256xf32>, vector<256x64xf32>, vector<32x64xf32> -> vector<32x64xf32>
    %79 = tpu.concatenate %33, %36, %39, %42, %45, %48, %51, %54, %57, %60, %63, %66, %69, %72, %75, %78 in 0 : vector<32x64xf32>, vector<32x64xf32>, vector<32x64xf32>, vector<32x64xf32>, vector<32x64xf32>, vector<32x64xf32>, vector<32x64xf32>, vector<32x64xf32>, vector<32x64xf32>, vector<32x64xf32>, vector<32x64xf32>, vector<32x64xf32>, vector<32x64xf32>, vector<32x64xf32>, vector<32x64xf32>, vector<32x64xf32> -> vector<512x64xf32>
    %c0_64 = arith.constant 0 : index
    %c0_65 = arith.constant 0 : index
    %80 = vector.load %arg6[%c0_64, %c0_65] : memref<64x512xf32, #tpu.memory_space<vmem>>, vector<64x512xf32>
    %cst_66 = arith.constant dense<0.000000e+00> : vector<64x64xf32>
    %81 = tpu.matmul %80, %79, %cst_66 {dimension_numbers = #tpu.dot_dimension_numbers<[1], [0], [0], [1], [0, 0, 1, 1], [], []>} : vector<64x512xf32>, vector<512x64xf32>, vector<64x64xf32> -> vector<64x64xf32>
    %cst_67 = arith.constant dense<0.000000e+00> : vector<64xf32>
    %82 = vector.multi_reduction <add>, %81, %cst_67 [1] : vector<64x64xf32> to vector<64xf32>
    %83 = vector.shape_cast %82 : vector<64xf32> to vector<64x1xf32>
    %cst_68 = arith.constant 6.400000e+01 : f32
    %84 = vector.broadcast %cst_68 : f32 to vector<64x1xf32>
    %85 = arith.divf %83, %84 : vector<64x1xf32>
    %86 = vector.broadcast %85 : vector<64x1xf32> to vector<64x64xf32>
    %87 = arith.subf %81, %86 : vector<64x64xf32>
    %88 = arith.mulf %87, %87 : vector<64x64xf32>
    %cst_69 = arith.constant dense<0.000000e+00> : vector<64xf32>
    %89 = vector.multi_reduction <add>, %88, %cst_69 [1] : vector<64x64xf32> to vector<64xf32>
    %90 = vector.shape_cast %89 : vector<64xf32> to vector<64x1xf32>
    %cst_70 = arith.constant 6.400000e+01 : f32
    %91 = vector.broadcast %cst_70 : f32 to vector<64x1xf32>
    %92 = arith.divf %90, %91 : vector<64x1xf32>
    %cst_71 = arith.constant 9.99999974E-6 : f32
    %93 = vector.broadcast %cst_71 : f32 to vector<64x1xf32>
    %94 = arith.addf %92, %93 : vector<64x1xf32>
    %95 = math.rsqrt %94 : vector<64x1xf32>
    %96 = vector.broadcast %95 : vector<64x1xf32> to vector<64x64xf32>
    %97 = arith.mulf %87, %96 : vector<64x64xf32>
    %c0_72 = arith.constant 0 : index
    %c0_73 = arith.constant 0 : index
    %98 = vector.load %arg7[%c0_72, %c0_73] : memref<64x1xf32, #tpu.memory_space<vmem>>, vector<64x1xf32>
    %99 = vector.broadcast %98 : vector<64x1xf32> to vector<64x64xf32>
    %100 = arith.mulf %97, %99 : vector<64x64xf32>
    %c0_74 = arith.constant 0 : index
    %c0_75 = arith.constant 0 : index
    %101 = vector.load %arg8[%c0_74, %c0_75] : memref<64x1xf32, #tpu.memory_space<vmem>>, vector<64x1xf32>
    %102 = vector.broadcast %101 : vector<64x1xf32> to vector<64x64xf32>
    %103 = arith.addf %100, %102 : vector<64x64xf32>
    %cst_76 = arith.constant 0.000000e+00 : f32
    %104 = vector.broadcast %cst_76 : f32 to vector<64x64xf32>
    %105 = arith.cmpf ogt, %103, %104 : vector<64x64xf32>
    %cst_77 = arith.constant 2.000000e-01 : f32
    %106 = vector.broadcast %cst_77 : f32 to vector<64x64xf32>
    %107 = arith.mulf %106, %103 : vector<64x64xf32>
    %108 = arith.select %105, %103, %107 : vector<64x64xi1>, vector<64x64xf32>
    %c0_78 = arith.constant 0 : index
    %c0_79 = arith.constant 0 : index
    %c0_80 = arith.constant 0 : index
    %109 = vector.load %arg9[%c0_78, %c0_79, %c0_80] : memref<16x64x16xf32, #tpu.memory_space<vmem>>, vector<1x64x16xf32>
    %110 = vector.shape_cast %109 : vector<1x64x16xf32> to vector<64x16xf32>
    %cst_81 = arith.constant dense<0.000000e+00> : vector<64x16xf32>
    %111 = tpu.matmul %108, %110, %cst_81 {dimension_numbers = #tpu.dot_dimension_numbers<[1], [0], [0], [1], [0, 0, 1, 1], [], []>} : vector<64x64xf32>, vector<64x16xf32>, vector<64x16xf32> -> vector<64x16xf32>
    %c1_82 = arith.constant 1 : index
    %c0_83 = arith.constant 0 : index
    %c0_84 = arith.constant 0 : index
    %112 = vector.load %arg9[%c1_82, %c0_83, %c0_84] : memref<16x64x16xf32, #tpu.memory_space<vmem>>, vector<1x64x16xf32>
    %113 = vector.shape_cast %112 : vector<1x64x16xf32> to vector<64x16xf32>
    %cst_85 = arith.constant dense<0.000000e+00> : vector<64x16xf32>
    %114 = tpu.matmul %108, %113, %cst_85 {dimension_numbers = #tpu.dot_dimension_numbers<[1], [0], [0], [1], [0, 0, 1, 1], [], []>} : vector<64x64xf32>, vector<64x16xf32>, vector<64x16xf32> -> vector<64x16xf32>
    %c2_86 = arith.constant 2 : index
    %c0_87 = arith.constant 0 : index
    %c0_88 = arith.constant 0 : index
    %115 = vector.load %arg9[%c2_86, %c0_87, %c0_88] : memref<16x64x16xf32, #tpu.memory_space<vmem>>, vector<1x64x16xf32>
    %116 = vector.shape_cast %115 : vector<1x64x16xf32> to vector<64x16xf32>
    %cst_89 = arith.constant dense<0.000000e+00> : vector<64x16xf32>
    %117 = tpu.matmul %108, %116, %cst_89 {dimension_numbers = #tpu.dot_dimension_numbers<[1], [0], [0], [1], [0, 0, 1, 1], [], []>} : vector<64x64xf32>, vector<64x16xf32>, vector<64x16xf32> -> vector<64x16xf32>
    %c3_90 = arith.constant 3 : index
    %c0_91 = arith.constant 0 : index
    %c0_92 = arith.constant 0 : index
    %118 = vector.load %arg9[%c3_90, %c0_91, %c0_92] : memref<16x64x16xf32, #tpu.memory_space<vmem>>, vector<1x64x16xf32>
    %119 = vector.shape_cast %118 : vector<1x64x16xf32> to vector<64x16xf32>
    %cst_93 = arith.constant dense<0.000000e+00> : vector<64x16xf32>
    %120 = tpu.matmul %108, %119, %cst_93 {dimension_numbers = #tpu.dot_dimension_numbers<[1], [0], [0], [1], [0, 0, 1, 1], [], []>} : vector<64x64xf32>, vector<64x16xf32>, vector<64x16xf32> -> vector<64x16xf32>
    %c4_94 = arith.constant 4 : index
    %c0_95 = arith.constant 0 : index
    %c0_96 = arith.constant 0 : index
    %121 = vector.load %arg9[%c4_94, %c0_95, %c0_96] : memref<16x64x16xf32, #tpu.memory_space<vmem>>, vector<1x64x16xf32>
    %122 = vector.shape_cast %121 : vector<1x64x16xf32> to vector<64x16xf32>
    %cst_97 = arith.constant dense<0.000000e+00> : vector<64x16xf32>
    %123 = tpu.matmul %108, %122, %cst_97 {dimension_numbers = #tpu.dot_dimension_numbers<[1], [0], [0], [1], [0, 0, 1, 1], [], []>} : vector<64x64xf32>, vector<64x16xf32>, vector<64x16xf32> -> vector<64x16xf32>
    %c5_98 = arith.constant 5 : index
    %c0_99 = arith.constant 0 : index
    %c0_100 = arith.constant 0 : index
    %124 = vector.load %arg9[%c5_98, %c0_99, %c0_100] : memref<16x64x16xf32, #tpu.memory_space<vmem>>, vector<1x64x16xf32>
    %125 = vector.shape_cast %124 : vector<1x64x16xf32> to vector<64x16xf32>
    %cst_101 = arith.constant dense<0.000000e+00> : vector<64x16xf32>
    %126 = tpu.matmul %108, %125, %cst_101 {dimension_numbers = #tpu.dot_dimension_numbers<[1], [0], [0], [1], [0, 0, 1, 1], [], []>} : vector<64x64xf32>, vector<64x16xf32>, vector<64x16xf32> -> vector<64x16xf32>
    %c6_102 = arith.constant 6 : index
    %c0_103 = arith.constant 0 : index
    %c0_104 = arith.constant 0 : index
    %127 = vector.load %arg9[%c6_102, %c0_103, %c0_104] : memref<16x64x16xf32, #tpu.memory_space<vmem>>, vector<1x64x16xf32>
    %128 = vector.shape_cast %127 : vector<1x64x16xf32> to vector<64x16xf32>
    %cst_105 = arith.constant dense<0.000000e+00> : vector<64x16xf32>
    %129 = tpu.matmul %108, %128, %cst_105 {dimension_numbers = #tpu.dot_dimension_numbers<[1], [0], [0], [1], [0, 0, 1, 1], [], []>} : vector<64x64xf32>, vector<64x16xf32>, vector<64x16xf32> -> vector<64x16xf32>
    %c7_106 = arith.constant 7 : index
    %c0_107 = arith.constant 0 : index
    %c0_108 = arith.constant 0 : index
    %130 = vector.load %arg9[%c7_106, %c0_107, %c0_108] : memref<16x64x16xf32, #tpu.memory_space<vmem>>, vector<1x64x16xf32>
    %131 = vector.shape_cast %130 : vector<1x64x16xf32> to vector<64x16xf32>
    %cst_109 = arith.constant dense<0.000000e+00> : vector<64x16xf32>
    %132 = tpu.matmul %108, %131, %cst_109 {dimension_numbers = #tpu.dot_dimension_numbers<[1], [0], [0], [1], [0, 0, 1, 1], [], []>} : vector<64x64xf32>, vector<64x16xf32>, vector<64x16xf32> -> vector<64x16xf32>
    %c8_110 = arith.constant 8 : index
    %c0_111 = arith.constant 0 : index
    %c0_112 = arith.constant 0 : index
    %133 = vector.load %arg9[%c8_110, %c0_111, %c0_112] : memref<16x64x16xf32, #tpu.memory_space<vmem>>, vector<1x64x16xf32>
    %134 = vector.shape_cast %133 : vector<1x64x16xf32> to vector<64x16xf32>
    %cst_113 = arith.constant dense<0.000000e+00> : vector<64x16xf32>
    %135 = tpu.matmul %108, %134, %cst_113 {dimension_numbers = #tpu.dot_dimension_numbers<[1], [0], [0], [1], [0, 0, 1, 1], [], []>} : vector<64x64xf32>, vector<64x16xf32>, vector<64x16xf32> -> vector<64x16xf32>
    %c9_114 = arith.constant 9 : index
    %c0_115 = arith.constant 0 : index
    %c0_116 = arith.constant 0 : index
    %136 = vector.load %arg9[%c9_114, %c0_115, %c0_116] : memref<16x64x16xf32, #tpu.memory_space<vmem>>, vector<1x64x16xf32>
    %137 = vector.shape_cast %136 : vector<1x64x16xf32> to vector<64x16xf32>
    %cst_117 = arith.constant dense<0.000000e+00> : vector<64x16xf32>
    %138 = tpu.matmul %108, %137, %cst_117 {dimension_numbers = #tpu.dot_dimension_numbers<[1], [0], [0], [1], [0, 0, 1, 1], [], []>} : vector<64x64xf32>, vector<64x16xf32>, vector<64x16xf32> -> vector<64x16xf32>
    %c10_118 = arith.constant 10 : index
    %c0_119 = arith.constant 0 : index
    %c0_120 = arith.constant 0 : index
    %139 = vector.load %arg9[%c10_118, %c0_119, %c0_120] : memref<16x64x16xf32, #tpu.memory_space<vmem>>, vector<1x64x16xf32>
    %140 = vector.shape_cast %139 : vector<1x64x16xf32> to vector<64x16xf32>
    %cst_121 = arith.constant dense<0.000000e+00> : vector<64x16xf32>
    %141 = tpu.matmul %108, %140, %cst_121 {dimension_numbers = #tpu.dot_dimension_numbers<[1], [0], [0], [1], [0, 0, 1, 1], [], []>} : vector<64x64xf32>, vector<64x16xf32>, vector<64x16xf32> -> vector<64x16xf32>
    %c11_122 = arith.constant 11 : index
    %c0_123 = arith.constant 0 : index
    %c0_124 = arith.constant 0 : index
    %142 = vector.load %arg9[%c11_122, %c0_123, %c0_124] : memref<16x64x16xf32, #tpu.memory_space<vmem>>, vector<1x64x16xf32>
    %143 = vector.shape_cast %142 : vector<1x64x16xf32> to vector<64x16xf32>
    %cst_125 = arith.constant dense<0.000000e+00> : vector<64x16xf32>
    %144 = tpu.matmul %108, %143, %cst_125 {dimension_numbers = #tpu.dot_dimension_numbers<[1], [0], [0], [1], [0, 0, 1, 1], [], []>} : vector<64x64xf32>, vector<64x16xf32>, vector<64x16xf32> -> vector<64x16xf32>
    %c12_126 = arith.constant 12 : index
    %c0_127 = arith.constant 0 : index
    %c0_128 = arith.constant 0 : index
    %145 = vector.load %arg9[%c12_126, %c0_127, %c0_128] : memref<16x64x16xf32, #tpu.memory_space<vmem>>, vector<1x64x16xf32>
    %146 = vector.shape_cast %145 : vector<1x64x16xf32> to vector<64x16xf32>
    %cst_129 = arith.constant dense<0.000000e+00> : vector<64x16xf32>
    %147 = tpu.matmul %108, %146, %cst_129 {dimension_numbers = #tpu.dot_dimension_numbers<[1], [0], [0], [1], [0, 0, 1, 1], [], []>} : vector<64x64xf32>, vector<64x16xf32>, vector<64x16xf32> -> vector<64x16xf32>
    %c13_130 = arith.constant 13 : index
    %c0_131 = arith.constant 0 : index
    %c0_132 = arith.constant 0 : index
    %148 = vector.load %arg9[%c13_130, %c0_131, %c0_132] : memref<16x64x16xf32, #tpu.memory_space<vmem>>, vector<1x64x16xf32>
    %149 = vector.shape_cast %148 : vector<1x64x16xf32> to vector<64x16xf32>
    %cst_133 = arith.constant dense<0.000000e+00> : vector<64x16xf32>
    %150 = tpu.matmul %108, %149, %cst_133 {dimension_numbers = #tpu.dot_dimension_numbers<[1], [0], [0], [1], [0, 0, 1, 1], [], []>} : vector<64x64xf32>, vector<64x16xf32>, vector<64x16xf32> -> vector<64x16xf32>
    %c14_134 = arith.constant 14 : index
    %c0_135 = arith.constant 0 : index
    %c0_136 = arith.constant 0 : index
    %151 = vector.load %arg9[%c14_134, %c0_135, %c0_136] : memref<16x64x16xf32, #tpu.memory_space<vmem>>, vector<1x64x16xf32>
    %152 = vector.shape_cast %151 : vector<1x64x16xf32> to vector<64x16xf32>
    %cst_137 = arith.constant dense<0.000000e+00> : vector<64x16xf32>
    %153 = tpu.matmul %108, %152, %cst_137 {dimension_numbers = #tpu.dot_dimension_numbers<[1], [0], [0], [1], [0, 0, 1, 1], [], []>} : vector<64x64xf32>, vector<64x16xf32>, vector<64x16xf32> -> vector<64x16xf32>
    %c15_138 = arith.constant 15 : index
    %c0_139 = arith.constant 0 : index
    %c0_140 = arith.constant 0 : index
    %154 = vector.load %arg9[%c15_138, %c0_139, %c0_140] : memref<16x64x16xf32, #tpu.memory_space<vmem>>, vector<1x64x16xf32>
    %155 = vector.shape_cast %154 : vector<1x64x16xf32> to vector<64x16xf32>
    %cst_141 = arith.constant dense<0.000000e+00> : vector<64x16xf32>
    %156 = tpu.matmul %108, %155, %cst_141 {dimension_numbers = #tpu.dot_dimension_numbers<[1], [0], [0], [1], [0, 0, 1, 1], [], []>} : vector<64x64xf32>, vector<64x16xf32>, vector<64x16xf32> -> vector<64x16xf32>
    %157 = tpu.concatenate %111, %114, %117, %120, %123, %126, %129, %132, %135, %138, %141, %144, %147, %150, %153, %156 in 0 : vector<64x16xf32>, vector<64x16xf32>, vector<64x16xf32>, vector<64x16xf32>, vector<64x16xf32>, vector<64x16xf32>, vector<64x16xf32>, vector<64x16xf32>, vector<64x16xf32>, vector<64x16xf32>, vector<64x16xf32>, vector<64x16xf32>, vector<64x16xf32>, vector<64x16xf32>, vector<64x16xf32>, vector<64x16xf32> -> vector<1024x16xf32>
    %c0_142 = arith.constant 0 : index
    %c0_143 = arith.constant 0 : index
    %158 = vector.load %arg10[%c0_142, %c0_143] : memref<128x1024xf32, #tpu.memory_space<vmem>>, vector<128x1024xf32>
    %cst_144 = arith.constant dense<0.000000e+00> : vector<128x16xf32>
    %159 = tpu.matmul %158, %157, %cst_144 {dimension_numbers = #tpu.dot_dimension_numbers<[1], [0], [0], [1], [0, 0, 1, 1], [], []>} : vector<128x1024xf32>, vector<1024x16xf32>, vector<128x16xf32> -> vector<128x16xf32>
    %cst_145 = arith.constant dense<0.000000e+00> : vector<128xf32>
    %160 = vector.multi_reduction <add>, %159, %cst_145 [1] : vector<128x16xf32> to vector<128xf32>
    %161 = vector.shape_cast %160 : vector<128xf32> to vector<128x1xf32>
    %cst_146 = arith.constant 1.600000e+01 : f32
    %162 = vector.broadcast %cst_146 : f32 to vector<128x1xf32>
    %163 = arith.divf %161, %162 : vector<128x1xf32>
    %164 = vector.broadcast %163 : vector<128x1xf32> to vector<128x16xf32>
    %165 = arith.subf %159, %164 : vector<128x16xf32>
    %166 = arith.mulf %165, %165 : vector<128x16xf32>
    %cst_147 = arith.constant dense<0.000000e+00> : vector<128xf32>
    %167 = vector.multi_reduction <add>, %166, %cst_147 [1] : vector<128x16xf32> to vector<128xf32>
    %168 = vector.shape_cast %167 : vector<128xf32> to vector<128x1xf32>
    %cst_148 = arith.constant 1.600000e+01 : f32
    %169 = vector.broadcast %cst_148 : f32 to vector<128x1xf32>
    %170 = arith.divf %168, %169 : vector<128x1xf32>
    %cst_149 = arith.constant 9.99999974E-6 : f32
    %171 = vector.broadcast %cst_149 : f32 to vector<128x1xf32>
    %172 = arith.addf %170, %171 : vector<128x1xf32>
    %173 = math.rsqrt %172 : vector<128x1xf32>
    %174 = vector.broadcast %173 : vector<128x1xf32> to vector<128x16xf32>
    %175 = arith.mulf %165, %174 : vector<128x16xf32>
    %c0_150 = arith.constant 0 : index
    %c0_151 = arith.constant 0 : index
    %176 = vector.load %arg11[%c0_150, %c0_151] : memref<128x1xf32, #tpu.memory_space<vmem>>, vector<128x1xf32>
    %177 = vector.broadcast %176 : vector<128x1xf32> to vector<128x16xf32>
    %178 = arith.mulf %175, %177 : vector<128x16xf32>
    %c0_152 = arith.constant 0 : index
    %c0_153 = arith.constant 0 : index
    %179 = vector.load %arg12[%c0_152, %c0_153] : memref<128x1xf32, #tpu.memory_space<vmem>>, vector<128x1xf32>
    %180 = vector.broadcast %179 : vector<128x1xf32> to vector<128x16xf32>
    %181 = arith.addf %178, %180 : vector<128x16xf32>
    %cst_154 = arith.constant 0.000000e+00 : f32
    %182 = vector.broadcast %cst_154 : f32 to vector<128x16xf32>
    %183 = arith.cmpf ogt, %181, %182 : vector<128x16xf32>
    %cst_155 = arith.constant 2.000000e-01 : f32
    %184 = vector.broadcast %cst_155 : f32 to vector<128x16xf32>
    %185 = arith.mulf %184, %181 : vector<128x16xf32>
    %186 = arith.select %183, %181, %185 : vector<128x16xi1>, vector<128x16xf32>
    %c0_156 = arith.constant 0 : index
    %c0_157 = arith.constant 0 : index
    %187 = vector.load %arg13[%c0_156, %c0_157] : memref<128x16xf32, #tpu.memory_space<vmem>>, vector<128x16xf32>
    %188 = arith.mulf %186, %187 : vector<128x16xf32>
    %cst_158 = arith.constant dense<0.000000e+00> : vector<128xf32>
    %189 = vector.multi_reduction <add>, %188, %cst_158 [1] : vector<128x16xf32> to vector<128xf32>
    %190 = vector.shape_cast %189 : vector<128xf32> to vector<128x1xf32>
    %cst_159 = arith.constant dense<0.000000e+00> : vector<1xf32>
    %191 = vector.multi_reduction <add>, %190, %cst_159 [0] : vector<128x1xf32> to vector<1xf32>
    %192 = vector.shape_cast %191 : vector<1xf32> to vector<1x1xf32>
    %c0_160 = arith.constant 0 : index
    %c0_161 = arith.constant 0 : index
    %193 = vector.load %arg14[%c0_160, %c0_161] : memref<1x1xf32, #tpu.memory_space<vmem>>, vector<1x1xf32>
    %194 = arith.addf %192, %193 : vector<1x1xf32>
    %195 = arith.negf %194 : vector<1x1xf32>
    %196 = math.exp %195 : vector<1x1xf32>
    %cst_162 = arith.constant 1.000000e+00 : f32
    %197 = vector.broadcast %cst_162 : f32 to vector<1x1xf32>
    %198 = arith.addf %197, %196 : vector<1x1xf32>
    %199 = arith.divf %197, %198 : vector<1x1xf32>
    %c0_163 = arith.constant 0 : index
    %c0_164 = arith.constant 0 : index
    %c0_165 = arith.constant 0 : index
    %200 = vector.load %arg15[%c0_163, %c0_164, %c0_165] : memref<1x1x1xf32, #tpu.memory_space<vmem>>, vector<1x1x1xf32>
    %201 = vector.shape_cast %200 : vector<1x1x1xf32> to vector<1x1xf32>
    %202 = vector.shape_cast %199 : vector<1x1xf32> to vector<1x1x1xf32>
    tpu.vector_store %arg15[%c0_163, %c0_164, %c0_165], %202 {strides = array<i32>} : memref<1x1x1xf32, #tpu.memory_space<vmem>>, vector<1x1x1xf32>,
    return
  }
  func.func @transform_0(%arg0: i32) -> (i32, i32, i32) {
    %c0_i32 = arith.constant 0 : i32
    %c0_i32_0 = arith.constant 0 : i32
    %c0_i32_1 = arith.constant 0 : i32
    return %arg0, %c0_i32, %c0_i32_0 : i32, i32, i32
  }
  func.func @transform_1(%arg0: i32) -> (i32, i32) {
    %c0_i32 = arith.constant 0 : i32
    %c0_i32_0 = arith.constant 0 : i32
    %c0_i32_1 = arith.constant 0 : i32
    return %c0_i32, %c0_i32_0 : i32, i32
  }
  func.func @transform_2(%arg0: i32) -> (i32, i32) {
    %c0_i32 = arith.constant 0 : i32
    %c0_i32_0 = arith.constant 0 : i32
    %c0_i32_1 = arith.constant 0 : i32
    return %c0_i32, %c0_i32_0 : i32, i32
  }
  func.func @transform_3(%arg0: i32) -> (i32, i32) {
    %c0_i32 = arith.constant 0 : i32
    %c0_i32_0 = arith.constant 0 : i32
    %c0_i32_1 = arith.constant 0 : i32
    return %c0_i32, %c0_i32_0 : i32, i32
  }
  func.func @transform_4(%arg0: i32) -> (i32, i32, i32) {
    %c0_i32 = arith.constant 0 : i32
    %c0_i32_0 = arith.constant 0 : i32
    %c0_i32_1 = arith.constant 0 : i32
    %c0_i32_2 = arith.constant 0 : i32
    return %c0_i32, %c0_i32_0, %c0_i32_1 : i32, i32, i32
  }
  func.func @transform_5(%arg0: i32) -> (i32, i32) {
    %c0_i32 = arith.constant 0 : i32
    %c0_i32_0 = arith.constant 0 : i32
    %c0_i32_1 = arith.constant 0 : i32
    return %c0_i32, %c0_i32_0 : i32, i32
  }
  func.func @transform_6(%arg0: i32) -> (i32, i32) {
    %c0_i32 = arith.constant 0 : i32
    %c0_i32_0 = arith.constant 0 : i32
    %c0_i32_1 = arith.constant 0 : i32
    return %c0_i32, %c0_i32_0 : i32, i32
  }
  func.func @transform_7(%arg0: i32) -> (i32, i32) {
    %c0_i32 = arith.constant 0 : i32
    %c0_i32_0 = arith.constant 0 : i32
    %c0_i32_1 = arith.constant 0 : i32
    return %c0_i32, %c0_i32_0 : i32, i32
  }
  func.func @transform_8(%arg0: i32) -> (i32, i32, i32) {
    %c0_i32 = arith.constant 0 : i32
    %c0_i32_0 = arith.constant 0 : i32
    %c0_i32_1 = arith.constant 0 : i32
    %c0_i32_2 = arith.constant 0 : i32
    return %c0_i32, %c0_i32_0, %c0_i32_1 : i32, i32, i32
  }
  func.func @transform_9(%arg0: i32) -> (i32, i32) {
    %c0_i32 = arith.constant 0 : i32
    %c0_i32_0 = arith.constant 0 : i32
    %c0_i32_1 = arith.constant 0 : i32
    return %c0_i32, %c0_i32_0 : i32, i32
  }
  func.func @transform_10(%arg0: i32) -> (i32, i32) {
    %c0_i32 = arith.constant 0 : i32
    %c0_i32_0 = arith.constant 0 : i32
    %c0_i32_1 = arith.constant 0 : i32
    return %c0_i32, %c0_i32_0 : i32, i32
  }
  func.func @transform_11(%arg0: i32) -> (i32, i32) {
    %c0_i32 = arith.constant 0 : i32
    %c0_i32_0 = arith.constant 0 : i32
    %c0_i32_1 = arith.constant 0 : i32
    return %c0_i32, %c0_i32_0 : i32, i32
  }
  func.func @transform_12(%arg0: i32) -> (i32, i32) {
    %c0_i32 = arith.constant 0 : i32
    %c0_i32_0 = arith.constant 0 : i32
    %c0_i32_1 = arith.constant 0 : i32
    return %c0_i32, %c0_i32_0 : i32, i32
  }
  func.func @transform_13(%arg0: i32) -> (i32, i32) {
    %c0_i32 = arith.constant 0 : i32
    %c0_i32_0 = arith.constant 0 : i32
    %c0_i32_1 = arith.constant 0 : i32
    return %c0_i32, %c0_i32_0 : i32, i32
  }
  func.func @transform_14(%arg0: i32) -> (i32, i32, i32) {
    %c0_i32 = arith.constant 0 : i32
    %c0_i32_0 = arith.constant 0 : i32
    %c0_i32_1 = arith.constant 0 : i32
    return %arg0, %c0_i32, %c0_i32_0 : i32, i32, i32
  }
}

</mosaic_0001>

<llo_original>
// kernel: discriminator_forward.2
$region0: #{discriminator_forward.2}
  #allocation0 [shape = 'u32[]', space=smem, size = 0x4, offset = 0x4, fixed_abs, tag = 'smem constant byte address 0x4 - core index']
  #allocation1 [shape = 'u32[144,128]{1,0:T(1,128)}', space=vmem, size = 0x12000, scoped, tag = 'internal scratch']
  %s0 = inlined_call_operand.vmem [shape: f32[2,16,4096], index: 0, kind: input, shape index: {}]
  %s1 = inlined_call_operand.vmem [shape: f32[16,16], index: 1, kind: input, shape index: {}]
  %s2 = inlined_call_operand.vmem [shape: f32[16,1], index: 2, kind: input, shape index: {}]
  %s3 = inlined_call_operand.vmem [shape: f32[2,16,4096], index: 3, kind: output, shape index: {}]
  %s4 = sld [smem:[#allocation0]]
  $region45: #{discriminator_forward.2} parent=0
    _
  %s6 = ssub.s32 1, %s4
  %s7 = scalar_select 0, %s6, %s4
  loop: start=0, step=1, limit=4
  $region2: #{discriminator_forward.2} parent=0 // loop_pre_header
    _
  $region3: #{discriminator_forward.2} parent=0 // loop_header
    %s9 = sphi 0, %s13
    %p10 = scmp.ge.s32.totalorder %s9, 4
    %s19 = sphi 0, %s21
    %s22 = sphi 0, %s19
    %s23 = sphi 0, %s22
    %s39 = sphi 0, %s23
    %s43 = sphi 0, %s43
    %s45 = sphi 0, %s43
    %s46 = sphi 0, %s45
    %s60 = sphi 0, %s46
    %s64 = sphi 0, %s64
    %s66 = sphi 0, %s64
    %s67 = sphi 0, %s66
    %s81 = sphi 0, %s67
    %s87 = sphi 0, %s89
    %s90 = sphi 0, %s87
    %s91 = sphi 0, %s90
    %s107 = sphi 0, %s91
  $region4: #{discriminator_forward.2} parent=0 // loop_header_branch
    %12 = sbr.rel (%p10) target = $region8
  $region5: #{discriminator_forward.2} parent=0 // loop_body
    %s14 = ssub.s32 %s9, 1
    %s15 = ssub.s32 %s9, 2
    %s16 = sadd.s32 %s9, 1
    %s17 = ssub.s32 %s9, %s16
    %p18 = scmp.eq.s32.totalorder %s17, 0
    %s20 = sadd.s32 %s19, 1
    %s21 = scalar_select %p18, %s19, %s20
    %p24 = pneg %p18
    %p25 = scmp.eq.s32.totalorder %s9, 1
    %p26 = por %p24, %p25
    %p27 = scmp.ne.s32.totalorder %s19, %s22
    %p28 = scmp.eq.s32.totalorder %s9, 0
    %p29 = por %p27, %p28
    %p30 = scmp.ne.s32.totalorder %s19, %s22
    %p31 = scmp.eq.s32.totalorder %s14, 1
    %p32 = por %p30, %p31
    %p33 = scmp.ne.s32.totalorder %s22, %s23
    %p34 = scmp.eq.s32.totalorder %s14, 0
    %p35 = por %p33, %p34
    %p36 = scmp.ne.s32.totalorder %s22, %s23
    %p37 = scmp.eq.s32.totalorder %s15, 1
    %p38 = por %p36, %p37
    %p40 = scmp.ne.s32.totalorder %s23, %s39
    %p41 = scmp.eq.s32.totalorder %s15, 0
    %p42 = por %p40, %p41
    %s44 = sadd.s32 %s43, 1
    %p47 = scmp.eq.s32.totalorder %s9, 1
    %p48 = scmp.ne.s32.totalorder %s43, %s45
    %p49 = scmp.eq.s32.totalorder %s9, 0
    %p50 = por %p48, %p49
    %p51 = scmp.ne.s32.totalorder %s43, %s45
    %p52 = scmp.eq.s32.totalorder %s14, 1
    %p53 = por %p51, %p52
    %p54 = scmp.ne.s32.totalorder %s45, %s46
    %p55 = scmp.eq.s32.totalorder %s14, 0
    %p56 = por %p54, %p55
    %p57 = scmp.ne.s32.totalorder %s45, %s46
    %p58 = scmp.eq.s32.totalorder %s15, 1
    %p59 = por %p57, %p58
    %p61 = scmp.ne.s32.totalorder %s46, %s60
    %p62 = scmp.eq.s32.totalorder %s15, 0
    %p63 = por %p61, %p62
    %s65 = sadd.s32 %s64, 1
    %p68 = scmp.eq.s32.totalorder %s9, 1
    %p69 = scmp.ne.s32.totalorder %s64, %s66
    %p70 = scmp.eq.s32.totalorder %s9, 0
    %p71 = por %p69, %p70
    %p72 = scmp.ne.s32.totalorder %s64, %s66
    %p73 = scmp.eq.s32.totalorder %s14, 1
    %p74 = por %p72, %p73
    %p75 = scmp.ne.s32.totalorder %s66, %s67
    %p76 = scmp.eq.s32.totalorder %s14, 0
    %p77 = por %p75, %p76
    %p78 = scmp.ne.s32.totalorder %s66, %s67
    %p79 = scmp.eq.s32.totalorder %s15, 1
    %p80 = por %p78, %p79
    %p82 = scmp.ne.s32.totalorder %s67, %s81
    %p83 = scmp.eq.s32.totalorder %s15, 0
    %p84 = por %p82, %p83
    %s85 = ssub.s32 %s9, %s16
    %p86 = scmp.eq.s32.totalorder %s85, 0
    %s88 = sadd.s32 %s87, 1
    %s89 = scalar_select %p86, %s87, %s88
    %p92 = pneg %p86
    %p93 = scmp.eq.s32.totalorder %s9, 1
    %p94 = por %p92, %p93
    %p95 = scmp.ne.s32.totalorder %s87, %s90
    %p96 = scmp.eq.s32.totalorder %s9, 0
    %p97 = por %p95, %p96
    %p98 = scmp.ne.s32.totalorder %s87, %s90
    %p99 = scmp.eq.s32.totalorder %s14, 1
    %p100 = por %p98, %p99
    %p101 = scmp.ne.s32.totalorder %s90, %s91
    %p102 = scmp.eq.s32.totalorder %s14, 0
    %p103 = por %p101, %p102
    %p104 = scmp.ne.s32.totalorder %s90, %s91
    %p105 = scmp.eq.s32.totalorder %s15, 1
    %p106 = por %p104, %p105
    %p108 = scmp.ne.s32.totalorder %s91, %s107
    %p109 = scmp.eq.s32.totalorder %s15, 0
    %p110 = por %p108, %p109
    %p111 = scmp.le.s32.totalorder 1, %s9
    %p112 = scmp.lt.s32.totalorder %s9, 3
    %p113 = pnand %p111, %p112
    %p114 = pneg %p113
    // Predicated region
    $region9: #{discriminator_forward.2} parent=5 // pred_check
      _
    $region10: #{discriminator_forward.2} parent=5 // pred_check_branch
      %116 = sbr.rel (%p113) target = $region12
    $region11: #{discriminator_forward.2} parent=5 // pred_region
      %s117 = ssub.s32 %s9, 1
      // Predicated region
      $region13: #{discriminator_forward.2} parent=11 // pred_check
        %p118 = pneg %p56
      $region14: #{discriminator_forward.2} parent=11 // pred_check_branch
        %120 = sbr.rel (%p118) target = $region16
      $region15: #{discriminator_forward.2} parent=11 // pred_region
        _
      $region16: #{discriminator_forward.2} parent=11 // pred_fallthru
        _
      // Predicated region
      $region17: #{discriminator_forward.2} parent=11 // pred_check
        %p121 = pneg %p77
      $region18: #{discriminator_forward.2} parent=11 // pred_check_branch
        %123 = sbr.rel (%p121) target = $region20
      $region19: #{discriminator_forward.2} parent=11 // pred_region
        _
      $region20: #{discriminator_forward.2} parent=11 // pred_fallthru
        _
    $region12: #{discriminator_forward.2} parent=5 // pred_fallthru
      _
    %p124 = scmp.lt.s32.totalorder %s9, 2
    // Predicated region
    $region21: #{discriminator_forward.2} parent=5 // pred_check
      %p125 = pneg %p124
    $region22: #{discriminator_forward.2} parent=5 // pred_check_branch
      %127 = sbr.rel (%p125) target = $region24
    $region23: #{discriminator_forward.2} parent=5 // pred_region
      // Predicated region
      $region25: #{discriminator_forward.2} parent=23 // pred_check
        %p128 = pneg %p29
      $region26: #{discriminator_forward.2} parent=23 // pred_check_branch
        %130 = sbr.rel (%p128) target = $region28
      $region27: #{discriminator_forward.2} parent=23 // pred_region
        %p131 = scmp.lt.s32.totalorder %s9, 1
        %s132 = scalar_select %p131, %s9, 1
        %s133 = smul.addr %s132, 64
        %s134 = smul.addr %s133, 8
        %s135 = scalar_lea.vmem %s0, %s134
      $region28: #{discriminator_forward.2} parent=23 // pred_fallthru
        _
    $region24: #{discriminator_forward.2} parent=5 // pred_fallthru
      _
    %p136 = scmp.le.s32.totalorder 1, %s9
    %p137 = scmp.lt.s32.totalorder %s9, 3
    %p138 = pnand %p136, %p137
    %p139 = pneg %p138
    // Predicated region
    $region29: #{discriminator_forward.2} parent=5 // pred_check
      _
    $region30: #{discriminator_forward.2} parent=5 // pred_check_branch
      %141 = sbr.rel (%p138) target = $region32
    $region31: #{discriminator_forward.2} parent=5 // pred_region
      %s142 = ssub.s32 %s9, 1
      %p143 = scmp.lt.s32.totalorder %s14, 1
      %s144 = scalar_select %p143, %s14, 1
      %s145 = smul.addr %s144, 64
      %s146 = smul.addr %s145, 8
      %s147 = scalar_lea.vmem %s0, %s146
      %p148 = pneg %p35
      %p149 = pneg %p32
      %p150 = pneg %p56
      %p151 = pneg %p53
      %p152 = pneg %p77
      %p153 = pneg %p74
      %p154 = pneg %p103
      %p155 = pneg %p100
      %p156 = scmp.lt.s32.totalorder %s14, 1
      %s157 = scalar_select %p156, %s14, 1
      %s158 = smul.addr %s157, 64
      %s159 = smul.addr %s158, 8
      %s160 = scalar_lea.vmem %s3, %s159
      %p161 = scmp.lt.s32.totalorder %s14, 1
      %s162 = scalar_select %p161, %s14, 1
      %s163 = smul.addr %s162, 64
      %s164 = smul.addr %s163, 8
      %s165 = scalar_lea.vmem %s0, %s164
      %p166 = scmp.lt.s32.totalorder %s14, 1
      %s167 = scalar_select %p166, %s14, 1
      %s168 = smul.addr %s167, 64
      %s169 = smul.addr %s168, 8
      %s170 = scalar_lea.vmem %s3, %s169
      %v171 = vld [vmem:[%s1] sm:$0xff]
      %v172 = vld [vmem:[%s1 + $0x8] sm:$0xff]
      %v173 = vld [vmem:[%s165] sm:$0xff]
      %v174 = vld [vmem:[%s165 + $0x8] sm:$0xff]
      %v175 = vld [vmem:[%s165 + $0x10] sm:$0xff]
      %v176 = vld [vmem:[%s165 + $0x18] sm:$0xff]
      %v177 = vld [vmem:[%s165 + $0x20] sm:$0xff]
      %v178 = vld [vmem:[%s165 + $0x28] sm:$0xff]
      %v179 = vld [vmem:[%s165 + $0x30] sm:$0xff]
      %v180 = vld [vmem:[%s165 + $0x38] sm:$0xff]
      %v181 = vld [vmem:[%s165 + $0x40] sm:$0xff]
      %v182 = vld [vmem:[%s165 + $0x48] sm:$0xff]
      %v183 = vld [vmem:[%s165 + $0x50] sm:$0xff]
      %v184 = vld [vmem:[%s165 + $0x58] sm:$0xff]
      %v185 = vld [vmem:[%s165 + $0x60] sm:$0xff]
      %v186 = vld [vmem:[%s165 + $0x68] sm:$0xff]
      %v187 = vld [vmem:[%s165 + $0x70] sm:$0xff]
      %v188 = vld [vmem:[%s165 + $0x78] sm:$0xff]
      %v189 = vld [vmem:[%s165 + $0x80] sm:$0xff]
      %v190 = vld [vmem:[%s165 + $0x88] sm:$0xff]
      %v191 = vld [vmem:[%s165 + $0x90] sm:$0xff]
      %v192 = vld [vmem:[%s165 + $0x98] sm:$0xff]
      %v193 = vld [vmem:[%s165 + $0xa0] sm:$0xff]
      %v194 = vld [vmem:[%s165 + $0xa8] sm:$0xff]
      %v195 = vld [vmem:[%s165 + $0xb0] sm:$0xff]
      %v196 = vld [vmem:[%s165 + $0xb8] sm:$0xff]
      %v197 = vld [vmem:[%s165 + $0xc0] sm:$0xff]
      %v198 = vld [vmem:[%s165 + $0xc8] sm:$0xff]
      %v199 = vld [vmem:[%s165 + $0xd0] sm:$0xff]
      %v200 = vld [vmem:[%s165 + $0xd8] sm:$0xff]
      %v201 = vld [vmem:[%s165 + $0xe0] sm:$0xff]
      %v202 = vld [vmem:[%s165 + $0xe8] sm:$0xff]
      %v203 = vld [vmem:[%s165 + $0xf0] sm:$0xff]
      %v204 = vld [vmem:[%s165 + $0xf8] sm:$0xff]
      %v205 = vld [vmem:[%s165 + $0x100] sm:$0xff]
      %v206 = vld [vmem:[%s165 + $0x108] sm:$0xff]
      %v207 = vld [vmem:[%s165 + $0x110] sm:$0xff]
      %v208 = vld [vmem:[%s165 + $0x118] sm:$0xff]
      %v209 = vld [vmem:[%s165 + $0x120] sm:$0xff]
      %v210 = vld [vmem:[%s165 + $0x128] sm:$0xff]
      %v211 = vld [vmem:[%s165 + $0x130] sm:$0xff]
      %v212 = vld [vmem:[%s165 + $0x138] sm:$0xff]
      %v213 = vld [vmem:[%s165 + $0x140] sm:$0xff]
      %v214 = vld [vmem:[%s165 + $0x148] sm:$0xff]
      %v215 = vld [vmem:[%s165 + $0x150] sm:$0xff]
      %v216 = vld [vmem:[%s165 + $0x158] sm:$0xff]
      %v217 = vld [vmem:[%s165 + $0x160] sm:$0xff]
      %v218 = vld [vmem:[%s165 + $0x168] sm:$0xff]
      %v219 = vld [vmem:[%s165 + $0x170] sm:$0xff]
      %v220 = vld [vmem:[%s165 + $0x178] sm:$0xff]
      %v221 = vld [vmem:[%s165 + $0x180] sm:$0xff]
      %v222 = vld [vmem:[%s165 + $0x188] sm:$0xff]
      %v223 = vld [vmem:[%s165 + $0x190] sm:$0xff]
      %v224 = vld [vmem:[%s165 + $0x198] sm:$0xff]
      %v225 = vld [vmem:[%s165 + $0x1a0] sm:$0xff]
      %v226 = vld [vmem:[%s165 + $0x1a8] sm:$0xff]
      %v227 = vld [vmem:[%s165 + $0x1b0] sm:$0xff]
      %v228 = vld [vmem:[%s165 + $0x1b8] sm:$0xff]
      %v229 = vld [vmem:[%s165 + $0x1c0] sm:$0xff]
      %v230 = vld [vmem:[%s165 + $0x1c8] sm:$0xff]
      %v231 = vld [vmem:[%s165 + $0x1d0] sm:$0xff]
      %v232 = vld [vmem:[%s165 + $0x1d8] sm:$0xff]
      %v233 = vld [vmem:[%s165 + $0x1e0] sm:$0xff]
      %v234 = vld [vmem:[%s165 + $0x1e8] sm:$0xff]
      %v235 = vld [vmem:[%s165 + $0x1f0] sm:$0xff]
      %v236 = vld [vmem:[%s165 + $0x1f8] sm:$0xff]
      %v237 = vld [vmem:[%s2] sm:$0xff]
      %v238 = vld [vmem:[%s2 + $0x8] sm:$0xff]
      %240 = vset.pattern.permute.xlu0 0
      %241 = vperm.xlu0 %240, %v237
      %v242 = vpop.permute.xlu0 %241
      %245 = vset.pattern.permute.xlu0 0
      %246 = vperm.xlu0 %245, %v238
      %v247 = vpop.permute.xlu0 %246
      %vm249 = vcmask 130048
      %v251 = vsel %vm249, %v171, 0
      %v254 = vsel %vm249, %v172, 0
      %256 = vmatprep.subr.mxu0 0.0
      %257 = vmatpush1.msra.mxu0 0.0
      %258 = vmatprep.subr.mxu0 0.0
      %259 = vmatpush1.msra.mxu0 0.0
      %260 = vmatprep.subr.mxu0 0.0
      %261 = vmatpush1.msra.mxu0 0.0
      %262 = vmatprep.subr.mxu0 0.0
      %263 = vmatpush1.msra.mxu0 0.0
      %264 = vmatprep.subr.mxu0 0.0
      %265 = vmatpush1.msra.mxu0 0.0
      %266 = vmatprep.subr.mxu0 0.0
      %267 = vmatpush1.msra.mxu0 0.0
      %268 = vmatprep.subr.mxu0 0.0
      %269 = vmatpush1.msra.mxu0 0.0
      %270 = vmatprep.subr.mxu0 0.0
      %271 = vmatpush1.msra.mxu0 0.0
      %272 = vmatprep.subr.mxu0 0.0
      %273 = vmatpush1.msra.mxu0 0.0
      %274 = vmatprep.subr.mxu0 0.0
      %275 = vmatpush1.msra.mxu0 0.0
      %276 = vmatprep.subr.mxu0 0.0
      %277 = vmatpush1.msra.mxu0 0.0
      %278 = vmatprep.subr.mxu0 0.0
      %279 = vmatpush1.msra.mxu0 0.0
      %280 = vmatprep.subr.mxu0 0.0
      %281 = vmatpush1.msra.mxu0 0.0
      %282 = vmatprep.subr.mxu0 0.0
      %283 = vmatpush1.msra.mxu0 0.0
      %284 = vmatprep.subr.mxu0 %v206
      %285 = vmatpush1.msra.mxu0 %v205
      %286 = vmatprep.subr.mxu0 %v174
      %287 = vmatpush1.msra.mxu0 %v173
      %288 = vmatprep.subr.mxu0 0.0
      %289 = vmatpush2.msra.mxu0 0.0
      %290 = vmatprep.subr.mxu0 0.0
      %291 = vmatpush2.msra.mxu0 0.0
      %292 = vmatprep.subr.mxu0 0.0
      %293 = vmatpush2.msra.mxu0 0.0
      %294 = vmatprep.subr.mxu0 0.0
      %295 = vmatpush2.msra.mxu0 0.0
      %296 = vmatprep.subr.mxu0 0.0
      %297 = vmatpush2.msra.mxu0 0.0
      %298 = vmatprep.subr.mxu0 0.0
      %299 = vmatpush2.msra.mxu0 0.0
      %300 = vmatprep.subr.mxu0 0.0
      %301 = vmatpush2.msra.mxu0 0.0
      %302 = vmatprep.subr.mxu0 0.0
      %303 = vmatpush2.msra.mxu0 0.0
      %304 = vmatprep.subr.mxu0 0.0
      %305 = vmatpush2.msra.mxu0 0.0
      %306 = vmatprep.subr.mxu0 0.0
      %307 = vmatpush2.msra.mxu0 0.0
      %308 = vmatprep.subr.mxu0 0.0
      %309 = vmatpush2.msra.mxu0 0.0
      %310 = vmatprep.subr.mxu0 0.0
      %311 = vmatpush2.msra.mxu0 0.0
      %312 = vmatprep.subr.mxu0 0.0
      %313 = vmatpush2.msra.mxu0 0.0
      %314 = vmatprep.subr.mxu0 0.0
      %315 = vmatpush2.msra.mxu0 0.0
      %316 = vmatprep.subr.mxu0 0.0
      %317 = vmatpush2.msra.mxu0 0.0
      %318 = vmatprep.subr.mxu0 0.0
      %319 = vmatpush2.msra.mxu0 0.0
      %320 = vmatprep.mubr.f32.mxu0 0.0
      %321 = vmatmul.mubr.f32.gmra.mxu0 %v251
      %v322 = vpop.f32.mrf.mxu0
      %v323 = vadd.f32 %v242, %v322
      %v324 = vpop.f32.mrf.mxu0
      %v325 = vadd.f32 %v242, %v324
      %326 = vmatprep.mubr.f32.mxu0 0.0
      %327 = vmatmul.mubr.f32.gmra.mxu0 %v254
      %v328 = vpop.f32.mrf.mxu0
      %v329 = vadd.f32 %v247, %v328
      %v330 = vpop.f32.mrf.mxu0
      %v331 = vadd.f32 %v247, %v330
      %332 = vdwg.mxu0
      %333 = vmatprep.subr.mxu0 0.0
      %334 = vmatpush1.msra.mxu0 0.0
      %335 = vmatprep.subr.mxu0 0.0
      %336 = vmatpush1.msra.mxu0 0.0
      %337 = vmatprep.subr.mxu0 0.0
      %338 = vmatpush1.msra.mxu0 0.0
      %339 = vmatprep.subr.mxu0 0.0
      %340 = vmatpush1.msra.mxu0 0.0
      %341 = vmatprep.subr.mxu0 0.0
      %342 = vmatpush1.msra.mxu0 0.0
      %343 = vmatprep.subr.mxu0 0.0
      %344 = vmatpush1.msra.mxu0 0.0
      %345 = vmatprep.subr.mxu0 0.0
      %346 = vmatpush1.msra.mxu0 0.0
      %347 = vmatprep.subr.mxu0 0.0
      %348 = vmatpush1.msra.mxu0 0.0
      %349 = vmatprep.subr.mxu0 0.0
      %350 = vmatpush1.msra.mxu0 0.0
      %351 = vmatprep.subr.mxu0 0.0
      %352 = vmatpush1.msra.mxu0 0.0
      %353 = vmatprep.subr.mxu0 0.0
      %354 = vmatpush1.msra.mxu0 0.0
      %355 = vmatprep.subr.mxu0 0.0
      %356 = vmatpush1.msra.mxu0 0.0
      %357 = vmatprep.subr.mxu0 0.0
      %358 = vmatpush1.msra.mxu0 0.0
      %359 = vmatprep.subr.mxu0 0.0
      %360 = vmatpush1.msra.mxu0 0.0
      %361 = vmatprep.subr.mxu0 %v208
      %362 = vmatpush1.msra.mxu0 %v207
      %363 = vmatprep.subr.mxu0 %v176
      %364 = vmatpush1.msra.mxu0 %v175
      %365 = vmatprep.subr.mxu0 0.0
      %366 = vmatpush2.msra.mxu0 0.0
      %367 = vmatprep.subr.mxu0 0.0
      %368 = vmatpush2.msra.mxu0 0.0
      %369 = vmatprep.subr.mxu0 0.0
      %370 = vmatpush2.msra.mxu0 0.0
      %371 = vmatprep.subr.mxu0 0.0
      %372 = vmatpush2.msra.mxu0 0.0
      %373 = vmatprep.subr.mxu0 0.0
      %374 = vmatpush2.msra.mxu0 0.0
      %375 = vmatprep.subr.mxu0 0.0
      %376 = vmatpush2.msra.mxu0 0.0
      %377 = vmatprep.subr.mxu0 0.0
      %378 = vmatpush2.msra.mxu0 0.0
      %379 = vmatprep.subr.mxu0 0.0
      %380 = vmatpush2.msra.mxu0 0.0
      %381 = vmatprep.subr.mxu0 0.0
      %382 = vmatpush2.msra.mxu0 0.0
      %383 = vmatprep.subr.mxu0 0.0
      %384 = vmatpush2.msra.mxu0 0.0
      %385 = vmatprep.subr.mxu0 0.0
      %386 = vmatpush2.msra.mxu0 0.0
      %387 = vmatprep.subr.mxu0 0.0
      %388 = vmatpush2.msra.mxu0 0.0
      %389 = vmatprep.subr.mxu0 0.0
      %390 = vmatpush2.msra.mxu0 0.0
      %391 = vmatprep.subr.mxu0 0.0
      %392 = vmatpush2.msra.mxu0 0.0
      %393 = vmatprep.subr.mxu0 0.0
      %394 = vmatpush2.msra.mxu0 0.0
      %395 = vmatprep.subr.mxu0 0.0
      %396 = vmatpush2.msra.mxu0 0.0
      %397 = vmatprep.mubr.f32.mxu0 0.0
      %398 = vmatmul.mubr.f32.gmra.mxu0 %v251
      %v399 = vpop.f32.mrf.mxu0
      %v400 = vadd.f32 %v242, %v399
      %v401 = vpop.f32.mrf.mxu0
      %v402 = vadd.f32 %v242, %v401
      %403 = vmatprep.mubr.f32.mxu0 0.0
      %404 = vmatmul.mubr.f32.gmra.mxu0 %v254
      %v405 = vpop.f32.mrf.mxu0
      %v406 = vadd.f32 %v247, %v405
      %v407 = vpop.f32.mrf.mxu0
      %v408 = vadd.f32 %v247, %v407
      %409 = vdwg.mxu0
      %410 = vmatprep.subr.mxu0 0.0
      %411 = vmatpush1.msra.mxu0 0.0
      %412 = vmatprep.subr.mxu0 0.0
      %413 = vmatpush1.msra.mxu0 0.0
      %414 = vmatprep.subr.mxu0 0.0
      %415 = vmatpush1.msra.mxu0 0.0
      %416 = vmatprep.subr.mxu0 0.0
      %417 = vmatpush1.msra.mxu0 0.0
      %418 = vmatprep.subr.mxu0 0.0
      %419 = vmatpush1.msra.mxu0 0.0
      %420 = vmatprep.subr.mxu0 0.0
      %421 = vmatpush1.msra.mxu0 0.0
      %422 = vmatprep.subr.mxu0 0.0
      %423 = vmatpush1.msra.mxu0 0.0
      %424 = vmatprep.subr.mxu0 0.0
      %425 = vmatpush1.msra.mxu0 0.0
      %426 = vmatprep.subr.mxu0 0.0
      %427 = vmatpush1.msra.mxu0 0.0
      %428 = vmatprep.subr.mxu0 0.0
      %429 = vmatpush1.msra.mxu0 0.0
      %430 = vmatprep.subr.mxu0 0.0
      %431 = vmatpush1.msra.mxu0 0.0
      %432 = vmatprep.subr.mxu0 0.0
      %433 = vmatpush1.msra.mxu0 0.0
      %434 = vmatprep.subr.mxu0 0.0
      %435 = vmatpush1.msra.mxu0 0.0
      %436 = vmatprep.subr.mxu0 0.0
      %437 = vmatpush1.msra.mxu0 0.0
      %438 = vmatprep.subr.mxu0 %v210
      %439 = vmatpush1.msra.mxu0 %v209
      %440 = vmatprep.subr.mxu0 %v178
      %441 = vmatpush1.msra.mxu0 %v177
      %442 = vmatprep.subr.mxu0 0.0
      %443 = vmatpush2.msra.mxu0 0.0
      %444 = vmatprep.subr.mxu0 0.0
      %445 = vmatpush2.msra.mxu0 0.0
      %446 = vmatprep.subr.mxu0 0.0
      %447 = vmatpush2.msra.mxu0 0.0
      %448 = vmatprep.subr.mxu0 0.0
      %449 = vmatpush2.msra.mxu0 0.0
      %450 = vmatprep.subr.mxu0 0.0
      %451 = vmatpush2.msra.mxu0 0.0
      %452 = vmatprep.subr.mxu0 0.0
      %453 = vmatpush2.msra.mxu0 0.0
      %454 = vmatprep.subr.mxu0 0.0
      %455 = vmatpush2.msra.mxu0 0.0
      %456 = vmatprep.subr.mxu0 0.0
      %457 = vmatpush2.msra.mxu0 0.0
      %458 = vmatprep.subr.mxu0 0.0
      %459 = vmatpush2.msra.mxu0 0.0
      %460 = vmatprep.subr.mxu0 0.0
      %461 = vmatpush2.msra.mxu0 0.0
      %462 = vmatprep.subr.mxu0 0.0
      %463 = vmatpush2.msra.mxu0 0.0
      %464 = vmatprep.subr.mxu0 0.0
      %465 = vmatpush2.msra.mxu0 0.0
      %466 = vmatprep.subr.mxu0 0.0
      %467 = vmatpush2.msra.mxu0 0.0
      %468 = vmatprep.subr.mxu0 0.0
      %469 = vmatpush2.msra.mxu0 0.0
      %470 = vmatprep.subr.mxu0 0.0
      %471 = vmatpush2.msra.mxu0 0.0
      %472 = vmatprep.subr.mxu0 0.0
      %473 = vmatpush2.msra.mxu0 0.0
      %474 = vmatprep.mubr.f32.mxu0 0.0
      %475 = vmatmul.mubr.f32.gmra.mxu0 %v251
      %v476 = vpop.f32.mrf.mxu0
      %v477 = vadd.f32 %v242, %v476
      %v478 = vpop.f32.mrf.mxu0
      %v479 = vadd.f32 %v242, %v478
      %480 = vmatprep.mubr.f32.mxu0 0.0
      %481 = vmatmul.mubr.f32.gmra.mxu0 %v254
      %v482 = vpop.f32.mrf.mxu0
      %v483 = vadd.f32 %v247, %v482
      %v484 = vpop.f32.mrf.mxu0
      %v485 = vadd.f32 %v247, %v484
      %486 = vdwg.mxu0
      %487 = vmatprep.subr.mxu0 0.0
      %488 = vmatpush1.msra.mxu0 0.0
      %489 = vmatprep.subr.mxu0 0.0
      %490 = vmatpush1.msra.mxu0 0.0
      %491 = vmatprep.subr.mxu0 0.0
      %492 = vmatpush1.msra.mxu0 0.0
      %493 = vmatprep.subr.mxu0 0.0
      %494 = vmatpush1.msra.mxu0 0.0
      %495 = vmatprep.subr.mxu0 0.0
      %496 = vmatpush1.msra.mxu0 0.0
      %497 = vmatprep.subr.mxu0 0.0
      %498 = vmatpush1.msra.mxu0 0.0
      %499 = vmatprep.subr.mxu0 0.0
      %500 = vmatpush1.msra.mxu0 0.0
      %501 = vmatprep.subr.mxu0 0.0
      %502 = vmatpush1.msra.mxu0 0.0
      %503 = vmatprep.subr.mxu0 0.0
      %504 = vmatpush1.msra.mxu0 0.0
      %505 = vmatprep.subr.mxu0 0.0
      %506 = vmatpush1.msra.mxu0 0.0
      %507 = vmatprep.subr.mxu0 0.0
      %508 = vmatpush1.msra.mxu0 0.0
      %509 = vmatprep.subr.mxu0 0.0
      %510 = vmatpush1.msra.mxu0 0.0
      %511 = vmatprep.subr.mxu0 0.0
      %512 = vmatpush1.msra.mxu0 0.0
      %513 = vmatprep.subr.mxu0 0.0
      %514 = vmatpush1.msra.mxu0 0.0
      %515 = vmatprep.subr.mxu0 %v212
      %516 = vmatpush1.msra.mxu0 %v211
      %517 = vmatprep.subr.mxu0 %v180
      %518 = vmatpush1.msra.mxu0 %v179
      %519 = vmatprep.subr.mxu0 0.0
      %520 = vmatpush2.msra.mxu0 0.0
      %521 = vmatprep.subr.mxu0 0.0
      %522 = vmatpush2.msra.mxu0 0.0
      %523 = vmatprep.subr.mxu0 0.0
      %524 = vmatpush2.msra.mxu0 0.0
      %525 = vmatprep.subr.mxu0 0.0
      %526 = vmatpush2.msra.mxu0 0.0
      %527 = vmatprep.subr.mxu0 0.0
      %528 = vmatpush2.msra.mxu0 0.0
      %529 = vmatprep.subr.mxu0 0.0
      %530 = vmatpush2.msra.mxu0 0.0
      %531 = vmatprep.subr.mxu0 0.0
      %532 = vmatpush2.msra.mxu0 0.0
      %533 = vmatprep.subr.mxu0 0.0
      %534 = vmatpush2.msra.mxu0 0.0
      %535 = vmatprep.subr.mxu0 0.0
      %536 = vmatpush2.msra.mxu0 0.0
      %537 = vmatprep.subr.mxu0 0.0
      %538 = vmatpush2.msra.mxu0 0.0
      %539 = vmatprep.subr.mxu0 0.0
      %540 = vmatpush2.msra.mxu0 0.0
      %541 = vmatprep.subr.mxu0 0.0
      %542 = vmatpush2.msra.mxu0 0.0
      %543 = vmatprep.subr.mxu0 0.0
      %544 = vmatpush2.msra.mxu0 0.0
      %545 = vmatprep.subr.mxu0 0.0
      %546 = vmatpush2.msra.mxu0 0.0
      %547 = vmatprep.subr.mxu0 0.0
      %548 = vmatpush2.msra.mxu0 0.0
      %549 = vmatprep.subr.mxu0 0.0
      %550 = vmatpush2.msra.mxu0 0.0
      %551 = vmatprep.mubr.f32.mxu0 0.0
      %552 = vmatmul.mubr.f32.gmra.mxu0 %v251
      %v553 = vpop.f32.mrf.mxu0
      %v554 = vadd.f32 %v242, %v553
      %v555 = vpop.f32.mrf.mxu0
      %v556 = vadd.f32 %v242, %v555
      %557 = vmatprep.mubr.f32.mxu0 0.0
      %558 = vmatmul.mubr.f32.gmra.mxu0 %v254
      %v559 = vpop.f32.mrf.mxu0
      %v560 = vadd.f32 %v247, %v559
      %v561 = vpop.f32.mrf.mxu0
      %v562 = vadd.f32 %v247, %v561
      %563 = vdwg.mxu0
      %564 = vmatprep.subr.mxu0 0.0
      %565 = vmatpush1.msra.mxu0 0.0
      %566 = vmatprep.subr.mxu0 0.0
      %567 = vmatpush1.msra.mxu0 0.0
      %568 = vmatprep.subr.mxu0 0.0
      %569 = vmatpush1.msra.mxu0 0.0
      %570 = vmatprep.subr.mxu0 0.0
      %571 = vmatpush1.msra.mxu0 0.0
      %572 = vmatprep.subr.mxu0 0.0
      %573 = vmatpush1.msra.mxu0 0.0
      %574 = vmatprep.subr.mxu0 0.0
      %575 = vmatpush1.msra.mxu0 0.0
      %576 = vmatprep.subr.mxu0 0.0
      %577 = vmatpush1.msra.mxu0 0.0
      %578 = vmatprep.subr.mxu0 0.0
      %579 = vmatpush1.msra.mxu0 0.0
      %580 = vmatprep.subr.mxu0 0.0
      %581 = vmatpush1.msra.mxu0 0.0
      %582 = vmatprep.subr.mxu0 0.0
      %583 = vmatpush1.msra.mxu0 0.0
      %584 = vmatprep.subr.mxu0 0.0
      %585 = vmatpush1.msra.mxu0 0.0
      %586 = vmatprep.subr.mxu0 0.0
      %587 = vmatpush1.msra.mxu0 0.0
      %588 = vmatprep.subr.mxu0 0.0
      %589 = vmatpush1.msra.mxu0 0.0
      %590 = vmatprep.subr.mxu0 0.0
      %591 = vmatpush1.msra.mxu0 0.0
      %592 = vmatprep.subr.mxu0 %v214
      %593 = vmatpush1.msra.mxu0 %v213
      %594 = vmatprep.subr.mxu0 %v182
      %595 = vmatpush1.msra.mxu0 %v181
      %596 = vmatprep.subr.mxu0 0.0
      %597 = vmatpush2.msra.mxu0 0.0
      %598 = vmatprep.subr.mxu0 0.0
      %599 = vmatpush2.msra.mxu0 0.0
      %600 = vmatprep.subr.mxu0 0.0
      %601 = vmatpush2.msra.mxu0 0.0
      %602 = vmatprep.subr.mxu0 0.0
      %603 = vmatpush2.msra.mxu0 0.0
      %604 = vmatprep.subr.mxu0 0.0
      %605 = vmatpush2.msra.mxu0 0.0
      %606 = vmatprep.subr.mxu0 0.0
      %607 = vmatpush2.msra.mxu0 0.0
      %608 = vmatprep.subr.mxu0 0.0
      %609 = vmatpush2.msra.mxu0 0.0
      %610 = vmatprep.subr.mxu0 0.0
      %611 = vmatpush2.msra.mxu0 0.0
      %612 = vmatprep.subr.mxu0 0.0
      %613 = vmatpush2.msra.mxu0 0.0
      %614 = vmatprep.subr.mxu0 0.0
      %615 = vmatpush2.msra.mxu0 0.0
      %616 = vmatprep.subr.mxu0 0.0
      %617 = vmatpush2.msra.mxu0 0.0
      %618 = vmatprep.subr.mxu0 0.0
      %619 = vmatpush2.msra.mxu0 0.0
      %620 = vmatprep.subr.mxu0 0.0
      %621 = vmatpush2.msra.mxu0 0.0
      %622 = vmatprep.subr.mxu0 0.0
      %623 = vmatpush2.msra.mxu0 0.0
      %624 = vmatprep.subr.mxu0 0.0
      %625 = vmatpush2.msra.mxu0 0.0
      %626 = vmatprep.subr.mxu0 0.0
      %627 = vmatpush2.msra.mxu0 0.0
      %628 = vmatprep.mubr.f32.mxu0 0.0
      %629 = vmatmul.mubr.f32.gmra.mxu0 %v251
      %v630 = vpop.f32.mrf.mxu0
      %v631 = vadd.f32 %v242, %v630
      %v632 = vpop.f32.mrf.mxu0
      %v633 = vadd.f32 %v242, %v632
      %634 = vmatprep.mubr.f32.mxu0 0.0
      %635 = vmatmul.mubr.f32.gmra.mxu0 %v254
      %v636 = vpop.f32.mrf.mxu0
      %v637 = vadd.f32 %v247, %v636
      %v638 = vpop.f32.mrf.mxu0
      %v639 = vadd.f32 %v247, %v638
      %640 = vdwg.mxu0
      %641 = vmatprep.subr.mxu0 0.0
      %642 = vmatpush1.msra.mxu0 0.0
      %643 = vmatprep.subr.mxu0 0.0
      %644 = vmatpush1.msra.mxu0 0.0
      %645 = vmatprep.subr.mxu0 0.0
      %646 = vmatpush1.msra.mxu0 0.0
      %647 = vmatprep.subr.mxu0 0.0
      %648 = vmatpush1.msra.mxu0 0.0
      %649 = vmatprep.subr.mxu0 0.0
      %650 = vmatpush1.msra.mxu0 0.0
      %651 = vmatprep.subr.mxu0 0.0
      %652 = vmatpush1.msra.mxu0 0.0
      %653 = vmatprep.subr.mxu0 0.0
      %654 = vmatpush1.msra.mxu0 0.0
      %655 = vmatprep.subr.mxu0 0.0
      %656 = vmatpush1.msra.mxu0 0.0
      %657 = vmatprep.subr.mxu0 0.0
      %658 = vmatpush1.msra.mxu0 0.0
      %659 = vmatprep.subr.mxu0 0.0
      %660 = vmatpush1.msra.mxu0 0.0
      %661 = vmatprep.subr.mxu0 0.0
      %662 = vmatpush1.msra.mxu0 0.0
      %663 = vmatprep.subr.mxu0 0.0
      %664 = vmatpush1.msra.mxu0 0.0
      %665 = vmatprep.subr.mxu0 0.0
      %666 = vmatpush1.msra.mxu0 0.0
      %667 = vmatprep.subr.mxu0 0.0
      %668 = vmatpush1.msra.mxu0 0.0
      %669 = vmatprep.subr.mxu0 %v216
      %670 = vmatpush1.msra.mxu0 %v215
      %671 = vmatprep.subr.mxu0 %v184
      %672 = vmatpush1.msra.mxu0 %v183
      %673 = vmatprep.subr.mxu0 0.0
      %674 = vmatpush2.msra.mxu0 0.0
      %675 = vmatprep.subr.mxu0 0.0
      %676 = vmatpush2.msra.mxu0 0.0
      %677 = vmatprep.subr.mxu0 0.0
      %678 = vmatpush2.msra.mxu0 0.0
      %679 = vmatprep.subr.mxu0 0.0
      %680 = vmatpush2.msra.mxu0 0.0
      %681 = vmatprep.subr.mxu0 0.0
      %682 = vmatpush2.msra.mxu0 0.0
      %683 = vmatprep.subr.mxu0 0.0
      %684 = vmatpush2.msra.mxu0 0.0
      %685 = vmatprep.subr.mxu0 0.0
      %686 = vmatpush2.msra.mxu0 0.0
      %687 = vmatprep.subr.mxu0 0.0
      %688 = vmatpush2.msra.mxu0 0.0
      %689 = vmatprep.subr.mxu0 0.0
      %690 = vmatpush2.msra.mxu0 0.0
      %691 = vmatprep.subr.mxu0 0.0
      %692 = vmatpush2.msra.mxu0 0.0
      %693 = vmatprep.subr.mxu0 0.0
      %694 = vmatpush2.msra.mxu0 0.0
      %695 = vmatprep.subr.mxu0 0.0
      %696 = vmatpush2.msra.mxu0 0.0
      %697 = vmatprep.subr.mxu0 0.0
      %698 = vmatpush2.msra.mxu0 0.0
      %699 = vmatprep.subr.mxu0 0.0
      %700 = vmatpush2.msra.mxu0 0.0
      %701 = vmatprep.subr.mxu0 0.0
      %702 = vmatpush2.msra.mxu0 0.0
      %703 = vmatprep.subr.mxu0 0.0
      %704 = vmatpush2.msra.mxu0 0.0
      %705 = vmatprep.mubr.f32.mxu0 0.0
      %706 = vmatmul.mubr.f32.gmra.mxu0 %v251
      %v707 = vpop.f32.mrf.mxu0
      %v708 = vadd.f32 %v242, %v707
      %v709 = vpop.f32.mrf.mxu0
      %v710 = vadd.f32 %v242, %v709
      %711 = vmatprep.mubr.f32.mxu0 0.0
      %712 = vmatmul.mubr.f32.gmra.mxu0 %v254
      %v713 = vpop.f32.mrf.mxu0
      %v714 = vadd.f32 %v247, %v713
      %v715 = vpop.f32.mrf.mxu0
      %v716 = vadd.f32 %v247, %v715
      %717 = vdwg.mxu0
      %718 = vmatprep.subr.mxu0 0.0
      %719 = vmatpush1.msra.mxu0 0.0
      %720 = vmatprep.subr.mxu0 0.0
      %721 = vmatpush1.msra.mxu0 0.0
      %722 = vmatprep.subr.mxu0 0.0
      %723 = vmatpush1.msra.mxu0 0.0
      %724 = vmatprep.subr.mxu0 0.0
      %725 = vmatpush1.msra.mxu0 0.0
      %726 = vmatprep.subr.mxu0 0.0
      %727 = vmatpush1.msra.mxu0 0.0
      %728 = vmatprep.subr.mxu0 0.0
      %729 = vmatpush1.msra.mxu0 0.0
      %730 = vmatprep.subr.mxu0 0.0
      %731 = vmatpush1.msra.mxu0 0.0
      %732 = vmatprep.subr.mxu0 0.0
      %733 = vmatpush1.msra.mxu0 0.0
      %734 = vmatprep.subr.mxu0 0.0
      %735 = vmatpush1.msra.mxu0 0.0
      %736 = vmatprep.subr.mxu0 0.0
      %737 = vmatpush1.msra.mxu0 0.0
      %738 = vmatprep.subr.mxu0 0.0
      %739 = vmatpush1.msra.mxu0 0.0
      %740 = vmatprep.subr.mxu0 0.0
      %741 = vmatpush1.msra.mxu0 0.0
      %742 = vmatprep.subr.mxu0 0.0
      %743 = vmatpush1.msra.mxu0 0.0
      %744 = vmatprep.subr.mxu0 0.0
      %745 = vmatpush1.msra.mxu0 0.0
      %746 = vmatprep.subr.mxu0 %v218
      %747 = vmatpush1.msra.mxu0 %v217
      %748 = vmatprep.subr.mxu0 %v186
      %749 = vmatpush1.msra.mxu0 %v185
      %750 = vmatprep.subr.mxu0 0.0
      %751 = vmatpush2.msra.mxu0 0.0
      %752 = vmatprep.subr.mxu0 0.0
      %753 = vmatpush2.msra.mxu0 0.0
      %754 = vmatprep.subr.mxu0 0.0
      %755 = vmatpush2.msra.mxu0 0.0
      %756 = vmatprep.subr.mxu0 0.0
      %757 = vmatpush2.msra.mxu0 0.0
      %758 = vmatprep.subr.mxu0 0.0
      %759 = vmatpush2.msra.mxu0 0.0
      %760 = vmatprep.subr.mxu0 0.0
      %761 = vmatpush2.msra.mxu0 0.0
      %762 = vmatprep.subr.mxu0 0.0
      %763 = vmatpush2.msra.mxu0 0.0
      %764 = vmatprep.subr.mxu0 0.0
      %765 = vmatpush2.msra.mxu0 0.0
      %766 = vmatprep.subr.mxu0 0.0
      %767 = vmatpush2.msra.mxu0 0.0
      %768 = vmatprep.subr.mxu0 0.0
      %769 = vmatpush2.msra.mxu0 0.0
      %770 = vmatprep.subr.mxu0 0.0
      %771 = vmatpush2.msra.mxu0 0.0
      %772 = vmatprep.subr.mxu0 0.0
      %773 = vmatpush2.msra.mxu0 0.0
      %774 = vmatprep.subr.mxu0 0.0
      %775 = vmatpush2.msra.mxu0 0.0
      %776 = vmatprep.subr.mxu0 0.0
      %777 = vmatpush2.msra.mxu0 0.0
      %778 = vmatprep.subr.mxu0 0.0
      %779 = vmatpush2.msra.mxu0 0.0
      %780 = vmatprep.subr.mxu0 0.0
      %781 = vmatpush2.msra.mxu0 0.0
      %782 = vmatprep.mubr.f32.mxu0 0.0
      %783 = vmatmul.mubr.f32.gmra.mxu0 %v251
      %v784 = vpop.f32.mrf.mxu0
      %v785 = vadd.f32 %v242, %v784
      %v786 = vpop.f32.mrf.mxu0
      %v787 = vadd.f32 %v242, %v786
      %788 = vmatprep.mubr.f32.mxu0 0.0
      %789 = vmatmul.mubr.f32.gmra.mxu0 %v254
      %v790 = vpop.f32.mrf.mxu0
      %v791 = vadd.f32 %v247, %v790
      %v792 = vpop.f32.mrf.mxu0
      %v793 = vadd.f32 %v247, %v792
      %794 = vdwg.mxu0
      %795 = vmatprep.subr.mxu0 0.0
      %796 = vmatpush1.msra.mxu0 0.0
      %797 = vmatprep.subr.mxu0 0.0
      %798 = vmatpush1.msra.mxu0 0.0
      %799 = vmatprep.subr.mxu0 0.0
      %800 = vmatpush1.msra.mxu0 0.0
      %801 = vmatprep.subr.mxu0 0.0
      %802 = vmatpush1.msra.mxu0 0.0
      %803 = vmatprep.subr.mxu0 0.0
      %804 = vmatpush1.msra.mxu0 0.0
      %805 = vmatprep.subr.mxu0 0.0
      %806 = vmatpush1.msra.mxu0 0.0
      %807 = vmatprep.subr.mxu0 0.0
      %808 = vmatpush1.msra.mxu0 0.0
      %809 = vmatprep.subr.mxu0 0.0
      %810 = vmatpush1.msra.mxu0 0.0
      %811 = vmatprep.subr.mxu0 0.0
      %812 = vmatpush1.msra.mxu0 0.0
      %813 = vmatprep.subr.mxu0 0.0
      %814 = vmatpush1.msra.mxu0 0.0
      %815 = vmatprep.subr.mxu0 0.0
      %816 = vmatpush1.msra.mxu0 0.0
      %817 = vmatprep.subr.mxu0 0.0
      %818 = vmatpush1.msra.mxu0 0.0
      %819 = vmatprep.subr.mxu0 0.0
      %820 = vmatpush1.msra.mxu0 0.0
      %821 = vmatprep.subr.mxu0 0.0
      %822 = vmatpush1.msra.mxu0 0.0
      %823 = vmatprep.subr.mxu0 %v220
      %824 = vmatpush1.msra.mxu0 %v219
      %825 = vmatprep.subr.mxu0 %v188
      %826 = vmatpush1.msra.mxu0 %v187
      %827 = vmatprep.subr.mxu0 0.0
      %828 = vmatpush2.msra.mxu0 0.0
      %829 = vmatprep.subr.mxu0 0.0
      %830 = vmatpush2.msra.mxu0 0.0
      %831 = vmatprep.subr.mxu0 0.0
      %832 = vmatpush2.msra.mxu0 0.0
      %833 = vmatprep.subr.mxu0 0.0
      %834 = vmatpush2.msra.mxu0 0.0
      %835 = vmatprep.subr.mxu0 0.0
      %836 = vmatpush2.msra.mxu0 0.0
      %837 = vmatprep.subr.mxu0 0.0
      %838 = vmatpush2.msra.mxu0 0.0
      %839 = vmatprep.subr.mxu0 0.0
      %840 = vmatpush2.msra.mxu0 0.0
      %841 = vmatprep.subr.mxu0 0.0
      %842 = vmatpush2.msra.mxu0 0.0
      %843 = vmatprep.subr.mxu0 0.0
      %844 = vmatpush2.msra.mxu0 0.0
      %845 = vmatprep.subr.mxu0 0.0
      %846 = vmatpush2.msra.mxu0 0.0
      %847 = vmatprep.subr.mxu0 0.0
      %848 = vmatpush2.msra.mxu0 0.0
      %849 = vmatprep.subr.mxu0 0.0
      %850 = vmatpush2.msra.mxu0 0.0
      %851 = vmatprep.subr.mxu0 0.0
      %852 = vmatpush2.msra.mxu0 0.0
      %853 = vmatprep.subr.mxu0 0.0
      %854 = vmatpush2.msra.mxu0 0.0
      %855 = vmatprep.subr.mxu0 0.0
      %856 = vmatpush2.msra.mxu0 0.0
      %857 = vmatprep.subr.mxu0 0.0
      %858 = vmatpush2.msra.mxu0 0.0
      %859 = vmatprep.mubr.f32.mxu0 0.0
      %860 = vmatmul.mubr.f32.gmra.mxu0 %v251
      %v861 = vpop.f32.mrf.mxu0
      %v862 = vadd.f32 %v242, %v861
      %v863 = vpop.f32.mrf.mxu0
      %v864 = vadd.f32 %v242, %v863
      %865 = vmatprep.mubr.f32.mxu0 0.0
      %866 = vmatmul.mubr.f32.gmra.mxu0 %v254
      %v867 = vpop.f32.mrf.mxu0
      %v868 = vadd.f32 %v247, %v867
      %v869 = vpop.f32.mrf.mxu0
      %v870 = vadd.f32 %v247, %v869
      %871 = vdwg.mxu0
      %872 = vmatprep.subr.mxu0 0.0
      %873 = vmatpush1.msra.mxu0 0.0
      %874 = vmatprep.subr.mxu0 0.0
      %875 = vmatpush1.msra.mxu0 0.0
      %876 = vmatprep.subr.mxu0 0.0
      %877 = vmatpush1.msra.mxu0 0.0
      %878 = vmatprep.subr.mxu0 0.0
      %879 = vmatpush1.msra.mxu0 0.0
      %880 = vmatprep.subr.mxu0 0.0
      %881 = vmatpush1.msra.mxu0 0.0
      %882 = vmatprep.subr.mxu0 0.0
      %883 = vmatpush1.msra.mxu0 0.0
      %884 = vmatprep.subr.mxu0 0.0
      %885 = vmatpush1.msra.mxu0 0.0
      %886 = vmatprep.subr.mxu0 0.0
      %887 = vmatpush1.msra.mxu0 0.0
      %888 = vmatprep.subr.mxu0 0.0
      %889 = vmatpush1.msra.mxu0 0.0
      %890 = vmatprep.subr.mxu0 0.0
      %891 = vmatpush1.msra.mxu0 0.0
      %892 = vmatprep.subr.mxu0 0.0
      %893 = vmatpush1.msra.mxu0 0.0
      %894 = vmatprep.subr.mxu0 0.0
      %895 = vmatpush1.msra.mxu0 0.0
      %896 = vmatprep.subr.mxu0 0.0
      %897 = vmatpush1.msra.mxu0 0.0
      %898 = vmatprep.subr.mxu0 0.0
      %899 = vmatpush1.msra.mxu0 0.0
      %900 = vmatprep.subr.mxu0 %v222
      %901 = vmatpush1.msra.mxu0 %v221
      %902 = vmatprep.subr.mxu0 %v190
      %903 = vmatpush1.msra.mxu0 %v189
      %904 = vmatprep.subr.mxu0 0.0
      %905 = vmatpush2.msra.mxu0 0.0
      %906 = vmatprep.subr.mxu0 0.0
      %907 = vmatpush2.msra.mxu0 0.0
      %908 = vmatprep.subr.mxu0 0.0
      %909 = vmatpush2.msra.mxu0 0.0
      %910 = vmatprep.subr.mxu0 0.0
      %911 = vmatpush2.msra.mxu0 0.0
      %912 = vmatprep.subr.mxu0 0.0
      %913 = vmatpush2.msra.mxu0 0.0
      %914 = vmatprep.subr.mxu0 0.0
      %915 = vmatpush2.msra.mxu0 0.0
      %916 = vmatprep.subr.mxu0 0.0
      %917 = vmatpush2.msra.mxu0 0.0
      %918 = vmatprep.subr.mxu0 0.0
      %919 = vmatpush2.msra.mxu0 0.0
      %920 = vmatprep.subr.mxu0 0.0
      %921 = vmatpush2.msra.mxu0 0.0
      %922 = vmatprep.subr.mxu0 0.0
      %923 = vmatpush2.msra.mxu0 0.0
      %924 = vmatprep.subr.mxu0 0.0
      %925 = vmatpush2.msra.mxu0 0.0
      %926 = vmatprep.subr.mxu0 0.0
      %927 = vmatpush2.msra.mxu0 0.0
      %928 = vmatprep.subr.mxu0 0.0
      %929 = vmatpush2.msra.mxu0 0.0
      %930 = vmatprep.subr.mxu0 0.0
      %931 = vmatpush2.msra.mxu0 0.0
      %932 = vmatprep.subr.mxu0 0.0
      %933 = vmatpush2.msra.mxu0 0.0
      %934 = vmatprep.subr.mxu0 0.0
      %935 = vmatpush2.msra.mxu0 0.0
      %936 = vmatprep.mubr.f32.mxu0 0.0
      %937 = vmatmul.mubr.f32.gmra.mxu0 %v251
      %v938 = vpop.f32.mrf.mxu0
      %v939 = vadd.f32 %v242, %v938
      %v940 = vpop.f32.mrf.mxu0
      %v941 = vadd.f32 %v242, %v940
      %942 = vmatprep.mubr.f32.mxu0 0.0
      %943 = vmatmul.mubr.f32.gmra.mxu0 %v254
      %v944 = vpop.f32.mrf.mxu0
      %v945 = vadd.f32 %v247, %v944
      %v946 = vpop.f32.mrf.mxu0
      %v947 = vadd.f32 %v247, %v946
      %948 = vdwg.mxu0
      %949 = vmatprep.subr.mxu0 0.0
      %950 = vmatpush1.msra.mxu0 0.0
      %951 = vmatprep.subr.mxu0 0.0
      %952 = vmatpush1.msra.mxu0 0.0
      %953 = vmatprep.subr.mxu0 0.0
      %954 = vmatpush1.msra.mxu0 0.0
      %955 = vmatprep.subr.mxu0 0.0
      %956 = vmatpush1.msra.mxu0 0.0
      %957 = vmatprep.subr.mxu0 0.0
      %958 = vmatpush1.msra.mxu0 0.0
      %959 = vmatprep.subr.mxu0 0.0
      %960 = vmatpush1.msra.mxu0 0.0
      %961 = vmatprep.subr.mxu0 0.0
      %962 = vmatpush1.msra.mxu0 0.0
      %963 = vmatprep.subr.mxu0 0.0
      %964 = vmatpush1.msra.mxu0 0.0
      %965 = vmatprep.subr.mxu0 0.0
      %966 = vmatpush1.msra.mxu0 0.0
      %967 = vmatprep.subr.mxu0 0.0
      %968 = vmatpush1.msra.mxu0 0.0
      %969 = vmatprep.subr.mxu0 0.0
      %970 = vmatpush1.msra.mxu0 0.0
      %971 = vmatprep.subr.mxu0 0.0
      %972 = vmatpush1.msra.mxu0 0.0
      %973 = vmatprep.subr.mxu0 0.0
      %974 = vmatpush1.msra.mxu0 0.0
      %975 = vmatprep.subr.mxu0 0.0
      %976 = vmatpush1.msra.mxu0 0.0
      %977 = vmatprep.subr.mxu0 %v224
      %978 = vmatpush1.msra.mxu0 %v223
      %979 = vmatprep.subr.mxu0 %v192
      %980 = vmatpush1.msra.mxu0 %v191
      %981 = vmatprep.subr.mxu0 0.0
      %982 = vmatpush2.msra.mxu0 0.0
      %983 = vmatprep.subr.mxu0 0.0
      %984 = vmatpush2.msra.mxu0 0.0
      %985 = vmatprep.subr.mxu0 0.0
      %986 = vmatpush2.msra.mxu0 0.0
      %987 = vmatprep.subr.mxu0 0.0
      %988 = vmatpush2.msra.mxu0 0.0
      %989 = vmatprep.subr.mxu0 0.0
      %990 = vmatpush2.msra.mxu0 0.0
      %991 = vmatprep.subr.mxu0 0.0
      %992 = vmatpush2.msra.mxu0 0.0
      %993 = vmatprep.subr.mxu0 0.0
      %994 = vmatpush2.msra.mxu0 0.0
      %995 = vmatprep.subr.mxu0 0.0
      %996 = vmatpush2.msra.mxu0 0.0
      %997 = vmatprep.subr.mxu0 0.0
      %998 = vmatpush2.msra.mxu0 0.0
      %999 = vmatprep.subr.mxu0 0.0
      %1000 = vmatpush2.msra.mxu0 0.0
      %1001 = vmatprep.subr.mxu0 0.0
      %1002 = vmatpush2.msra.mxu0 0.0
      %1003 = vmatprep.subr.mxu0 0.0
      %1004 = vmatpush2.msra.mxu0 0.0
      %1005 = vmatprep.subr.mxu0 0.0
      %1006 = vmatpush2.msra.mxu0 0.0
      %1007 = vmatprep.subr.mxu0 0.0
      %1008 = vmatpush2.msra.mxu0 0.0
      %1009 = vmatprep.subr.mxu0 0.0
      %1010 = vmatpush2.msra.mxu0 0.0
      %1011 = vmatprep.subr.mxu0 0.0
      %1012 = vmatpush2.msra.mxu0 0.0
      %1013 = vmatprep.mubr.f32.mxu0 0.0
      %1014 = vmatmul.mubr.f32.gmra.mxu0 %v251
      %v1015 = vpop.f32.mrf.mxu0
      %v1016 = vadd.f32 %v242, %v1015
      %v1017 = vpop.f32.mrf.mxu0
      %v1018 = vadd.f32 %v242, %v1017
      %1019 = vmatprep.mubr.f32.mxu0 0.0
      %1020 = vmatmul.mubr.f32.gmra.mxu0 %v254
      %v1021 = vpop.f32.mrf.mxu0
      %v1022 = vadd.f32 %v247, %v1021
      %v1023 = vpop.f32.mrf.mxu0
      %v1024 = vadd.f32 %v247, %v1023
      %1025 = vdwg.mxu0
      %1026 = vmatprep.subr.mxu0 0.0
      %1027 = vmatpush1.msra.mxu0 0.0
      %1028 = vmatprep.subr.mxu0 0.0
      %1029 = vmatpush1.msra.mxu0 0.0
      %1030 = vmatprep.subr.mxu0 0.0
      %1031 = vmatpush1.msra.mxu0 0.0
      %1032 = vmatprep.subr.mxu0 0.0
      %1033 = vmatpush1.msra.mxu0 0.0
      %1034 = vmatprep.subr.mxu0 0.0
      %1035 = vmatpush1.msra.mxu0 0.0
      %1036 = vmatprep.subr.mxu0 0.0
      %1037 = vmatpush1.msra.mxu0 0.0
      %1038 = vmatprep.subr.mxu0 0.0
      %1039 = vmatpush1.msra.mxu0 0.0
      %1040 = vmatprep.subr.mxu0 0.0
      %1041 = vmatpush1.msra.mxu0 0.0
      %1042 = vmatprep.subr.mxu0 0.0
      %1043 = vmatpush1.msra.mxu0 0.0
      %1044 = vmatprep.subr.mxu0 0.0
      %1045 = vmatpush1.msra.mxu0 0.0
      %1046 = vmatprep.subr.mxu0 0.0
      %1047 = vmatpush1.msra.mxu0 0.0
      %1048 = vmatprep.subr.mxu0 0.0
      %1049 = vmatpush1.msra.mxu0 0.0
      %1050 = vmatprep.subr.mxu0 0.0
      %1051 = vmatpush1.msra.mxu0 0.0
      %1052 = vmatprep.subr.mxu0 0.0
      %1053 = vmatpush1.msra.mxu0 0.0
      %1054 = vmatprep.subr.mxu0 %v226
      %1055 = vmatpush1.msra.mxu0 %v225
      %1056 = vmatprep.subr.mxu0 %v194
      %1057 = vmatpush1.msra.mxu0 %v193
      %1058 = vmatprep.subr.mxu0 0.0
      %1059 = vmatpush2.msra.mxu0 0.0
      %1060 = vmatprep.subr.mxu0 0.0
      %1061 = vmatpush2.msra.mxu0 0.0
      %1062 = vmatprep.subr.mxu0 0.0
      %1063 = vmatpush2.msra.mxu0 0.0
      %1064 = vmatprep.subr.mxu0 0.0
      %1065 = vmatpush2.msra.mxu0 0.0
      %1066 = vmatprep.subr.mxu0 0.0
      %1067 = vmatpush2.msra.mxu0 0.0
      %1068 = vmatprep.subr.mxu0 0.0
      %1069 = vmatpush2.msra.mxu0 0.0
      %1070 = vmatprep.subr.mxu0 0.0
      %1071 = vmatpush2.msra.mxu0 0.0
      %1072 = vmatprep.subr.mxu0 0.0
      %1073 = vmatpush2.msra.mxu0 0.0
      %1074 = vmatprep.subr.mxu0 0.0
      %1075 = vmatpush2.msra.mxu0 0.0
      %1076 = vmatprep.subr.mxu0 0.0
      %1077 = vmatpush2.msra.mxu0 0.0
      %1078 = vmatprep.subr.mxu0 0.0
      %1079 = vmatpush2.msra.mxu0 0.0
      %1080 = vmatprep.subr.mxu0 0.0
      %1081 = vmatpush2.msra.mxu0 0.0
      %1082 = vmatprep.subr.mxu0 0.0
      %1083 = vmatpush2.msra.mxu0 0.0
      %1084 = vmatprep.subr.mxu0 0.0
      %1085 = vmatpush2.msra.mxu0 0.0
      %1086 = vmatprep.subr.mxu0 0.0
      %1087 = vmatpush2.msra.mxu0 0.0
      %1088 = vmatprep.subr.mxu0 0.0
      %1089 = vmatpush2.msra.mxu0 0.0
      %1090 = vmatprep.mubr.f32.mxu0 0.0
      %1091 = vmatmul.mubr.f32.gmra.mxu0 %v251
      %v1092 = vpop.f32.mrf.mxu0
      %v1093 = vadd.f32 %v242, %v1092
      %v1094 = vpop.f32.mrf.mxu0
      %v1095 = vadd.f32 %v242, %v1094
      %1096 = vmatprep.mubr.f32.mxu0 0.0
      %1097 = vmatmul.mubr.f32.gmra.mxu0 %v254
      %v1098 = vpop.f32.mrf.mxu0
      %v1099 = vadd.f32 %v247, %v1098
      %v1100 = vpop.f32.mrf.mxu0
      %v1101 = vadd.f32 %v247, %v1100
      %1102 = vdwg.mxu0
      %1103 = vmatprep.subr.mxu0 0.0
      %1104 = vmatpush1.msra.mxu0 0.0
      %1105 = vmatprep.subr.mxu0 0.0
      %1106 = vmatpush1.msra.mxu0 0.0
      %1107 = vmatprep.subr.mxu0 0.0
      %1108 = vmatpush1.msra.mxu0 0.0
      %1109 = vmatprep.subr.mxu0 0.0
      %1110 = vmatpush1.msra.mxu0 0.0
      %1111 = vmatprep.subr.mxu0 0.0
      %1112 = vmatpush1.msra.mxu0 0.0
      %1113 = vmatprep.subr.mxu0 0.0
      %1114 = vmatpush1.msra.mxu0 0.0
      %1115 = vmatprep.subr.mxu0 0.0
      %1116 = vmatpush1.msra.mxu0 0.0
      %1117 = vmatprep.subr.mxu0 0.0
      %1118 = vmatpush1.msra.mxu0 0.0
      %1119 = vmatprep.subr.mxu0 0.0
      %1120 = vmatpush1.msra.mxu0 0.0
      %1121 = vmatprep.subr.mxu0 0.0
      %1122 = vmatpush1.msra.mxu0 0.0
      %1123 = vmatprep.subr.mxu0 0.0
      %1124 = vmatpush1.msra.mxu0 0.0
      %1125 = vmatprep.subr.mxu0 0.0
      %1126 = vmatpush1.msra.mxu0 0.0
      %1127 = vmatprep.subr.mxu0 0.0
      %1128 = vmatpush1.msra.mxu0 0.0
      %1129 = vmatprep.subr.mxu0 0.0
      %1130 = vmatpush1.msra.mxu0 0.0
      %1131 = vmatprep.subr.mxu0 %v228
      %1132 = vmatpush1.msra.mxu0 %v227
      %1133 = vmatprep.subr.mxu0 %v196
      %1134 = vmatpush1.msra.mxu0 %v195
      %1135 = vmatprep.subr.mxu0 0.0
      %1136 = vmatpush2.msra.mxu0 0.0
      %1137 = vmatprep.subr.mxu0 0.0
      %1138 = vmatpush2.msra.mxu0 0.0
      %1139 = vmatprep.subr.mxu0 0.0
      %1140 = vmatpush2.msra.mxu0 0.0
      %1141 = vmatprep.subr.mxu0 0.0
      %1142 = vmatpush2.msra.mxu0 0.0
      %1143 = vmatprep.subr.mxu0 0.0
      %1144 = vmatpush2.msra.mxu0 0.0
      %1145 = vmatprep.subr.mxu0 0.0
      %1146 = vmatpush2.msra.mxu0 0.0
      %1147 = vmatprep.subr.mxu0 0.0
      %1148 = vmatpush2.msra.mxu0 0.0
      %1149 = vmatprep.subr.mxu0 0.0
      %1150 = vmatpush2.msra.mxu0 0.0
      %1151 = vmatprep.subr.mxu0 0.0
      %1152 = vmatpush2.msra.mxu0 0.0
      %1153 = vmatprep.subr.mxu0 0.0
      %1154 = vmatpush2.msra.mxu0 0.0
      %1155 = vmatprep.subr.mxu0 0.0
      %1156 = vmatpush2.msra.mxu0 0.0
      %1157 = vmatprep.subr.mxu0 0.0
      %1158 = vmatpush2.msra.mxu0 0.0
      %1159 = vmatprep.subr.mxu0 0.0
      %1160 = vmatpush2.msra.mxu0 0.0
      %1161 = vmatprep.subr.mxu0 0.0
      %1162 = vmatpush2.msra.mxu0 0.0
      %1163 = vmatprep.subr.mxu0 0.0
      %1164 = vmatpush2.msra.mxu0 0.0
      %1165 = vmatprep.subr.mxu0 0.0
      %1166 = vmatpush2.msra.mxu0 0.0
      %1167 = vmatprep.mubr.f32.mxu0 0.0
      %1168 = vmatmul.mubr.f32.gmra.mxu0 %v251
      %v1169 = vpop.f32.mrf.mxu0
      %v1170 = vadd.f32 %v242, %v1169
      %v1171 = vpop.f32.mrf.mxu0
      %v1172 = vadd.f32 %v242, %v1171
      %1173 = vmatprep.mubr.f32.mxu0 0.0
      %1174 = vmatmul.mubr.f32.gmra.mxu0 %v254
      %v1175 = vpop.f32.mrf.mxu0
      %v1176 = vadd.f32 %v247, %v1175
      %v1177 = vpop.f32.mrf.mxu0
      %v1178 = vadd.f32 %v247, %v1177
      %1179 = vdwg.mxu0
      %1180 = vmatprep.subr.mxu0 0.0
      %1181 = vmatpush1.msra.mxu0 0.0
      %1182 = vmatprep.subr.mxu0 0.0
      %1183 = vmatpush1.msra.mxu0 0.0
      %1184 = vmatprep.subr.mxu0 0.0
      %1185 = vmatpush1.msra.mxu0 0.0
      %1186 = vmatprep.subr.mxu0 0.0
      %1187 = vmatpush1.msra.mxu0 0.0
      %1188 = vmatprep.subr.mxu0 0.0
      %1189 = vmatpush1.msra.mxu0 0.0
      %1190 = vmatprep.subr.mxu0 0.0
      %1191 = vmatpush1.msra.mxu0 0.0
      %1192 = vmatprep.subr.mxu0 0.0
      %1193 = vmatpush1.msra.mxu0 0.0
      %1194 = vmatprep.subr.mxu0 0.0
      %1195 = vmatpush1.msra.mxu0 0.0
      %1196 = vmatprep.subr.mxu0 0.0
      %1197 = vmatpush1.msra.mxu0 0.0
      %1198 = vmatprep.subr.mxu0 0.0
      %1199 = vmatpush1.msra.mxu0 0.0
      %1200 = vmatprep.subr.mxu0 0.0
      %1201 = vmatpush1.msra.mxu0 0.0
      %1202 = vmatprep.subr.mxu0 0.0
      %1203 = vmatpush1.msra.mxu0 0.0
      %1204 = vmatprep.subr.mxu0 0.0
      %1205 = vmatpush1.msra.mxu0 0.0
      %1206 = vmatprep.subr.mxu0 0.0
      %1207 = vmatpush1.msra.mxu0 0.0
      %1208 = vmatprep.subr.mxu0 %v230
      %1209 = vmatpush1.msra.mxu0 %v229
      %1210 = vmatprep.subr.mxu0 %v198
      %1211 = vmatpush1.msra.mxu0 %v197
      %1212 = vmatprep.subr.mxu0 0.0
      %1213 = vmatpush2.msra.mxu0 0.0
      %1214 = vmatprep.subr.mxu0 0.0
      %1215 = vmatpush2.msra.mxu0 0.0
      %1216 = vmatprep.subr.mxu0 0.0
      %1217 = vmatpush2.msra.mxu0 0.0
      %1218 = vmatprep.subr.mxu0 0.0
      %1219 = vmatpush2.msra.mxu0 0.0
      %1220 = vmatprep.subr.mxu0 0.0
      %1221 = vmatpush2.msra.mxu0 0.0
      %1222 = vmatprep.subr.mxu0 0.0
      %1223 = vmatpush2.msra.mxu0 0.0
      %1224 = vmatprep.subr.mxu0 0.0
      %1225 = vmatpush2.msra.mxu0 0.0
      %1226 = vmatprep.subr.mxu0 0.0
      %1227 = vmatpush2.msra.mxu0 0.0
      %1228 = vmatprep.subr.mxu0 0.0
      %1229 = vmatpush2.msra.mxu0 0.0
      %1230 = vmatprep.subr.mxu0 0.0
      %1231 = vmatpush2.msra.mxu0 0.0
      %1232 = vmatprep.subr.mxu0 0.0
      %1233 = vmatpush2.msra.mxu0 0.0
      %1234 = vmatprep.subr.mxu0 0.0
      %1235 = vmatpush2.msra.mxu0 0.0
      %1236 = vmatprep.subr.mxu0 0.0
      %1237 = vmatpush2.msra.mxu0 0.0
      %1238 = vmatprep.subr.mxu0 0.0
      %1239 = vmatpush2.msra.mxu0 0.0
      %1240 = vmatprep.subr.mxu0 0.0
      %1241 = vmatpush2.msra.mxu0 0.0
      %1242 = vmatprep.subr.mxu0 0.0
      %1243 = vmatpush2.msra.mxu0 0.0
      %1244 = vmatprep.mubr.f32.mxu0 0.0
      %1245 = vmatmul.mubr.f32.gmra.mxu0 %v251
      %v1246 = vpop.f32.mrf.mxu0
      %v1247 = vadd.f32 %v242, %v1246
      %v1248 = vpop.f32.mrf.mxu0
      %v1249 = vadd.f32 %v242, %v1248
      %1250 = vmatprep.mubr.f32.mxu0 0.0
      %1251 = vmatmul.mubr.f32.gmra.mxu0 %v254
      %v1252 = vpop.f32.mrf.mxu0
      %v1253 = vadd.f32 %v247, %v1252
      %v1254 = vpop.f32.mrf.mxu0
      %v1255 = vadd.f32 %v247, %v1254
      %1256 = vdwg.mxu0
      %1257 = vmatprep.subr.mxu0 0.0
      %1258 = vmatpush1.msra.mxu0 0.0
      %1259 = vmatprep.subr.mxu0 0.0
      %1260 = vmatpush1.msra.mxu0 0.0
      %1261 = vmatprep.subr.mxu0 0.0
      %1262 = vmatpush1.msra.mxu0 0.0
      %1263 = vmatprep.subr.mxu0 0.0
      %1264 = vmatpush1.msra.mxu0 0.0
      %1265 = vmatprep.subr.mxu0 0.0
      %1266 = vmatpush1.msra.mxu0 0.0
      %1267 = vmatprep.subr.mxu0 0.0
      %1268 = vmatpush1.msra.mxu0 0.0
      %1269 = vmatprep.subr.mxu0 0.0
      %1270 = vmatpush1.msra.mxu0 0.0
      %1271 = vmatprep.subr.mxu0 0.0
      %1272 = vmatpush1.msra.mxu0 0.0
      %1273 = vmatprep.subr.mxu0 0.0
      %1274 = vmatpush1.msra.mxu0 0.0
      %1275 = vmatprep.subr.mxu0 0.0
      %1276 = vmatpush1.msra.mxu0 0.0
      %1277 = vmatprep.subr.mxu0 0.0
      %1278 = vmatpush1.msra.mxu0 0.0
      %1279 = vmatprep.subr.mxu0 0.0
      %1280 = vmatpush1.msra.mxu0 0.0
      %1281 = vmatprep.subr.mxu0 0.0
      %1282 = vmatpush1.msra.mxu0 0.0
      %1283 = vmatprep.subr.mxu0 0.0
      %1284 = vmatpush1.msra.mxu0 0.0
      %1285 = vmatprep.subr.mxu0 %v232
      %1286 = vmatpush1.msra.mxu0 %v231
      %1287 = vmatprep.subr.mxu0 %v200
      %1288 = vmatpush1.msra.mxu0 %v199
      %1289 = vmatprep.subr.mxu0 0.0
      %1290 = vmatpush2.msra.mxu0 0.0
      %1291 = vmatprep.subr.mxu0 0.0
      %1292 = vmatpush2.msra.mxu0 0.0
      %1293 = vmatprep.subr.mxu0 0.0
      %1294 = vmatpush2.msra.mxu0 0.0
      %1295 = vmatprep.subr.mxu0 0.0
      %1296 = vmatpush2.msra.mxu0 0.0
      %1297 = vmatprep.subr.mxu0 0.0
      %1298 = vmatpush2.msra.mxu0 0.0
      %1299 = vmatprep.subr.mxu0 0.0
      %1300 = vmatpush2.msra.mxu0 0.0
      %1301 = vmatprep.subr.mxu0 0.0
      %1302 = vmatpush2.msra.mxu0 0.0
      %1303 = vmatprep.subr.mxu0 0.0
      %1304 = vmatpush2.msra.mxu0 0.0
      %1305 = vmatprep.subr.mxu0 0.0
      %1306 = vmatpush2.msra.mxu0 0.0
      %1307 = vmatprep.subr.mxu0 0.0
      %1308 = vmatpush2.msra.mxu0 0.0
      %1309 = vmatprep.subr.mxu0 0.0
      %1310 = vmatpush2.msra.mxu0 0.0
      %1311 = vmatprep.subr.mxu0 0.0
      %1312 = vmatpush2.msra.mxu0 0.0
      %1313 = vmatprep.subr.mxu0 0.0
      %1314 = vmatpush2.msra.mxu0 0.0
      %1315 = vmatprep.subr.mxu0 0.0
      %1316 = vmatpush2.msra.mxu0 0.0
      %1317 = vmatprep.subr.mxu0 0.0
      %1318 = vmatpush2.msra.mxu0 0.0
      %1319 = vmatprep.subr.mxu0 0.0
      %1320 = vmatpush2.msra.mxu0 0.0
      %1321 = vmatprep.mubr.f32.mxu0 0.0
      %1322 = vmatmul.mubr.f32.gmra.mxu0 %v251
      %v1323 = vpop.f32.mrf.mxu0
      %v1324 = vadd.f32 %v242, %v1323
      %v1325 = vpop.f32.mrf.mxu0
      %v1326 = vadd.f32 %v242, %v1325
      %1327 = vmatprep.mubr.f32.mxu0 0.0
      %1328 = vmatmul.mubr.f32.gmra.mxu0 %v254
      %v1329 = vpop.f32.mrf.mxu0
      %v1330 = vadd.f32 %v247, %v1329
      %v1331 = vpop.f32.mrf.mxu0
      %v1332 = vadd.f32 %v247, %v1331
      %1333 = vdwg.mxu0
      %1334 = vmatprep.subr.mxu0 0.0
      %1335 = vmatpush1.msra.mxu0 0.0
      %1336 = vmatprep.subr.mxu0 0.0
      %1337 = vmatpush1.msra.mxu0 0.0
      %1338 = vmatprep.subr.mxu0 0.0
      %1339 = vmatpush1.msra.mxu0 0.0
      %1340 = vmatprep.subr.mxu0 0.0
      %1341 = vmatpush1.msra.mxu0 0.0
      %1342 = vmatprep.subr.mxu0 0.0
      %1343 = vmatpush1.msra.mxu0 0.0
      %1344 = vmatprep.subr.mxu0 0.0
      %1345 = vmatpush1.msra.mxu0 0.0
      %1346 = vmatprep.subr.mxu0 0.0
      %1347 = vmatpush1.msra.mxu0 0.0
      %1348 = vmatprep.subr.mxu0 0.0
      %1349 = vmatpush1.msra.mxu0 0.0
      %1350 = vmatprep.subr.mxu0 0.0
      %1351 = vmatpush1.msra.mxu0 0.0
      %1352 = vmatprep.subr.mxu0 0.0
      %1353 = vmatpush1.msra.mxu0 0.0
      %1354 = vmatprep.subr.mxu0 0.0
      %1355 = vmatpush1.msra.mxu0 0.0
      %1356 = vmatprep.subr.mxu0 0.0
      %1357 = vmatpush1.msra.mxu0 0.0
      %1358 = vmatprep.subr.mxu0 0.0
      %1359 = vmatpush1.msra.mxu0 0.0
      %1360 = vmatprep.subr.mxu0 0.0
      %1361 = vmatpush1.msra.mxu0 0.0
      %1362 = vmatprep.subr.mxu0 %v234
      %1363 = vmatpush1.msra.mxu0 %v233
      %1364 = vmatprep.subr.mxu0 %v202
      %1365 = vmatpush1.msra.mxu0 %v201
      %1366 = vmatprep.subr.mxu0 0.0
      %1367 = vmatpush2.msra.mxu0 0.0
      %1368 = vmatprep.subr.mxu0 0.0
      %1369 = vmatpush2.msra.mxu0 0.0
      %1370 = vmatprep.subr.mxu0 0.0
      %1371 = vmatpush2.msra.mxu0 0.0
      %1372 = vmatprep.subr.mxu0 0.0
      %1373 = vmatpush2.msra.mxu0 0.0
      %1374 = vmatprep.subr.mxu0 0.0
      %1375 = vmatpush2.msra.mxu0 0.0
      %1376 = vmatprep.subr.mxu0 0.0
      %1377 = vmatpush2.msra.mxu0 0.0
      %1378 = vmatprep.subr.mxu0 0.0
      %1379 = vmatpush2.msra.mxu0 0.0
      %1380 = vmatprep.subr.mxu0 0.0
      %1381 = vmatpush2.msra.mxu0 0.0
      %1382 = vmatprep.subr.mxu0 0.0
      %1383 = vmatpush2.msra.mxu0 0.0
      %1384 = vmatprep.subr.mxu0 0.0
      %1385 = vmatpush2.msra.mxu0 0.0
      %1386 = vmatprep.subr.mxu0 0.0
      %1387 = vmatpush2.msra.mxu0 0.0
      %1388 = vmatprep.subr.mxu0 0.0
      %1389 = vmatpush2.msra.mxu0 0.0
      %1390 = vmatprep.subr.mxu0 0.0
      %1391 = vmatpush2.msra.mxu0 0.0
      %1392 = vmatprep.subr.mxu0 0.0
      %1393 = vmatpush2.msra.mxu0 0.0
      %1394 = vmatprep.subr.mxu0 0.0
      %1395 = vmatpush2.msra.mxu0 0.0
      %1396 = vmatprep.subr.mxu0 0.0
      %1397 = vmatpush2.msra.mxu0 0.0
      %1398 = vmatprep.mubr.f32.mxu0 0.0
      %1399 = vmatmul.mubr.f32.gmra.mxu0 %v251
      %v1400 = vpop.f32.mrf.mxu0
      %v1401 = vadd.f32 %v242, %v1400
      %v1402 = vpop.f32.mrf.mxu0
      %v1403 = vadd.f32 %v242, %v1402
      %1404 = vmatprep.mubr.f32.mxu0 0.0
      %1405 = vmatmul.mubr.f32.gmra.mxu0 %v254
      %v1406 = vpop.f32.mrf.mxu0
      %v1407 = vadd.f32 %v247, %v1406
      %v1408 = vpop.f32.mrf.mxu0
      %v1409 = vadd.f32 %v247, %v1408
      %1410 = vdwg.mxu0
      %1411 = vmatprep.subr.mxu0 0.0
      %1412 = vmatpush1.msra.mxu0 0.0
      %1413 = vmatprep.subr.mxu0 0.0
      %1414 = vmatpush1.msra.mxu0 0.0
      %1415 = vmatprep.subr.mxu0 0.0
      %1416 = vmatpush1.msra.mxu0 0.0
      %1417 = vmatprep.subr.mxu0 0.0
      %1418 = vmatpush1.msra.mxu0 0.0
      %1419 = vmatprep.subr.mxu0 0.0
      %1420 = vmatpush1.msra.mxu0 0.0
      %1421 = vmatprep.subr.mxu0 0.0
      %1422 = vmatpush1.msra.mxu0 0.0
      %1423 = vmatprep.subr.mxu0 0.0
      %1424 = vmatpush1.msra.mxu0 0.0
      %1425 = vmatprep.subr.mxu0 0.0
      %1426 = vmatpush1.msra.mxu0 0.0
      %1427 = vmatprep.subr.mxu0 0.0
      %1428 = vmatpush1.msra.mxu0 0.0
      %1429 = vmatprep.subr.mxu0 0.0
      %1430 = vmatpush1.msra.mxu0 0.0
      %1431 = vmatprep.subr.mxu0 0.0
      %1432 = vmatpush1.msra.mxu0 0.0
      %1433 = vmatprep.subr.mxu0 0.0
      %1434 = vmatpush1.msra.mxu0 0.0
      %1435 = vmatprep.subr.mxu0 0.0
      %1436 = vmatpush1.msra.mxu0 0.0
      %1437 = vmatprep.subr.mxu0 0.0
      %1438 = vmatpush1.msra.mxu0 0.0
      %1439 = vmatprep.subr.mxu0 %v236
      %1440 = vmatpush1.msra.mxu0 %v235
      %1441 = vmatprep.subr.mxu0 %v204
      %1442 = vmatpush1.msra.mxu0 %v203
      %1443 = vmatprep.subr.mxu0 0.0
      %1444 = vmatpush2.msra.mxu0 0.0
      %1445 = vmatprep.subr.mxu0 0.0
      %1446 = vmatpush2.msra.mxu0 0.0
      %1447 = vmatprep.subr.mxu0 0.0
      %1448 = vmatpush2.msra.mxu0 0.0
      %1449 = vmatprep.subr.mxu0 0.0
      %1450 = vmatpush2.msra.mxu0 0.0
      %1451 = vmatprep.subr.mxu0 0.0
      %1452 = vmatpush2.msra.mxu0 0.0
      %1453 = vmatprep.subr.mxu0 0.0
      %1454 = vmatpush2.msra.mxu0 0.0
      %1455 = vmatprep.subr.mxu0 0.0
      %1456 = vmatpush2.msra.mxu0 0.0
      %1457 = vmatprep.subr.mxu0 0.0
      %1458 = vmatpush2.msra.mxu0 0.0
      %1459 = vmatprep.subr.mxu0 0.0
      %1460 = vmatpush2.msra.mxu0 0.0
      %1461 = vmatprep.subr.mxu0 0.0
      %1462 = vmatpush2.msra.mxu0 0.0
      %1463 = vmatprep.subr.mxu0 0.0
      %1464 = vmatpush2.msra.mxu0 0.0
      %1465 = vmatprep.subr.mxu0 0.0
      %1466 = vmatpush2.msra.mxu0 0.0
      %1467 = vmatprep.subr.mxu0 0.0
      %1468 = vmatpush2.msra.mxu0 0.0
      %1469 = vmatprep.subr.mxu0 0.0
      %1470 = vmatpush2.msra.mxu0 0.0
      %1471 = vmatprep.subr.mxu0 0.0
      %1472 = vmatpush2.msra.mxu0 0.0
      %1473 = vmatprep.subr.mxu0 0.0
      %1474 = vmatpush2.msra.mxu0 0.0
      %1475 = vmatprep.mubr.f32.mxu0 0.0
      %1476 = vmatmul.mubr.f32.gmra.mxu0 %v251
      %v1477 = vpop.f32.mrf.mxu0
      %v1478 = vadd.f32 %v242, %v1477
      %v1479 = vpop.f32.mrf.mxu0
      %v1480 = vadd.f32 %v242, %v1479
      %1481 = vmatprep.mubr.f32.mxu0 0.0
      %1482 = vmatmul.mubr.f32.gmra.mxu0 %v254
      %v1483 = vpop.f32.mrf.mxu0
      %v1484 = vadd.f32 %v247, %v1483
      %v1485 = vpop.f32.mrf.mxu0
      %v1486 = vadd.f32 %v247, %v1485
      %1487 = vdwg.mxu0
      %vm1488 = vcmp.gt.f32.partialorder %v323, 0.0
      %vm1489 = vcmp.gt.f32.partialorder %v325, 0.0
      %vm1490 = vcmp.gt.f32.partialorder %v400, 0.0
      %vm1491 = vcmp.gt.f32.partialorder %v402, 0.0
      %vm1492 = vcmp.gt.f32.partialorder %v477, 0.0
      %vm1493 = vcmp.gt.f32.partialorder %v479, 0.0
      %vm1494 = vcmp.gt.f32.partialorder %v554, 0.0
      %vm1495 = vcmp.gt.f32.partialorder %v556, 0.0
      %vm1496 = vcmp.gt.f32.partialorder %v631, 0.0
      %vm1497 = vcmp.gt.f32.partialorder %v633, 0.0
      %vm1498 = vcmp.gt.f32.partialorder %v708, 0.0
      %vm1499 = vcmp.gt.f32.partialorder %v710, 0.0
      %vm1500 = vcmp.gt.f32.partialorder %v785, 0.0
      %vm1501 = vcmp.gt.f32.partialorder %v787, 0.0
      %vm1502 = vcmp.gt.f32.partialorder %v862, 0.0
      %vm1503 = vcmp.gt.f32.partialorder %v864, 0.0
      %vm1504 = vcmp.gt.f32.partialorder %v939, 0.0
      %vm1505 = vcmp.gt.f32.partialorder %v941, 0.0
      %vm1506 = vcmp.gt.f32.partialorder %v1016, 0.0
      %vm1507 = vcmp.gt.f32.partialorder %v1018, 0.0
      %vm1508 = vcmp.gt.f32.partialorder %v1093, 0.0
      %vm1509 = vcmp.gt.f32.partialorder %v1095, 0.0
      %vm1510 = vcmp.gt.f32.partialorder %v1170, 0.0
      %vm1511 = vcmp.gt.f32.partialorder %v1172, 0.0
      %vm1512 = vcmp.gt.f32.partialorder %v1247, 0.0
      %vm1513 = vcmp.gt.f32.partialorder %v1249, 0.0
      %vm1514 = vcmp.gt.f32.partialorder %v1324, 0.0
      %vm1515 = vcmp.gt.f32.partialorder %v1326, 0.0
      %vm1516 = vcmp.gt.f32.partialorder %v1401, 0.0
      %vm1517 = vcmp.gt.f32.partialorder %v1403, 0.0
      %vm1518 = vcmp.gt.f32.partialorder %v1478, 0.0
      %vm1519 = vcmp.gt.f32.partialorder %v1480, 0.0
      %vm1520 = vcmp.gt.f32.partialorder %v329, 0.0
      %vm1521 = vcmp.gt.f32.partialorder %v331, 0.0
      %vm1522 = vcmp.gt.f32.partialorder %v406, 0.0
      %vm1523 = vcmp.gt.f32.partialorder %v408, 0.0
      %vm1524 = vcmp.gt.f32.partialorder %v483, 0.0
      %vm1525 = vcmp.gt.f32.partialorder %v485, 0.0
      %vm1526 = vcmp.gt.f32.partialorder %v560, 0.0
      %vm1527 = vcmp.gt.f32.partialorder %v562, 0.0
      %vm1528 = vcmp.gt.f32.partialorder %v637, 0.0
      %vm1529 = vcmp.gt.f32.partialorder %v639, 0.0
      %vm1530 = vcmp.gt.f32.partialorder %v714, 0.0
      %vm1531 = vcmp.gt.f32.partialorder %v716, 0.0
      %vm1532 = vcmp.gt.f32.partialorder %v791, 0.0
      %vm1533 = vcmp.gt.f32.partialorder %v793, 0.0
      %vm1534 = vcmp.gt.f32.partialorder %v868, 0.0
      %vm1535 = vcmp.gt.f32.partialorder %v870, 0.0
      %vm1536 = vcmp.gt.f32.partialorder %v945, 0.0
      %vm1537 = vcmp.gt.f32.partialorder %v947, 0.0
      %vm1538 = vcmp.gt.f32.partialorder %v1022, 0.0
      %vm1539 = vcmp.gt.f32.partialorder %v1024, 0.0
      %vm1540 = vcmp.gt.f32.partialorder %v1099, 0.0
      %vm1541 = vcmp.gt.f32.partialorder %v1101, 0.0
      %vm1542 = vcmp.gt.f32.partialorder %v1176, 0.0
      %vm1543 = vcmp.gt.f32.partialorder %v1178, 0.0
      %vm1544 = vcmp.gt.f32.partialorder %v1253, 0.0
      %vm1545 = vcmp.gt.f32.partialorder %v1255, 0.0
      %vm1546 = vcmp.gt.f32.partialorder %v1330, 0.0
      %vm1547 = vcmp.gt.f32.partialorder %v1332, 0.0
      %vm1548 = vcmp.gt.f32.partialorder %v1407, 0.0
      %vm1549 = vcmp.gt.f32.partialorder %v1409, 0.0
      %vm1550 = vcmp.gt.f32.partialorder %v1484, 0.0
      %vm1551 = vcmp.gt.f32.partialorder %v1486, 0.0
      %v1552 = vmul.f32 %v323, 0.2
      %v1553 = vmul.f32 %v325, 0.2
      %v1554 = vmul.f32 %v400, 0.2
      %v1555 = vmul.f32 %v402, 0.2
      %v1556 = vmul.f32 %v477, 0.2
      %v1557 = vmul.f32 %v479, 0.2
      %v1558 = vmul.f32 %v554, 0.2
      %v1559 = vmul.f32 %v556, 0.2
      %v1560 = vmul.f32 %v631, 0.2
      %v1561 = vmul.f32 %v633, 0.2
      %v1562 = vmul.f32 %v708, 0.2
      %v1563 = vmul.f32 %v710, 0.2
      %v1564 = vmul.f32 %v785, 0.2
      %v1565 = vmul.f32 %v787, 0.2
      %v1566 = vmul.f32 %v862, 0.2
      %v1567 = vmul.f32 %v864, 0.2
      %v1568 = vmul.f32 %v939, 0.2
      %v1569 = vmul.f32 %v941, 0.2
      %v1570 = vmul.f32 %v1016, 0.2
      %v1571 = vmul.f32 %v1018, 0.2
      %v1572 = vmul.f32 %v1093, 0.2
      %v1573 = vmul.f32 %v1095, 0.2
      %v1574 = vmul.f32 %v1170, 0.2
      %v1575 = vmul.f32 %v1172, 0.2
      %v1576 = vmul.f32 %v1247, 0.2
      %v1577 = vmul.f32 %v1249, 0.2
      %v1578 = vmul.f32 %v1324, 0.2
      %v1579 = vmul.f32 %v1326, 0.2
      %v1580 = vmul.f32 %v1401, 0.2
      %v1581 = vmul.f32 %v1403, 0.2
      %v1582 = vmul.f32 %v1478, 0.2
      %v1583 = vmul.f32 %v1480, 0.2
      %v1584 = vmul.f32 %v329, 0.2
      %v1585 = vmul.f32 %v331, 0.2
      %v1586 = vmul.f32 %v406, 0.2
      %v1587 = vmul.f32 %v408, 0.2
      %v1588 = vmul.f32 %v483, 0.2
      %v1589 = vmul.f32 %v485, 0.2
      %v1590 = vmul.f32 %v560, 0.2
      %v1591 = vmul.f32 %v562, 0.2
      %v1592 = vmul.f32 %v637, 0.2
      %v1593 = vmul.f32 %v639, 0.2
      %v1594 = vmul.f32 %v714, 0.2
      %v1595 = vmul.f32 %v716, 0.2
      %v1596 = vmul.f32 %v791, 0.2
      %v1597 = vmul.f32 %v793, 0.2
      %v1598 = vmul.f32 %v868, 0.2
      %v1599 = vmul.f32 %v870, 0.2
      %v1600 = vmul.f32 %v945, 0.2
      %v1601 = vmul.f32 %v947, 0.2
      %v1602 = vmul.f32 %v1022, 0.2
      %v1603 = vmul.f32 %v1024, 0.2
      %v1604 = vmul.f32 %v1099, 0.2
      %v1605 = vmul.f32 %v1101, 0.2
      %v1606 = vmul.f32 %v1176, 0.2
      %v1607 = vmul.f32 %v1178, 0.2
      %v1608 = vmul.f32 %v1253, 0.2
      %v1609 = vmul.f32 %v1255, 0.2
      %v1610 = vmul.f32 %v1330, 0.2
      %v1611 = vmul.f32 %v1332, 0.2
      %v1612 = vmul.f32 %v1407, 0.2
      %v1613 = vmul.f32 %v1409, 0.2
      %v1614 = vmul.f32 %v1484, 0.2
      %v1615 = vmul.f32 %v1486, 0.2
      %v1616 = vsel %vm1488, %v323, %v1552
      %v1617 = vsel %vm1489, %v325, %v1553
      %v1618 = vsel %vm1490, %v400, %v1554
      %v1619 = vsel %vm1491, %v402, %v1555
      %v1620 = vsel %vm1492, %v477, %v1556
      %v1621 = vsel %vm1493, %v479, %v1557
      %v1622 = vsel %vm1494, %v554, %v1558
      %v1623 = vsel %vm1495, %v556, %v1559
      %v1624 = vsel %vm1496, %v631, %v1560
      %v1625 = vsel %vm1497, %v633, %v1561
      %v1626 = vsel %vm1498, %v708, %v1562
      %v1627 = vsel %vm1499, %v710, %v1563
      %v1628 = vsel %vm1500, %v785, %v1564
      %v1629 = vsel %vm1501, %v787, %v1565
      %v1630 = vsel %vm1502, %v862, %v1566
      %v1631 = vsel %vm1503, %v864, %v1567
      %v1632 = vsel %vm1504, %v939, %v1568
      %v1633 = vsel %vm1505, %v941, %v1569
      %v1634 = vsel %vm1506, %v1016, %v1570
      %v1635 = vsel %vm1507, %v1018, %v1571
      %v1636 = vsel %vm1508, %v1093, %v1572
      %v1637 = vsel %vm1509, %v1095, %v1573
      %v1638 = vsel %vm1510, %v1170, %v1574
      %v1639 = vsel %vm1511, %v1172, %v1575
      %v1640 = vsel %vm1512, %v1247, %v1576
      %v1641 = vsel %vm1513, %v1249, %v1577
      %v1642 = vsel %vm1514, %v1324, %v1578
      %v1643 = vsel %vm1515, %v1326, %v1579
      %v1644 = vsel %vm1516, %v1401, %v1580
      %v1645 = vsel %vm1517, %v1403, %v1581
      %v1646 = vsel %vm1518, %v1478, %v1582
      %v1647 = vsel %vm1519, %v1480, %v1583
      %v1648 = vsel %vm1520, %v329, %v1584
      %v1649 = vsel %vm1521, %v331, %v1585
      %v1650 = vsel %vm1522, %v406, %v1586
      %v1651 = vsel %vm1523, %v408, %v1587
      %v1652 = vsel %vm1524, %v483, %v1588
      %v1653 = vsel %vm1525, %v485, %v1589
      %v1654 = vsel %vm1526, %v560, %v1590
      %v1655 = vsel %vm1527, %v562, %v1591
      %v1656 = vsel %vm1528, %v637, %v1592
      %v1657 = vsel %vm1529, %v639, %v1593
      %v1658 = vsel %vm1530, %v714, %v1594
      %v1659 = vsel %vm1531, %v716, %v1595
      %v1660 = vsel %vm1532, %v791, %v1596
      %v1661 = vsel %vm1533, %v793, %v1597
      %v1662 = vsel %vm1534, %v868, %v1598
      %v1663 = vsel %vm1535, %v870, %v1599
      %v1664 = vsel %vm1536, %v945, %v1600
      %v1665 = vsel %vm1537, %v947, %v1601
      %v1666 = vsel %vm1538, %v1022, %v1602
      %v1667 = vsel %vm1539, %v1024, %v1603
      %v1668 = vsel %vm1540, %v1099, %v1604
      %v1669 = vsel %vm1541, %v1101, %v1605
      %v1670 = vsel %vm1542, %v1176, %v1606
      %v1671 = vsel %vm1543, %v1178, %v1607
      %v1672 = vsel %vm1544, %v1253, %v1608
      %v1673 = vsel %vm1545, %v1255, %v1609
      %v1674 = vsel %vm1546, %v1330, %v1610
      %v1675 = vsel %vm1547, %v1332, %v1611
      %v1676 = vsel %vm1548, %v1407, %v1612
      %v1677 = vsel %vm1549, %v1409, %v1613
      %v1678 = vsel %vm1550, %v1484, %v1614
      %v1679 = vsel %vm1551, %v1486, %v1615
      %1680 = vst [vmem:[%s170] sm:$0xff] %v1616
      %1681 = vst [vmem:[%s170 + $0x8] sm:$0xff] %v1617
      %1682 = vst [vmem:[%s170 + $0x10] sm:$0xff] %v1618
      %1683 = vst [vmem:[%s170 + $0x18] sm:$0xff] %v1619
      %1684 = vst [vmem:[%s170 + $0x20] sm:$0xff] %v1620
      %1685 = vst [vmem:[%s170 + $0x28] sm:$0xff] %v1621
      %1686 = vst [vmem:[%s170 + $0x30] sm:$0xff] %v1622
      %1687 = vst [vmem:[%s170 + $0x38] sm:$0xff] %v1623
      %1688 = vst [vmem:[%s170 + $0x40] sm:$0xff] %v1624
      %1689 = vst [vmem:[%s170 + $0x48] sm:$0xff] %v1625
      %1690 = vst [vmem:[%s170 + $0x50] sm:$0xff] %v1626
      %1691 = vst [vmem:[%s170 + $0x58] sm:$0xff] %v1627
      %1692 = vst [vmem:[%s170 + $0x60] sm:$0xff] %v1628
      %1693 = vst [vmem:[%s170 + $0x68] sm:$0xff] %v1629
      %1694 = vst [vmem:[%s170 + $0x70] sm:$0xff] %v1630
      %1695 = vst [vmem:[%s170 + $0x78] sm:$0xff] %v1631
      %1696 = vst [vmem:[%s170 + $0x80] sm:$0xff] %v1632
      %1697 = vst [vmem:[%s170 + $0x88] sm:$0xff] %v1633
      %1698 = vst [vmem:[%s170 + $0x90] sm:$0xff] %v1634
      %1699 = vst [vmem:[%s170 + $0x98] sm:$0xff] %v1635
      %1700 = vst [vmem:[%s170 + $0xa0] sm:$0xff] %v1636
      %1701 = vst [vmem:[%s170 + $0xa8] sm:$0xff] %v1637
      %1702 = vst [vmem:[%s170 + $0xb0] sm:$0xff] %v1638
      %1703 = vst [vmem:[%s170 + $0xb8] sm:$0xff] %v1639
      %1704 = vst [vmem:[%s170 + $0xc0] sm:$0xff] %v1640
      %1705 = vst [vmem:[%s170 + $0xc8] sm:$0xff] %v1641
      %1706 = vst [vmem:[%s170 + $0xd0] sm:$0xff] %v1642
      %1707 = vst [vmem:[%s170 + $0xd8] sm:$0xff] %v1643
      %1708 = vst [vmem:[%s170 + $0xe0] sm:$0xff] %v1644
      %1709 = vst [vmem:[%s170 + $0xe8] sm:$0xff] %v1645
      %1710 = vst [vmem:[%s170 + $0xf0] sm:$0xff] %v1646
      %1711 = vst [vmem:[%s170 + $0xf8] sm:$0xff] %v1647
      %1712 = vst [vmem:[%s170 + $0x100] sm:$0xff] %v1648
      %1713 = vst [vmem:[%s170 + $0x108] sm:$0xff] %v1649
      %1714 = vst [vmem:[%s170 + $0x110] sm:$0xff] %v1650
      %1715 = vst [vmem:[%s170 + $0x118] sm:$0xff] %v1651
      %1716 = vst [vmem:[%s170 + $0x120] sm:$0xff] %v1652
      %1717 = vst [vmem:[%s170 + $0x128] sm:$0xff] %v1653
      %1718 = vst [vmem:[%s170 + $0x130] sm:$0xff] %v1654
      %1719 = vst [vmem:[%s170 + $0x138] sm:$0xff] %v1655
      %1720 = vst [vmem:[%s170 + $0x140] sm:$0xff] %v1656
      %1721 = vst [vmem:[%s170 + $0x148] sm:$0xff] %v1657
      %1722 = vst [vmem:[%s170 + $0x150] sm:$0xff] %v1658
      %1723 = vst [vmem:[%s170 + $0x158] sm:$0xff] %v1659
      %1724 = vst [vmem:[%s170 + $0x160] sm:$0xff] %v1660
      %1725 = vst [vmem:[%s170 + $0x168] sm:$0xff] %v1661
      %1726 = vst [vmem:[%s170 + $0x170] sm:$0xff] %v1662
      %1727 = vst [vmem:[%s170 + $0x178] sm:$0xff] %v1663
      %1728 = vst [vmem:[%s170 + $0x180] sm:$0xff] %v1664
      %1729 = vst [vmem:[%s170 + $0x188] sm:$0xff] %v1665
      %1730 = vst [vmem:[%s170 + $0x190] sm:$0xff] %v1666
      %1731 = vst [vmem:[%s170 + $0x198] sm:$0xff] %v1667
      %1732 = vst [vmem:[%s170 + $0x1a0] sm:$0xff] %v1668
      %1733 = vst [vmem:[%s170 + $0x1a8] sm:$0xff] %v1669
      %1734 = vst [vmem:[%s170 + $0x1b0] sm:$0xff] %v1670
      %1735 = vst [vmem:[%s170 + $0x1b8] sm:$0xff] %v1671
      %1736 = vst [vmem:[%s170 + $0x1c0] sm:$0xff] %v1672
      %1737 = vst [vmem:[%s170 + $0x1c8] sm:$0xff] %v1673
      %1738 = vst [vmem:[%s170 + $0x1d0] sm:$0xff] %v1674
      %1739 = vst [vmem:[%s170 + $0x1d8] sm:$0xff] %v1675
      %1740 = vst [vmem:[%s170 + $0x1e0] sm:$0xff] %v1676
      %1741 = vst [vmem:[%s170 + $0x1e8] sm:$0xff] %v1677
      %1742 = vst [vmem:[%s170 + $0x1f0] sm:$0xff] %v1678
      %1743 = vst [vmem:[%s170 + $0x1f8] sm:$0xff] %v1679
      %p1744 = scmp.lt.s32.totalorder %s14, 1
      %s1745 = scalar_select %p1744, %s14, 1
      %s1746 = smul.addr %s1745, 64
      %s1747 = smul.addr %s1746, 8
      %s1748 = scalar_lea.vmem %s3, %s1747
      // Predicated region
      $region33: #{discriminator_forward.2} parent=31 // pred_check
        %p1749 = pneg %p100
      $region34: #{discriminator_forward.2} parent=31 // pred_check_branch
        %1751 = sbr.rel (%p1749) target = $region36
      $region35: #{discriminator_forward.2} parent=31 // pred_region
        _
      $region36: #{discriminator_forward.2} parent=31 // pred_fallthru
        _
    $region32: #{discriminator_forward.2} parent=5 // pred_fallthru
      _
    %p1752 = scmp.le.s32.totalorder 2, %s9
    // Predicated region
    $region37: #{discriminator_forward.2} parent=5 // pred_check
      %p1753 = pneg %p1752
    $region38: #{discriminator_forward.2} parent=5 // pred_check_branch
      %1755 = sbr.rel (%p1753) target = $region40
    $region39: #{discriminator_forward.2} parent=5 // pred_region
      %s1756 = ssub.s32 %s9, 2
      // Predicated region
      $region41: #{discriminator_forward.2} parent=39 // pred_check
        %p1757 = pneg %p106
      $region42: #{discriminator_forward.2} parent=39 // pred_check_branch
        %1759 = sbr.rel (%p1757) target = $region44
      $region43: #{discriminator_forward.2} parent=39 // pred_region
        %p1760 = scmp.lt.s32.totalorder %s15, 1
        %s1761 = scalar_select %p1760, %s15, 1
        %s1762 = smul.addr %s1761, 64
        %s1763 = smul.addr %s1762, 8
        %s1764 = scalar_lea.vmem %s3, %s1763
      $region44: #{discriminator_forward.2} parent=39 // pred_fallthru
        _
    $region40: #{discriminator_forward.2} parent=5 // pred_fallthru
      _
  $region6: #{discriminator_forward.2} parent=0 // loop_footer
    %s13 = sadd.s32 1, %s9
  $region7: #{discriminator_forward.2} parent=0 // loop_footer_branch
    %8 = sbr.rel target = $region3
  $region8: #{discriminator_forward.2} parent=0 // loop_exit
    _

// kernel: discriminator_forward.3
$region0: #{discriminator_forward.3}
  #allocation0 [shape = 'u32[]', space=smem, size = 0x4, offset = 0x4, fixed_abs, tag = 'smem constant byte address 0x4 - core index']
  #allocation1 [shape = 'u32[144,128]{1,0:T(1,128)}', space=vmem, size = 0x12000, scoped, tag = 'internal scratch']
  #allocation2 [shape = 'f32[1,1]{1,0:T(1,128)S(1)}', space=vmem, size = 0x200, scoped, tag = 'scoped memory for discriminator_forward.3']
  %s0 = inlined_call_operand.vmem [shape: f32[2,256,256], index: 0, kind: input, shape index: {}]
  %s1 = inlined_call_operand.vmem [shape: f32[32,256], index: 1, kind: input, shape index: {}]
  %s2 = inlined_call_operand.vmem [shape: f32[32,1], index: 2, kind: input, shape index: {}]
  %s3 = inlined_call_operand.vmem [shape: f32[32,1], index: 3, kind: input, shape index: {}]
  %s4 = inlined_call_operand.vmem [shape: f32[16,256,64], index: 4, kind: input, shape index: {}]
  %s5 = inlined_call_operand.vmem [shape: f32[64,512], index: 5, kind: input, shape index: {}]
  %s6 = inlined_call_operand.vmem [shape: f32[64,1], index: 6, kind: input, shape index: {}]
  %s7 = inlined_call_operand.vmem [shape: f32[64,1], index: 7, kind: input, shape index: {}]
  %s8 = inlined_call_operand.vmem [shape: f32[16,64,16], index: 8, kind: input, shape index: {}]
  %s9 = inlined_call_operand.vmem [shape: f32[128,1024], index: 9, kind: input, shape index: {}]
  %s10 = inlined_call_operand.vmem [shape: f32[128,1], index: 10, kind: input, shape index: {}]
  %s11 = inlined_call_operand.vmem [shape: f32[128,1], index: 11, kind: input, shape index: {}]
  %s12 = inlined_call_operand.vmem [shape: f32[128,16], index: 12, kind: input, shape index: {}]
  %s13 = inlined_call_operand.<no memory space> [shape: f32[1,1], index: 13, kind: input, shape index: {}]
  %s14 = inlined_call_operand.vmem [shape: f32[2,1,1], index: 14, kind: output, shape index: {}]
  %s15 = sld [smem:[#allocation0]]
  $region89: #{discriminator_forward.3} parent=0
    _
  %s17 = ssub.s32 1, %s15
  %s18 = scalar_select 0, %s17, %s15
  %v19 = vstv %s13
  %20 = vst [vmem:[#allocation2] sm:$0x1] %v19
  loop: start=0, step=1, limit=4
  $region2: #{discriminator_forward.3} parent=0 // loop_pre_header
    _
  $region3: #{discriminator_forward.3} parent=0 // loop_header
    %s22 = sphi 0, %s26
    %p23 = scmp.ge.s32.totalorder %s22, 4
    %s32 = sphi 0, %s34
    %s35 = sphi 0, %s32
    %s36 = sphi 0, %s35
    %s52 = sphi 0, %s36
    %s56 = sphi 0, %s56
    %s58 = sphi 0, %s56
    %s59 = sphi 0, %s58
    %s73 = sphi 0, %s59
    %s77 = sphi 0, %s77
    %s79 = sphi 0, %s77
    %s80 = sphi 0, %s79
    %s94 = sphi 0, %s80
    %s98 = sphi 0, %s98
    %s100 = sphi 0, %s98
    %s101 = sphi 0, %s100
    %s115 = sphi 0, %s101
    %s119 = sphi 0, %s119
    %s121 = sphi 0, %s119
    %s122 = sphi 0, %s121
    %s136 = sphi 0, %s122
    %s140 = sphi 0, %s140
    %s142 = sphi 0, %s140
    %s143 = sphi 0, %s142
    %s157 = sphi 0, %s143
    %s161 = sphi 0, %s161
    %s163 = sphi 0, %s161
    %s164 = sphi 0, %s163
    %s178 = sphi 0, %s164
    %s182 = sphi 0, %s182
    %s184 = sphi 0, %s182
    %s185 = sphi 0, %s184
    %s199 = sphi 0, %s185
    %s203 = sphi 0, %s203
    %s205 = sphi 0, %s203
    %s206 = sphi 0, %s205
    %s220 = sphi 0, %s206
    %s224 = sphi 0, %s224
    %s226 = sphi 0, %s224
    %s227 = sphi 0, %s226
    %s241 = sphi 0, %s227
    %s245 = sphi 0, %s245
    %s247 = sphi 0, %s245
    %s248 = sphi 0, %s247
    %s262 = sphi 0, %s248
    %s266 = sphi 0, %s266
    %s268 = sphi 0, %s266
    %s269 = sphi 0, %s268
    %s283 = sphi 0, %s269
    %s287 = sphi 0, %s287
    %s289 = sphi 0, %s287
    %s290 = sphi 0, %s289
    %s304 = sphi 0, %s290
    %s308 = sphi 0, %s308
    %s310 = sphi 0, %s308
    %s311 = sphi 0, %s310
    %s325 = sphi 0, %s311
    %s331 = sphi 0, %s333
    %s334 = sphi 0, %s331
    %s335 = sphi 0, %s334
    %s351 = sphi 0, %s335
  $region4: #{discriminator_forward.3} parent=0 // loop_header_branch
    %25 = sbr.rel (%p23) target = $region8
  $region5: #{discriminator_forward.3} parent=0 // loop_body
    %s27 = ssub.s32 %s22, 1
    %s28 = ssub.s32 %s22, 2
    %s29 = sadd.s32 %s22, 1
    %s30 = ssub.s32 %s22, %s29
    %p31 = scmp.eq.s32.totalorder %s30, 0
    %s33 = sadd.s32 %s32, 1
    %s34 = scalar_select %p31, %s32, %s33
    %p37 = pneg %p31
    %p38 = scmp.eq.s32.totalorder %s22, 1
    %p39 = por %p37, %p38
    %p40 = scmp.ne.s32.totalorder %s32, %s35
    %p41 = scmp.eq.s32.totalorder %s22, 0
    %p42 = por %p40, %p41
    %p43 = scmp.ne.s32.totalorder %s32, %s35
    %p44 = scmp.eq.s32.totalorder %s27, 1
    %p45 = por %p43, %p44
    %p46 = scmp.ne.s32.totalorder %s35, %s36
    %p47 = scmp.eq.s32.totalorder %s27, 0
    %p48 = por %p46, %p47
    %p49 = scmp.ne.s32.totalorder %s35, %s36
    %p50 = scmp.eq.s32.totalorder %s28, 1
    %p51 = por %p49, %p50
    %p53 = scmp.ne.s32.totalorder %s36, %s52
    %p54 = scmp.eq.s32.totalorder %s28, 0
    %p55 = por %p53, %p54
    %s57 = sadd.s32 %s56, 1
    %p60 = scmp.eq.s32.totalorder %s22, 1
    %p61 = scmp.ne.s32.totalorder %s56, %s58
    %p62 = scmp.eq.s32.totalorder %s22, 0
    %p63 = por %p61, %p62
    %p64 = scmp.ne.s32.totalorder %s56, %s58
    %p65 = scmp.eq.s32.totalorder %s27, 1
    %p66 = por %p64, %p65
    %p67 = scmp.ne.s32.totalorder %s58, %s59
    %p68 = scmp.eq.s32.totalorder %s27, 0
    %p69 = por %p67, %p68
    %p70 = scmp.ne.s32.totalorder %s58, %s59
    %p71 = scmp.eq.s32.totalorder %s28, 1
    %p72 = por %p70, %p71
    %p74 = scmp.ne.s32.totalorder %s59, %s73
    %p75 = scmp.eq.s32.totalorder %s28, 0
    %p76 = por %p74, %p75
    %s78 = sadd.s32 %s77, 1
    %p81 = scmp.eq.s32.totalorder %s22, 1
    %p82 = scmp.ne.s32.totalorder %s77, %s79
    %p83 = scmp.eq.s32.totalorder %s22, 0
    %p84 = por %p82, %p83
    %p85 = scmp.ne.s32.totalorder %s77, %s79
    %p86 = scmp.eq.s32.totalorder %s27, 1
    %p87 = por %p85, %p86
    %p88 = scmp.ne.s32.totalorder %s79, %s80
    %p89 = scmp.eq.s32.totalorder %s27, 0
    %p90 = por %p88, %p89
    %p91 = scmp.ne.s32.totalorder %s79, %s80
    %p92 = scmp.eq.s32.totalorder %s28, 1
    %p93 = por %p91, %p92
    %p95 = scmp.ne.s32.totalorder %s80, %s94
    %p96 = scmp.eq.s32.totalorder %s28, 0
    %p97 = por %p95, %p96
    %s99 = sadd.s32 %s98, 1
    %p102 = scmp.eq.s32.totalorder %s22, 1
    %p103 = scmp.ne.s32.totalorder %s98, %s100
    %p104 = scmp.eq.s32.totalorder %s22, 0
    %p105 = por %p103, %p104
    %p106 = scmp.ne.s32.totalorder %s98, %s100
    %p107 = scmp.eq.s32.totalorder %s27, 1
    %p108 = por %p106, %p107
    %p109 = scmp.ne.s32.totalorder %s100, %s101
    %p110 = scmp.eq.s32.totalorder %s27, 0
    %p111 = por %p109, %p110
    %p112 = scmp.ne.s32.totalorder %s100, %s101
    %p113 = scmp.eq.s32.totalorder %s28, 1
    %p114 = por %p112, %p113
    %p116 = scmp.ne.s32.totalorder %s101, %s115
    %p117 = scmp.eq.s32.totalorder %s28, 0
    %p118 = por %p116, %p117
    %s120 = sadd.s32 %s119, 1
    %p123 = scmp.eq.s32.totalorder %s22, 1
    %p124 = scmp.ne.s32.totalorder %s119, %s121
    %p125 = scmp.eq.s32.totalorder %s22, 0
    %p126 = por %p124, %p125
    %p127 = scmp.ne.s32.totalorder %s119, %s121
    %p128 = scmp.eq.s32.totalorder %s27, 1
    %p129 = por %p127, %p128
    %p130 = scmp.ne.s32.totalorder %s121, %s122
    %p131 = scmp.eq.s32.totalorder %s27, 0
    %p132 = por %p130, %p131
    %p133 = scmp.ne.s32.totalorder %s121, %s122
    %p134 = scmp.eq.s32.totalorder %s28, 1
    %p135 = por %p133, %p134
    %p137 = scmp.ne.s32.totalorder %s122, %s136
    %p138 = scmp.eq.s32.totalorder %s28, 0
    %p139 = por %p137, %p138
    %s141 = sadd.s32 %s140, 1
    %p144 = scmp.eq.s32.totalorder %s22, 1
    %p145 = scmp.ne.s32.totalorder %s140, %s142
    %p146 = scmp.eq.s32.totalorder %s22, 0
    %p147 = por %p145, %p146
    %p148 = scmp.ne.s32.totalorder %s140, %s142
    %p149 = scmp.eq.s32.totalorder %s27, 1
    %p150 = por %p148, %p149
    %p151 = scmp.ne.s32.totalorder %s142, %s143
    %p152 = scmp.eq.s32.totalorder %s27, 0
    %p153 = por %p151, %p152
    %p154 = scmp.ne.s32.totalorder %s142, %s143
    %p155 = scmp.eq.s32.totalorder %s28, 1
    %p156 = por %p154, %p155
    %p158 = scmp.ne.s32.totalorder %s143, %s157
    %p159 = scmp.eq.s32.totalorder %s28, 0
    %p160 = por %p158, %p159
    %s162 = sadd.s32 %s161, 1
    %p165 = scmp.eq.s32.totalorder %s22, 1
    %p166 = scmp.ne.s32.totalorder %s161, %s163
    %p167 = scmp.eq.s32.totalorder %s22, 0
    %p168 = por %p166, %p167
    %p169 = scmp.ne.s32.totalorder %s161, %s163
    %p170 = scmp.eq.s32.totalorder %s27, 1
    %p171 = por %p169, %p170
    %p172 = scmp.ne.s32.totalorder %s163, %s164
    %p173 = scmp.eq.s32.totalorder %s27, 0
    %p174 = por %p172, %p173
    %p175 = scmp.ne.s32.totalorder %s163, %s164
    %p176 = scmp.eq.s32.totalorder %s28, 1
    %p177 = por %p175, %p176
    %p179 = scmp.ne.s32.totalorder %s164, %s178
    %p180 = scmp.eq.s32.totalorder %s28, 0
    %p181 = por %p179, %p180
    %s183 = sadd.s32 %s182, 1
    %p186 = scmp.eq.s32.totalorder %s22, 1
    %p187 = scmp.ne.s32.totalorder %s182, %s184
    %p188 = scmp.eq.s32.totalorder %s22, 0
    %p189 = por %p187, %p188
    %p190 = scmp.ne.s32.totalorder %s182, %s184
    %p191 = scmp.eq.s32.totalorder %s27, 1
    %p192 = por %p190, %p191
    %p193 = scmp.ne.s32.totalorder %s184, %s185
    %p194 = scmp.eq.s32.totalorder %s27, 0
    %p195 = por %p193, %p194
    %p196 = scmp.ne.s32.totalorder %s184, %s185
    %p197 = scmp.eq.s32.totalorder %s28, 1
    %p198 = por %p196, %p197
    %p200 = scmp.ne.s32.totalorder %s185, %s199
    %p201 = scmp.eq.s32.totalorder %s28, 0
    %p202 = por %p200, %p201
    %s204 = sadd.s32 %s203, 1
    %p207 = scmp.eq.s32.totalorder %s22, 1
    %p208 = scmp.ne.s32.totalorder %s203, %s205
    %p209 = scmp.eq.s32.totalorder %s22, 0
    %p210 = por %p208, %p209
    %p211 = scmp.ne.s32.totalorder %s203, %s205
    %p212 = scmp.eq.s32.totalorder %s27, 1
    %p213 = por %p211, %p212
    %p214 = scmp.ne.s32.totalorder %s205, %s206
    %p215 = scmp.eq.s32.totalorder %s27, 0
    %p216 = por %p214, %p215
    %p217 = scmp.ne.s32.totalorder %s205, %s206
    %p218 = scmp.eq.s32.totalorder %s28, 1
    %p219 = por %p217, %p218
    %p221 = scmp.ne.s32.totalorder %s206, %s220
    %p222 = scmp.eq.s32.totalorder %s28, 0
    %p223 = por %p221, %p222
    %s225 = sadd.s32 %s224, 1
    %p228 = scmp.eq.s32.totalorder %s22, 1
    %p229 = scmp.ne.s32.totalorder %s224, %s226
    %p230 = scmp.eq.s32.totalorder %s22, 0
    %p231 = por %p229, %p230
    %p232 = scmp.ne.s32.totalorder %s224, %s226
    %p233 = scmp.eq.s32.totalorder %s27, 1
    %p234 = por %p232, %p233
    %p235 = scmp.ne.s32.totalorder %s226, %s227
    %p236 = scmp.eq.s32.totalorder %s27, 0
    %p237 = por %p235, %p236
    %p238 = scmp.ne.s32.totalorder %s226, %s227
    %p239 = scmp.eq.s32.totalorder %s28, 1
    %p240 = por %p238, %p239
    %p242 = scmp.ne.s32.totalorder %s227, %s241
    %p243 = scmp.eq.s32.totalorder %s28, 0
    %p244 = por %p242, %p243
    %s246 = sadd.s32 %s245, 1
    %p249 = scmp.eq.s32.totalorder %s22, 1
    %p250 = scmp.ne.s32.totalorder %s245, %s247
    %p251 = scmp.eq.s32.totalorder %s22, 0
    %p252 = por %p250, %p251
    %p253 = scmp.ne.s32.totalorder %s245, %s247
    %p254 = scmp.eq.s32.totalorder %s27, 1
    %p255 = por %p253, %p254
    %p256 = scmp.ne.s32.totalorder %s247, %s248
    %p257 = scmp.eq.s32.totalorder %s27, 0
    %p258 = por %p256, %p257
    %p259 = scmp.ne.s32.totalorder %s247, %s248
    %p260 = scmp.eq.s32.totalorder %s28, 1
    %p261 = por %p259, %p260
    %p263 = scmp.ne.s32.totalorder %s248, %s262
    %p264 = scmp.eq.s32.totalorder %s28, 0
    %p265 = por %p263, %p264
    %s267 = sadd.s32 %s266, 1
    %p270 = scmp.eq.s32.totalorder %s22, 1
    %p271 = scmp.ne.s32.totalorder %s266, %s268
    %p272 = scmp.eq.s32.totalorder %s22, 0
    %p273 = por %p271, %p272
    %p274 = scmp.ne.s32.totalorder %s266, %s268
    %p275 = scmp.eq.s32.totalorder %s27, 1
    %p276 = por %p274, %p275
    %p277 = scmp.ne.s32.totalorder %s268, %s269
    %p278 = scmp.eq.s32.totalorder %s27, 0
    %p279 = por %p277, %p278
    %p280 = scmp.ne.s32.totalorder %s268, %s269
    %p281 = scmp.eq.s32.totalorder %s28, 1
    %p282 = por %p280, %p281
    %p284 = scmp.ne.s32.totalorder %s269, %s283
    %p285 = scmp.eq.s32.totalorder %s28, 0
    %p286 = por %p284, %p285
    %s288 = sadd.s32 %s287, 1
    %p291 = scmp.eq.s32.totalorder %s22, 1
    %p292 = scmp.ne.s32.totalorder %s287, %s289
    %p293 = scmp.eq.s32.totalorder %s22, 0
    %p294 = por %p292, %p293
    %p295 = scmp.ne.s32.totalorder %s287, %s289
    %p296 = scmp.eq.s32.totalorder %s27, 1
    %p297 = por %p295, %p296
    %p298 = scmp.ne.s32.totalorder %s289, %s290
    %p299 = scmp.eq.s32.totalorder %s27, 0
    %p300 = por %p298, %p299
    %p301 = scmp.ne.s32.totalorder %s289, %s290
    %p302 = scmp.eq.s32.totalorder %s28, 1
    %p303 = por %p301, %p302
    %p305 = scmp.ne.s32.totalorder %s290, %s304
    %p306 = scmp.eq.s32.totalorder %s28, 0
    %p307 = por %p305, %p306
    %s309 = sadd.s32 %s308, 1
    %p312 = scmp.eq.s32.totalorder %s22, 1
    %p313 = scmp.ne.s32.totalorder %s308, %s310
    %p314 = scmp.eq.s32.totalorder %s22, 0
    %p315 = por %p313, %p314
    %p316 = scmp.ne.s32.totalorder %s308, %s310
    %p317 = scmp.eq.s32.totalorder %s27, 1
    %p318 = por %p316, %p317
    %p319 = scmp.ne.s32.totalorder %s310, %s311
    %p320 = scmp.eq.s32.totalorder %s27, 0
    %p321 = por %p319, %p320
    %p322 = scmp.ne.s32.totalorder %s310, %s311
    %p323 = scmp.eq.s32.totalorder %s28, 1
    %p324 = por %p322, %p323
    %p326 = scmp.ne.s32.totalorder %s311, %s325
    %p327 = scmp.eq.s32.totalorder %s28, 0
    %p328 = por %p326, %p327
    %s329 = ssub.s32 %s22, %s29
    %p330 = scmp.eq.s32.totalorder %s329, 0
    %s332 = sadd.s32 %s331, 1
    %s333 = scalar_select %p330, %s331, %s332
    %p336 = pneg %p330
    %p337 = scmp.eq.s32.totalorder %s22, 1
    %p338 = por %p336, %p337
    %p339 = scmp.ne.s32.totalorder %s331, %s334
    %p340 = scmp.eq.s32.totalorder %s22, 0
    %p341 = por %p339, %p340
    %p342 = scmp.ne.s32.totalorder %s331, %s334
    %p343 = scmp.eq.s32.totalorder %s27, 1
    %p344 = por %p342, %p343
    %p345 = scmp.ne.s32.totalorder %s334, %s335
    %p346 = scmp.eq.s32.totalorder %s27, 0
    %p347 = por %p345, %p346
    %p348 = scmp.ne.s32.totalorder %s334, %s335
    %p349 = scmp.eq.s32.totalorder %s28, 1
    %p350 = por %p348, %p349
    %p352 = scmp.ne.s32.totalorder %s335, %s351
    %p353 = scmp.eq.s32.totalorder %s28, 0
    %p354 = por %p352, %p353
    %p355 = scmp.le.s32.totalorder 1, %s22
    %p356 = scmp.lt.s32.totalorder %s22, 3
    %p357 = pnand %p355, %p356
    %p358 = pneg %p357
    // Predicated region
    $region9: #{discriminator_forward.3} parent=5 // pred_check
      _
    $region10: #{discriminator_forward.3} parent=5 // pred_check_branch
      %360 = sbr.rel (%p357) target = $region12
    $region11: #{discriminator_forward.3} parent=5 // pred_region
      %s361 = ssub.s32 %s22, 1
      // Predicated region
      $region13: #{discriminator_forward.3} parent=11 // pred_check
        %p362 = pneg %p69
      $region14: #{discriminator_forward.3} parent=11 // pred_check_branch
        %364 = sbr.rel (%p362) target = $region16
      $region15: #{discriminator_forward.3} parent=11 // pred_region
        _
      $region16: #{discriminator_forward.3} parent=11 // pred_fallthru
        _
      // Predicated region
      $region17: #{discriminator_forward.3} parent=11 // pred_check
        %p365 = pneg %p90
      $region18: #{discriminator_forward.3} parent=11 // pred_check_branch
        %367 = sbr.rel (%p365) target = $region20
      $region19: #{discriminator_forward.3} parent=11 // pred_region
        _
      $region20: #{discriminator_forward.3} parent=11 // pred_fallthru
        _
      // Predicated region
      $region21: #{discriminator_forward.3} parent=11 // pred_check
        %p368 = pneg %p111
      $region22: #{discriminator_forward.3} parent=11 // pred_check_branch
        %370 = sbr.rel (%p368) target = $region24
      $region23: #{discriminator_forward.3} parent=11 // pred_region
        _
      $region24: #{discriminator_forward.3} parent=11 // pred_fallthru
        _
      // Predicated region
      $region25: #{discriminator_forward.3} parent=11 // pred_check
        %p371 = pneg %p132
      $region26: #{discriminator_forward.3} parent=11 // pred_check_branch
        %373 = sbr.rel (%p371) target = $region28
      $region27: #{discriminator_forward.3} parent=11 // pred_region
        _
      $region28: #{discriminator_forward.3} parent=11 // pred_fallthru
        _
      // Predicated region
      $region29: #{discriminator_forward.3} parent=11 // pred_check
        %p374 = pneg %p153
      $region30: #{discriminator_forward.3} parent=11 // pred_check_branch
        %376 = sbr.rel (%p374) target = $region32
      $region31: #{discriminator_forward.3} parent=11 // pred_region
        _
      $region32: #{discriminator_forward.3} parent=11 // pred_fallthru
        _
      // Predicated region
      $region33: #{discriminator_forward.3} parent=11 // pred_check
        %p377 = pneg %p174
      $region34: #{discriminator_forward.3} parent=11 // pred_check_branch
        %379 = sbr.rel (%p377) target = $region36
      $region35: #{discriminator_forward.3} parent=11 // pred_region
        _
      $region36: #{discriminator_forward.3} parent=11 // pred_fallthru
        _
      // Predicated region
      $region37: #{discriminator_forward.3} parent=11 // pred_check
        %p380 = pneg %p195
      $region38: #{discriminator_forward.3} parent=11 // pred_check_branch
        %382 = sbr.rel (%p380) target = $region40
      $region39: #{discriminator_forward.3} parent=11 // pred_region
        _
      $region40: #{discriminator_forward.3} parent=11 // pred_fallthru
        _
      // Predicated region
      $region41: #{discriminator_forward.3} parent=11 // pred_check
        %p383 = pneg %p216
      $region42: #{discriminator_forward.3} parent=11 // pred_check_branch
        %385 = sbr.rel (%p383) target = $region44
      $region43: #{discriminator_forward.3} parent=11 // pred_region
        _
      $region44: #{discriminator_forward.3} parent=11 // pred_fallthru
        _
      // Predicated region
      $region45: #{discriminator_forward.3} parent=11 // pred_check
        %p386 = pneg %p237
      $region46: #{discriminator_forward.3} parent=11 // pred_check_branch
        %388 = sbr.rel (%p386) target = $region48
      $region47: #{discriminator_forward.3} parent=11 // pred_region
        _
      $region48: #{discriminator_forward.3} parent=11 // pred_fallthru
        _
      // Predicated region
      $region49: #{discriminator_forward.3} parent=11 // pred_check
        %p389 = pneg %p258
      $region50: #{discriminator_forward.3} parent=11 // pred_check_branch
        %391 = sbr.rel (%p389) target = $region52
      $region51: #{discriminator_forward.3} parent=11 // pred_region
        _
      $region52: #{discriminator_forward.3} parent=11 // pred_fallthru
        _
      // Predicated region
      $region53: #{discriminator_forward.3} parent=11 // pred_check
        %p392 = pneg %p279
      $region54: #{discriminator_forward.3} parent=11 // pred_check_branch
        %394 = sbr.rel (%p392) target = $region56
      $region55: #{discriminator_forward.3} parent=11 // pred_region
        _
      $region56: #{discriminator_forward.3} parent=11 // pred_fallthru
        _
      // Predicated region
      $region57: #{discriminator_forward.3} parent=11 // pred_check
        %p395 = pneg %p300
      $region58: #{discriminator_forward.3} parent=11 // pred_check_branch
        %397 = sbr.rel (%p395) target = $region60
      $region59: #{discriminator_forward.3} parent=11 // pred_region
        _
      $region60: #{discriminator_forward.3} parent=11 // pred_fallthru
        _
      // Predicated region
      $region61: #{discriminator_forward.3} parent=11 // pred_check
        %p398 = pneg %p321
      $region62: #{discriminator_forward.3} parent=11 // pred_check_branch
        %400 = sbr.rel (%p398) target = $region64
      $region63: #{discriminator_forward.3} parent=11 // pred_region
        _
      $region64: #{discriminator_forward.3} parent=11 // pred_fallthru
        _
    $region12: #{discriminator_forward.3} parent=5 // pred_fallthru
      _
    %p401 = scmp.lt.s32.totalorder %s22, 2
    // Predicated region
    $region65: #{discriminator_forward.3} parent=5 // pred_check
      %p402 = pneg %p401
    $region66: #{discriminator_forward.3} parent=5 // pred_check_branch
      %404 = sbr.rel (%p402) target = $region68
    $region67: #{discriminator_forward.3} parent=5 // pred_region
      // Predicated region
      $region69: #{discriminator_forward.3} parent=67 // pred_check
        %p405 = pneg %p42
      $region70: #{discriminator_forward.3} parent=67 // pred_check_branch
        %407 = sbr.rel (%p405) target = $region72
      $region71: #{discriminator_forward.3} parent=67 // pred_region
        %p408 = scmp.lt.s32.totalorder %s22, 1
        %s409 = scalar_select %p408, %s22, 1
        %s410 = smul.addr %s409, 64
        %s411 = smul.addr %s410, 8
        %s412 = scalar_lea.vmem %s0, %s411
      $region72: #{discriminator_forward.3} parent=67 // pred_fallthru
        _
    $region68: #{discriminator_forward.3} parent=5 // pred_fallthru
      _
    %p413 = scmp.le.s32.totalorder 1, %s22
    %p414 = scmp.lt.s32.totalorder %s22, 3
    %p415 = pnand %p413, %p414
    %p416 = pneg %p415
    // Predicated region
    $region73: #{discriminator_forward.3} parent=5 // pred_check
      _
    $region74: #{discriminator_forward.3} parent=5 // pred_check_branch
      %418 = sbr.rel (%p415) target = $region76
    $region75: #{discriminator_forward.3} parent=5 // pred_region
      %s419 = ssub.s32 %s22, 1
      %p420 = scmp.lt.s32.totalorder %s27, 1
      %s421 = scalar_select %p420, %s27, 1
      %s422 = smul.addr %s421, 64
      %s423 = smul.addr %s422, 8
      %s424 = scalar_lea.vmem %s0, %s423
      %p425 = pneg %p48
      %p426 = pneg %p45
      %p427 = pneg %p69
      %p428 = pneg %p66
      %p429 = pneg %p90
      %p430 = pneg %p87
      %p431 = pneg %p111
      %p432 = pneg %p108
      %p433 = pneg %p132
      %p434 = pneg %p129
      %p435 = pneg %p153
      %p436 = pneg %p150
      %p437 = pneg %p174
      %p438 = pneg %p171
      %p439 = pneg %p195
      %p440 = pneg %p192
      %p441 = pneg %p216
      %p442 = pneg %p213
      %p443 = pneg %p237
      %p444 = pneg %p234
      %p445 = pneg %p258
      %p446 = pneg %p255
      %p447 = pneg %p279
      %p448 = pneg %p276
      %p449 = pneg %p300
      %p450 = pneg %p297
      %p451 = pneg %p321
      %p452 = pneg %p318
      %p453 = pneg %p347
      %p454 = pneg %p344
      %p455 = scmp.lt.s32.totalorder %s27, 1
      %s456 = scalar_select %p455, %s27, 1
      %s457 = scalar_lea.vmem %s14, %s456
      %p458 = scmp.lt.s32.totalorder %s27, 1
      %s459 = scalar_select %p458, %s27, 1
      %s460 = smul.addr %s459, 64
      %s461 = smul.addr %s460, 8
      %s462 = scalar_lea.vmem %s0, %s461
      %p463 = scmp.lt.s32.totalorder %s27, 1
      %s464 = scalar_select %p463, %s27, 1
      %s465 = scalar_lea.vmem %s14, %s464
      %v466 = vld [vmem:[%s1] sm:$0xff]
      %v467 = vld [vmem:[%s1 + $0x8] sm:$0xff]
      %v468 = vld [vmem:[%s1 + $0x10] sm:$0xff]
      %v469 = vld [vmem:[%s1 + $0x18] sm:$0xff]
      %v470 = vld [vmem:[%s1 + $0x20] sm:$0xff]
      %v471 = vld [vmem:[%s1 + $0x28] sm:$0xff]
      %v472 = vld [vmem:[%s1 + $0x30] sm:$0xff]
      %v473 = vld [vmem:[%s1 + $0x38] sm:$0xff]
      %v474 = vld [vmem:[%s462] sm:$0xff]
      %v475 = vld [vmem:[%s462 + $0x8] sm:$0xff]
      %v476 = vld [vmem:[%s462 + $0x10] sm:$0xff]
      %v477 = vld [vmem:[%s462 + $0x18] sm:$0xff]
      %v478 = vld [vmem:[%s462 + $0x20] sm:$0xff]
      %v479 = vld [vmem:[%s462 + $0x28] sm:$0xff]
      %v480 = vld [vmem:[%s462 + $0x30] sm:$0xff]
      %v481 = vld [vmem:[%s462 + $0x38] sm:$0xff]
      %v482 = vld [vmem:[%s462 + $0x40] sm:$0xff]
      %v483 = vld [vmem:[%s462 + $0x48] sm:$0xff]
      %v484 = vld [vmem:[%s462 + $0x50] sm:$0xff]
      %v485 = vld [vmem:[%s462 + $0x58] sm:$0xff]
      %v486 = vld [vmem:[%s462 + $0x60] sm:$0xff]
      %v487 = vld [vmem:[%s462 + $0x68] sm:$0xff]
      %v488 = vld [vmem:[%s462 + $0x70] sm:$0xff]
      %v489 = vld [vmem:[%s462 + $0x78] sm:$0xff]
      %v490 = vld [vmem:[%s462 + $0x80] sm:$0xff]
      %v491 = vld [vmem:[%s462 + $0x88] sm:$0xff]
      %v492 = vld [vmem:[%s462 + $0x90] sm:$0xff]
      %v493 = vld [vmem:[%s462 + $0x98] sm:$0xff]
      %v494 = vld [vmem:[%s462 + $0xa0] sm:$0xff]
      %v495 = vld [vmem:[%s462 + $0xa8] sm:$0xff]
      %v496 = vld [vmem:[%s462 + $0xb0] sm:$0xff]
      %v497 = vld [vmem:[%s462 + $0xb8] sm:$0xff]
      %v498 = vld [vmem:[%s462 + $0xc0] sm:$0xff]
      %v499 = vld [vmem:[%s462 + $0xc8] sm:$0xff]
      %v500 = vld [vmem:[%s462 + $0xd0] sm:$0xff]
      %v501 = vld [vmem:[%s462 + $0xd8] sm:$0xff]
      %v502 = vld [vmem:[%s462 + $0xe0] sm:$0xff]
      %v503 = vld [vmem:[%s462 + $0xe8] sm:$0xff]
      %v504 = vld [vmem:[%s462 + $0xf0] sm:$0xff]
      %v505 = vld [vmem:[%s462 + $0xf8] sm:$0xff]
      %v506 = vld [vmem:[%s462 + $0x100] sm:$0xff]
      %v507 = vld [vmem:[%s462 + $0x108] sm:$0xff]
      %v508 = vld [vmem:[%s462 + $0x110] sm:$0xff]
      %v509 = vld [vmem:[%s462 + $0x118] sm:$0xff]
      %v510 = vld [vmem:[%s462 + $0x120] sm:$0xff]
      %v511 = vld [vmem:[%s462 + $0x128] sm:$0xff]
      %v512 = vld [vmem:[%s462 + $0x130] sm:$0xff]
      %v513 = vld [vmem:[%s462 + $0x138] sm:$0xff]
      %v514 = vld [vmem:[%s462 + $0x140] sm:$0xff]
      %v515 = vld [vmem:[%s462 + $0x148] sm:$0xff]
      %v516 = vld [vmem:[%s462 + $0x150] sm:$0xff]
      %v517 = vld [vmem:[%s462 + $0x158] sm:$0xff]
      %v518 = vld [vmem:[%s462 + $0x160] sm:$0xff]
      %v519 = vld [vmem:[%s462 + $0x168] sm:$0xff]
      %v520 = vld [vmem:[%s462 + $0x170] sm:$0xff]
      %v521 = vld [vmem:[%s462 + $0x178] sm:$0xff]
      %v522 = vld [vmem:[%s462 + $0x180] sm:$0xff]
      %v523 = vld [vmem:[%s462 + $0x188] sm:$0xff]
      %v524 = vld [vmem:[%s462 + $0x190] sm:$0xff]
      %v525 = vld [vmem:[%s462 + $0x198] sm:$0xff]
      %v526 = vld [vmem:[%s462 + $0x1a0] sm:$0xff]
      %v527 = vld [vmem:[%s462 + $0x1a8] sm:$0xff]
      %v528 = vld [vmem:[%s462 + $0x1b0] sm:$0xff]
      %v529 = vld [vmem:[%s462 + $0x1b8] sm:$0xff]
      %v530 = vld [vmem:[%s462 + $0x1c0] sm:$0xff]
      %v531 = vld [vmem:[%s462 + $0x1c8] sm:$0xff]
      %v532 = vld [vmem:[%s462 + $0x1d0] sm:$0xff]
      %v533 = vld [vmem:[%s462 + $0x1d8] sm:$0xff]
      %v534 = vld [vmem:[%s462 + $0x1e0] sm:$0xff]
      %v535 = vld [vmem:[%s462 + $0x1e8] sm:$0xff]
      %v536 = vld [vmem:[%s462 + $0x1f0] sm:$0xff]
      %v537 = vld [vmem:[%s462 + $0x1f8] sm:$0xff]
      %538 = vmatprep.subr.mxu0 %v505
      %539 = vmatpush1.msra.mxu0 %v504
      %540 = vmatprep.subr.mxu0 %v503
      %541 = vmatpush1.msra.mxu0 %v502
      %542 = vmatprep.subr.mxu0 %v501
      %543 = vmatpush1.msra.mxu0 %v500
      %544 = vmatprep.subr.mxu0 %v499
      %545 = vmatpush1.msra.mxu0 %v498
      %546 = vmatprep.subr.mxu0 %v497
      %547 = vmatpush1.msra.mxu0 %v496
      %548 = vmatprep.subr.mxu0 %v495
      %549 = vmatpush1.msra.mxu0 %v494
      %550 = vmatprep.subr.mxu0 %v493
      %551 = vmatpush1.msra.mxu0 %v492
      %552 = vmatprep.subr.mxu0 %v491
      %553 = vmatpush1.msra.mxu0 %v490
      %554 = vmatprep.subr.mxu0 %v489
      %555 = vmatpush1.msra.mxu0 %v488
      %556 = vmatprep.subr.mxu0 %v487
      %557 = vmatpush1.msra.mxu0 %v486
      %558 = vmatprep.subr.mxu0 %v485
      %559 = vmatpush1.msra.mxu0 %v484
      %560 = vmatprep.subr.mxu0 %v483
      %561 = vmatpush1.msra.mxu0 %v482
      %562 = vmatprep.subr.mxu0 %v481
      %563 = vmatpush1.msra.mxu0 %v480
      %564 = vmatprep.subr.mxu0 %v479
      %565 = vmatpush1.msra.mxu0 %v478
      %566 = vmatprep.subr.mxu0 %v477
      %567 = vmatpush1.msra.mxu0 %v476
      %568 = vmatprep.subr.mxu0 %v475
      %569 = vmatpush1.msra.mxu0 %v474
      %570 = vmatprep.subr.mxu0 %v537
      %571 = vmatpush2.msra.mxu0 %v536
      %572 = vmatprep.subr.mxu0 %v535
      %573 = vmatpush2.msra.mxu0 %v534
      %574 = vmatprep.subr.mxu0 %v533
      %575 = vmatpush2.msra.mxu0 %v532
      %576 = vmatprep.subr.mxu0 %v531
      %577 = vmatpush2.msra.mxu0 %v530
      %578 = vmatprep.subr.mxu0 %v529
      %579 = vmatpush2.msra.mxu0 %v528
      %580 = vmatprep.subr.mxu0 %v527
      %581 = vmatpush2.msra.mxu0 %v526
      %582 = vmatprep.subr.mxu0 %v525
      %583 = vmatpush2.msra.mxu0 %v524
      %584 = vmatprep.subr.mxu0 %v523
      %585 = vmatpush2.msra.mxu0 %v522
      %586 = vmatprep.subr.mxu0 %v521
      %587 = vmatpush2.msra.mxu0 %v520
      %588 = vmatprep.subr.mxu0 %v519
      %589 = vmatpush2.msra.mxu0 %v518
      %590 = vmatprep.subr.mxu0 %v517
      %591 = vmatpush2.msra.mxu0 %v516
      %592 = vmatprep.subr.mxu0 %v515
      %593 = vmatpush2.msra.mxu0 %v514
      %594 = vmatprep.subr.mxu0 %v513
      %595 = vmatpush2.msra.mxu0 %v512
      %596 = vmatprep.subr.mxu0 %v511
      %597 = vmatpush2.msra.mxu0 %v510
      %598 = vmatprep.subr.mxu0 %v509
      %599 = vmatpush2.msra.mxu0 %v508
      %600 = vmatprep.subr.mxu0 %v507
      %601 = vmatpush2.msra.mxu0 %v506
      %602 = vmatprep.mubr.f32.mxu0 %v467
      %603 = vmatmul.mubr.f32.gmra.mxu0 %v466
      %v604 = vpop.f32.mrf.mxu0
      %v605 = vadd.f32 0.0, %v604
      %v606 = vpop.f32.mrf.mxu0
      %v607 = vadd.f32 0.0, %v606
      %608 = vmatprep.mubr.f32.mxu0 %v469
      %609 = vmatmul.mubr.f32.gmra.mxu0 %v468
      %v610 = vpop.f32.mrf.mxu0
      %v611 = vadd.f32 0.0, %v610
      %v612 = vpop.f32.mrf.mxu0
      %v613 = vadd.f32 0.0, %v612
      %614 = vmatprep.mubr.f32.mxu0 %v471
      %615 = vmatmul.mubr.f32.gmra.mxu0 %v470
      %v616 = vpop.f32.mrf.mxu0
      %v617 = vadd.f32 0.0, %v616
      %v618 = vpop.f32.mrf.mxu0
      %v619 = vadd.f32 0.0, %v618
      %620 = vmatprep.mubr.f32.mxu0 %v473
      %621 = vmatmul.mubr.f32.gmra.mxu0 %v472
      %v622 = vpop.f32.mrf.mxu0
      %v623 = vadd.f32 0.0, %v622
      %v624 = vpop.f32.mrf.mxu0
      %v625 = vadd.f32 0.0, %v624
      %626 = vdwg.mxu0
      %v627 = vadd.f32 %v605, %v607
      %628 = vadd.xlane.f32.xlu0 %v627
      %v629 = vpop.xlane.xlu0 %628
      %v630 = vadd.f32 %v611, %v613
      %631 = vadd.xlane.f32.xlu0 %v630
      %v632 = vpop.xlane.xlu0 %631
      %v633 = vadd.f32 %v617, %v619
      %634 = vadd.xlane.f32.xlu0 %v633
      %v635 = vpop.xlane.xlu0 %634
      %v636 = vadd.f32 %v623, %v625
      %637 = vadd.xlane.f32.xlu0 %v636
      %v638 = vpop.xlane.xlu0 %637
      %v639 = vrcp.pop 256.0
      %v640 = vmul.f32 %v629, %v639
      %v641 = vmul.f32 %v632, %v639
      %v642 = vmul.f32 %v635, %v639
      %v643 = vmul.f32 %v638, %v639
      %v644 = vsub.f32 %v605, %v640
      %v645 = vsub.f32 %v607, %v640
      %v646 = vsub.f32 %v611, %v641
      %v647 = vsub.f32 %v613, %v641
      %v648 = vsub.f32 %v617, %v642
      %v649 = vsub.f32 %v619, %v642
      %v650 = vsub.f32 %v623, %v643
      %v651 = vsub.f32 %v625, %v643
      %v652 = vmul.f32 %v644, %v644
      %v653 = vmul.f32 %v645, %v645
      %v654 = vmul.f32 %v646, %v646
      %v655 = vmul.f32 %v647, %v647
      %v656 = vmul.f32 %v648, %v648
      %v657 = vmul.f32 %v649, %v649
      %v658 = vmul.f32 %v650, %v650
      %v659 = vmul.f32 %v651, %v651
      %v660 = vadd.f32 %v652, %v653
      %661 = vadd.xlane.f32.xlu0 %v660
      %v662 = vpop.xlane.xlu0 %661
      %v663 = vadd.f32 %v654, %v655
      %664 = vadd.xlane.f32.xlu0 %v663
      %v665 = vpop.xlane.xlu0 %664
      %v666 = vadd.f32 %v656, %v657
      %667 = vadd.xlane.f32.xlu0 %v666
      %v668 = vpop.xlane.xlu0 %667
      %v669 = vadd.f32 %v658, %v659
      %670 = vadd.xlane.f32.xlu0 %v669
      %v671 = vpop.xlane.xlu0 %670
      %v672 = vmul.f32 %v662, %v639
      %v673 = vmul.f32 %v665, %v639
      %v674 = vmul.f32 %v668, %v639
      %v675 = vmul.f32 %v671, %v639
      %v676 = vadd.f32 %v672, 1e-05
      %v677 = vadd.f32 %v673, 1e-05
      %v678 = vadd.f32 %v674, 1e-05
      %v679 = vadd.f32 %v675, 1e-05
      %v680 = vrsqrt.pop %v676
      %v681 = vrsqrt.pop %v677
      %v682 = vrsqrt.pop %v678
      %v683 = vrsqrt.pop %v679
      %v684 = vmul.f32 %v644, %v680
      %v685 = vmul.f32 %v645, %v680
      %v686 = vmul.f32 %v646, %v681
      %v687 = vmul.f32 %v647, %v681
      %v688 = vmul.f32 %v648, %v682
      %v689 = vmul.f32 %v649, %v682
      %v690 = vmul.f32 %v650, %v683
      %v691 = vmul.f32 %v651, %v683
      %v692 = vld [vmem:[%s2] sm:$0xff]
      %v693 = vld [vmem:[%s2 + $0x8] sm:$0xff]
      %v694 = vld [vmem:[%s2 + $0x10] sm:$0xff]
      %v695 = vld [vmem:[%s2 + $0x18] sm:$0xff]
      %697 = vset.pattern.permute.xlu0 0
      %698 = vperm.xlu0 %697, %v692
      %v699 = vpop.permute.xlu0 %698
      %702 = vset.pattern.permute.xlu0 0
      %703 = vperm.xlu0 %702, %v693
      %v704 = vpop.permute.xlu0 %703
      %707 = vset.pattern.permute.xlu0 0
      %708 = vperm.xlu0 %707, %v694
      %v709 = vpop.permute.xlu0 %708
      %712 = vset.pattern.permute.xlu0 0
      %713 = vperm.xlu0 %712, %v695
      %v714 = vpop.permute.xlu0 %713
      %v716 = vmul.f32 %v684, %v699
      %v717 = vmul.f32 %v685, %v699
      %v718 = vmul.f32 %v686, %v704
      %v719 = vmul.f32 %v687, %v704
      %v720 = vmul.f32 %v688, %v709
      %v721 = vmul.f32 %v689, %v709
      %v722 = vmul.f32 %v690, %v714
      %v723 = vmul.f32 %v691, %v714
      %v724 = vld [vmem:[%s3] sm:$0xff]
      %v725 = vld [vmem:[%s3 + $0x8] sm:$0xff]
      %v726 = vld [vmem:[%s3 + $0x10] sm:$0xff]
      %v727 = vld [vmem:[%s3 + $0x18] sm:$0xff]
      %729 = vset.pattern.permute.xlu0 0
      %730 = vperm.xlu0 %729, %v724
      %v731 = vpop.permute.xlu0 %730
      %734 = vset.pattern.permute.xlu0 0
      %735 = vperm.xlu0 %734, %v725
      %v736 = vpop.permute.xlu0 %735
      %739 = vset.pattern.permute.xlu0 0
      %740 = vperm.xlu0 %739, %v726
      %v741 = vpop.permute.xlu0 %740
      %744 = vset.pattern.permute.xlu0 0
      %745 = vperm.xlu0 %744, %v727
      %v746 = vpop.permute.xlu0 %745
      %v748 = vadd.f32 %v716, %v731
      %v749 = vadd.f32 %v717, %v731
      %v750 = vadd.f32 %v718, %v736
      %v751 = vadd.f32 %v719, %v736
      %v752 = vadd.f32 %v720, %v741
      %v753 = vadd.f32 %v721, %v741
      %v754 = vadd.f32 %v722, %v746
      %v755 = vadd.f32 %v723, %v746
      %vm756 = vcmp.gt.f32.partialorder %v748, 0.0
      %vm757 = vcmp.gt.f32.partialorder %v749, 0.0
      %vm758 = vcmp.gt.f32.partialorder %v750, 0.0
      %vm759 = vcmp.gt.f32.partialorder %v751, 0.0
      %vm760 = vcmp.gt.f32.partialorder %v752, 0.0
      %vm761 = vcmp.gt.f32.partialorder %v753, 0.0
      %vm762 = vcmp.gt.f32.partialorder %v754, 0.0
      %vm763 = vcmp.gt.f32.partialorder %v755, 0.0
      %v764 = vmul.f32 %v748, 0.2
      %v765 = vmul.f32 %v749, 0.2
      %v766 = vmul.f32 %v750, 0.2
      %v767 = vmul.f32 %v751, 0.2
      %v768 = vmul.f32 %v752, 0.2
      %v769 = vmul.f32 %v753, 0.2
      %v770 = vmul.f32 %v754, 0.2
      %v771 = vmul.f32 %v755, 0.2
      %v772 = vsel %vm756, %v748, %v764
      %v773 = vsel %vm757, %v749, %v765
      %v774 = vsel %vm758, %v750, %v766
      %v775 = vsel %vm759, %v751, %v767
      %v776 = vsel %vm760, %v752, %v768
      %v777 = vsel %vm761, %v753, %v769
      %v778 = vsel %vm762, %v754, %v770
      %v779 = vsel %vm763, %v755, %v771
      %v780 = vld [vmem:[%s4] sm:$0xff]
      %v781 = vld [vmem:[%s4 + $0x8] sm:$0xff]
      %v782 = vld [vmem:[%s4 + $0x10] sm:$0xff]
      %v783 = vld [vmem:[%s4 + $0x18] sm:$0xff]
      %v784 = vld [vmem:[%s4 + $0x20] sm:$0xff]
      %v785 = vld [vmem:[%s4 + $0x28] sm:$0xff]
      %v786 = vld [vmem:[%s4 + $0x30] sm:$0xff]
      %v787 = vld [vmem:[%s4 + $0x38] sm:$0xff]
      %v788 = vld [vmem:[%s4 + $0x40] sm:$0xff]
      %v789 = vld [vmem:[%s4 + $0x48] sm:$0xff]
      %v790 = vld [vmem:[%s4 + $0x50] sm:$0xff]
      %v791 = vld [vmem:[%s4 + $0x58] sm:$0xff]
      %v792 = vld [vmem:[%s4 + $0x60] sm:$0xff]
      %v793 = vld [vmem:[%s4 + $0x68] sm:$0xff]
      %v794 = vld [vmem:[%s4 + $0x70] sm:$0xff]
      %v795 = vld [vmem:[%s4 + $0x78] sm:$0xff]
      %v796 = vld [vmem:[%s4 + $0x80] sm:$0xff]
      %v797 = vld [vmem:[%s4 + $0x88] sm:$0xff]
      %v798 = vld [vmem:[%s4 + $0x90] sm:$0xff]
      %v799 = vld [vmem:[%s4 + $0x98] sm:$0xff]
      %v800 = vld [vmem:[%s4 + $0xa0] sm:$0xff]
      %v801 = vld [vmem:[%s4 + $0xa8] sm:$0xff]
      %v802 = vld [vmem:[%s4 + $0xb0] sm:$0xff]
      %v803 = vld [vmem:[%s4 + $0xb8] sm:$0xff]
      %v804 = vld [vmem:[%s4 + $0xc0] sm:$0xff]
      %v805 = vld [vmem:[%s4 + $0xc8] sm:$0xff]
      %v806 = vld [vmem:[%s4 + $0xd0] sm:$0xff]
      %v807 = vld [vmem:[%s4 + $0xd8] sm:$0xff]
      %v808 = vld [vmem:[%s4 + $0xe0] sm:$0xff]
      %v809 = vld [vmem:[%s4 + $0xe8] sm:$0xff]
      %v810 = vld [vmem:[%s4 + $0xf0] sm:$0xff]
      %v811 = vld [vmem:[%s4 + $0xf8] sm:$0xff]
      %812 = vmatprep.subr.mxu0 0.0
      %813 = vmatpush1.msra.mxu0 %v795
      %814 = vmatprep.subr.mxu0 0.0
      %815 = vmatpush1.msra.mxu0 %v794
      %816 = vmatprep.subr.mxu0 0.0
      %817 = vmatpush1.msra.mxu0 %v793
      %818 = vmatprep.subr.mxu0 0.0
      %819 = vmatpush1.msra.mxu0 %v792
      %820 = vmatprep.subr.mxu0 0.0
      %821 = vmatpush1.msra.mxu0 %v791
      %822 = vmatprep.subr.mxu0 0.0
      %823 = vmatpush1.msra.mxu0 %v790
      %824 = vmatprep.subr.mxu0 0.0
      %825 = vmatpush1.msra.mxu0 %v789
      %826 = vmatprep.subr.mxu0 0.0
      %827 = vmatpush1.msra.mxu0 %v788
      %828 = vmatprep.subr.mxu0 0.0
      %829 = vmatpush1.msra.mxu0 %v787
      %830 = vmatprep.subr.mxu0 0.0
      %831 = vmatpush1.msra.mxu0 %v786
      %832 = vmatprep.subr.mxu0 0.0
      %833 = vmatpush1.msra.mxu0 %v785
      %834 = vmatprep.subr.mxu0 0.0
      %835 = vmatpush1.msra.mxu0 %v784
      %836 = vmatprep.subr.mxu0 0.0
      %837 = vmatpush1.msra.mxu0 %v783
      %838 = vmatprep.subr.mxu0 0.0
      %839 = vmatpush1.msra.mxu0 %v782
      %840 = vmatprep.subr.mxu0 0.0
      %841 = vmatpush1.msra.mxu0 %v781
      %842 = vmatprep.subr.mxu0 0.0
      %843 = vmatpush1.msra.mxu0 %v780
      %844 = vmatprep.subr.mxu0 0.0
      %845 = vmatpush2.msra.mxu0 %v811
      %846 = vmatprep.subr.mxu0 0.0
      %847 = vmatpush2.msra.mxu0 %v810
      %848 = vmatprep.subr.mxu0 0.0
      %849 = vmatpush2.msra.mxu0 %v809
      %850 = vmatprep.subr.mxu0 0.0
      %851 = vmatpush2.msra.mxu0 %v808
      %852 = vmatprep.subr.mxu0 0.0
      %853 = vmatpush2.msra.mxu0 %v807
      %854 = vmatprep.subr.mxu0 0.0
      %855 = vmatpush2.msra.mxu0 %v806
      %856 = vmatprep.subr.mxu0 0.0
      %857 = vmatpush2.msra.mxu0 %v805
      %858 = vmatprep.subr.mxu0 0.0
      %859 = vmatpush2.msra.mxu0 %v804
      %860 = vmatprep.subr.mxu0 0.0
      %861 = vmatpush2.msra.mxu0 %v803
      %862 = vmatprep.subr.mxu0 0.0
      %863 = vmatpush2.msra.mxu0 %v802
      %864 = vmatprep.subr.mxu0 0.0
      %865 = vmatpush2.msra.mxu0 %v801
      %866 = vmatprep.subr.mxu0 0.0
      %867 = vmatpush2.msra.mxu0 %v800
      %868 = vmatprep.subr.mxu0 0.0
      %869 = vmatpush2.msra.mxu0 %v799
      %870 = vmatprep.subr.mxu0 0.0
      %871 = vmatpush2.msra.mxu0 %v798
      %872 = vmatprep.subr.mxu0 0.0
      %873 = vmatpush2.msra.mxu0 %v797
      %874 = vmatprep.subr.mxu0 0.0
      %875 = vmatpush2.msra.mxu0 %v796
      %876 = vmatprep.mubr.f32.mxu0 %v773
      %877 = vmatmul.mubr.f32.gmra.mxu0 %v772
      %v878 = vpop.f32.mrf.mxu0
      %v879 = vadd.f32 0.0, %v878
      %v880 = vpop.f32.mrf.mxu0
      %881 = vmatprep.mubr.f32.mxu0 %v775
      %882 = vmatmul.mubr.f32.gmra.mxu0 %v774
      %v883 = vpop.f32.mrf.mxu0
      %v884 = vadd.f32 0.0, %v883
      %v885 = vpop.f32.mrf.mxu0
      %886 = vmatprep.mubr.f32.mxu0 %v777
      %887 = vmatmul.mubr.f32.gmra.mxu0 %v776
      %v888 = vpop.f32.mrf.mxu0
      %v889 = vadd.f32 0.0, %v888
      %v890 = vpop.f32.mrf.mxu0
      %891 = vmatprep.mubr.f32.mxu0 %v779
      %892 = vmatmul.mubr.f32.gmra.mxu0 %v778
      %v893 = vpop.f32.mrf.mxu0
      %v894 = vadd.f32 0.0, %v893
      %v895 = vpop.f32.mrf.mxu0
      %896 = vdwg.mxu0
      %s897 = scalar_lea.vmem %s4, 256
      %v898 = vld [vmem:[%s897] sm:$0xff]
      %v899 = vld [vmem:[%s897 + $0x8] sm:$0xff]
      %v900 = vld [vmem:[%s897 + $0x10] sm:$0xff]
      %v901 = vld [vmem:[%s897 + $0x18] sm:$0xff]
      %v902 = vld [vmem:[%s897 + $0x20] sm:$0xff]
      %v903 = vld [vmem:[%s897 + $0x28] sm:$0xff]
      %v904 = vld [vmem:[%s897 + $0x30] sm:$0xff]
      %v905 = vld [vmem:[%s897 + $0x38] sm:$0xff]
      %v906 = vld [vmem:[%s897 + $0x40] sm:$0xff]
      %v907 = vld [vmem:[%s897 + $0x48] sm:$0xff]
      %v908 = vld [vmem:[%s897 + $0x50] sm:$0xff]
      %v909 = vld [vmem:[%s897 + $0x58] sm:$0xff]
      %v910 = vld [vmem:[%s897 + $0x60] sm:$0xff]
      %v911 = vld [vmem:[%s897 + $0x68] sm:$0xff]
      %v912 = vld [vmem:[%s897 + $0x70] sm:$0xff]
      %v913 = vld [vmem:[%s897 + $0x78] sm:$0xff]
      %v914 = vld [vmem:[%s897 + $0x80] sm:$0xff]
      %v915 = vld [vmem:[%s897 + $0x88] sm:$0xff]
      %v916 = vld [vmem:[%s897 + $0x90] sm:$0xff]
      %v917 = vld [vmem:[%s897 + $0x98] sm:$0xff]
      %v918 = vld [vmem:[%s897 + $0xa0] sm:$0xff]
      %v919 = vld [vmem:[%s897 + $0xa8] sm:$0xff]
      %v920 = vld [vmem:[%s897 + $0xb0] sm:$0xff]
      %v921 = vld [vmem:[%s897 + $0xb8] sm:$0xff]
      %v922 = vld [vmem:[%s897 + $0xc0] sm:$0xff]
      %v923 = vld [vmem:[%s897 + $0xc8] sm:$0xff]
      %v924 = vld [vmem:[%s897 + $0xd0] sm:$0xff]
      %v925 = vld [vmem:[%s897 + $0xd8] sm:$0xff]
      %v926 = vld [vmem:[%s897 + $0xe0] sm:$0xff]
      %v927 = vld [vmem:[%s897 + $0xe8] sm:$0xff]
      %v928 = vld [vmem:[%s897 + $0xf0] sm:$0xff]
      %v929 = vld [vmem:[%s897 + $0xf8] sm:$0xff]
      %930 = vmatprep.subr.mxu0 0.0
      %931 = vmatpush1.msra.mxu0 %v913
      %932 = vmatprep.subr.mxu0 0.0
      %933 = vmatpush1.msra.mxu0 %v912
      %934 = vmatprep.subr.mxu0 0.0
      %935 = vmatpush1.msra.mxu0 %v911
      %936 = vmatprep.subr.mxu0 0.0
      %937 = vmatpush1.msra.mxu0 %v910
      %938 = vmatprep.subr.mxu0 0.0
      %939 = vmatpush1.msra.mxu0 %v909
      %940 = vmatprep.subr.mxu0 0.0
      %941 = vmatpush1.msra.mxu0 %v908
      %942 = vmatprep.subr.mxu0 0.0
      %943 = vmatpush1.msra.mxu0 %v907
      %944 = vmatprep.subr.mxu0 0.0
      %945 = vmatpush1.msra.mxu0 %v906
      %946 = vmatprep.subr.mxu0 0.0
      %947 = vmatpush1.msra.mxu0 %v905
      %948 = vmatprep.subr.mxu0 0.0
      %949 = vmatpush1.msra.mxu0 %v904
      %950 = vmatprep.subr.mxu0 0.0
      %951 = vmatpush1.msra.mxu0 %v903
      %952 = vmatprep.subr.mxu0 0.0
      %953 = vmatpush1.msra.mxu0 %v902
      %954 = vmatprep.subr.mxu0 0.0
      %955 = vmatpush1.msra.mxu0 %v901
      %956 = vmatprep.subr.mxu0 0.0
      %957 = vmatpush1.msra.mxu0 %v900
      %958 = vmatprep.subr.mxu0 0.0
      %959 = vmatpush1.msra.mxu0 %v899
      %960 = vmatprep.subr.mxu0 0.0
      %961 = vmatpush1.msra.mxu0 %v898
      %962 = vmatprep.subr.mxu0 0.0
      %963 = vmatpush2.msra.mxu0 %v929
      %964 = vmatprep.subr.mxu0 0.0
      %965 = vmatpush2.msra.mxu0 %v928
      %966 = vmatprep.subr.mxu0 0.0
      %967 = vmatpush2.msra.mxu0 %v927
      %968 = vmatprep.subr.mxu0 0.0
      %969 = vmatpush2.msra.mxu0 %v926
      %970 = vmatprep.subr.mxu0 0.0
      %971 = vmatpush2.msra.mxu0 %v925
      %972 = vmatprep.subr.mxu0 0.0
      %973 = vmatpush2.msra.mxu0 %v924
      %974 = vmatprep.subr.mxu0 0.0
      %975 = vmatpush2.msra.mxu0 %v923
      %976 = vmatprep.subr.mxu0 0.0
      %977 = vmatpush2.msra.mxu0 %v922
      %978 = vmatprep.subr.mxu0 0.0
      %979 = vmatpush2.msra.mxu0 %v921
      %980 = vmatprep.subr.mxu0 0.0
      %981 = vmatpush2.msra.mxu0 %v920
      %982 = vmatprep.subr.mxu0 0.0
      %983 = vmatpush2.msra.mxu0 %v919
      %984 = vmatprep.subr.mxu0 0.0
      %985 = vmatpush2.msra.mxu0 %v918
      %986 = vmatprep.subr.mxu0 0.0
      %987 = vmatpush2.msra.mxu0 %v917
      %988 = vmatprep.subr.mxu0 0.0
      %989 = vmatpush2.msra.mxu0 %v916
      %990 = vmatprep.subr.mxu0 0.0
      %991 = vmatpush2.msra.mxu0 %v915
      %992 = vmatprep.subr.mxu0 0.0
      %993 = vmatpush2.msra.mxu0 %v914
      %994 = vmatprep.mubr.f32.mxu0 %v773
      %995 = vmatmul.mubr.f32.gmra.mxu0 %v772
      %v996 = vpop.f32.mrf.mxu0
      %v997 = vadd.f32 0.0, %v996
      %v998 = vpop.f32.mrf.mxu0
      %999 = vmatprep.mubr.f32.mxu0 %v775
      %1000 = vmatmul.mubr.f32.gmra.mxu0 %v774
      %v1001 = vpop.f32.mrf.mxu0
      %v1002 = vadd.f32 0.0, %v1001
      %v1003 = vpop.f32.mrf.mxu0
      %1004 = vmatprep.mubr.f32.mxu0 %v777
      %1005 = vmatmul.mubr.f32.gmra.mxu0 %v776
      %v1006 = vpop.f32.mrf.mxu0
      %v1007 = vadd.f32 0.0, %v1006
      %v1008 = vpop.f32.mrf.mxu0
      %1009 = vmatprep.mubr.f32.mxu0 %v779
      %1010 = vmatmul.mubr.f32.gmra.mxu0 %v778
      %v1011 = vpop.f32.mrf.mxu0
      %v1012 = vadd.f32 0.0, %v1011
      %v1013 = vpop.f32.mrf.mxu0
      %1014 = vdwg.mxu0
      %s1015 = scalar_lea.vmem %s4, 512
      %v1016 = vld [vmem:[%s1015] sm:$0xff]
      %v1017 = vld [vmem:[%s1015 + $0x8] sm:$0xff]
      %v1018 = vld [vmem:[%s1015 + $0x10] sm:$0xff]
      %v1019 = vld [vmem:[%s1015 + $0x18] sm:$0xff]
      %v1020 = vld [vmem:[%s1015 + $0x20] sm:$0xff]
      %v1021 = vld [vmem:[%s1015 + $0x28] sm:$0xff]
      %v1022 = vld [vmem:[%s1015 + $0x30] sm:$0xff]
      %v1023 = vld [vmem:[%s1015 + $0x38] sm:$0xff]
      %v1024 = vld [vmem:[%s1015 + $0x40] sm:$0xff]
      %v1025 = vld [vmem:[%s1015 + $0x48] sm:$0xff]
      %v1026 = vld [vmem:[%s1015 + $0x50] sm:$0xff]
      %v1027 = vld [vmem:[%s1015 + $0x58] sm:$0xff]
      %v1028 = vld [vmem:[%s1015 + $0x60] sm:$0xff]
      %v1029 = vld [vmem:[%s1015 + $0x68] sm:$0xff]
      %v1030 = vld [vmem:[%s1015 + $0x70] sm:$0xff]
      %v1031 = vld [vmem:[%s1015 + $0x78] sm:$0xff]
      %v1032 = vld [vmem:[%s1015 + $0x80] sm:$0xff]
      %v1033 = vld [vmem:[%s1015 + $0x88] sm:$0xff]
      %v1034 = vld [vmem:[%s1015 + $0x90] sm:$0xff]
      %v1035 = vld [vmem:[%s1015 + $0x98] sm:$0xff]
      %v1036 = vld [vmem:[%s1015 + $0xa0] sm:$0xff]
      %v1037 = vld [vmem:[%s1015 + $0xa8] sm:$0xff]
      %v1038 = vld [vmem:[%s1015 + $0xb0] sm:$0xff]
      %v1039 = vld [vmem:[%s1015 + $0xb8] sm:$0xff]
      %v1040 = vld [vmem:[%s1015 + $0xc0] sm:$0xff]
      %v1041 = vld [vmem:[%s1015 + $0xc8] sm:$0xff]
      %v1042 = vld [vmem:[%s1015 + $0xd0] sm:$0xff]
      %v1043 = vld [vmem:[%s1015 + $0xd8] sm:$0xff]
      %v1044 = vld [vmem:[%s1015 + $0xe0] sm:$0xff]
      %v1045 = vld [vmem:[%s1015 + $0xe8] sm:$0xff]
      %v1046 = vld [vmem:[%s1015 + $0xf0] sm:$0xff]
      %v1047 = vld [vmem:[%s1015 + $0xf8] sm:$0xff]
      %1048 = vmatprep.subr.mxu0 0.0
      %1049 = vmatpush1.msra.mxu0 %v1031
      %1050 = vmatprep.subr.mxu0 0.0
      %1051 = vmatpush1.msra.mxu0 %v1030
      %1052 = vmatprep.subr.mxu0 0.0
      %1053 = vmatpush1.msra.mxu0 %v1029
      %1054 = vmatprep.subr.mxu0 0.0
      %1055 = vmatpush1.msra.mxu0 %v1028
      %1056 = vmatprep.subr.mxu0 0.0
      %1057 = vmatpush1.msra.mxu0 %v1027
      %1058 = vmatprep.subr.mxu0 0.0
      %1059 = vmatpush1.msra.mxu0 %v1026
      %1060 = vmatprep.subr.mxu0 0.0
      %1061 = vmatpush1.msra.mxu0 %v1025
      %1062 = vmatprep.subr.mxu0 0.0
      %1063 = vmatpush1.msra.mxu0 %v1024
      %1064 = vmatprep.subr.mxu0 0.0
      %1065 = vmatpush1.msra.mxu0 %v1023
      %1066 = vmatprep.subr.mxu0 0.0
      %1067 = vmatpush1.msra.mxu0 %v1022
      %1068 = vmatprep.subr.mxu0 0.0
      %1069 = vmatpush1.msra.mxu0 %v1021
      %1070 = vmatprep.subr.mxu0 0.0
      %1071 = vmatpush1.msra.mxu0 %v1020
      %1072 = vmatprep.subr.mxu0 0.0
      %1073 = vmatpush1.msra.mxu0 %v1019
      %1074 = vmatprep.subr.mxu0 0.0
      %1075 = vmatpush1.msra.mxu0 %v1018
      %1076 = vmatprep.subr.mxu0 0.0
      %1077 = vmatpush1.msra.mxu0 %v1017
      %1078 = vmatprep.subr.mxu0 0.0
      %1079 = vmatpush1.msra.mxu0 %v1016
      %1080 = vmatprep.subr.mxu0 0.0
      %1081 = vmatpush2.msra.mxu0 %v1047
      %1082 = vmatprep.subr.mxu0 0.0
      %1083 = vmatpush2.msra.mxu0 %v1046
      %1084 = vmatprep.subr.mxu0 0.0
      %1085 = vmatpush2.msra.mxu0 %v1045
      %1086 = vmatprep.subr.mxu0 0.0
      %1087 = vmatpush2.msra.mxu0 %v1044
      %1088 = vmatprep.subr.mxu0 0.0
      %1089 = vmatpush2.msra.mxu0 %v1043
      %1090 = vmatprep.subr.mxu0 0.0
      %1091 = vmatpush2.msra.mxu0 %v1042
      %1092 = vmatprep.subr.mxu0 0.0
      %1093 = vmatpush2.msra.mxu0 %v1041
      %1094 = vmatprep.subr.mxu0 0.0
      %1095 = vmatpush2.msra.mxu0 %v1040
      %1096 = vmatprep.subr.mxu0 0.0
      %1097 = vmatpush2.msra.mxu0 %v1039
      %1098 = vmatprep.subr.mxu0 0.0
      %1099 = vmatpush2.msra.mxu0 %v1038
      %1100 = vmatprep.subr.mxu0 0.0
      %1101 = vmatpush2.msra.mxu0 %v1037
      %1102 = vmatprep.subr.mxu0 0.0
      %1103 = vmatpush2.msra.mxu0 %v1036
      %1104 = vmatprep.subr.mxu0 0.0
      %1105 = vmatpush2.msra.mxu0 %v1035
      %1106 = vmatprep.subr.mxu0 0.0
      %1107 = vmatpush2.msra.mxu0 %v1034
      %1108 = vmatprep.subr.mxu0 0.0
      %1109 = vmatpush2.msra.mxu0 %v1033
      %1110 = vmatprep.subr.mxu0 0.0
      %1111 = vmatpush2.msra.mxu0 %v1032
      %1112 = vmatprep.mubr.f32.mxu0 %v773
      %1113 = vmatmul.mubr.f32.gmra.mxu0 %v772
      %v1114 = vpop.f32.mrf.mxu0
      %v1115 = vadd.f32 0.0, %v1114
      %v1116 = vpop.f32.mrf.mxu0
      %1117 = vmatprep.mubr.f32.mxu0 %v775
      %1118 = vmatmul.mubr.f32.gmra.mxu0 %v774
      %v1119 = vpop.f32.mrf.mxu0
      %v1120 = vadd.f32 0.0, %v1119
      %v1121 = vpop.f32.mrf.mxu0
      %1122 = vmatprep.mubr.f32.mxu0 %v777
      %1123 = vmatmul.mubr.f32.gmra.mxu0 %v776
      %v1124 = vpop.f32.mrf.mxu0
      %v1125 = vadd.f32 0.0, %v1124
      %v1126 = vpop.f32.mrf.mxu0
      %1127 = vmatprep.mubr.f32.mxu0 %v779
      %1128 = vmatmul.mubr.f32.gmra.mxu0 %v778
      %v1129 = vpop.f32.mrf.mxu0
      %v1130 = vadd.f32 0.0, %v1129
      %v1131 = vpop.f32.mrf.mxu0
      %1132 = vdwg.mxu0
      %s1133 = scalar_lea.vmem %s4, 768
      %v1134 = vld [vmem:[%s1133] sm:$0xff]
      %v1135 = vld [vmem:[%s1133 + $0x8] sm:$0xff]
      %v1136 = vld [vmem:[%s1133 + $0x10] sm:$0xff]
      %v1137 = vld [vmem:[%s1133 + $0x18] sm:$0xff]
      %v1138 = vld [vmem:[%s1133 + $0x20] sm:$0xff]
      %v1139 = vld [vmem:[%s1133 + $0x28] sm:$0xff]
      %v1140 = vld [vmem:[%s1133 + $0x30] sm:$0xff]
      %v1141 = vld [vmem:[%s1133 + $0x38] sm:$0xff]
      %v1142 = vld [vmem:[%s1133 + $0x40] sm:$0xff]
      %v1143 = vld [vmem:[%s1133 + $0x48] sm:$0xff]
      %v1144 = vld [vmem:[%s1133 + $0x50] sm:$0xff]
      %v1145 = vld [vmem:[%s1133 + $0x58] sm:$0xff]
      %v1146 = vld [vmem:[%s1133 + $0x60] sm:$0xff]
      %v1147 = vld [vmem:[%s1133 + $0x68] sm:$0xff]
      %v1148 = vld [vmem:[%s1133 + $0x70] sm:$0xff]
      %v1149 = vld [vmem:[%s1133 + $0x78] sm:$0xff]
      %v1150 = vld [vmem:[%s1133 + $0x80] sm:$0xff]
      %v1151 = vld [vmem:[%s1133 + $0x88] sm:$0xff]
      %v1152 = vld [vmem:[%s1133 + $0x90] sm:$0xff]
      %v1153 = vld [vmem:[%s1133 + $0x98] sm:$0xff]
      %v1154 = vld [vmem:[%s1133 + $0xa0] sm:$0xff]
      %v1155 = vld [vmem:[%s1133 + $0xa8] sm:$0xff]
      %v1156 = vld [vmem:[%s1133 + $0xb0] sm:$0xff]
      %v1157 = vld [vmem:[%s1133 + $0xb8] sm:$0xff]
      %v1158 = vld [vmem:[%s1133 + $0xc0] sm:$0xff]
      %v1159 = vld [vmem:[%s1133 + $0xc8] sm:$0xff]
      %v1160 = vld [vmem:[%s1133 + $0xd0] sm:$0xff]
      %v1161 = vld [vmem:[%s1133 + $0xd8] sm:$0xff]
      %v1162 = vld [vmem:[%s1133 + $0xe0] sm:$0xff]
      %v1163 = vld [vmem:[%s1133 + $0xe8] sm:$0xff]
      %v1164 = vld [vmem:[%s1133 + $0xf0] sm:$0xff]
      %v1165 = vld [vmem:[%s1133 + $0xf8] sm:$0xff]
      %1166 = vmatprep.subr.mxu0 0.0
      %1167 = vmatpush1.msra.mxu0 %v1149
      %1168 = vmatprep.subr.mxu0 0.0
      %1169 = vmatpush1.msra.mxu0 %v1148
      %1170 = vmatprep.subr.mxu0 0.0
      %1171 = vmatpush1.msra.mxu0 %v1147
      %1172 = vmatprep.subr.mxu0 0.0
      %1173 = vmatpush1.msra.mxu0 %v1146
      %1174 = vmatprep.subr.mxu0 0.0
      %1175 = vmatpush1.msra.mxu0 %v1145
      %1176 = vmatprep.subr.mxu0 0.0
      %1177 = vmatpush1.msra.mxu0 %v1144
      %1178 = vmatprep.subr.mxu0 0.0
      %1179 = vmatpush1.msra.mxu0 %v1143
      %1180 = vmatprep.subr.mxu0 0.0
      %1181 = vmatpush1.msra.mxu0 %v1142
      %1182 = vmatprep.subr.mxu0 0.0
      %1183 = vmatpush1.msra.mxu0 %v1141
      %1184 = vmatprep.subr.mxu0 0.0
      %1185 = vmatpush1.msra.mxu0 %v1140
      %1186 = vmatprep.subr.mxu0 0.0
      %1187 = vmatpush1.msra.mxu0 %v1139
      %1188 = vmatprep.subr.mxu0 0.0
      %1189 = vmatpush1.msra.mxu0 %v1138
      %1190 = vmatprep.subr.mxu0 0.0
      %1191 = vmatpush1.msra.mxu0 %v1137
      %1192 = vmatprep.subr.mxu0 0.0
      %1193 = vmatpush1.msra.mxu0 %v1136
      %1194 = vmatprep.subr.mxu0 0.0
      %1195 = vmatpush1.msra.mxu0 %v1135
      %1196 = vmatprep.subr.mxu0 0.0
      %1197 = vmatpush1.msra.mxu0 %v1134
      %1198 = vmatprep.subr.mxu0 0.0
      %1199 = vmatpush2.msra.mxu0 %v1165
      %1200 = vmatprep.subr.mxu0 0.0
      %1201 = vmatpush2.msra.mxu0 %v1164
      %1202 = vmatprep.subr.mxu0 0.0
      %1203 = vmatpush2.msra.mxu0 %v1163
      %1204 = vmatprep.subr.mxu0 0.0
      %1205 = vmatpush2.msra.mxu0 %v1162
      %1206 = vmatprep.subr.mxu0 0.0
      %1207 = vmatpush2.msra.mxu0 %v1161
      %1208 = vmatprep.subr.mxu0 0.0
      %1209 = vmatpush2.msra.mxu0 %v1160
      %1210 = vmatprep.subr.mxu0 0.0
      %1211 = vmatpush2.msra.mxu0 %v1159
      %1212 = vmatprep.subr.mxu0 0.0
      %1213 = vmatpush2.msra.mxu0 %v1158
      %1214 = vmatprep.subr.mxu0 0.0
      %1215 = vmatpush2.msra.mxu0 %v1157
      %1216 = vmatprep.subr.mxu0 0.0
      %1217 = vmatpush2.msra.mxu0 %v1156
      %1218 = vmatprep.subr.mxu0 0.0
      %1219 = vmatpush2.msra.mxu0 %v1155
      %1220 = vmatprep.subr.mxu0 0.0
      %1221 = vmatpush2.msra.mxu0 %v1154
      %1222 = vmatprep.subr.mxu0 0.0
      %1223 = vmatpush2.msra.mxu0 %v1153
      %1224 = vmatprep.subr.mxu0 0.0
      %1225 = vmatpush2.msra.mxu0 %v1152
      %1226 = vmatprep.subr.mxu0 0.0
      %1227 = vmatpush2.msra.mxu0 %v1151
      %1228 = vmatprep.subr.mxu0 0.0
      %1229 = vmatpush2.msra.mxu0 %v1150
      %1230 = vmatprep.mubr.f32.mxu0 %v773
      %1231 = vmatmul.mubr.f32.gmra.mxu0 %v772
      %v1232 = vpop.f32.mrf.mxu0
      %v1233 = vadd.f32 0.0, %v1232
      %v1234 = vpop.f32.mrf.mxu0
      %1235 = vmatprep.mubr.f32.mxu0 %v775
      %1236 = vmatmul.mubr.f32.gmra.mxu0 %v774
      %v1237 = vpop.f32.mrf.mxu0
      %v1238 = vadd.f32 0.0, %v1237
      %v1239 = vpop.f32.mrf.mxu0
      %1240 = vmatprep.mubr.f32.mxu0 %v777
      %1241 = vmatmul.mubr.f32.gmra.mxu0 %v776
      %v1242 = vpop.f32.mrf.mxu0
      %v1243 = vadd.f32 0.0, %v1242
      %v1244 = vpop.f32.mrf.mxu0
      %1245 = vmatprep.mubr.f32.mxu0 %v779
      %1246 = vmatmul.mubr.f32.gmra.mxu0 %v778
      %v1247 = vpop.f32.mrf.mxu0
      %v1248 = vadd.f32 0.0, %v1247
      %v1249 = vpop.f32.mrf.mxu0
      %1250 = vdwg.mxu0
      %s1251 = scalar_lea.vmem %s4, 1024
      %v1252 = vld [vmem:[%s1251] sm:$0xff]
      %v1253 = vld [vmem:[%s1251 + $0x8] sm:$0xff]
      %v1254 = vld [vmem:[%s1251 + $0x10] sm:$0xff]
      %v1255 = vld [vmem:[%s1251 + $0x18] sm:$0xff]
      %v1256 = vld [vmem:[%s1251 + $0x20] sm:$0xff]
      %v1257 = vld [vmem:[%s1251 + $0x28] sm:$0xff]
      %v1258 = vld [vmem:[%s1251 + $0x30] sm:$0xff]
      %v1259 = vld [vmem:[%s1251 + $0x38] sm:$0xff]
      %v1260 = vld [vmem:[%s1251 + $0x40] sm:$0xff]
      %v1261 = vld [vmem:[%s1251 + $0x48] sm:$0xff]
      %v1262 = vld [vmem:[%s1251 + $0x50] sm:$0xff]
      %v1263 = vld [vmem:[%s1251 + $0x58] sm:$0xff]
      %v1264 = vld [vmem:[%s1251 + $0x60] sm:$0xff]
      %v1265 = vld [vmem:[%s1251 + $0x68] sm:$0xff]
      %v1266 = vld [vmem:[%s1251 + $0x70] sm:$0xff]
      %v1267 = vld [vmem:[%s1251 + $0x78] sm:$0xff]
      %v1268 = vld [vmem:[%s1251 + $0x80] sm:$0xff]
      %v1269 = vld [vmem:[%s1251 + $0x88] sm:$0xff]
      %v1270 = vld [vmem:[%s1251 + $0x90] sm:$0xff]
      %v1271 = vld [vmem:[%s1251 + $0x98] sm:$0xff]
      %v1272 = vld [vmem:[%s1251 + $0xa0] sm:$0xff]
      %v1273 = vld [vmem:[%s1251 + $0xa8] sm:$0xff]
      %v1274 = vld [vmem:[%s1251 + $0xb0] sm:$0xff]
      %v1275 = vld [vmem:[%s1251 + $0xb8] sm:$0xff]
      %v1276 = vld [vmem:[%s1251 + $0xc0] sm:$0xff]
      %v1277 = vld [vmem:[%s1251 + $0xc8] sm:$0xff]
      %v1278 = vld [vmem:[%s1251 + $0xd0] sm:$0xff]
      %v1279 = vld [vmem:[%s1251 + $0xd8] sm:$0xff]
      %v1280 = vld [vmem:[%s1251 + $0xe0] sm:$0xff]
      %v1281 = vld [vmem:[%s1251 + $0xe8] sm:$0xff]
      %v1282 = vld [vmem:[%s1251 + $0xf0] sm:$0xff]
      %v1283 = vld [vmem:[%s1251 + $0xf8] sm:$0xff]
      %1284 = vmatprep.subr.mxu0 0.0
      %1285 = vmatpush1.msra.mxu0 %v1267
      %1286 = vmatprep.subr.mxu0 0.0
      %1287 = vmatpush1.msra.mxu0 %v1266
      %1288 = vmatprep.subr.mxu0 0.0
      %1289 = vmatpush1.msra.mxu0 %v1265
      %1290 = vmatprep.subr.mxu0 0.0
      %1291 = vmatpush1.msra.mxu0 %v1264
      %1292 = vmatprep.subr.mxu0 0.0
      %1293 = vmatpush1.msra.mxu0 %v1263
      %1294 = vmatprep.subr.mxu0 0.0
      %1295 = vmatpush1.msra.mxu0 %v1262
      %1296 = vmatprep.subr.mxu0 0.0
      %1297 = vmatpush1.msra.mxu0 %v1261
      %1298 = vmatprep.subr.mxu0 0.0
      %1299 = vmatpush1.msra.mxu0 %v1260
      %1300 = vmatprep.subr.mxu0 0.0
      %1301 = vmatpush1.msra.mxu0 %v1259
      %1302 = vmatprep.subr.mxu0 0.0
      %1303 = vmatpush1.msra.mxu0 %v1258
      %1304 = vmatprep.subr.mxu0 0.0
      %1305 = vmatpush1.msra.mxu0 %v1257
      %1306 = vmatprep.subr.mxu0 0.0
      %1307 = vmatpush1.msra.mxu0 %v1256
      %1308 = vmatprep.subr.mxu0 0.0
      %1309 = vmatpush1.msra.mxu0 %v1255
      %1310 = vmatprep.subr.mxu0 0.0
      %1311 = vmatpush1.msra.mxu0 %v1254
      %1312 = vmatprep.subr.mxu0 0.0
      %1313 = vmatpush1.msra.mxu0 %v1253
      %1314 = vmatprep.subr.mxu0 0.0
      %1315 = vmatpush1.msra.mxu0 %v1252
      %1316 = vmatprep.subr.mxu0 0.0
      %1317 = vmatpush2.msra.mxu0 %v1283
      %1318 = vmatprep.subr.mxu0 0.0
      %1319 = vmatpush2.msra.mxu0 %v1282
      %1320 = vmatprep.subr.mxu0 0.0
      %1321 = vmatpush2.msra.mxu0 %v1281
      %1322 = vmatprep.subr.mxu0 0.0
      %1323 = vmatpush2.msra.mxu0 %v1280
      %1324 = vmatprep.subr.mxu0 0.0
      %1325 = vmatpush2.msra.mxu0 %v1279
      %1326 = vmatprep.subr.mxu0 0.0
      %1327 = vmatpush2.msra.mxu0 %v1278
      %1328 = vmatprep.subr.mxu0 0.0
      %1329 = vmatpush2.msra.mxu0 %v1277
      %1330 = vmatprep.subr.mxu0 0.0
      %1331 = vmatpush2.msra.mxu0 %v1276
      %1332 = vmatprep.subr.mxu0 0.0
      %1333 = vmatpush2.msra.mxu0 %v1275
      %1334 = vmatprep.subr.mxu0 0.0
      %1335 = vmatpush2.msra.mxu0 %v1274
      %1336 = vmatprep.subr.mxu0 0.0
      %1337 = vmatpush2.msra.mxu0 %v1273
      %1338 = vmatprep.subr.mxu0 0.0
      %1339 = vmatpush2.msra.mxu0 %v1272
      %1340 = vmatprep.subr.mxu0 0.0
      %1341 = vmatpush2.msra.mxu0 %v1271
      %1342 = vmatprep.subr.mxu0 0.0
      %1343 = vmatpush2.msra.mxu0 %v1270
      %1344 = vmatprep.subr.mxu0 0.0
      %1345 = vmatpush2.msra.mxu0 %v1269
      %1346 = vmatprep.subr.mxu0 0.0
      %1347 = vmatpush2.msra.mxu0 %v1268
      %1348 = vmatprep.mubr.f32.mxu0 %v773
      %1349 = vmatmul.mubr.f32.gmra.mxu0 %v772
      %v1350 = vpop.f32.mrf.mxu0
      %v1351 = vadd.f32 0.0, %v1350
      %v1352 = vpop.f32.mrf.mxu0
      %1353 = vmatprep.mubr.f32.mxu0 %v775
      %1354 = vmatmul.mubr.f32.gmra.mxu0 %v774
      %v1355 = vpop.f32.mrf.mxu0
      %v1356 = vadd.f32 0.0, %v1355
      %v1357 = vpop.f32.mrf.mxu0
      %1358 = vmatprep.mubr.f32.mxu0 %v777
      %1359 = vmatmul.mubr.f32.gmra.mxu0 %v776
      %v1360 = vpop.f32.mrf.mxu0
      %v1361 = vadd.f32 0.0, %v1360
      %v1362 = vpop.f32.mrf.mxu0
      %1363 = vmatprep.mubr.f32.mxu0 %v779
      %1364 = vmatmul.mubr.f32.gmra.mxu0 %v778
      %v1365 = vpop.f32.mrf.mxu0
      %v1366 = vadd.f32 0.0, %v1365
      %v1367 = vpop.f32.mrf.mxu0
      %1368 = vdwg.mxu0
      %s1369 = scalar_lea.vmem %s4, 1280
      %v1370 = vld [vmem:[%s1369] sm:$0xff]
      %v1371 = vld [vmem:[%s1369 + $0x8] sm:$0xff]
      %v1372 = vld [vmem:[%s1369 + $0x10] sm:$0xff]
      %v1373 = vld [vmem:[%s1369 + $0x18] sm:$0xff]
      %v1374 = vld [vmem:[%s1369 + $0x20] sm:$0xff]
      %v1375 = vld [vmem:[%s1369 + $0x28] sm:$0xff]
      %v1376 = vld [vmem:[%s1369 + $0x30] sm:$0xff]
      %v1377 = vld [vmem:[%s1369 + $0x38] sm:$0xff]
      %v1378 = vld [vmem:[%s1369 + $0x40] sm:$0xff]
      %v1379 = vld [vmem:[%s1369 + $0x48] sm:$0xff]
      %v1380 = vld [vmem:[%s1369 + $0x50] sm:$0xff]
      %v1381 = vld [vmem:[%s1369 + $0x58] sm:$0xff]
      %v1382 = vld [vmem:[%s1369 + $0x60] sm:$0xff]
      %v1383 = vld [vmem:[%s1369 + $0x68] sm:$0xff]
      %v1384 = vld [vmem:[%s1369 + $0x70] sm:$0xff]
      %v1385 = vld [vmem:[%s1369 + $0x78] sm:$0xff]
      %v1386 = vld [vmem:[%s1369 + $0x80] sm:$0xff]
      %v1387 = vld [vmem:[%s1369 + $0x88] sm:$0xff]
      %v1388 = vld [vmem:[%s1369 + $0x90] sm:$0xff]
      %v1389 = vld [vmem:[%s1369 + $0x98] sm:$0xff]
      %v1390 = vld [vmem:[%s1369 + $0xa0] sm:$0xff]
      %v1391 = vld [vmem:[%s1369 + $0xa8] sm:$0xff]
      %v1392 = vld [vmem:[%s1369 + $0xb0] sm:$0xff]
      %v1393 = vld [vmem:[%s1369 + $0xb8] sm:$0xff]
      %v1394 = vld [vmem:[%s1369 + $0xc0] sm:$0xff]
      %v1395 = vld [vmem:[%s1369 + $0xc8] sm:$0xff]
      %v1396 = vld [vmem:[%s1369 + $0xd0] sm:$0xff]
      %v1397 = vld [vmem:[%s1369 + $0xd8] sm:$0xff]
      %v1398 = vld [vmem:[%s1369 + $0xe0] sm:$0xff]
      %v1399 = vld [vmem:[%s1369 + $0xe8] sm:$0xff]
      %v1400 = vld [vmem:[%s1369 + $0xf0] sm:$0xff]
      %v1401 = vld [vmem:[%s1369 + $0xf8] sm:$0xff]
      %1402 = vmatprep.subr.mxu0 0.0
      %1403 = vmatpush1.msra.mxu0 %v1385
      %1404 = vmatprep.subr.mxu0 0.0
      %1405 = vmatpush1.msra.mxu0 %v1384
      %1406 = vmatprep.subr.mxu0 0.0
      %1407 = vmatpush1.msra.mxu0 %v1383
      %1408 = vmatprep.subr.mxu0 0.0
      %1409 = vmatpush1.msra.mxu0 %v1382
      %1410 = vmatprep.subr.mxu0 0.0
      %1411 = vmatpush1.msra.mxu0 %v1381
      %1412 = vmatprep.subr.mxu0 0.0
      %1413 = vmatpush1.msra.mxu0 %v1380
      %1414 = vmatprep.subr.mxu0 0.0
      %1415 = vmatpush1.msra.mxu0 %v1379
      %1416 = vmatprep.subr.mxu0 0.0
      %1417 = vmatpush1.msra.mxu0 %v1378
      %1418 = vmatprep.subr.mxu0 0.0
      %1419 = vmatpush1.msra.mxu0 %v1377
      %1420 = vmatprep.subr.mxu0 0.0
      %1421 = vmatpush1.msra.mxu0 %v1376
      %1422 = vmatprep.subr.mxu0 0.0
      %1423 = vmatpush1.msra.mxu0 %v1375
      %1424 = vmatprep.subr.mxu0 0.0
      %1425 = vmatpush1.msra.mxu0 %v1374
      %1426 = vmatprep.subr.mxu0 0.0
      %1427 = vmatpush1.msra.mxu0 %v1373
      %1428 = vmatprep.subr.mxu0 0.0
      %1429 = vmatpush1.msra.mxu0 %v1372
      %1430 = vmatprep.subr.mxu0 0.0
      %1431 = vmatpush1.msra.mxu0 %v1371
      %1432 = vmatprep.subr.mxu0 0.0
      %1433 = vmatpush1.msra.mxu0 %v1370
      %1434 = vmatprep.subr.mxu0 0.0
      %1435 = vmatpush2.msra.mxu0 %v1401
      %1436 = vmatprep.subr.mxu0 0.0
      %1437 = vmatpush2.msra.mxu0 %v1400
      %1438 = vmatprep.subr.mxu0 0.0
      %1439 = vmatpush2.msra.mxu0 %v1399
      %1440 = vmatprep.subr.mxu0 0.0
      %1441 = vmatpush2.msra.mxu0 %v1398
      %1442 = vmatprep.subr.mxu0 0.0
      %1443 = vmatpush2.msra.mxu0 %v1397
      %1444 = vmatprep.subr.mxu0 0.0
      %1445 = vmatpush2.msra.mxu0 %v1396
      %1446 = vmatprep.subr.mxu0 0.0
      %1447 = vmatpush2.msra.mxu0 %v1395
      %1448 = vmatprep.subr.mxu0 0.0
      %1449 = vmatpush2.msra.mxu0 %v1394
      %1450 = vmatprep.subr.mxu0 0.0
      %1451 = vmatpush2.msra.mxu0 %v1393
      %1452 = vmatprep.subr.mxu0 0.0
      %1453 = vmatpush2.msra.mxu0 %v1392
      %1454 = vmatprep.subr.mxu0 0.0
      %1455 = vmatpush2.msra.mxu0 %v1391
      %1456 = vmatprep.subr.mxu0 0.0
      %1457 = vmatpush2.msra.mxu0 %v1390
      %1458 = vmatprep.subr.mxu0 0.0
      %1459 = vmatpush2.msra.mxu0 %v1389
      %1460 = vmatprep.subr.mxu0 0.0
      %1461 = vmatpush2.msra.mxu0 %v1388
      %1462 = vmatprep.subr.mxu0 0.0
      %1463 = vmatpush2.msra.mxu0 %v1387
      %1464 = vmatprep.subr.mxu0 0.0
      %1465 = vmatpush2.msra.mxu0 %v1386
      %1466 = vmatprep.mubr.f32.mxu0 %v773
      %1467 = vmatmul.mubr.f32.gmra.mxu0 %v772
      %v1468 = vpop.f32.mrf.mxu0
      %v1469 = vadd.f32 0.0, %v1468
      %v1470 = vpop.f32.mrf.mxu0
      %1471 = vmatprep.mubr.f32.mxu0 %v775
      %1472 = vmatmul.mubr.f32.gmra.mxu0 %v774
      %v1473 = vpop.f32.mrf.mxu0
      %v1474 = vadd.f32 0.0, %v1473
      %v1475 = vpop.f32.mrf.mxu0
      %1476 = vmatprep.mubr.f32.mxu0 %v777
      %1477 = vmatmul.mubr.f32.gmra.mxu0 %v776
      %v1478 = vpop.f32.mrf.mxu0
      %v1479 = vadd.f32 0.0, %v1478
      %v1480 = vpop.f32.mrf.mxu0
      %1481 = vmatprep.mubr.f32.mxu0 %v779
      %1482 = vmatmul.mubr.f32.gmra.mxu0 %v778
      %v1483 = vpop.f32.mrf.mxu0
      %v1484 = vadd.f32 0.0, %v1483
      %v1485 = vpop.f32.mrf.mxu0
      %1486 = vdwg.mxu0
      %s1487 = scalar_lea.vmem %s4, 1536
      %v1488 = vld [vmem:[%s1487] sm:$0xff]
      %v1489 = vld [vmem:[%s1487 + $0x8] sm:$0xff]
      %v1490 = vld [vmem:[%s1487 + $0x10] sm:$0xff]
      %v1491 = vld [vmem:[%s1487 + $0x18] sm:$0xff]
      %v1492 = vld [vmem:[%s1487 + $0x20] sm:$0xff]
      %v1493 = vld [vmem:[%s1487 + $0x28] sm:$0xff]
      %v1494 = vld [vmem:[%s1487 + $0x30] sm:$0xff]
      %v1495 = vld [vmem:[%s1487 + $0x38] sm:$0xff]
      %v1496 = vld [vmem:[%s1487 + $0x40] sm:$0xff]
      %v1497 = vld [vmem:[%s1487 + $0x48] sm:$0xff]
      %v1498 = vld [vmem:[%s1487 + $0x50] sm:$0xff]
      %v1499 = vld [vmem:[%s1487 + $0x58] sm:$0xff]
      %v1500 = vld [vmem:[%s1487 + $0x60] sm:$0xff]
      %v1501 = vld [vmem:[%s1487 + $0x68] sm:$0xff]
      %v1502 = vld [vmem:[%s1487 + $0x70] sm:$0xff]
      %v1503 = vld [vmem:[%s1487 + $0x78] sm:$0xff]
      %v1504 = vld [vmem:[%s1487 + $0x80] sm:$0xff]
      %v1505 = vld [vmem:[%s1487 + $0x88] sm:$0xff]
      %v1506 = vld [vmem:[%s1487 + $0x90] sm:$0xff]
      %v1507 = vld [vmem:[%s1487 + $0x98] sm:$0xff]
      %v1508 = vld [vmem:[%s1487 + $0xa0] sm:$0xff]
      %v1509 = vld [vmem:[%s1487 + $0xa8] sm:$0xff]
      %v1510 = vld [vmem:[%s1487 + $0xb0] sm:$0xff]
      %v1511 = vld [vmem:[%s1487 + $0xb8] sm:$0xff]
      %v1512 = vld [vmem:[%s1487 + $0xc0] sm:$0xff]
      %v1513 = vld [vmem:[%s1487 + $0xc8] sm:$0xff]
      %v1514 = vld [vmem:[%s1487 + $0xd0] sm:$0xff]
      %v1515 = vld [vmem:[%s1487 + $0xd8] sm:$0xff]
      %v1516 = vld [vmem:[%s1487 + $0xe0] sm:$0xff]
      %v1517 = vld [vmem:[%s1487 + $0xe8] sm:$0xff]
      %v1518 = vld [vmem:[%s1487 + $0xf0] sm:$0xff]
      %v1519 = vld [vmem:[%s1487 + $0xf8] sm:$0xff]
      %1520 = vmatprep.subr.mxu0 0.0
      %1521 = vmatpush1.msra.mxu0 %v1503
      %1522 = vmatprep.subr.mxu0 0.0
      %1523 = vmatpush1.msra.mxu0 %v1502
      %1524 = vmatprep.subr.mxu0 0.0
      %1525 = vmatpush1.msra.mxu0 %v1501
      %1526 = vmatprep.subr.mxu0 0.0
      %1527 = vmatpush1.msra.mxu0 %v1500
      %1528 = vmatprep.subr.mxu0 0.0
      %1529 = vmatpush1.msra.mxu0 %v1499
      %1530 = vmatprep.subr.mxu0 0.0
      %1531 = vmatpush1.msra.mxu0 %v1498
      %1532 = vmatprep.subr.mxu0 0.0
      %1533 = vmatpush1.msra.mxu0 %v1497
      %1534 = vmatprep.subr.mxu0 0.0
      %1535 = vmatpush1.msra.mxu0 %v1496
      %1536 = vmatprep.subr.mxu0 0.0
      %1537 = vmatpush1.msra.mxu0 %v1495
      %1538 = vmatprep.subr.mxu0 0.0
      %1539 = vmatpush1.msra.mxu0 %v1494
      %1540 = vmatprep.subr.mxu0 0.0
      %1541 = vmatpush1.msra.mxu0 %v1493
      %1542 = vmatprep.subr.mxu0 0.0
      %1543 = vmatpush1.msra.mxu0 %v1492
      %1544 = vmatprep.subr.mxu0 0.0
      %1545 = vmatpush1.msra.mxu0 %v1491
      %1546 = vmatprep.subr.mxu0 0.0
      %1547 = vmatpush1.msra.mxu0 %v1490
      %1548 = vmatprep.subr.mxu0 0.0
      %1549 = vmatpush1.msra.mxu0 %v1489
      %1550 = vmatprep.subr.mxu0 0.0
      %1551 = vmatpush1.msra.mxu0 %v1488
      %1552 = vmatprep.subr.mxu0 0.0
      %1553 = vmatpush2.msra.mxu0 %v1519
      %1554 = vmatprep.subr.mxu0 0.0
      %1555 = vmatpush2.msra.mxu0 %v1518
      %1556 = vmatprep.subr.mxu0 0.0
      %1557 = vmatpush2.msra.mxu0 %v1517
      %1558 = vmatprep.subr.mxu0 0.0
      %1559 = vmatpush2.msra.mxu0 %v1516
      %1560 = vmatprep.subr.mxu0 0.0
      %1561 = vmatpush2.msra.mxu0 %v1515
      %1562 = vmatprep.subr.mxu0 0.0
      %1563 = vmatpush2.msra.mxu0 %v1514
      %1564 = vmatprep.subr.mxu0 0.0
      %1565 = vmatpush2.msra.mxu0 %v1513
      %1566 = vmatprep.subr.mxu0 0.0
      %1567 = vmatpush2.msra.mxu0 %v1512
      %1568 = vmatprep.subr.mxu0 0.0
      %1569 = vmatpush2.msra.mxu0 %v1511
      %1570 = vmatprep.subr.mxu0 0.0
      %1571 = vmatpush2.msra.mxu0 %v1510
      %1572 = vmatprep.subr.mxu0 0.0
      %1573 = vmatpush2.msra.mxu0 %v1509
      %1574 = vmatprep.subr.mxu0 0.0
      %1575 = vmatpush2.msra.mxu0 %v1508
      %1576 = vmatprep.subr.mxu0 0.0
      %1577 = vmatpush2.msra.mxu0 %v1507
      %1578 = vmatprep.subr.mxu0 0.0
      %1579 = vmatpush2.msra.mxu0 %v1506
      %1580 = vmatprep.subr.mxu0 0.0
      %1581 = vmatpush2.msra.mxu0 %v1505
      %1582 = vmatprep.subr.mxu0 0.0
      %1583 = vmatpush2.msra.mxu0 %v1504
      %1584 = vmatprep.mubr.f32.mxu0 %v773
      %1585 = vmatmul.mubr.f32.gmra.mxu0 %v772
      %v1586 = vpop.f32.mrf.mxu0
      %v1587 = vadd.f32 0.0, %v1586
      %v1588 = vpop.f32.mrf.mxu0
      %1589 = vmatprep.mubr.f32.mxu0 %v775
      %1590 = vmatmul.mubr.f32.gmra.mxu0 %v774
      %v1591 = vpop.f32.mrf.mxu0
      %v1592 = vadd.f32 0.0, %v1591
      %v1593 = vpop.f32.mrf.mxu0
      %1594 = vmatprep.mubr.f32.mxu0 %v777
      %1595 = vmatmul.mubr.f32.gmra.mxu0 %v776
      %v1596 = vpop.f32.mrf.mxu0
      %v1597 = vadd.f32 0.0, %v1596
      %v1598 = vpop.f32.mrf.mxu0
      %1599 = vmatprep.mubr.f32.mxu0 %v779
      %1600 = vmatmul.mubr.f32.gmra.mxu0 %v778
      %v1601 = vpop.f32.mrf.mxu0
      %v1602 = vadd.f32 0.0, %v1601
      %v1603 = vpop.f32.mrf.mxu0
      %1604 = vdwg.mxu0
      %s1605 = scalar_lea.vmem %s4, 1792
      %v1606 = vld [vmem:[%s1605] sm:$0xff]
      %v1607 = vld [vmem:[%s1605 + $0x8] sm:$0xff]
      %v1608 = vld [vmem:[%s1605 + $0x10] sm:$0xff]
      %v1609 = vld [vmem:[%s1605 + $0x18] sm:$0xff]
      %v1610 = vld [vmem:[%s1605 + $0x20] sm:$0xff]
      %v1611 = vld [vmem:[%s1605 + $0x28] sm:$0xff]
      %v1612 = vld [vmem:[%s1605 + $0x30] sm:$0xff]
      %v1613 = vld [vmem:[%s1605 + $0x38] sm:$0xff]
      %v1614 = vld [vmem:[%s1605 + $0x40] sm:$0xff]
      %v1615 = vld [vmem:[%s1605 + $0x48] sm:$0xff]
      %v1616 = vld [vmem:[%s1605 + $0x50] sm:$0xff]
      %v1617 = vld [vmem:[%s1605 + $0x58] sm:$0xff]
      %v1618 = vld [vmem:[%s1605 + $0x60] sm:$0xff]
      %v1619 = vld [vmem:[%s1605 + $0x68] sm:$0xff]
      %v1620 = vld [vmem:[%s1605 + $0x70] sm:$0xff]
      %v1621 = vld [vmem:[%s1605 + $0x78] sm:$0xff]
      %v1622 = vld [vmem:[%s1605 + $0x80] sm:$0xff]
      %v1623 = vld [vmem:[%s1605 + $0x88] sm:$0xff]
      %v1624 = vld [vmem:[%s1605 + $0x90] sm:$0xff]
      %v1625 = vld [vmem:[%s1605 + $0x98] sm:$0xff]
      %v1626 = vld [vmem:[%s1605 + $0xa0] sm:$0xff]
      %v1627 = vld [vmem:[%s1605 + $0xa8] sm:$0xff]
      %v1628 = vld [vmem:[%s1605 + $0xb0] sm:$0xff]
      %v1629 = vld [vmem:[%s1605 + $0xb8] sm:$0xff]
      %v1630 = vld [vmem:[%s1605 + $0xc0] sm:$0xff]
      %v1631 = vld [vmem:[%s1605 + $0xc8] sm:$0xff]
      %v1632 = vld [vmem:[%s1605 + $0xd0] sm:$0xff]
      %v1633 = vld [vmem:[%s1605 + $0xd8] sm:$0xff]
      %v1634 = vld [vmem:[%s1605 + $0xe0] sm:$0xff]
      %v1635 = vld [vmem:[%s1605 + $0xe8] sm:$0xff]
      %v1636 = vld [vmem:[%s1605 + $0xf0] sm:$0xff]
      %v1637 = vld [vmem:[%s1605 + $0xf8] sm:$0xff]
      %1638 = vmatprep.subr.mxu0 0.0
      %1639 = vmatpush1.msra.mxu0 %v1621
      %1640 = vmatprep.subr.mxu0 0.0
      %1641 = vmatpush1.msra.mxu0 %v1620
      %1642 = vmatprep.subr.mxu0 0.0
      %1643 = vmatpush1.msra.mxu0 %v1619
      %1644 = vmatprep.subr.mxu0 0.0
      %1645 = vmatpush1.msra.mxu0 %v1618
      %1646 = vmatprep.subr.mxu0 0.0
      %1647 = vmatpush1.msra.mxu0 %v1617
      %1648 = vmatprep.subr.mxu0 0.0
      %1649 = vmatpush1.msra.mxu0 %v1616
      %1650 = vmatprep.subr.mxu0 0.0
      %1651 = vmatpush1.msra.mxu0 %v1615
      %1652 = vmatprep.subr.mxu0 0.0
      %1653 = vmatpush1.msra.mxu0 %v1614
      %1654 = vmatprep.subr.mxu0 0.0
      %1655 = vmatpush1.msra.mxu0 %v1613
      %1656 = vmatprep.subr.mxu0 0.0
      %1657 = vmatpush1.msra.mxu0 %v1612
      %1658 = vmatprep.subr.mxu0 0.0
      %1659 = vmatpush1.msra.mxu0 %v1611
      %1660 = vmatprep.subr.mxu0 0.0
      %1661 = vmatpush1.msra.mxu0 %v1610
      %1662 = vmatprep.subr.mxu0 0.0
      %1663 = vmatpush1.msra.mxu0 %v1609
      %1664 = vmatprep.subr.mxu0 0.0
      %1665 = vmatpush1.msra.mxu0 %v1608
      %1666 = vmatprep.subr.mxu0 0.0
      %1667 = vmatpush1.msra.mxu0 %v1607
      %1668 = vmatprep.subr.mxu0 0.0
      %1669 = vmatpush1.msra.mxu0 %v1606
      %1670 = vmatprep.subr.mxu0 0.0
      %1671 = vmatpush2.msra.mxu0 %v1637
      %1672 = vmatprep.subr.mxu0 0.0
      %1673 = vmatpush2.msra.mxu0 %v1636
      %1674 = vmatprep.subr.mxu0 0.0
      %1675 = vmatpush2.msra.mxu0 %v1635
      %1676 = vmatprep.subr.mxu0 0.0
      %1677 = vmatpush2.msra.mxu0 %v1634
      %1678 = vmatprep.subr.mxu0 0.0
      %1679 = vmatpush2.msra.mxu0 %v1633
      %1680 = vmatprep.subr.mxu0 0.0
      %1681 = vmatpush2.msra.mxu0 %v1632
      %1682 = vmatprep.subr.mxu0 0.0
      %1683 = vmatpush2.msra.mxu0 %v1631
      %1684 = vmatprep.subr.mxu0 0.0
      %1685 = vmatpush2.msra.mxu0 %v1630
      %1686 = vmatprep.subr.mxu0 0.0
      %1687 = vmatpush2.msra.mxu0 %v1629
      %1688 = vmatprep.subr.mxu0 0.0
      %1689 = vmatpush2.msra.mxu0 %v1628
      %1690 = vmatprep.subr.mxu0 0.0
      %1691 = vmatpush2.msra.mxu0 %v1627
      %1692 = vmatprep.subr.mxu0 0.0
      %1693 = vmatpush2.msra.mxu0 %v1626
      %1694 = vmatprep.subr.mxu0 0.0
      %1695 = vmatpush2.msra.mxu0 %v1625
      %1696 = vmatprep.subr.mxu0 0.0
      %1697 = vmatpush2.msra.mxu0 %v1624
      %1698 = vmatprep.subr.mxu0 0.0
      %1699 = vmatpush2.msra.mxu0 %v1623
      %1700 = vmatprep.subr.mxu0 0.0
      %1701 = vmatpush2.msra.mxu0 %v1622
      %1702 = vmatprep.mubr.f32.mxu0 %v773
      %1703 = vmatmul.mubr.f32.gmra.mxu0 %v772
      %v1704 = vpop.f32.mrf.mxu0
      %v1705 = vadd.f32 0.0, %v1704
      %v1706 = vpop.f32.mrf.mxu0
      %1707 = vmatprep.mubr.f32.mxu0 %v775
      %1708 = vmatmul.mubr.f32.gmra.mxu0 %v774
      %v1709 = vpop.f32.mrf.mxu0
      %v1710 = vadd.f32 0.0, %v1709
      %v1711 = vpop.f32.mrf.mxu0
      %1712 = vmatprep.mubr.f32.mxu0 %v777
      %1713 = vmatmul.mubr.f32.gmra.mxu0 %v776
      %v1714 = vpop.f32.mrf.mxu0
      %v1715 = vadd.f32 0.0, %v1714
      %v1716 = vpop.f32.mrf.mxu0
      %1717 = vmatprep.mubr.f32.mxu0 %v779
      %1718 = vmatmul.mubr.f32.gmra.mxu0 %v778
      %v1719 = vpop.f32.mrf.mxu0
      %v1720 = vadd.f32 0.0, %v1719
      %v1721 = vpop.f32.mrf.mxu0
      %1722 = vdwg.mxu0
      %s1723 = scalar_lea.vmem %s4, 2048
      %v1724 = vld [vmem:[%s1723] sm:$0xff]
      %v1725 = vld [vmem:[%s1723 + $0x8] sm:$0xff]
      %v1726 = vld [vmem:[%s1723 + $0x10] sm:$0xff]
      %v1727 = vld [vmem:[%s1723 + $0x18] sm:$0xff]
      %v1728 = vld [vmem:[%s1723 + $0x20] sm:$0xff]
      %v1729 = vld [vmem:[%s1723 + $0x28] sm:$0xff]
      %v1730 = vld [vmem:[%s1723 + $0x30] sm:$0xff]
      %v1731 = vld [vmem:[%s1723 + $0x38] sm:$0xff]
      %v1732 = vld [vmem:[%s1723 + $0x40] sm:$0xff]
      %v1733 = vld [vmem:[%s1723 + $0x48] sm:$0xff]
      %v1734 = vld [vmem:[%s1723 + $0x50] sm:$0xff]
      %v1735 = vld [vmem:[%s1723 + $0x58] sm:$0xff]
      %v1736 = vld [vmem:[%s1723 + $0x60] sm:$0xff]
      %v1737 = vld [vmem:[%s1723 + $0x68] sm:$0xff]
      %v1738 = vld [vmem:[%s1723 + $0x70] sm:$0xff]
      %v1739 = vld [vmem:[%s1723 + $0x78] sm:$0xff]
      %v1740 = vld [vmem:[%s1723 + $0x80] sm:$0xff]
      %v1741 = vld [vmem:[%s1723 + $0x88] sm:$0xff]
      %v1742 = vld [vmem:[%s1723 + $0x90] sm:$0xff]
      %v1743 = vld [vmem:[%s1723 + $0x98] sm:$0xff]
      %v1744 = vld [vmem:[%s1723 + $0xa0] sm:$0xff]
      %v1745 = vld [vmem:[%s1723 + $0xa8] sm:$0xff]
      %v1746 = vld [vmem:[%s1723 + $0xb0] sm:$0xff]
      %v1747 = vld [vmem:[%s1723 + $0xb8] sm:$0xff]
      %v1748 = vld [vmem:[%s1723 + $0xc0] sm:$0xff]
      %v1749 = vld [vmem:[%s1723 + $0xc8] sm:$0xff]
      %v1750 = vld [vmem:[%s1723 + $0xd0] sm:$0xff]
      %v1751 = vld [vmem:[%s1723 + $0xd8] sm:$0xff]
      %v1752 = vld [vmem:[%s1723 + $0xe0] sm:$0xff]
      %v1753 = vld [vmem:[%s1723 + $0xe8] sm:$0xff]
      %v1754 = vld [vmem:[%s1723 + $0xf0] sm:$0xff]
      %v1755 = vld [vmem:[%s1723 + $0xf8] sm:$0xff]
      %1756 = vmatprep.subr.mxu0 0.0
      %1757 = vmatpush1.msra.mxu0 %v1739
      %1758 = vmatprep.subr.mxu0 0.0
      %1759 = vmatpush1.msra.mxu0 %v1738
      %1760 = vmatprep.subr.mxu0 0.0
      %1761 = vmatpush1.msra.mxu0 %v1737
      %1762 = vmatprep.subr.mxu0 0.0
      %1763 = vmatpush1.msra.mxu0 %v1736
      %1764 = vmatprep.subr.mxu0 0.0
      %1765 = vmatpush1.msra.mxu0 %v1735
      %1766 = vmatprep.subr.mxu0 0.0
      %1767 = vmatpush1.msra.mxu0 %v1734
      %1768 = vmatprep.subr.mxu0 0.0
      %1769 = vmatpush1.msra.mxu0 %v1733
      %1770 = vmatprep.subr.mxu0 0.0
      %1771 = vmatpush1.msra.mxu0 %v1732
      %1772 = vmatprep.subr.mxu0 0.0
      %1773 = vmatpush1.msra.mxu0 %v1731
      %1774 = vmatprep.subr.mxu0 0.0
      %1775 = vmatpush1.msra.mxu0 %v1730
      %1776 = vmatprep.subr.mxu0 0.0
      %1777 = vmatpush1.msra.mxu0 %v1729
      %1778 = vmatprep.subr.mxu0 0.0
      %1779 = vmatpush1.msra.mxu0 %v1728
      %1780 = vmatprep.subr.mxu0 0.0
      %1781 = vmatpush1.msra.mxu0 %v1727
      %1782 = vmatprep.subr.mxu0 0.0
      %1783 = vmatpush1.msra.mxu0 %v1726
      %1784 = vmatprep.subr.mxu0 0.0
      %1785 = vmatpush1.msra.mxu0 %v1725
      %1786 = vmatprep.subr.mxu0 0.0
      %1787 = vmatpush1.msra.mxu0 %v1724
      %1788 = vmatprep.subr.mxu0 0.0
      %1789 = vmatpush2.msra.mxu0 %v1755
      %1790 = vmatprep.subr.mxu0 0.0
      %1791 = vmatpush2.msra.mxu0 %v1754
      %1792 = vmatprep.subr.mxu0 0.0
      %1793 = vmatpush2.msra.mxu0 %v1753
      %1794 = vmatprep.subr.mxu0 0.0
      %1795 = vmatpush2.msra.mxu0 %v1752
      %1796 = vmatprep.subr.mxu0 0.0
      %1797 = vmatpush2.msra.mxu0 %v1751
      %1798 = vmatprep.subr.mxu0 0.0
      %1799 = vmatpush2.msra.mxu0 %v1750
      %1800 = vmatprep.subr.mxu0 0.0
      %1801 = vmatpush2.msra.mxu0 %v1749
      %1802 = vmatprep.subr.mxu0 0.0
      %1803 = vmatpush2.msra.mxu0 %v1748
      %1804 = vmatprep.subr.mxu0 0.0
      %1805 = vmatpush2.msra.mxu0 %v1747
      %1806 = vmatprep.subr.mxu0 0.0
      %1807 = vmatpush2.msra.mxu0 %v1746
      %1808 = vmatprep.subr.mxu0 0.0
      %1809 = vmatpush2.msra.mxu0 %v1745
      %1810 = vmatprep.subr.mxu0 0.0
      %1811 = vmatpush2.msra.mxu0 %v1744
      %1812 = vmatprep.subr.mxu0 0.0
      %1813 = vmatpush2.msra.mxu0 %v1743
      %1814 = vmatprep.subr.mxu0 0.0
      %1815 = vmatpush2.msra.mxu0 %v1742
      %1816 = vmatprep.subr.mxu0 0.0
      %1817 = vmatpush2.msra.mxu0 %v1741
      %1818 = vmatprep.subr.mxu0 0.0
      %1819 = vmatpush2.msra.mxu0 %v1740
      %1820 = vmatprep.mubr.f32.mxu0 %v773
      %1821 = vmatmul.mubr.f32.gmra.mxu0 %v772
      %v1822 = vpop.f32.mrf.mxu0
      %v1823 = vadd.f32 0.0, %v1822
      %v1824 = vpop.f32.mrf.mxu0
      %1825 = vmatprep.mubr.f32.mxu0 %v775
      %1826 = vmatmul.mubr.f32.gmra.mxu0 %v774
      %v1827 = vpop.f32.mrf.mxu0
      %v1828 = vadd.f32 0.0, %v1827
      %v1829 = vpop.f32.mrf.mxu0
      %1830 = vmatprep.mubr.f32.mxu0 %v777
      %1831 = vmatmul.mubr.f32.gmra.mxu0 %v776
      %v1832 = vpop.f32.mrf.mxu0
      %v1833 = vadd.f32 0.0, %v1832
      %v1834 = vpop.f32.mrf.mxu0
      %1835 = vmatprep.mubr.f32.mxu0 %v779
      %1836 = vmatmul.mubr.f32.gmra.mxu0 %v778
      %v1837 = vpop.f32.mrf.mxu0
      %v1838 = vadd.f32 0.0, %v1837
      %v1839 = vpop.f32.mrf.mxu0
      %1840 = vdwg.mxu0
      %s1841 = scalar_lea.vmem %s4, 2304
      %v1842 = vld [vmem:[%s1841] sm:$0xff]
      %v1843 = vld [vmem:[%s1841 + $0x8] sm:$0xff]
      %v1844 = vld [vmem:[%s1841 + $0x10] sm:$0xff]
      %v1845 = vld [vmem:[%s1841 + $0x18] sm:$0xff]
      %v1846 = vld [vmem:[%s1841 + $0x20] sm:$0xff]
      %v1847 = vld [vmem:[%s1841 + $0x28] sm:$0xff]
      %v1848 = vld [vmem:[%s1841 + $0x30] sm:$0xff]
      %v1849 = vld [vmem:[%s1841 + $0x38] sm:$0xff]
      %v1850 = vld [vmem:[%s1841 + $0x40] sm:$0xff]
      %v1851 = vld [vmem:[%s1841 + $0x48] sm:$0xff]
      %v1852 = vld [vmem:[%s1841 + $0x50] sm:$0xff]
      %v1853 = vld [vmem:[%s1841 + $0x58] sm:$0xff]
      %v1854 = vld [vmem:[%s1841 + $0x60] sm:$0xff]
      %v1855 = vld [vmem:[%s1841 + $0x68] sm:$0xff]
      %v1856 = vld [vmem:[%s1841 + $0x70] sm:$0xff]
      %v1857 = vld [vmem:[%s1841 + $0x78] sm:$0xff]
      %v1858 = vld [vmem:[%s1841 + $0x80] sm:$0xff]
      %v1859 = vld [vmem:[%s1841 + $0x88] sm:$0xff]
      %v1860 = vld [vmem:[%s1841 + $0x90] sm:$0xff]
      %v1861 = vld [vmem:[%s1841 + $0x98] sm:$0xff]
      %v1862 = vld [vmem:[%s1841 + $0xa0] sm:$0xff]
      %v1863 = vld [vmem:[%s1841 + $0xa8] sm:$0xff]
      %v1864 = vld [vmem:[%s1841 + $0xb0] sm:$0xff]
      %v1865 = vld [vmem:[%s1841 + $0xb8] sm:$0xff]
      %v1866 = vld [vmem:[%s1841 + $0xc0] sm:$0xff]
      %v1867 = vld [vmem:[%s1841 + $0xc8] sm:$0xff]
      %v1868 = vld [vmem:[%s1841 + $0xd0] sm:$0xff]
      %v1869 = vld [vmem:[%s1841 + $0xd8] sm:$0xff]
      %v1870 = vld [vmem:[%s1841 + $0xe0] sm:$0xff]
      %v1871 = vld [vmem:[%s1841 + $0xe8] sm:$0xff]
      %v1872 = vld [vmem:[%s1841 + $0xf0] sm:$0xff]
      %v1873 = vld [vmem:[%s1841 + $0xf8] sm:$0xff]
      %1874 = vmatprep.subr.mxu0 0.0
      %1875 = vmatpush1.msra.mxu0 %v1857
      %1876 = vmatprep.subr.mxu0 0.0
      %1877 = vmatpush1.msra.mxu0 %v1856
      %1878 = vmatprep.subr.mxu0 0.0
      %1879 = vmatpush1.msra.mxu0 %v1855
      %1880 = vmatprep.subr.mxu0 0.0
      %1881 = vmatpush1.msra.mxu0 %v1854
      %1882 = vmatprep.subr.mxu0 0.0
      %1883 = vmatpush1.msra.mxu0 %v1853
      %1884 = vmatprep.subr.mxu0 0.0
      %1885 = vmatpush1.msra.mxu0 %v1852
      %1886 = vmatprep.subr.mxu0 0.0
      %1887 = vmatpush1.msra.mxu0 %v1851
      %1888 = vmatprep.subr.mxu0 0.0
      %1889 = vmatpush1.msra.mxu0 %v1850
      %1890 = vmatprep.subr.mxu0 0.0
      %1891 = vmatpush1.msra.mxu0 %v1849
      %1892 = vmatprep.subr.mxu0 0.0
      %1893 = vmatpush1.msra.mxu0 %v1848
      %1894 = vmatprep.subr.mxu0 0.0
      %1895 = vmatpush1.msra.mxu0 %v1847
      %1896 = vmatprep.subr.mxu0 0.0
      %1897 = vmatpush1.msra.mxu0 %v1846
      %1898 = vmatprep.subr.mxu0 0.0
      %1899 = vmatpush1.msra.mxu0 %v1845
      %1900 = vmatprep.subr.mxu0 0.0
      %1901 = vmatpush1.msra.mxu0 %v1844
      %1902 = vmatprep.subr.mxu0 0.0
      %1903 = vmatpush1.msra.mxu0 %v1843
      %1904 = vmatprep.subr.mxu0 0.0
      %1905 = vmatpush1.msra.mxu0 %v1842
      %1906 = vmatprep.subr.mxu0 0.0
      %1907 = vmatpush2.msra.mxu0 %v1873
      %1908 = vmatprep.subr.mxu0 0.0
      %1909 = vmatpush2.msra.mxu0 %v1872
      %1910 = vmatprep.subr.mxu0 0.0
      %1911 = vmatpush2.msra.mxu0 %v1871
      %1912 = vmatprep.subr.mxu0 0.0
      %1913 = vmatpush2.msra.mxu0 %v1870
      %1914 = vmatprep.subr.mxu0 0.0
      %1915 = vmatpush2.msra.mxu0 %v1869
      %1916 = vmatprep.subr.mxu0 0.0
      %1917 = vmatpush2.msra.mxu0 %v1868
      %1918 = vmatprep.subr.mxu0 0.0
      %1919 = vmatpush2.msra.mxu0 %v1867
      %1920 = vmatprep.subr.mxu0 0.0
      %1921 = vmatpush2.msra.mxu0 %v1866
      %1922 = vmatprep.subr.mxu0 0.0
      %1923 = vmatpush2.msra.mxu0 %v1865
      %1924 = vmatprep.subr.mxu0 0.0
      %1925 = vmatpush2.msra.mxu0 %v1864
      %1926 = vmatprep.subr.mxu0 0.0
      %1927 = vmatpush2.msra.mxu0 %v1863
      %1928 = vmatprep.subr.mxu0 0.0
      %1929 = vmatpush2.msra.mxu0 %v1862
      %1930 = vmatprep.subr.mxu0 0.0
      %1931 = vmatpush2.msra.mxu0 %v1861
      %1932 = vmatprep.subr.mxu0 0.0
      %1933 = vmatpush2.msra.mxu0 %v1860
      %1934 = vmatprep.subr.mxu0 0.0
      %1935 = vmatpush2.msra.mxu0 %v1859
      %1936 = vmatprep.subr.mxu0 0.0
      %1937 = vmatpush2.msra.mxu0 %v1858
      %1938 = vmatprep.mubr.f32.mxu0 %v773
      %1939 = vmatmul.mubr.f32.gmra.mxu0 %v772
      %v1940 = vpop.f32.mrf.mxu0
      %v1941 = vadd.f32 0.0, %v1940
      %v1942 = vpop.f32.mrf.mxu0
      %1943 = vmatprep.mubr.f32.mxu0 %v775
      %1944 = vmatmul.mubr.f32.gmra.mxu0 %v774
      %v1945 = vpop.f32.mrf.mxu0
      %v1946 = vadd.f32 0.0, %v1945
      %v1947 = vpop.f32.mrf.mxu0
      %1948 = vmatprep.mubr.f32.mxu0 %v777
      %1949 = vmatmul.mubr.f32.gmra.mxu0 %v776
      %v1950 = vpop.f32.mrf.mxu0
      %v1951 = vadd.f32 0.0, %v1950
      %v1952 = vpop.f32.mrf.mxu0
      %1953 = vmatprep.mubr.f32.mxu0 %v779
      %1954 = vmatmul.mubr.f32.gmra.mxu0 %v778
      %v1955 = vpop.f32.mrf.mxu0
      %v1956 = vadd.f32 0.0, %v1955
      %v1957 = vpop.f32.mrf.mxu0
      %1958 = vdwg.mxu0
      %s1959 = scalar_lea.vmem %s4, 2560
      %v1960 = vld [vmem:[%s1959] sm:$0xff]
      %v1961 = vld [vmem:[%s1959 + $0x8] sm:$0xff]
      %v1962 = vld [vmem:[%s1959 + $0x10] sm:$0xff]
      %v1963 = vld [vmem:[%s1959 + $0x18] sm:$0xff]
      %v1964 = vld [vmem:[%s1959 + $0x20] sm:$0xff]
      %v1965 = vld [vmem:[%s1959 + $0x28] sm:$0xff]
      %v1966 = vld [vmem:[%s1959 + $0x30] sm:$0xff]
      %v1967 = vld [vmem:[%s1959 + $0x38] sm:$0xff]
      %v1968 = vld [vmem:[%s1959 + $0x40] sm:$0xff]
      %v1969 = vld [vmem:[%s1959 + $0x48] sm:$0xff]
      %v1970 = vld [vmem:[%s1959 + $0x50] sm:$0xff]
      %v1971 = vld [vmem:[%s1959 + $0x58] sm:$0xff]
      %v1972 = vld [vmem:[%s1959 + $0x60] sm:$0xff]
      %v1973 = vld [vmem:[%s1959 + $0x68] sm:$0xff]
      %v1974 = vld [vmem:[%s1959 + $0x70] sm:$0xff]
      %v1975 = vld [vmem:[%s1959 + $0x78] sm:$0xff]
      %v1976 = vld [vmem:[%s1959 + $0x80] sm:$0xff]
      %v1977 = vld [vmem:[%s1959 + $0x88] sm:$0xff]
      %v1978 = vld [vmem:[%s1959 + $0x90] sm:$0xff]
      %v1979 = vld [vmem:[%s1959 + $0x98] sm:$0xff]
      %v1980 = vld [vmem:[%s1959 + $0xa0] sm:$0xff]
      %v1981 = vld [vmem:[%s1959 + $0xa8] sm:$0xff]
      %v1982 = vld [vmem:[%s1959 + $0xb0] sm:$0xff]
      %v1983 = vld [vmem:[%s1959 + $0xb8] sm:$0xff]
      %v1984 = vld [vmem:[%s1959 + $0xc0] sm:$0xff]
      %v1985 = vld [vmem:[%s1959 + $0xc8] sm:$0xff]
      %v1986 = vld [vmem:[%s1959 + $0xd0] sm:$0xff]
      %v1987 = vld [vmem:[%s1959 + $0xd8] sm:$0xff]
      %v1988 = vld [vmem:[%s1959 + $0xe0] sm:$0xff]
      %v1989 = vld [vmem:[%s1959 + $0xe8] sm:$0xff]
      %v1990 = vld [vmem:[%s1959 + $0xf0] sm:$0xff]
      %v1991 = vld [vmem:[%s1959 + $0xf8] sm:$0xff]
      %1992 = vmatprep.subr.mxu0 0.0
      %1993 = vmatpush1.msra.mxu0 %v1975
      %1994 = vmatprep.subr.mxu0 0.0
      %1995 = vmatpush1.msra.mxu0 %v1974
      %1996 = vmatprep.subr.mxu0 0.0
      %1997 = vmatpush1.msra.mxu0 %v1973
      %1998 = vmatprep.subr.mxu0 0.0
      %1999 = vmatpush1.msra.mxu0 %v1972
      %2000 = vmatprep.subr.mxu0 0.0
      %2001 = vmatpush1.msra.mxu0 %v1971
      %2002 = vmatprep.subr.mxu0 0.0
      %2003 = vmatpush1.msra.mxu0 %v1970
      %2004 = vmatprep.subr.mxu0 0.0
      %2005 = vmatpush1.msra.mxu0 %v1969
      %2006 = vmatprep.subr.mxu0 0.0
      %2007 = vmatpush1.msra.mxu0 %v1968
      %2008 = vmatprep.subr.mxu0 0.0
      %2009 = vmatpush1.msra.mxu0 %v1967
      %2010 = vmatprep.subr.mxu0 0.0
      %2011 = vmatpush1.msra.mxu0 %v1966
      %2012 = vmatprep.subr.mxu0 0.0
      %2013 = vmatpush1.msra.mxu0 %v1965
      %2014 = vmatprep.subr.mxu0 0.0
      %2015 = vmatpush1.msra.mxu0 %v1964
      %2016 = vmatprep.subr.mxu0 0.0
      %2017 = vmatpush1.msra.mxu0 %v1963
      %2018 = vmatprep.subr.mxu0 0.0
      %2019 = vmatpush1.msra.mxu0 %v1962
      %2020 = vmatprep.subr.mxu0 0.0
      %2021 = vmatpush1.msra.mxu0 %v1961
      %2022 = vmatprep.subr.mxu0 0.0
      %2023 = vmatpush1.msra.mxu0 %v1960
      %2024 = vmatprep.subr.mxu0 0.0
      %2025 = vmatpush2.msra.mxu0 %v1991
      %2026 = vmatprep.subr.mxu0 0.0
      %2027 = vmatpush2.msra.mxu0 %v1990
      %2028 = vmatprep.subr.mxu0 0.0
      %2029 = vmatpush2.msra.mxu0 %v1989
      %2030 = vmatprep.subr.mxu0 0.0
      %2031 = vmatpush2.msra.mxu0 %v1988
      %2032 = vmatprep.subr.mxu0 0.0
      %2033 = vmatpush2.msra.mxu0 %v1987
      %2034 = vmatprep.subr.mxu0 0.0
      %2035 = vmatpush2.msra.mxu0 %v1986
      %2036 = vmatprep.subr.mxu0 0.0
      %2037 = vmatpush2.msra.mxu0 %v1985
      %2038 = vmatprep.subr.mxu0 0.0
      %2039 = vmatpush2.msra.mxu0 %v1984
      %2040 = vmatprep.subr.mxu0 0.0
      %2041 = vmatpush2.msra.mxu0 %v1983
      %2042 = vmatprep.subr.mxu0 0.0
      %2043 = vmatpush2.msra.mxu0 %v1982
      %2044 = vmatprep.subr.mxu0 0.0
      %2045 = vmatpush2.msra.mxu0 %v1981
      %2046 = vmatprep.subr.mxu0 0.0
      %2047 = vmatpush2.msra.mxu0 %v1980
      %2048 = vmatprep.subr.mxu0 0.0
      %2049 = vmatpush2.msra.mxu0 %v1979
      %2050 = vmatprep.subr.mxu0 0.0
      %2051 = vmatpush2.msra.mxu0 %v1978
      %2052 = vmatprep.subr.mxu0 0.0
      %2053 = vmatpush2.msra.mxu0 %v1977
      %2054 = vmatprep.subr.mxu0 0.0
      %2055 = vmatpush2.msra.mxu0 %v1976
      %2056 = vmatprep.mubr.f32.mxu0 %v773
      %2057 = vmatmul.mubr.f32.gmra.mxu0 %v772
      %v2058 = vpop.f32.mrf.mxu0
      %v2059 = vadd.f32 0.0, %v2058
      %v2060 = vpop.f32.mrf.mxu0
      %2061 = vmatprep.mubr.f32.mxu0 %v775
      %2062 = vmatmul.mubr.f32.gmra.mxu0 %v774
      %v2063 = vpop.f32.mrf.mxu0
      %v2064 = vadd.f32 0.0, %v2063
      %v2065 = vpop.f32.mrf.mxu0
      %2066 = vmatprep.mubr.f32.mxu0 %v777
      %2067 = vmatmul.mubr.f32.gmra.mxu0 %v776
      %v2068 = vpop.f32.mrf.mxu0
      %v2069 = vadd.f32 0.0, %v2068
      %v2070 = vpop.f32.mrf.mxu0
      %2071 = vmatprep.mubr.f32.mxu0 %v779
      %2072 = vmatmul.mubr.f32.gmra.mxu0 %v778
      %v2073 = vpop.f32.mrf.mxu0
      %v2074 = vadd.f32 0.0, %v2073
      %v2075 = vpop.f32.mrf.mxu0
      %2076 = vdwg.mxu0
      %s2077 = scalar_lea.vmem %s4, 2816
      %v2078 = vld [vmem:[%s2077] sm:$0xff]
      %v2079 = vld [vmem:[%s2077 + $0x8] sm:$0xff]
      %v2080 = vld [vmem:[%s2077 + $0x10] sm:$0xff]
      %v2081 = vld [vmem:[%s2077 + $0x18] sm:$0xff]
      %v2082 = vld [vmem:[%s2077 + $0x20] sm:$0xff]
      %v2083 = vld [vmem:[%s2077 + $0x28] sm:$0xff]
      %v2084 = vld [vmem:[%s2077 + $0x30] sm:$0xff]
      %v2085 = vld [vmem:[%s2077 + $0x38] sm:$0xff]
      %v2086 = vld [vmem:[%s2077 + $0x40] sm:$0xff]
      %v2087 = vld [vmem:[%s2077 + $0x48] sm:$0xff]
      %v2088 = vld [vmem:[%s2077 + $0x50] sm:$0xff]
      %v2089 = vld [vmem:[%s2077 + $0x58] sm:$0xff]
      %v2090 = vld [vmem:[%s2077 + $0x60] sm:$0xff]
      %v2091 = vld [vmem:[%s2077 + $0x68] sm:$0xff]
      %v2092 = vld [vmem:[%s2077 + $0x70] sm:$0xff]
      %v2093 = vld [vmem:[%s2077 + $0x78] sm:$0xff]
      %v2094 = vld [vmem:[%s2077 + $0x80] sm:$0xff]
      %v2095 = vld [vmem:[%s2077 + $0x88] sm:$0xff]
      %v2096 = vld [vmem:[%s2077 + $0x90] sm:$0xff]
      %v2097 = vld [vmem:[%s2077 + $0x98] sm:$0xff]
      %v2098 = vld [vmem:[%s2077 + $0xa0] sm:$0xff]
      %v2099 = vld [vmem:[%s2077 + $0xa8] sm:$0xff]
      %v2100 = vld [vmem:[%s2077 + $0xb0] sm:$0xff]
      %v2101 = vld [vmem:[%s2077 + $0xb8] sm:$0xff]
      %v2102 = vld [vmem:[%s2077 + $0xc0] sm:$0xff]
      %v2103 = vld [vmem:[%s2077 + $0xc8] sm:$0xff]
      %v2104 = vld [vmem:[%s2077 + $0xd0] sm:$0xff]
      %v2105 = vld [vmem:[%s2077 + $0xd8] sm:$0xff]
      %v2106 = vld [vmem:[%s2077 + $0xe0] sm:$0xff]
      %v2107 = vld [vmem:[%s2077 + $0xe8] sm:$0xff]
      %v2108 = vld [vmem:[%s2077 + $0xf0] sm:$0xff]
      %v2109 = vld [vmem:[%s2077 + $0xf8] sm:$0xff]
      %2110 = vmatprep.subr.mxu0 0.0
      %2111 = vmatpush1.msra.mxu0 %v2093
      %2112 = vmatprep.subr.mxu0 0.0
      %2113 = vmatpush1.msra.mxu0 %v2092
      %2114 = vmatprep.subr.mxu0 0.0
      %2115 = vmatpush1.msra.mxu0 %v2091
      %2116 = vmatprep.subr.mxu0 0.0
      %2117 = vmatpush1.msra.mxu0 %v2090
      %2118 = vmatprep.subr.mxu0 0.0
      %2119 = vmatpush1.msra.mxu0 %v2089
      %2120 = vmatprep.subr.mxu0 0.0
      %2121 = vmatpush1.msra.mxu0 %v2088
      %2122 = vmatprep.subr.mxu0 0.0
      %2123 = vmatpush1.msra.mxu0 %v2087
      %2124 = vmatprep.subr.mxu0 0.0
      %2125 = vmatpush1.msra.mxu0 %v2086
      %2126 = vmatprep.subr.mxu0 0.0
      %2127 = vmatpush1.msra.mxu0 %v2085
      %2128 = vmatprep.subr.mxu0 0.0
      %2129 = vmatpush1.msra.mxu0 %v2084
      %2130 = vmatprep.subr.mxu0 0.0
      %2131 = vmatpush1.msra.mxu0 %v2083
      %2132 = vmatprep.subr.mxu0 0.0
      %2133 = vmatpush1.msra.mxu0 %v2082
      %2134 = vmatprep.subr.mxu0 0.0
      %2135 = vmatpush1.msra.mxu0 %v2081
      %2136 = vmatprep.subr.mxu0 0.0
      %2137 = vmatpush1.msra.mxu0 %v2080
      %2138 = vmatprep.subr.mxu0 0.0
      %2139 = vmatpush1.msra.mxu0 %v2079
      %2140 = vmatprep.subr.mxu0 0.0
      %2141 = vmatpush1.msra.mxu0 %v2078
      %2142 = vmatprep.subr.mxu0 0.0
      %2143 = vmatpush2.msra.mxu0 %v2109
      %2144 = vmatprep.subr.mxu0 0.0
      %2145 = vmatpush2.msra.mxu0 %v2108
      %2146 = vmatprep.subr.mxu0 0.0
      %2147 = vmatpush2.msra.mxu0 %v2107
      %2148 = vmatprep.subr.mxu0 0.0
      %2149 = vmatpush2.msra.mxu0 %v2106
      %2150 = vmatprep.subr.mxu0 0.0
      %2151 = vmatpush2.msra.mxu0 %v2105
      %2152 = vmatprep.subr.mxu0 0.0
      %2153 = vmatpush2.msra.mxu0 %v2104
      %2154 = vmatprep.subr.mxu0 0.0
      %2155 = vmatpush2.msra.mxu0 %v2103
      %2156 = vmatprep.subr.mxu0 0.0
      %2157 = vmatpush2.msra.mxu0 %v2102
      %2158 = vmatprep.subr.mxu0 0.0
      %2159 = vmatpush2.msra.mxu0 %v2101
      %2160 = vmatprep.subr.mxu0 0.0
      %2161 = vmatpush2.msra.mxu0 %v2100
      %2162 = vmatprep.subr.mxu0 0.0
      %2163 = vmatpush2.msra.mxu0 %v2099
      %2164 = vmatprep.subr.mxu0 0.0
      %2165 = vmatpush2.msra.mxu0 %v2098
      %2166 = vmatprep.subr.mxu0 0.0
      %2167 = vmatpush2.msra.mxu0 %v2097
      %2168 = vmatprep.subr.mxu0 0.0
      %2169 = vmatpush2.msra.mxu0 %v2096
      %2170 = vmatprep.subr.mxu0 0.0
      %2171 = vmatpush2.msra.mxu0 %v2095
      %2172 = vmatprep.subr.mxu0 0.0
      %2173 = vmatpush2.msra.mxu0 %v2094
      %2174 = vmatprep.mubr.f32.mxu0 %v773
      %2175 = vmatmul.mubr.f32.gmra.mxu0 %v772
      %v2176 = vpop.f32.mrf.mxu0
      %v2177 = vadd.f32 0.0, %v2176
      %v2178 = vpop.f32.mrf.mxu0
      %2179 = vmatprep.mubr.f32.mxu0 %v775
      %2180 = vmatmul.mubr.f32.gmra.mxu0 %v774
      %v2181 = vpop.f32.mrf.mxu0
      %v2182 = vadd.f32 0.0, %v2181
      %v2183 = vpop.f32.mrf.mxu0
      %2184 = vmatprep.mubr.f32.mxu0 %v777
      %2185 = vmatmul.mubr.f32.gmra.mxu0 %v776
      %v2186 = vpop.f32.mrf.mxu0
      %v2187 = vadd.f32 0.0, %v2186
      %v2188 = vpop.f32.mrf.mxu0
      %2189 = vmatprep.mubr.f32.mxu0 %v779
      %2190 = vmatmul.mubr.f32.gmra.mxu0 %v778
      %v2191 = vpop.f32.mrf.mxu0
      %v2192 = vadd.f32 0.0, %v2191
      %v2193 = vpop.f32.mrf.mxu0
      %2194 = vdwg.mxu0
      %s2195 = scalar_lea.vmem %s4, 3072
      %v2196 = vld [vmem:[%s2195] sm:$0xff]
      %v2197 = vld [vmem:[%s2195 + $0x8] sm:$0xff]
      %v2198 = vld [vmem:[%s2195 + $0x10] sm:$0xff]
      %v2199 = vld [vmem:[%s2195 + $0x18] sm:$0xff]
      %v2200 = vld [vmem:[%s2195 + $0x20] sm:$0xff]
      %v2201 = vld [vmem:[%s2195 + $0x28] sm:$0xff]
      %v2202 = vld [vmem:[%s2195 + $0x30] sm:$0xff]
      %v2203 = vld [vmem:[%s2195 + $0x38] sm:$0xff]
      %v2204 = vld [vmem:[%s2195 + $0x40] sm:$0xff]
      %v2205 = vld [vmem:[%s2195 + $0x48] sm:$0xff]
      %v2206 = vld [vmem:[%s2195 + $0x50] sm:$0xff]
      %v2207 = vld [vmem:[%s2195 + $0x58] sm:$0xff]
      %v2208 = vld [vmem:[%s2195 + $0x60] sm:$0xff]
      %v2209 = vld [vmem:[%s2195 + $0x68] sm:$0xff]
      %v2210 = vld [vmem:[%s2195 + $0x70] sm:$0xff]
      %v2211 = vld [vmem:[%s2195 + $0x78] sm:$0xff]
      %v2212 = vld [vmem:[%s2195 + $0x80] sm:$0xff]
      %v2213 = vld [vmem:[%s2195 + $0x88] sm:$0xff]
      %v2214 = vld [vmem:[%s2195 + $0x90] sm:$0xff]
      %v2215 = vld [vmem:[%s2195 + $0x98] sm:$0xff]
      %v2216 = vld [vmem:[%s2195 + $0xa0] sm:$0xff]
      %v2217 = vld [vmem:[%s2195 + $0xa8] sm:$0xff]
      %v2218 = vld [vmem:[%s2195 + $0xb0] sm:$0xff]
      %v2219 = vld [vmem:[%s2195 + $0xb8] sm:$0xff]
      %v2220 = vld [vmem:[%s2195 + $0xc0] sm:$0xff]
      %v2221 = vld [vmem:[%s2195 + $0xc8] sm:$0xff]
      %v2222 = vld [vmem:[%s2195 + $0xd0] sm:$0xff]
      %v2223 = vld [vmem:[%s2195 + $0xd8] sm:$0xff]
      %v2224 = vld [vmem:[%s2195 + $0xe0] sm:$0xff]
      %v2225 = vld [vmem:[%s2195 + $0xe8] sm:$0xff]
      %v2226 = vld [vmem:[%s2195 + $0xf0] sm:$0xff]
      %v2227 = vld [vmem:[%s2195 + $0xf8] sm:$0xff]
      %2228 = vmatprep.subr.mxu0 0.0
      %2229 = vmatpush1.msra.mxu0 %v2211
      %2230 = vmatprep.subr.mxu0 0.0
      %2231 = vmatpush1.msra.mxu0 %v2210
      %2232 = vmatprep.subr.mxu0 0.0
      %2233 = vmatpush1.msra.mxu0 %v2209
      %2234 = vmatprep.subr.mxu0 0.0
      %2235 = vmatpush1.msra.mxu0 %v2208
      %2236 = vmatprep.subr.mxu0 0.0
      %2237 = vmatpush1.msra.mxu0 %v2207
      %2238 = vmatprep.subr.mxu0 0.0
      %2239 = vmatpush1.msra.mxu0 %v2206
      %2240 = vmatprep.subr.mxu0 0.0
      %2241 = vmatpush1.msra.mxu0 %v2205
      %2242 = vmatprep.subr.mxu0 0.0
      %2243 = vmatpush1.msra.mxu0 %v2204
      %2244 = vmatprep.subr.mxu0 0.0
      %2245 = vmatpush1.msra.mxu0 %v2203
      %2246 = vmatprep.subr.mxu0 0.0
      %2247 = vmatpush1.msra.mxu0 %v2202
      %2248 = vmatprep.subr.mxu0 0.0
      %2249 = vmatpush1.msra.mxu0 %v2201
      %2250 = vmatprep.subr.mxu0 0.0
      %2251 = vmatpush1.msra.mxu0 %v2200
      %2252 = vmatprep.subr.mxu0 0.0
      %2253 = vmatpush1.msra.mxu0 %v2199
      %2254 = vmatprep.subr.mxu0 0.0
      %2255 = vmatpush1.msra.mxu0 %v2198
      %2256 = vmatprep.subr.mxu0 0.0
      %2257 = vmatpush1.msra.mxu0 %v2197
      %2258 = vmatprep.subr.mxu0 0.0
      %2259 = vmatpush1.msra.mxu0 %v2196
      %2260 = vmatprep.subr.mxu0 0.0
      %2261 = vmatpush2.msra.mxu0 %v2227
      %2262 = vmatprep.subr.mxu0 0.0
      %2263 = vmatpush2.msra.mxu0 %v2226
      %2264 = vmatprep.subr.mxu0 0.0
      %2265 = vmatpush2.msra.mxu0 %v2225
      %2266 = vmatprep.subr.mxu0 0.0
      %2267 = vmatpush2.msra.mxu0 %v2224
      %2268 = vmatprep.subr.mxu0 0.0
      %2269 = vmatpush2.msra.mxu0 %v2223
      %2270 = vmatprep.subr.mxu0 0.0
      %2271 = vmatpush2.msra.mxu0 %v2222
      %2272 = vmatprep.subr.mxu0 0.0
      %2273 = vmatpush2.msra.mxu0 %v2221
      %2274 = vmatprep.subr.mxu0 0.0
      %2275 = vmatpush2.msra.mxu0 %v2220
      %2276 = vmatprep.subr.mxu0 0.0
      %2277 = vmatpush2.msra.mxu0 %v2219
      %2278 = vmatprep.subr.mxu0 0.0
      %2279 = vmatpush2.msra.mxu0 %v2218
      %2280 = vmatprep.subr.mxu0 0.0
      %2281 = vmatpush2.msra.mxu0 %v2217
      %2282 = vmatprep.subr.mxu0 0.0
      %2283 = vmatpush2.msra.mxu0 %v2216
      %2284 = vmatprep.subr.mxu0 0.0
      %2285 = vmatpush2.msra.mxu0 %v2215
      %2286 = vmatprep.subr.mxu0 0.0
      %2287 = vmatpush2.msra.mxu0 %v2214
      %2288 = vmatprep.subr.mxu0 0.0
      %2289 = vmatpush2.msra.mxu0 %v2213
      %2290 = vmatprep.subr.mxu0 0.0
      %2291 = vmatpush2.msra.mxu0 %v2212
      %2292 = vmatprep.mubr.f32.mxu0 %v773
      %2293 = vmatmul.mubr.f32.gmra.mxu0 %v772
      %v2294 = vpop.f32.mrf.mxu0
      %v2295 = vadd.f32 0.0, %v2294
      %v2296 = vpop.f32.mrf.mxu0
      %2297 = vmatprep.mubr.f32.mxu0 %v775
      %2298 = vmatmul.mubr.f32.gmra.mxu0 %v774
      %v2299 = vpop.f32.mrf.mxu0
      %v2300 = vadd.f32 0.0, %v2299
      %v2301 = vpop.f32.mrf.mxu0
      %2302 = vmatprep.mubr.f32.mxu0 %v777
      %2303 = vmatmul.mubr.f32.gmra.mxu0 %v776
      %v2304 = vpop.f32.mrf.mxu0
      %v2305 = vadd.f32 0.0, %v2304
      %v2306 = vpop.f32.mrf.mxu0
      %2307 = vmatprep.mubr.f32.mxu0 %v779
      %2308 = vmatmul.mubr.f32.gmra.mxu0 %v778
      %v2309 = vpop.f32.mrf.mxu0
      %v2310 = vadd.f32 0.0, %v2309
      %v2311 = vpop.f32.mrf.mxu0
      %2312 = vdwg.mxu0
      %s2313 = scalar_lea.vmem %s4, 3328
      %v2314 = vld [vmem:[%s2313] sm:$0xff]
      %v2315 = vld [vmem:[%s2313 + $0x8] sm:$0xff]
      %v2316 = vld [vmem:[%s2313 + $0x10] sm:$0xff]
      %v2317 = vld [vmem:[%s2313 + $0x18] sm:$0xff]
      %v2318 = vld [vmem:[%s2313 + $0x20] sm:$0xff]
      %v2319 = vld [vmem:[%s2313 + $0x28] sm:$0xff]
      %v2320 = vld [vmem:[%s2313 + $0x30] sm:$0xff]
      %v2321 = vld [vmem:[%s2313 + $0x38] sm:$0xff]
      %v2322 = vld [vmem:[%s2313 + $0x40] sm:$0xff]
      %v2323 = vld [vmem:[%s2313 + $0x48] sm:$0xff]
      %v2324 = vld [vmem:[%s2313 + $0x50] sm:$0xff]
      %v2325 = vld [vmem:[%s2313 + $0x58] sm:$0xff]
      %v2326 = vld [vmem:[%s2313 + $0x60] sm:$0xff]
      %v2327 = vld [vmem:[%s2313 + $0x68] sm:$0xff]
      %v2328 = vld [vmem:[%s2313 + $0x70] sm:$0xff]
      %v2329 = vld [vmem:[%s2313 + $0x78] sm:$0xff]
      %v2330 = vld [vmem:[%s2313 + $0x80] sm:$0xff]
      %v2331 = vld [vmem:[%s2313 + $0x88] sm:$0xff]
      %v2332 = vld [vmem:[%s2313 + $0x90] sm:$0xff]
      %v2333 = vld [vmem:[%s2313 + $0x98] sm:$0xff]
      %v2334 = vld [vmem:[%s2313 + $0xa0] sm:$0xff]
      %v2335 = vld [vmem:[%s2313 + $0xa8] sm:$0xff]
      %v2336 = vld [vmem:[%s2313 + $0xb0] sm:$0xff]
      %v2337 = vld [vmem:[%s2313 + $0xb8] sm:$0xff]
      %v2338 = vld [vmem:[%s2313 + $0xc0] sm:$0xff]
      %v2339 = vld [vmem:[%s2313 + $0xc8] sm:$0xff]
      %v2340 = vld [vmem:[%s2313 + $0xd0] sm:$0xff]
      %v2341 = vld [vmem:[%s2313 + $0xd8] sm:$0xff]
      %v2342 = vld [vmem:[%s2313 + $0xe0] sm:$0xff]
      %v2343 = vld [vmem:[%s2313 + $0xe8] sm:$0xff]
      %v2344 = vld [vmem:[%s2313 + $0xf0] sm:$0xff]
      %v2345 = vld [vmem:[%s2313 + $0xf8] sm:$0xff]
      %2346 = vmatprep.subr.mxu0 0.0
      %2347 = vmatpush1.msra.mxu0 %v2329
      %2348 = vmatprep.subr.mxu0 0.0
      %2349 = vmatpush1.msra.mxu0 %v2328
      %2350 = vmatprep.subr.mxu0 0.0
      %2351 = vmatpush1.msra.mxu0 %v2327
      %2352 = vmatprep.subr.mxu0 0.0
      %2353 = vmatpush1.msra.mxu0 %v2326
      %2354 = vmatprep.subr.mxu0 0.0
      %2355 = vmatpush1.msra.mxu0 %v2325
      %2356 = vmatprep.subr.mxu0 0.0
      %2357 = vmatpush1.msra.mxu0 %v2324
      %2358 = vmatprep.subr.mxu0 0.0
      %2359 = vmatpush1.msra.mxu0 %v2323
      %2360 = vmatprep.subr.mxu0 0.0
      %2361 = vmatpush1.msra.mxu0 %v2322
      %2362 = vmatprep.subr.mxu0 0.0
      %2363 = vmatpush1.msra.mxu0 %v2321
      %2364 = vmatprep.subr.mxu0 0.0
      %2365 = vmatpush1.msra.mxu0 %v2320
      %2366 = vmatprep.subr.mxu0 0.0
      %2367 = vmatpush1.msra.mxu0 %v2319
      %2368 = vmatprep.subr.mxu0 0.0
      %2369 = vmatpush1.msra.mxu0 %v2318
      %2370 = vmatprep.subr.mxu0 0.0
      %2371 = vmatpush1.msra.mxu0 %v2317
      %2372 = vmatprep.subr.mxu0 0.0
      %2373 = vmatpush1.msra.mxu0 %v2316
      %2374 = vmatprep.subr.mxu0 0.0
      %2375 = vmatpush1.msra.mxu0 %v2315
      %2376 = vmatprep.subr.mxu0 0.0
      %2377 = vmatpush1.msra.mxu0 %v2314
      %2378 = vmatprep.subr.mxu0 0.0
      %2379 = vmatpush2.msra.mxu0 %v2345
      %2380 = vmatprep.subr.mxu0 0.0
      %2381 = vmatpush2.msra.mxu0 %v2344
      %2382 = vmatprep.subr.mxu0 0.0
      %2383 = vmatpush2.msra.mxu0 %v2343
      %2384 = vmatprep.subr.mxu0 0.0
      %2385 = vmatpush2.msra.mxu0 %v2342
      %2386 = vmatprep.subr.mxu0 0.0
      %2387 = vmatpush2.msra.mxu0 %v2341
      %2388 = vmatprep.subr.mxu0 0.0
      %2389 = vmatpush2.msra.mxu0 %v2340
      %2390 = vmatprep.subr.mxu0 0.0
      %2391 = vmatpush2.msra.mxu0 %v2339
      %2392 = vmatprep.subr.mxu0 0.0
      %2393 = vmatpush2.msra.mxu0 %v2338
      %2394 = vmatprep.subr.mxu0 0.0
      %2395 = vmatpush2.msra.mxu0 %v2337
      %2396 = vmatprep.subr.mxu0 0.0
      %2397 = vmatpush2.msra.mxu0 %v2336
      %2398 = vmatprep.subr.mxu0 0.0
      %2399 = vmatpush2.msra.mxu0 %v2335
      %2400 = vmatprep.subr.mxu0 0.0
      %2401 = vmatpush2.msra.mxu0 %v2334
      %2402 = vmatprep.subr.mxu0 0.0
      %2403 = vmatpush2.msra.mxu0 %v2333
      %2404 = vmatprep.subr.mxu0 0.0
      %2405 = vmatpush2.msra.mxu0 %v2332
      %2406 = vmatprep.subr.mxu0 0.0
      %2407 = vmatpush2.msra.mxu0 %v2331
      %2408 = vmatprep.subr.mxu0 0.0
      %2409 = vmatpush2.msra.mxu0 %v2330
      %2410 = vmatprep.mubr.f32.mxu0 %v773
      %2411 = vmatmul.mubr.f32.gmra.mxu0 %v772
      %v2412 = vpop.f32.mrf.mxu0
      %v2413 = vadd.f32 0.0, %v2412
      %v2414 = vpop.f32.mrf.mxu0
      %2415 = vmatprep.mubr.f32.mxu0 %v775
      %2416 = vmatmul.mubr.f32.gmra.mxu0 %v774
      %v2417 = vpop.f32.mrf.mxu0
      %v2418 = vadd.f32 0.0, %v2417
      %v2419 = vpop.f32.mrf.mxu0
      %2420 = vmatprep.mubr.f32.mxu0 %v777
      %2421 = vmatmul.mubr.f32.gmra.mxu0 %v776
      %v2422 = vpop.f32.mrf.mxu0
      %v2423 = vadd.f32 0.0, %v2422
      %v2424 = vpop.f32.mrf.mxu0
      %2425 = vmatprep.mubr.f32.mxu0 %v779
      %2426 = vmatmul.mubr.f32.gmra.mxu0 %v778
      %v2427 = vpop.f32.mrf.mxu0
      %v2428 = vadd.f32 0.0, %v2427
      %v2429 = vpop.f32.mrf.mxu0
      %2430 = vdwg.mxu0
      %s2431 = scalar_lea.vmem %s4, 3584
      %v2432 = vld [vmem:[%s2431] sm:$0xff]
      %v2433 = vld [vmem:[%s2431 + $0x8] sm:$0xff]
      %v2434 = vld [vmem:[%s2431 + $0x10] sm:$0xff]
      %v2435 = vld [vmem:[%s2431 + $0x18] sm:$0xff]
      %v2436 = vld [vmem:[%s2431 + $0x20] sm:$0xff]
      %v2437 = vld [vmem:[%s2431 + $0x28] sm:$0xff]
      %v2438 = vld [vmem:[%s2431 + $0x30] sm:$0xff]
      %v2439 = vld [vmem:[%s2431 + $0x38] sm:$0xff]
      %v2440 = vld [vmem:[%s2431 + $0x40] sm:$0xff]
      %v2441 = vld [vmem:[%s2431 + $0x48] sm:$0xff]
      %v2442 = vld [vmem:[%s2431 + $0x50] sm:$0xff]
      %v2443 = vld [vmem:[%s2431 + $0x58] sm:$0xff]
      %v2444 = vld [vmem:[%s2431 + $0x60] sm:$0xff]
      %v2445 = vld [vmem:[%s2431 + $0x68] sm:$0xff]
      %v2446 = vld [vmem:[%s2431 + $0x70] sm:$0xff]
      %v2447 = vld [vmem:[%s2431 + $0x78] sm:$0xff]
      %v2448 = vld [vmem:[%s2431 + $0x80] sm:$0xff]
      %v2449 = vld [vmem:[%s2431 + $0x88] sm:$0xff]
      %v2450 = vld [vmem:[%s2431 + $0x90] sm:$0xff]
      %v2451 = vld [vmem:[%s2431 + $0x98] sm:$0xff]
      %v2452 = vld [vmem:[%s2431 + $0xa0] sm:$0xff]
      %v2453 = vld [vmem:[%s2431 + $0xa8] sm:$0xff]
      %v2454 = vld [vmem:[%s2431 + $0xb0] sm:$0xff]
      %v2455 = vld [vmem:[%s2431 + $0xb8] sm:$0xff]
      %v2456 = vld [vmem:[%s2431 + $0xc0] sm:$0xff]
      %v2457 = vld [vmem:[%s2431 + $0xc8] sm:$0xff]
      %v2458 = vld [vmem:[%s2431 + $0xd0] sm:$0xff]
      %v2459 = vld [vmem:[%s2431 + $0xd8] sm:$0xff]
      %v2460 = vld [vmem:[%s2431 + $0xe0] sm:$0xff]
      %v2461 = vld [vmem:[%s2431 + $0xe8] sm:$0xff]
      %v2462 = vld [vmem:[%s2431 + $0xf0] sm:$0xff]
      %v2463 = vld [vmem:[%s2431 + $0xf8] sm:$0xff]
      %2464 = vmatprep.subr.mxu0 0.0
      %2465 = vmatpush1.msra.mxu0 %v2447
      %2466 = vmatprep.subr.mxu0 0.0
      %2467 = vmatpush1.msra.mxu0 %v2446
      %2468 = vmatprep.subr.mxu0 0.0
      %2469 = vmatpush1.msra.mxu0 %v2445
      %2470 = vmatprep.subr.mxu0 0.0
      %2471 = vmatpush1.msra.mxu0 %v2444
      %2472 = vmatprep.subr.mxu0 0.0
      %2473 = vmatpush1.msra.mxu0 %v2443
      %2474 = vmatprep.subr.mxu0 0.0
      %2475 = vmatpush1.msra.mxu0 %v2442
      %2476 = vmatprep.subr.mxu0 0.0
      %2477 = vmatpush1.msra.mxu0 %v2441
      %2478 = vmatprep.subr.mxu0 0.0
      %2479 = vmatpush1.msra.mxu0 %v2440
      %2480 = vmatprep.subr.mxu0 0.0
      %2481 = vmatpush1.msra.mxu0 %v2439
      %2482 = vmatprep.subr.mxu0 0.0
      %2483 = vmatpush1.msra.mxu0 %v2438
      %2484 = vmatprep.subr.mxu0 0.0
      %2485 = vmatpush1.msra.mxu0 %v2437
      %2486 = vmatprep.subr.mxu0 0.0
      %2487 = vmatpush1.msra.mxu0 %v2436
      %2488 = vmatprep.subr.mxu0 0.0
      %2489 = vmatpush1.msra.mxu0 %v2435
      %2490 = vmatprep.subr.mxu0 0.0
      %2491 = vmatpush1.msra.mxu0 %v2434
      %2492 = vmatprep.subr.mxu0 0.0
      %2493 = vmatpush1.msra.mxu0 %v2433
      %2494 = vmatprep.subr.mxu0 0.0
      %2495 = vmatpush1.msra.mxu0 %v2432
      %2496 = vmatprep.subr.mxu0 0.0
      %2497 = vmatpush2.msra.mxu0 %v2463
      %2498 = vmatprep.subr.mxu0 0.0
      %2499 = vmatpush2.msra.mxu0 %v2462
      %2500 = vmatprep.subr.mxu0 0.0
      %2501 = vmatpush2.msra.mxu0 %v2461
      %2502 = vmatprep.subr.mxu0 0.0
      %2503 = vmatpush2.msra.mxu0 %v2460
      %2504 = vmatprep.subr.mxu0 0.0
      %2505 = vmatpush2.msra.mxu0 %v2459
      %2506 = vmatprep.subr.mxu0 0.0
      %2507 = vmatpush2.msra.mxu0 %v2458
      %2508 = vmatprep.subr.mxu0 0.0
      %2509 = vmatpush2.msra.mxu0 %v2457
      %2510 = vmatprep.subr.mxu0 0.0
      %2511 = vmatpush2.msra.mxu0 %v2456
      %2512 = vmatprep.subr.mxu0 0.0
      %2513 = vmatpush2.msra.mxu0 %v2455
      %2514 = vmatprep.subr.mxu0 0.0
      %2515 = vmatpush2.msra.mxu0 %v2454
      %2516 = vmatprep.subr.mxu0 0.0
      %2517 = vmatpush2.msra.mxu0 %v2453
      %2518 = vmatprep.subr.mxu0 0.0
      %2519 = vmatpush2.msra.mxu0 %v2452
      %2520 = vmatprep.subr.mxu0 0.0
      %2521 = vmatpush2.msra.mxu0 %v2451
      %2522 = vmatprep.subr.mxu0 0.0
      %2523 = vmatpush2.msra.mxu0 %v2450
      %2524 = vmatprep.subr.mxu0 0.0
      %2525 = vmatpush2.msra.mxu0 %v2449
      %2526 = vmatprep.subr.mxu0 0.0
      %2527 = vmatpush2.msra.mxu0 %v2448
      %2528 = vmatprep.mubr.f32.mxu0 %v773
      %2529 = vmatmul.mubr.f32.gmra.mxu0 %v772
      %v2530 = vpop.f32.mrf.mxu0
      %v2531 = vadd.f32 0.0, %v2530
      %v2532 = vpop.f32.mrf.mxu0
      %2533 = vmatprep.mubr.f32.mxu0 %v775
      %2534 = vmatmul.mubr.f32.gmra.mxu0 %v774
      %v2535 = vpop.f32.mrf.mxu0
      %v2536 = vadd.f32 0.0, %v2535
      %v2537 = vpop.f32.mrf.mxu0
      %2538 = vmatprep.mubr.f32.mxu0 %v777
      %2539 = vmatmul.mubr.f32.gmra.mxu0 %v776
      %v2540 = vpop.f32.mrf.mxu0
      %v2541 = vadd.f32 0.0, %v2540
      %v2542 = vpop.f32.mrf.mxu0
      %2543 = vmatprep.mubr.f32.mxu0 %v779
      %2544 = vmatmul.mubr.f32.gmra.mxu0 %v778
      %v2545 = vpop.f32.mrf.mxu0
      %v2546 = vadd.f32 0.0, %v2545
      %v2547 = vpop.f32.mrf.mxu0
      %2548 = vdwg.mxu0
      %s2549 = scalar_lea.vmem %s4, 3840
      %v2550 = vld [vmem:[%s2549] sm:$0xff]
      %v2551 = vld [vmem:[%s2549 + $0x8] sm:$0xff]
      %v2552 = vld [vmem:[%s2549 + $0x10] sm:$0xff]
      %v2553 = vld [vmem:[%s2549 + $0x18] sm:$0xff]
      %v2554 = vld [vmem:[%s2549 + $0x20] sm:$0xff]
      %v2555 = vld [vmem:[%s2549 + $0x28] sm:$0xff]
      %v2556 = vld [vmem:[%s2549 + $0x30] sm:$0xff]
      %v2557 = vld [vmem:[%s2549 + $0x38] sm:$0xff]
      %v2558 = vld [vmem:[%s2549 + $0x40] sm:$0xff]
      %v2559 = vld [vmem:[%s2549 + $0x48] sm:$0xff]
      %v2560 = vld [vmem:[%s2549 + $0x50] sm:$0xff]
      %v2561 = vld [vmem:[%s2549 + $0x58] sm:$0xff]
      %v2562 = vld [vmem:[%s2549 + $0x60] sm:$0xff]
      %v2563 = vld [vmem:[%s2549 + $0x68] sm:$0xff]
      %v2564 = vld [vmem:[%s2549 + $0x70] sm:$0xff]
      %v2565 = vld [vmem:[%s2549 + $0x78] sm:$0xff]
      %v2566 = vld [vmem:[%s2549 + $0x80] sm:$0xff]
      %v2567 = vld [vmem:[%s2549 + $0x88] sm:$0xff]
      %v2568 = vld [vmem:[%s2549 + $0x90] sm:$0xff]
      %v2569 = vld [vmem:[%s2549 + $0x98] sm:$0xff]
      %v2570 = vld [vmem:[%s2549 + $0xa0] sm:$0xff]
      %v2571 = vld [vmem:[%s2549 + $0xa8] sm:$0xff]
      %v2572 = vld [vmem:[%s2549 + $0xb0] sm:$0xff]
      %v2573 = vld [vmem:[%s2549 + $0xb8] sm:$0xff]
      %v2574 = vld [vmem:[%s2549 + $0xc0] sm:$0xff]
      %v2575 = vld [vmem:[%s2549 + $0xc8] sm:$0xff]
      %v2576 = vld [vmem:[%s2549 + $0xd0] sm:$0xff]
      %v2577 = vld [vmem:[%s2549 + $0xd8] sm:$0xff]
      %v2578 = vld [vmem:[%s2549 + $0xe0] sm:$0xff]
      %v2579 = vld [vmem:[%s2549 + $0xe8] sm:$0xff]
      %v2580 = vld [vmem:[%s2549 + $0xf0] sm:$0xff]
      %v2581 = vld [vmem:[%s2549 + $0xf8] sm:$0xff]
      %2582 = vmatprep.subr.mxu0 0.0
      %2583 = vmatpush1.msra.mxu0 %v2565
      %2584 = vmatprep.subr.mxu0 0.0
      %2585 = vmatpush1.msra.mxu0 %v2564
      %2586 = vmatprep.subr.mxu0 0.0
      %2587 = vmatpush1.msra.mxu0 %v2563
      %2588 = vmatprep.subr.mxu0 0.0
      %2589 = vmatpush1.msra.mxu0 %v2562
      %2590 = vmatprep.subr.mxu0 0.0
      %2591 = vmatpush1.msra.mxu0 %v2561
      %2592 = vmatprep.subr.mxu0 0.0
      %2593 = vmatpush1.msra.mxu0 %v2560
      %2594 = vmatprep.subr.mxu0 0.0
      %2595 = vmatpush1.msra.mxu0 %v2559
      %2596 = vmatprep.subr.mxu0 0.0
      %2597 = vmatpush1.msra.mxu0 %v2558
      %2598 = vmatprep.subr.mxu0 0.0
      %2599 = vmatpush1.msra.mxu0 %v2557
      %2600 = vmatprep.subr.mxu0 0.0
      %2601 = vmatpush1.msra.mxu0 %v2556
      %2602 = vmatprep.subr.mxu0 0.0
      %2603 = vmatpush1.msra.mxu0 %v2555
      %2604 = vmatprep.subr.mxu0 0.0
      %2605 = vmatpush1.msra.mxu0 %v2554
      %2606 = vmatprep.subr.mxu0 0.0
      %2607 = vmatpush1.msra.mxu0 %v2553
      %2608 = vmatprep.subr.mxu0 0.0
      %2609 = vmatpush1.msra.mxu0 %v2552
      %2610 = vmatprep.subr.mxu0 0.0
      %2611 = vmatpush1.msra.mxu0 %v2551
      %2612 = vmatprep.subr.mxu0 0.0
      %2613 = vmatpush1.msra.mxu0 %v2550
      %2614 = vmatprep.subr.mxu0 0.0
      %2615 = vmatpush2.msra.mxu0 %v2581
      %2616 = vmatprep.subr.mxu0 0.0
      %2617 = vmatpush2.msra.mxu0 %v2580
      %2618 = vmatprep.subr.mxu0 0.0
      %2619 = vmatpush2.msra.mxu0 %v2579
      %2620 = vmatprep.subr.mxu0 0.0
      %2621 = vmatpush2.msra.mxu0 %v2578
      %2622 = vmatprep.subr.mxu0 0.0
      %2623 = vmatpush2.msra.mxu0 %v2577
      %2624 = vmatprep.subr.mxu0 0.0
      %2625 = vmatpush2.msra.mxu0 %v2576
      %2626 = vmatprep.subr.mxu0 0.0
      %2627 = vmatpush2.msra.mxu0 %v2575
      %2628 = vmatprep.subr.mxu0 0.0
      %2629 = vmatpush2.msra.mxu0 %v2574
      %2630 = vmatprep.subr.mxu0 0.0
      %2631 = vmatpush2.msra.mxu0 %v2573
      %2632 = vmatprep.subr.mxu0 0.0
      %2633 = vmatpush2.msra.mxu0 %v2572
      %2634 = vmatprep.subr.mxu0 0.0
      %2635 = vmatpush2.msra.mxu0 %v2571
      %2636 = vmatprep.subr.mxu0 0.0
      %2637 = vmatpush2.msra.mxu0 %v2570
      %2638 = vmatprep.subr.mxu0 0.0
      %2639 = vmatpush2.msra.mxu0 %v2569
      %2640 = vmatprep.subr.mxu0 0.0
      %2641 = vmatpush2.msra.mxu0 %v2568
      %2642 = vmatprep.subr.mxu0 0.0
      %2643 = vmatpush2.msra.mxu0 %v2567
      %2644 = vmatprep.subr.mxu0 0.0
      %2645 = vmatpush2.msra.mxu0 %v2566
      %2646 = vmatprep.mubr.f32.mxu0 %v773
      %2647 = vmatmul.mubr.f32.gmra.mxu0 %v772
      %v2648 = vpop.f32.mrf.mxu0
      %v2649 = vadd.f32 0.0, %v2648
      %v2650 = vpop.f32.mrf.mxu0
      %2651 = vmatprep.mubr.f32.mxu0 %v775
      %2652 = vmatmul.mubr.f32.gmra.mxu0 %v774
      %v2653 = vpop.f32.mrf.mxu0
      %v2654 = vadd.f32 0.0, %v2653
      %v2655 = vpop.f32.mrf.mxu0
      %2656 = vmatprep.mubr.f32.mxu0 %v777
      %2657 = vmatmul.mubr.f32.gmra.mxu0 %v776
      %v2658 = vpop.f32.mrf.mxu0
      %v2659 = vadd.f32 0.0, %v2658
      %v2660 = vpop.f32.mrf.mxu0
      %2661 = vmatprep.mubr.f32.mxu0 %v779
      %2662 = vmatmul.mubr.f32.gmra.mxu0 %v778
      %v2663 = vpop.f32.mrf.mxu0
      %v2664 = vadd.f32 0.0, %v2663
      %v2665 = vpop.f32.mrf.mxu0
      %2666 = vdwg.mxu0
      %v2667 = vld [vmem:[%s5] sm:$0xff]
      %v2668 = vld [vmem:[%s5 + $0x8] sm:$0xff]
      %v2669 = vld [vmem:[%s5 + $0x10] sm:$0xff]
      %v2670 = vld [vmem:[%s5 + $0x18] sm:$0xff]
      %v2671 = vld [vmem:[%s5 + $0x20] sm:$0xff]
      %v2672 = vld [vmem:[%s5 + $0x28] sm:$0xff]
      %v2673 = vld [vmem:[%s5 + $0x30] sm:$0xff]
      %v2674 = vld [vmem:[%s5 + $0x38] sm:$0xff]
      %v2675 = vld [vmem:[%s5 + $0x40] sm:$0xff]
      %v2676 = vld [vmem:[%s5 + $0x48] sm:$0xff]
      %v2677 = vld [vmem:[%s5 + $0x50] sm:$0xff]
      %v2678 = vld [vmem:[%s5 + $0x58] sm:$0xff]
      %v2679 = vld [vmem:[%s5 + $0x60] sm:$0xff]
      %v2680 = vld [vmem:[%s5 + $0x68] sm:$0xff]
      %v2681 = vld [vmem:[%s5 + $0x70] sm:$0xff]
      %v2682 = vld [vmem:[%s5 + $0x78] sm:$0xff]
      %v2683 = vld [vmem:[%s5 + $0x80] sm:$0xff]
      %v2684 = vld [vmem:[%s5 + $0x88] sm:$0xff]
      %v2685 = vld [vmem:[%s5 + $0x90] sm:$0xff]
      %v2686 = vld [vmem:[%s5 + $0x98] sm:$0xff]
      %v2687 = vld [vmem:[%s5 + $0xa0] sm:$0xff]
      %v2688 = vld [vmem:[%s5 + $0xa8] sm:$0xff]
      %v2689 = vld [vmem:[%s5 + $0xb0] sm:$0xff]
      %v2690 = vld [vmem:[%s5 + $0xb8] sm:$0xff]
      %v2691 = vld [vmem:[%s5 + $0xc0] sm:$0xff]
      %v2692 = vld [vmem:[%s5 + $0xc8] sm:$0xff]
      %v2693 = vld [vmem:[%s5 + $0xd0] sm:$0xff]
      %v2694 = vld [vmem:[%s5 + $0xd8] sm:$0xff]
      %v2695 = vld [vmem:[%s5 + $0xe0] sm:$0xff]
      %v2696 = vld [vmem:[%s5 + $0xe8] sm:$0xff]
      %v2697 = vld [vmem:[%s5 + $0xf0] sm:$0xff]
      %v2698 = vld [vmem:[%s5 + $0xf8] sm:$0xff]
      %2699 = vmatprep.subr.mxu0 0.0
      %2700 = vmatpush1.msra.mxu0 %v1248
      %2701 = vmatprep.subr.mxu0 0.0
      %2702 = vmatpush1.msra.mxu0 %v1243
      %2703 = vmatprep.subr.mxu0 0.0
      %2704 = vmatpush1.msra.mxu0 %v1238
      %2705 = vmatprep.subr.mxu0 0.0
      %2706 = vmatpush1.msra.mxu0 %v1233
      %2707 = vmatprep.subr.mxu0 0.0
      %2708 = vmatpush1.msra.mxu0 %v1130
      %2709 = vmatprep.subr.mxu0 0.0
      %2710 = vmatpush1.msra.mxu0 %v1125
      %2711 = vmatprep.subr.mxu0 0.0
      %2712 = vmatpush1.msra.mxu0 %v1120
      %2713 = vmatprep.subr.mxu0 0.0
      %2714 = vmatpush1.msra.mxu0 %v1115
      %2715 = vmatprep.subr.mxu0 0.0
      %2716 = vmatpush1.msra.mxu0 %v1012
      %2717 = vmatprep.subr.mxu0 0.0
      %2718 = vmatpush1.msra.mxu0 %v1007
      %2719 = vmatprep.subr.mxu0 0.0
      %2720 = vmatpush1.msra.mxu0 %v1002
      %2721 = vmatprep.subr.mxu0 0.0
      %2722 = vmatpush1.msra.mxu0 %v997
      %2723 = vmatprep.subr.mxu0 0.0
      %2724 = vmatpush1.msra.mxu0 %v894
      %2725 = vmatprep.subr.mxu0 0.0
      %2726 = vmatpush1.msra.mxu0 %v889
      %2727 = vmatprep.subr.mxu0 0.0
      %2728 = vmatpush1.msra.mxu0 %v884
      %2729 = vmatprep.subr.mxu0 0.0
      %2730 = vmatpush1.msra.mxu0 %v879
      %2731 = vmatprep.subr.mxu0 0.0
      %2732 = vmatpush2.msra.mxu0 %v1720
      %2733 = vmatprep.subr.mxu0 0.0
      %2734 = vmatpush2.msra.mxu0 %v1715
      %2735 = vmatprep.subr.mxu0 0.0
      %2736 = vmatpush2.msra.mxu0 %v1710
      %2737 = vmatprep.subr.mxu0 0.0
      %2738 = vmatpush2.msra.mxu0 %v1705
      %2739 = vmatprep.subr.mxu0 0.0
      %2740 = vmatpush2.msra.mxu0 %v1602
      %2741 = vmatprep.subr.mxu0 0.0
      %2742 = vmatpush2.msra.mxu0 %v1597
      %2743 = vmatprep.subr.mxu0 0.0
      %2744 = vmatpush2.msra.mxu0 %v1592
      %2745 = vmatprep.subr.mxu0 0.0
      %2746 = vmatpush2.msra.mxu0 %v1587
      %2747 = vmatprep.subr.mxu0 0.0
      %2748 = vmatpush2.msra.mxu0 %v1484
      %2749 = vmatprep.subr.mxu0 0.0
      %2750 = vmatpush2.msra.mxu0 %v1479
      %2751 = vmatprep.subr.mxu0 0.0
      %2752 = vmatpush2.msra.mxu0 %v1474
      %2753 = vmatprep.subr.mxu0 0.0
      %2754 = vmatpush2.msra.mxu0 %v1469
      %2755 = vmatprep.subr.mxu0 0.0
      %2756 = vmatpush2.msra.mxu0 %v1366
      %2757 = vmatprep.subr.mxu0 0.0
      %2758 = vmatpush2.msra.mxu0 %v1361
      %2759 = vmatprep.subr.mxu0 0.0
      %2760 = vmatpush2.msra.mxu0 %v1356
      %2761 = vmatprep.subr.mxu0 0.0
      %2762 = vmatpush2.msra.mxu0 %v1351
      %2763 = vmatprep.mubr.f32.mxu0 %v2668
      %2764 = vmatmul.mubr.f32.gmra.mxu0 %v2667
      %v2765 = vpop.f32.mrf.mxu0
      %v2766 = vadd.f32 0.0, %v2765
      %v2767 = vpop.f32.mrf.mxu0
      %2768 = vmatprep.mubr.f32.mxu0 %v2672
      %2769 = vmatmul.mubr.f32.gmra.mxu0 %v2671
      %v2770 = vpop.f32.mrf.mxu0
      %v2771 = vadd.f32 0.0, %v2770
      %v2772 = vpop.f32.mrf.mxu0
      %2773 = vmatprep.mubr.f32.mxu0 %v2676
      %2774 = vmatmul.mubr.f32.gmra.mxu0 %v2675
      %v2775 = vpop.f32.mrf.mxu0
      %v2776 = vadd.f32 0.0, %v2775
      %v2777 = vpop.f32.mrf.mxu0
      %2778 = vmatprep.mubr.f32.mxu0 %v2680
      %2779 = vmatmul.mubr.f32.gmra.mxu0 %v2679
      %v2780 = vpop.f32.mrf.mxu0
      %v2781 = vadd.f32 0.0, %v2780
      %v2782 = vpop.f32.mrf.mxu0
      %2783 = vmatprep.mubr.f32.mxu0 %v2684
      %2784 = vmatmul.mubr.f32.gmra.mxu0 %v2683
      %v2785 = vpop.f32.mrf.mxu0
      %v2786 = vadd.f32 0.0, %v2785
      %v2787 = vpop.f32.mrf.mxu0
      %2788 = vmatprep.mubr.f32.mxu0 %v2688
      %2789 = vmatmul.mubr.f32.gmra.mxu0 %v2687
      %v2790 = vpop.f32.mrf.mxu0
      %v2791 = vadd.f32 0.0, %v2790
      %v2792 = vpop.f32.mrf.mxu0
      %2793 = vmatprep.mubr.f32.mxu0 %v2692
      %2794 = vmatmul.mubr.f32.gmra.mxu0 %v2691
      %v2795 = vpop.f32.mrf.mxu0
      %v2796 = vadd.f32 0.0, %v2795
      %v2797 = vpop.f32.mrf.mxu0
      %2798 = vmatprep.mubr.f32.mxu0 %v2696
      %2799 = vmatmul.mubr.f32.gmra.mxu0 %v2695
      %v2800 = vpop.f32.mrf.mxu0
      %v2801 = vadd.f32 0.0, %v2800
      %v2802 = vpop.f32.mrf.mxu0
      %2803 = vdwg.mxu0
      %2804 = vmatprep.subr.mxu0 0.0
      %2805 = vmatpush1.msra.mxu0 %v2192
      %2806 = vmatprep.subr.mxu0 0.0
      %2807 = vmatpush1.msra.mxu0 %v2187
      %2808 = vmatprep.subr.mxu0 0.0
      %2809 = vmatpush1.msra.mxu0 %v2182
      %2810 = vmatprep.subr.mxu0 0.0
      %2811 = vmatpush1.msra.mxu0 %v2177
      %2812 = vmatprep.subr.mxu0 0.0
      %2813 = vmatpush1.msra.mxu0 %v2074
      %2814 = vmatprep.subr.mxu0 0.0
      %2815 = vmatpush1.msra.mxu0 %v2069
      %2816 = vmatprep.subr.mxu0 0.0
      %2817 = vmatpush1.msra.mxu0 %v2064
      %2818 = vmatprep.subr.mxu0 0.0
      %2819 = vmatpush1.msra.mxu0 %v2059
      %2820 = vmatprep.subr.mxu0 0.0
      %2821 = vmatpush1.msra.mxu0 %v1956
      %2822 = vmatprep.subr.mxu0 0.0
      %2823 = vmatpush1.msra.mxu0 %v1951
      %2824 = vmatprep.subr.mxu0 0.0
      %2825 = vmatpush1.msra.mxu0 %v1946
      %2826 = vmatprep.subr.mxu0 0.0
      %2827 = vmatpush1.msra.mxu0 %v1941
      %2828 = vmatprep.subr.mxu0 0.0
      %2829 = vmatpush1.msra.mxu0 %v1838
      %2830 = vmatprep.subr.mxu0 0.0
      %2831 = vmatpush1.msra.mxu0 %v1833
      %2832 = vmatprep.subr.mxu0 0.0
      %2833 = vmatpush1.msra.mxu0 %v1828
      %2834 = vmatprep.subr.mxu0 0.0
      %2835 = vmatpush1.msra.mxu0 %v1823
      %2836 = vmatprep.subr.mxu0 0.0
      %2837 = vmatpush2.msra.mxu0 %v2664
      %2838 = vmatprep.subr.mxu0 0.0
      %2839 = vmatpush2.msra.mxu0 %v2659
      %2840 = vmatprep.subr.mxu0 0.0
      %2841 = vmatpush2.msra.mxu0 %v2654
      %2842 = vmatprep.subr.mxu0 0.0
      %2843 = vmatpush2.msra.mxu0 %v2649
      %2844 = vmatprep.subr.mxu0 0.0
      %2845 = vmatpush2.msra.mxu0 %v2546
      %2846 = vmatprep.subr.mxu0 0.0
      %2847 = vmatpush2.msra.mxu0 %v2541
      %2848 = vmatprep.subr.mxu0 0.0
      %2849 = vmatpush2.msra.mxu0 %v2536
      %2850 = vmatprep.subr.mxu0 0.0
      %2851 = vmatpush2.msra.mxu0 %v2531
      %2852 = vmatprep.subr.mxu0 0.0
      %2853 = vmatpush2.msra.mxu0 %v2428
      %2854 = vmatprep.subr.mxu0 0.0
      %2855 = vmatpush2.msra.mxu0 %v2423
      %2856 = vmatprep.subr.mxu0 0.0
      %2857 = vmatpush2.msra.mxu0 %v2418
      %2858 = vmatprep.subr.mxu0 0.0
      %2859 = vmatpush2.msra.mxu0 %v2413
      %2860 = vmatprep.subr.mxu0 0.0
      %2861 = vmatpush2.msra.mxu0 %v2310
      %2862 = vmatprep.subr.mxu0 0.0
      %2863 = vmatpush2.msra.mxu0 %v2305
      %2864 = vmatprep.subr.mxu0 0.0
      %2865 = vmatpush2.msra.mxu0 %v2300
      %2866 = vmatprep.subr.mxu0 0.0
      %2867 = vmatpush2.msra.mxu0 %v2295
      %2868 = vmatprep.mubr.f32.mxu0 %v2670
      %2869 = vmatmul.mubr.f32.gmra.mxu0 %v2669
      %v2870 = vpop.f32.mrf.mxu0
      %v2871 = vadd.f32 %v2766, %v2870
      %v2872 = vpop.f32.mrf.mxu0
      %2873 = vmatprep.mubr.f32.mxu0 %v2674
      %2874 = vmatmul.mubr.f32.gmra.mxu0 %v2673
      %v2875 = vpop.f32.mrf.mxu0
      %v2876 = vadd.f32 %v2771, %v2875
      %v2877 = vpop.f32.mrf.mxu0
      %2878 = vmatprep.mubr.f32.mxu0 %v2678
      %2879 = vmatmul.mubr.f32.gmra.mxu0 %v2677
      %v2880 = vpop.f32.mrf.mxu0
      %v2881 = vadd.f32 %v2776, %v2880
      %v2882 = vpop.f32.mrf.mxu0
      %2883 = vmatprep.mubr.f32.mxu0 %v2682
      %2884 = vmatmul.mubr.f32.gmra.mxu0 %v2681
      %v2885 = vpop.f32.mrf.mxu0
      %v2886 = vadd.f32 %v2781, %v2885
      %v2887 = vpop.f32.mrf.mxu0
      %2888 = vmatprep.mubr.f32.mxu0 %v2686
      %2889 = vmatmul.mubr.f32.gmra.mxu0 %v2685
      %v2890 = vpop.f32.mrf.mxu0
      %v2891 = vadd.f32 %v2786, %v2890
      %v2892 = vpop.f32.mrf.mxu0
      %2893 = vmatprep.mubr.f32.mxu0 %v2690
      %2894 = vmatmul.mubr.f32.gmra.mxu0 %v2689
      %v2895 = vpop.f32.mrf.mxu0
      %v2896 = vadd.f32 %v2791, %v2895
      %v2897 = vpop.f32.mrf.mxu0
      %2898 = vmatprep.mubr.f32.mxu0 %v2694
      %2899 = vmatmul.mubr.f32.gmra.mxu0 %v2693
      %v2900 = vpop.f32.mrf.mxu0
      %v2901 = vadd.f32 %v2796, %v2900
      %v2902 = vpop.f32.mrf.mxu0
      %2903 = vmatprep.mubr.f32.mxu0 %v2698
      %2904 = vmatmul.mubr.f32.gmra.mxu0 %v2697
      %v2905 = vpop.f32.mrf.mxu0
      %v2906 = vadd.f32 %v2801, %v2905
      %v2907 = vpop.f32.mrf.mxu0
      %2908 = vdwg.mxu0
      %vm2909 = vcmask 523264
      %v2910 = vsel %vm2909, %v2871, 0.0
      %2911 = vadd.xlane.f32.xlu0 %v2910
      %v2912 = vpop.xlane.xlu0 %2911
      %v2913 = vsel %vm2909, %v2876, 0.0
      %2914 = vadd.xlane.f32.xlu0 %v2913
      %v2915 = vpop.xlane.xlu0 %2914
      %v2916 = vsel %vm2909, %v2881, 0.0
      %2917 = vadd.xlane.f32.xlu0 %v2916
      %v2918 = vpop.xlane.xlu0 %2917
      %v2919 = vsel %vm2909, %v2886, 0.0
      %2920 = vadd.xlane.f32.xlu0 %v2919
      %v2921 = vpop.xlane.xlu0 %2920
      %v2922 = vsel %vm2909, %v2891, 0.0
      %2923 = vadd.xlane.f32.xlu0 %v2922
      %v2924 = vpop.xlane.xlu0 %2923
      %v2925 = vsel %vm2909, %v2896, 0.0
      %2926 = vadd.xlane.f32.xlu0 %v2925
      %v2927 = vpop.xlane.xlu0 %2926
      %v2928 = vsel %vm2909, %v2901, 0.0
      %2929 = vadd.xlane.f32.xlu0 %v2928
      %v2930 = vpop.xlane.xlu0 %2929
      %v2931 = vsel %vm2909, %v2906, 0.0
      %2932 = vadd.xlane.f32.xlu0 %v2931
      %v2933 = vpop.xlane.xlu0 %2932
      %v2934 = vrcp.pop 64.0
      %v2935 = vmul.f32 %v2912, %v2934
      %v2936 = vmul.f32 %v2915, %v2934
      %v2937 = vmul.f32 %v2918, %v2934
      %v2938 = vmul.f32 %v2921, %v2934
      %v2939 = vmul.f32 %v2924, %v2934
      %v2940 = vmul.f32 %v2927, %v2934
      %v2941 = vmul.f32 %v2930, %v2934
      %v2942 = vmul.f32 %v2933, %v2934
      %v2943 = vsub.f32 %v2871, %v2935
      %v2944 = vsub.f32 %v2876, %v2936
      %v2945 = vsub.f32 %v2881, %v2937
      %v2946 = vsub.f32 %v2886, %v2938
      %v2947 = vsub.f32 %v2891, %v2939
      %v2948 = vsub.f32 %v2896, %v2940
      %v2949 = vsub.f32 %v2901, %v2941
      %v2950 = vsub.f32 %v2906, %v2942
      %v2951 = vmul.f32 %v2943, %v2943
      %v2952 = vmul.f32 %v2944, %v2944
      %v2953 = vmul.f32 %v2945, %v2945
      %v2954 = vmul.f32 %v2946, %v2946
      %v2955 = vmul.f32 %v2947, %v2947
      %v2956 = vmul.f32 %v2948, %v2948
      %v2957 = vmul.f32 %v2949, %v2949
      %v2958 = vmul.f32 %v2950, %v2950
      %v2959 = vsel %vm2909, %v2951, 0.0
      %2960 = vadd.xlane.f32.xlu0 %v2959
      %v2961 = vpop.xlane.xlu0 %2960
      %v2962 = vsel %vm2909, %v2952, 0.0
      %2963 = vadd.xlane.f32.xlu0 %v2962
      %v2964 = vpop.xlane.xlu0 %2963
      %v2965 = vsel %vm2909, %v2953, 0.0
      %2966 = vadd.xlane.f32.xlu0 %v2965
      %v2967 = vpop.xlane.xlu0 %2966
      %v2968 = vsel %vm2909, %v2954, 0.0
      %2969 = vadd.xlane.f32.xlu0 %v2968
      %v2970 = vpop.xlane.xlu0 %2969
      %v2971 = vsel %vm2909, %v2955, 0.0
      %2972 = vadd.xlane.f32.xlu0 %v2971
      %v2973 = vpop.xlane.xlu0 %2972
      %v2974 = vsel %vm2909, %v2956, 0.0
      %2975 = vadd.xlane.f32.xlu0 %v2974
      %v2976 = vpop.xlane.xlu0 %2975
      %v2977 = vsel %vm2909, %v2957, 0.0
      %2978 = vadd.xlane.f32.xlu0 %v2977
      %v2979 = vpop.xlane.xlu0 %2978
      %v2980 = vsel %vm2909, %v2958, 0.0
      %2981 = vadd.xlane.f32.xlu0 %v2980
      %v2982 = vpop.xlane.xlu0 %2981
      %v2983 = vmul.f32 %v2961, %v2934
      %v2984 = vmul.f32 %v2964, %v2934
      %v2985 = vmul.f32 %v2967, %v2934
      %v2986 = vmul.f32 %v2970, %v2934
      %v2987 = vmul.f32 %v2973, %v2934
      %v2988 = vmul.f32 %v2976, %v2934
      %v2989 = vmul.f32 %v2979, %v2934
      %v2990 = vmul.f32 %v2982, %v2934
      %v2991 = vadd.f32 %v2983, 1e-05
      %v2992 = vadd.f32 %v2984, 1e-05
      %v2993 = vadd.f32 %v2985, 1e-05
      %v2994 = vadd.f32 %v2986, 1e-05
      %v2995 = vadd.f32 %v2987, 1e-05
      %v2996 = vadd.f32 %v2988, 1e-05
      %v2997 = vadd.f32 %v2989, 1e-05
      %v2998 = vadd.f32 %v2990, 1e-05
      %v2999 = vrsqrt.pop %v2991
      %v3000 = vrsqrt.pop %v2992
      %v3001 = vrsqrt.pop %v2993
      %v3002 = vrsqrt.pop %v2994
      %v3003 = vrsqrt.pop %v2995
      %v3004 = vrsqrt.pop %v2996
      %v3005 = vrsqrt.pop %v2997
      %v3006 = vrsqrt.pop %v2998
      %v3007 = vmul.f32 %v2943, %v2999
      %v3008 = vmul.f32 %v2944, %v3000
      %v3009 = vmul.f32 %v2945, %v3001
      %v3010 = vmul.f32 %v2946, %v3002
      %v3011 = vmul.f32 %v2947, %v3003
      %v3012 = vmul.f32 %v2948, %v3004
      %v3013 = vmul.f32 %v2949, %v3005
      %v3014 = vmul.f32 %v2950, %v3006
      %v3015 = vld [vmem:[%s6] sm:$0xff]
      %v3016 = vld [vmem:[%s6 + $0x8] sm:$0xff]
      %v3017 = vld [vmem:[%s6 + $0x10] sm:$0xff]
      %v3018 = vld [vmem:[%s6 + $0x18] sm:$0xff]
      %v3019 = vld [vmem:[%s6 + $0x20] sm:$0xff]
      %v3020 = vld [vmem:[%s6 + $0x28] sm:$0xff]
      %v3021 = vld [vmem:[%s6 + $0x30] sm:$0xff]
      %v3022 = vld [vmem:[%s6 + $0x38] sm:$0xff]
      %3024 = vset.pattern.permute.xlu0 0
      %3025 = vperm.xlu0 %3024, %v3015
      %v3026 = vpop.permute.xlu0 %3025
      %3029 = vset.pattern.permute.xlu0 0
      %3030 = vperm.xlu0 %3029, %v3016
      %v3031 = vpop.permute.xlu0 %3030
      %3034 = vset.pattern.permute.xlu0 0
      %3035 = vperm.xlu0 %3034, %v3017
      %v3036 = vpop.permute.xlu0 %3035
      %3039 = vset.pattern.permute.xlu0 0
      %3040 = vperm.xlu0 %3039, %v3018
      %v3041 = vpop.permute.xlu0 %3040
      %3044 = vset.pattern.permute.xlu0 0
      %3045 = vperm.xlu0 %3044, %v3019
      %v3046 = vpop.permute.xlu0 %3045
      %3049 = vset.pattern.permute.xlu0 0
      %3050 = vperm.xlu0 %3049, %v3020
      %v3051 = vpop.permute.xlu0 %3050
      %3054 = vset.pattern.permute.xlu0 0
      %3055 = vperm.xlu0 %3054, %v3021
      %v3056 = vpop.permute.xlu0 %3055
      %3059 = vset.pattern.permute.xlu0 0
      %3060 = vperm.xlu0 %3059, %v3022
      %v3061 = vpop.permute.xlu0 %3060
      %v3063 = vmul.f32 %v3007, %v3026
      %v3064 = vmul.f32 %v3008, %v3031
      %v3065 = vmul.f32 %v3009, %v3036
      %v3066 = vmul.f32 %v3010, %v3041
      %v3067 = vmul.f32 %v3011, %v3046
      %v3068 = vmul.f32 %v3012, %v3051
      %v3069 = vmul.f32 %v3013, %v3056
      %v3070 = vmul.f32 %v3014, %v3061
      %v3071 = vld [vmem:[%s7] sm:$0xff]
      %v3072 = vld [vmem:[%s7 + $0x8] sm:$0xff]
      %v3073 = vld [vmem:[%s7 + $0x10] sm:$0xff]
      %v3074 = vld [vmem:[%s7 + $0x18] sm:$0xff]
      %v3075 = vld [vmem:[%s7 + $0x20] sm:$0xff]
      %v3076 = vld [vmem:[%s7 + $0x28] sm:$0xff]
      %v3077 = vld [vmem:[%s7 + $0x30] sm:$0xff]
      %v3078 = vld [vmem:[%s7 + $0x38] sm:$0xff]
      %3080 = vset.pattern.permute.xlu0 0
      %3081 = vperm.xlu0 %3080, %v3071
      %v3082 = vpop.permute.xlu0 %3081
      %3085 = vset.pattern.permute.xlu0 0
      %3086 = vperm.xlu0 %3085, %v3072
      %v3087 = vpop.permute.xlu0 %3086
      %3090 = vset.pattern.permute.xlu0 0
      %3091 = vperm.xlu0 %3090, %v3073
      %v3092 = vpop.permute.xlu0 %3091
      %3095 = vset.pattern.permute.xlu0 0
      %3096 = vperm.xlu0 %3095, %v3074
      %v3097 = vpop.permute.xlu0 %3096
      %3100 = vset.pattern.permute.xlu0 0
      %3101 = vperm.xlu0 %3100, %v3075
      %v3102 = vpop.permute.xlu0 %3101
      %3105 = vset.pattern.permute.xlu0 0
      %3106 = vperm.xlu0 %3105, %v3076
      %v3107 = vpop.permute.xlu0 %3106
      %3110 = vset.pattern.permute.xlu0 0
      %3111 = vperm.xlu0 %3110, %v3077
      %v3112 = vpop.permute.xlu0 %3111
      %3115 = vset.pattern.permute.xlu0 0
      %3116 = vperm.xlu0 %3115, %v3078
      %v3117 = vpop.permute.xlu0 %3116
      %v3119 = vadd.f32 %v3063, %v3082
      %v3120 = vadd.f32 %v3064, %v3087
      %v3121 = vadd.f32 %v3065, %v3092
      %v3122 = vadd.f32 %v3066, %v3097
      %v3123 = vadd.f32 %v3067, %v3102
      %v3124 = vadd.f32 %v3068, %v3107
      %v3125 = vadd.f32 %v3069, %v3112
      %v3126 = vadd.f32 %v3070, %v3117
      %vm3127 = vcmp.gt.f32.partialorder %v3119, 0.0
      %vm3128 = vcmp.gt.f32.partialorder %v3120, 0.0
      %vm3129 = vcmp.gt.f32.partialorder %v3121, 0.0
      %vm3130 = vcmp.gt.f32.partialorder %v3122, 0.0
      %vm3131 = vcmp.gt.f32.partialorder %v3123, 0.0
      %vm3132 = vcmp.gt.f32.partialorder %v3124, 0.0
      %vm3133 = vcmp.gt.f32.partialorder %v3125, 0.0
      %vm3134 = vcmp.gt.f32.partialorder %v3126, 0.0
      %v3135 = vmul.f32 %v3119, 0.2
      %v3136 = vmul.f32 %v3120, 0.2
      %v3137 = vmul.f32 %v3121, 0.2
      %v3138 = vmul.f32 %v3122, 0.2
      %v3139 = vmul.f32 %v3123, 0.2
      %v3140 = vmul.f32 %v3124, 0.2
      %v3141 = vmul.f32 %v3125, 0.2
      %v3142 = vmul.f32 %v3126, 0.2
      %v3143 = vsel %vm3127, %v3119, %v3135
      %v3144 = vsel %vm3128, %v3120, %v3136
      %v3145 = vsel %vm3129, %v3121, %v3137
      %v3146 = vsel %vm3130, %v3122, %v3138
      %v3147 = vsel %vm3131, %v3123, %v3139
      %v3148 = vsel %vm3132, %v3124, %v3140
      %v3149 = vsel %vm3133, %v3125, %v3141
      %v3150 = vsel %vm3134, %v3126, %v3142
      %v3151 = vld [vmem:[%s8] sm:$0xff]
      %v3152 = vld [vmem:[%s8 + $0x8] sm:$0xff]
      %v3153 = vld [vmem:[%s8 + $0x10] sm:$0xff]
      %v3154 = vld [vmem:[%s8 + $0x18] sm:$0xff]
      %v3155 = vld [vmem:[%s8 + $0x20] sm:$0xff]
      %v3156 = vld [vmem:[%s8 + $0x28] sm:$0xff]
      %v3157 = vld [vmem:[%s8 + $0x30] sm:$0xff]
      %v3158 = vld [vmem:[%s8 + $0x38] sm:$0xff]
      %v3160 = vsel %vm2909, %v3143, 0
      %v3163 = vsel %vm2909, %v3144, 0
      %v3166 = vsel %vm2909, %v3145, 0
      %v3169 = vsel %vm2909, %v3146, 0
      %v3172 = vsel %vm2909, %v3147, 0
      %v3175 = vsel %vm2909, %v3148, 0
      %v3178 = vsel %vm2909, %v3149, 0
      %v3181 = vsel %vm2909, %v3150, 0
      %3183 = vmatprep.subr.mxu0 0.0
      %3184 = vmatpush1.msra.mxu0 0.0
      %3185 = vmatprep.subr.mxu0 0.0
      %3186 = vmatpush1.msra.mxu0 0.0
      %3187 = vmatprep.subr.mxu0 0.0
      %3188 = vmatpush1.msra.mxu0 0.0
      %3189 = vmatprep.subr.mxu0 0.0
      %3190 = vmatpush1.msra.mxu0 0.0
      %3191 = vmatprep.subr.mxu0 0.0
      %3192 = vmatpush1.msra.mxu0 0.0
      %3193 = vmatprep.subr.mxu0 0.0
      %3194 = vmatpush1.msra.mxu0 0.0
      %3195 = vmatprep.subr.mxu0 0.0
      %3196 = vmatpush1.msra.mxu0 0.0
      %3197 = vmatprep.subr.mxu0 0.0
      %3198 = vmatpush1.msra.mxu0 0.0
      %3199 = vmatprep.subr.mxu0 0.0
      %3200 = vmatpush1.msra.mxu0 %v3158
      %3201 = vmatprep.subr.mxu0 0.0
      %3202 = vmatpush1.msra.mxu0 %v3157
      %3203 = vmatprep.subr.mxu0 0.0
      %3204 = vmatpush1.msra.mxu0 %v3156
      %3205 = vmatprep.subr.mxu0 0.0
      %3206 = vmatpush1.msra.mxu0 %v3155
      %3207 = vmatprep.subr.mxu0 0.0
      %3208 = vmatpush1.msra.mxu0 %v3154
      %3209 = vmatprep.subr.mxu0 0.0
      %3210 = vmatpush1.msra.mxu0 %v3153
      %3211 = vmatprep.subr.mxu0 0.0
      %3212 = vmatpush1.msra.mxu0 %v3152
      %3213 = vmatprep.subr.mxu0 0.0
      %3214 = vmatpush1.msra.mxu0 %v3151
      %3215 = vmatprep.subr.mxu0 0.0
      %3216 = vmatpush2.msra.mxu0 0.0
      %3217 = vmatprep.subr.mxu0 0.0
      %3218 = vmatpush2.msra.mxu0 0.0
      %3219 = vmatprep.subr.mxu0 0.0
      %3220 = vmatpush2.msra.mxu0 0.0
      %3221 = vmatprep.subr.mxu0 0.0
      %3222 = vmatpush2.msra.mxu0 0.0
      %3223 = vmatprep.subr.mxu0 0.0
      %3224 = vmatpush2.msra.mxu0 0.0
      %3225 = vmatprep.subr.mxu0 0.0
      %3226 = vmatpush2.msra.mxu0 0.0
      %3227 = vmatprep.subr.mxu0 0.0
      %3228 = vmatpush2.msra.mxu0 0.0
      %3229 = vmatprep.subr.mxu0 0.0
      %3230 = vmatpush2.msra.mxu0 0.0
      %3231 = vmatprep.subr.mxu0 0.0
      %3232 = vmatpush2.msra.mxu0 0.0
      %3233 = vmatprep.subr.mxu0 0.0
      %3234 = vmatpush2.msra.mxu0 0.0
      %3235 = vmatprep.subr.mxu0 0.0
      %3236 = vmatpush2.msra.mxu0 0.0
      %3237 = vmatprep.subr.mxu0 0.0
      %3238 = vmatpush2.msra.mxu0 0.0
      %3239 = vmatprep.subr.mxu0 0.0
      %3240 = vmatpush2.msra.mxu0 0.0
      %3241 = vmatprep.subr.mxu0 0.0
      %3242 = vmatpush2.msra.mxu0 0.0
      %3243 = vmatprep.subr.mxu0 0.0
      %3244 = vmatpush2.msra.mxu0 0.0
      %3245 = vmatprep.subr.mxu0 0.0
      %3246 = vmatpush2.msra.mxu0 0.0
      %3247 = vmatprep.mubr.f32.mxu0 0.0
      %3248 = vmatmul.mubr.f32.gmra.mxu0 %v3160
      %v3249 = vpop.f32.mrf.mxu0
      %v3250 = vadd.f32 0.0, %v3249
      %v3251 = vpop.f32.mrf.mxu0
      %3252 = vmatprep.mubr.f32.mxu0 0.0
      %3253 = vmatmul.mubr.f32.gmra.mxu0 %v3163
      %v3254 = vpop.f32.mrf.mxu0
      %v3255 = vadd.f32 0.0, %v3254
      %v3256 = vpop.f32.mrf.mxu0
      %3257 = vmatprep.mubr.f32.mxu0 0.0
      %3258 = vmatmul.mubr.f32.gmra.mxu0 %v3166
      %v3259 = vpop.f32.mrf.mxu0
      %v3260 = vadd.f32 0.0, %v3259
      %v3261 = vpop.f32.mrf.mxu0
      %3262 = vmatprep.mubr.f32.mxu0 0.0
      %3263 = vmatmul.mubr.f32.gmra.mxu0 %v3169
      %v3264 = vpop.f32.mrf.mxu0
      %v3265 = vadd.f32 0.0, %v3264
      %v3266 = vpop.f32.mrf.mxu0
      %3267 = vmatprep.mubr.f32.mxu0 0.0
      %3268 = vmatmul.mubr.f32.gmra.mxu0 %v3172
      %v3269 = vpop.f32.mrf.mxu0
      %v3270 = vadd.f32 0.0, %v3269
      %v3271 = vpop.f32.mrf.mxu0
      %3272 = vmatprep.mubr.f32.mxu0 0.0
      %3273 = vmatmul.mubr.f32.gmra.mxu0 %v3175
      %v3274 = vpop.f32.mrf.mxu0
      %v3275 = vadd.f32 0.0, %v3274
      %v3276 = vpop.f32.mrf.mxu0
      %3277 = vmatprep.mubr.f32.mxu0 0.0
      %3278 = vmatmul.mubr.f32.gmra.mxu0 %v3178
      %v3279 = vpop.f32.mrf.mxu0
      %v3280 = vadd.f32 0.0, %v3279
      %v3281 = vpop.f32.mrf.mxu0
      %3282 = vmatprep.mubr.f32.mxu0 0.0
      %3283 = vmatmul.mubr.f32.gmra.mxu0 %v3181
      %v3284 = vpop.f32.mrf.mxu0
      %v3285 = vadd.f32 0.0, %v3284
      %v3286 = vpop.f32.mrf.mxu0
      %3287 = vdwg.mxu0
      %s3288 = scalar_lea.vmem %s8, 64
      %v3289 = vld [vmem:[%s3288] sm:$0xff]
      %v3290 = vld [vmem:[%s3288 + $0x8] sm:$0xff]
      %v3291 = vld [vmem:[%s3288 + $0x10] sm:$0xff]
      %v3292 = vld [vmem:[%s3288 + $0x18] sm:$0xff]
      %v3293 = vld [vmem:[%s3288 + $0x20] sm:$0xff]
      %v3294 = vld [vmem:[%s3288 + $0x28] sm:$0xff]
      %v3295 = vld [vmem:[%s3288 + $0x30] sm:$0xff]
      %v3296 = vld [vmem:[%s3288 + $0x38] sm:$0xff]
      %3297 = vmatprep.subr.mxu0 0.0
      %3298 = vmatpush1.msra.mxu0 0.0
      %3299 = vmatprep.subr.mxu0 0.0
      %3300 = vmatpush1.msra.mxu0 0.0
      %3301 = vmatprep.subr.mxu0 0.0
      %3302 = vmatpush1.msra.mxu0 0.0
      %3303 = vmatprep.subr.mxu0 0.0
      %3304 = vmatpush1.msra.mxu0 0.0
      %3305 = vmatprep.subr.mxu0 0.0
      %3306 = vmatpush1.msra.mxu0 0.0
      %3307 = vmatprep.subr.mxu0 0.0
      %3308 = vmatpush1.msra.mxu0 0.0
      %3309 = vmatprep.subr.mxu0 0.0
      %3310 = vmatpush1.msra.mxu0 0.0
      %3311 = vmatprep.subr.mxu0 0.0
      %3312 = vmatpush1.msra.mxu0 0.0
      %3313 = vmatprep.subr.mxu0 0.0
      %3314 = vmatpush1.msra.mxu0 %v3296
      %3315 = vmatprep.subr.mxu0 0.0
      %3316 = vmatpush1.msra.mxu0 %v3295
      %3317 = vmatprep.subr.mxu0 0.0
      %3318 = vmatpush1.msra.mxu0 %v3294
      %3319 = vmatprep.subr.mxu0 0.0
      %3320 = vmatpush1.msra.mxu0 %v3293
      %3321 = vmatprep.subr.mxu0 0.0
      %3322 = vmatpush1.msra.mxu0 %v3292
      %3323 = vmatprep.subr.mxu0 0.0
      %3324 = vmatpush1.msra.mxu0 %v3291
      %3325 = vmatprep.subr.mxu0 0.0
      %3326 = vmatpush1.msra.mxu0 %v3290
      %3327 = vmatprep.subr.mxu0 0.0
      %3328 = vmatpush1.msra.mxu0 %v3289
      %3329 = vmatprep.subr.mxu0 0.0
      %3330 = vmatpush2.msra.mxu0 0.0
      %3331 = vmatprep.subr.mxu0 0.0
      %3332 = vmatpush2.msra.mxu0 0.0
      %3333 = vmatprep.subr.mxu0 0.0
      %3334 = vmatpush2.msra.mxu0 0.0
      %3335 = vmatprep.subr.mxu0 0.0
      %3336 = vmatpush2.msra.mxu0 0.0
      %3337 = vmatprep.subr.mxu0 0.0
      %3338 = vmatpush2.msra.mxu0 0.0
      %3339 = vmatprep.subr.mxu0 0.0
      %3340 = vmatpush2.msra.mxu0 0.0
      %3341 = vmatprep.subr.mxu0 0.0
      %3342 = vmatpush2.msra.mxu0 0.0
      %3343 = vmatprep.subr.mxu0 0.0
      %3344 = vmatpush2.msra.mxu0 0.0
      %3345 = vmatprep.subr.mxu0 0.0
      %3346 = vmatpush2.msra.mxu0 0.0
      %3347 = vmatprep.subr.mxu0 0.0
      %3348 = vmatpush2.msra.mxu0 0.0
      %3349 = vmatprep.subr.mxu0 0.0
      %3350 = vmatpush2.msra.mxu0 0.0
      %3351 = vmatprep.subr.mxu0 0.0
      %3352 = vmatpush2.msra.mxu0 0.0
      %3353 = vmatprep.subr.mxu0 0.0
      %3354 = vmatpush2.msra.mxu0 0.0
      %3355 = vmatprep.subr.mxu0 0.0
      %3356 = vmatpush2.msra.mxu0 0.0
      %3357 = vmatprep.subr.mxu0 0.0
      %3358 = vmatpush2.msra.mxu0 0.0
      %3359 = vmatprep.subr.mxu0 0.0
      %3360 = vmatpush2.msra.mxu0 0.0
      %3361 = vmatprep.mubr.f32.mxu0 0.0
      %3362 = vmatmul.mubr.f32.gmra.mxu0 %v3160
      %v3363 = vpop.f32.mrf.mxu0
      %v3364 = vadd.f32 0.0, %v3363
      %v3365 = vpop.f32.mrf.mxu0
      %3366 = vmatprep.mubr.f32.mxu0 0.0
      %3367 = vmatmul.mubr.f32.gmra.mxu0 %v3163
      %v3368 = vpop.f32.mrf.mxu0
      %v3369 = vadd.f32 0.0, %v3368
      %v3370 = vpop.f32.mrf.mxu0
      %3371 = vmatprep.mubr.f32.mxu0 0.0
      %3372 = vmatmul.mubr.f32.gmra.mxu0 %v3166
      %v3373 = vpop.f32.mrf.mxu0
      %v3374 = vadd.f32 0.0, %v3373
      %v3375 = vpop.f32.mrf.mxu0
      %3376 = vmatprep.mubr.f32.mxu0 0.0
      %3377 = vmatmul.mubr.f32.gmra.mxu0 %v3169
      %v3378 = vpop.f32.mrf.mxu0
      %v3379 = vadd.f32 0.0, %v3378
      %v3380 = vpop.f32.mrf.mxu0
      %3381 = vmatprep.mubr.f32.mxu0 0.0
      %3382 = vmatmul.mubr.f32.gmra.mxu0 %v3172
      %v3383 = vpop.f32.mrf.mxu0
      %v3384 = vadd.f32 0.0, %v3383
      %v3385 = vpop.f32.mrf.mxu0
      %3386 = vmatprep.mubr.f32.mxu0 0.0
      %3387 = vmatmul.mubr.f32.gmra.mxu0 %v3175
      %v3388 = vpop.f32.mrf.mxu0
      %v3389 = vadd.f32 0.0, %v3388
      %v3390 = vpop.f32.mrf.mxu0
      %3391 = vmatprep.mubr.f32.mxu0 0.0
      %3392 = vmatmul.mubr.f32.gmra.mxu0 %v3178
      %v3393 = vpop.f32.mrf.mxu0
      %v3394 = vadd.f32 0.0, %v3393
      %v3395 = vpop.f32.mrf.mxu0
      %3396 = vmatprep.mubr.f32.mxu0 0.0
      %3397 = vmatmul.mubr.f32.gmra.mxu0 %v3181
      %v3398 = vpop.f32.mrf.mxu0
      %v3399 = vadd.f32 0.0, %v3398
      %v3400 = vpop.f32.mrf.mxu0
      %3401 = vdwg.mxu0
      %s3402 = scalar_lea.vmem %s8, 128
      %v3403 = vld [vmem:[%s3402] sm:$0xff]
      %v3404 = vld [vmem:[%s3402 + $0x8] sm:$0xff]
      %v3405 = vld [vmem:[%s3402 + $0x10] sm:$0xff]
      %v3406 = vld [vmem:[%s3402 + $0x18] sm:$0xff]
      %v3407 = vld [vmem:[%s3402 + $0x20] sm:$0xff]
      %v3408 = vld [vmem:[%s3402 + $0x28] sm:$0xff]
      %v3409 = vld [vmem:[%s3402 + $0x30] sm:$0xff]
      %v3410 = vld [vmem:[%s3402 + $0x38] sm:$0xff]
      %3411 = vmatprep.subr.mxu0 0.0
      %3412 = vmatpush1.msra.mxu0 0.0
      %3413 = vmatprep.subr.mxu0 0.0
      %3414 = vmatpush1.msra.mxu0 0.0
      %3415 = vmatprep.subr.mxu0 0.0
      %3416 = vmatpush1.msra.mxu0 0.0
      %3417 = vmatprep.subr.mxu0 0.0
      %3418 = vmatpush1.msra.mxu0 0.0
      %3419 = vmatprep.subr.mxu0 0.0
      %3420 = vmatpush1.msra.mxu0 0.0
      %3421 = vmatprep.subr.mxu0 0.0
      %3422 = vmatpush1.msra.mxu0 0.0
      %3423 = vmatprep.subr.mxu0 0.0
      %3424 = vmatpush1.msra.mxu0 0.0
      %3425 = vmatprep.subr.mxu0 0.0
      %3426 = vmatpush1.msra.mxu0 0.0
      %3427 = vmatprep.subr.mxu0 0.0
      %3428 = vmatpush1.msra.mxu0 %v3410
      %3429 = vmatprep.subr.mxu0 0.0
      %3430 = vmatpush1.msra.mxu0 %v3409
      %3431 = vmatprep.subr.mxu0 0.0
      %3432 = vmatpush1.msra.mxu0 %v3408
      %3433 = vmatprep.subr.mxu0 0.0
      %3434 = vmatpush1.msra.mxu0 %v3407
      %3435 = vmatprep.subr.mxu0 0.0
      %3436 = vmatpush1.msra.mxu0 %v3406
      %3437 = vmatprep.subr.mxu0 0.0
      %3438 = vmatpush1.msra.mxu0 %v3405
      %3439 = vmatprep.subr.mxu0 0.0
      %3440 = vmatpush1.msra.mxu0 %v3404
      %3441 = vmatprep.subr.mxu0 0.0
      %3442 = vmatpush1.msra.mxu0 %v3403
      %3443 = vmatprep.subr.mxu0 0.0
      %3444 = vmatpush2.msra.mxu0 0.0
      %3445 = vmatprep.subr.mxu0 0.0
      %3446 = vmatpush2.msra.mxu0 0.0
      %3447 = vmatprep.subr.mxu0 0.0
      %3448 = vmatpush2.msra.mxu0 0.0
      %3449 = vmatprep.subr.mxu0 0.0
      %3450 = vmatpush2.msra.mxu0 0.0
      %3451 = vmatprep.subr.mxu0 0.0
      %3452 = vmatpush2.msra.mxu0 0.0
      %3453 = vmatprep.subr.mxu0 0.0
      %3454 = vmatpush2.msra.mxu0 0.0
      %3455 = vmatprep.subr.mxu0 0.0
      %3456 = vmatpush2.msra.mxu0 0.0
      %3457 = vmatprep.subr.mxu0 0.0
      %3458 = vmatpush2.msra.mxu0 0.0
      %3459 = vmatprep.subr.mxu0 0.0
      %3460 = vmatpush2.msra.mxu0 0.0
      %3461 = vmatprep.subr.mxu0 0.0
      %3462 = vmatpush2.msra.mxu0 0.0
      %3463 = vmatprep.subr.mxu0 0.0
      %3464 = vmatpush2.msra.mxu0 0.0
      %3465 = vmatprep.subr.mxu0 0.0
      %3466 = vmatpush2.msra.mxu0 0.0
      %3467 = vmatprep.subr.mxu0 0.0
      %3468 = vmatpush2.msra.mxu0 0.0
      %3469 = vmatprep.subr.mxu0 0.0
      %3470 = vmatpush2.msra.mxu0 0.0
      %3471 = vmatprep.subr.mxu0 0.0
      %3472 = vmatpush2.msra.mxu0 0.0
      %3473 = vmatprep.subr.mxu0 0.0
      %3474 = vmatpush2.msra.mxu0 0.0
      %3475 = vmatprep.mubr.f32.mxu0 0.0
      %3476 = vmatmul.mubr.f32.gmra.mxu0 %v3160
      %v3477 = vpop.f32.mrf.mxu0
      %v3478 = vadd.f32 0.0, %v3477
      %v3479 = vpop.f32.mrf.mxu0
      %3480 = vmatprep.mubr.f32.mxu0 0.0
      %3481 = vmatmul.mubr.f32.gmra.mxu0 %v3163
      %v3482 = vpop.f32.mrf.mxu0
      %v3483 = vadd.f32 0.0, %v3482
      %v3484 = vpop.f32.mrf.mxu0
      %3485 = vmatprep.mubr.f32.mxu0 0.0
      %3486 = vmatmul.mubr.f32.gmra.mxu0 %v3166
      %v3487 = vpop.f32.mrf.mxu0
      %v3488 = vadd.f32 0.0, %v3487
      %v3489 = vpop.f32.mrf.mxu0
      %3490 = vmatprep.mubr.f32.mxu0 0.0
      %3491 = vmatmul.mubr.f32.gmra.mxu0 %v3169
      %v3492 = vpop.f32.mrf.mxu0
      %v3493 = vadd.f32 0.0, %v3492
      %v3494 = vpop.f32.mrf.mxu0
      %3495 = vmatprep.mubr.f32.mxu0 0.0
      %3496 = vmatmul.mubr.f32.gmra.mxu0 %v3172
      %v3497 = vpop.f32.mrf.mxu0
      %v3498 = vadd.f32 0.0, %v3497
      %v3499 = vpop.f32.mrf.mxu0
      %3500 = vmatprep.mubr.f32.mxu0 0.0
      %3501 = vmatmul.mubr.f32.gmra.mxu0 %v3175
      %v3502 = vpop.f32.mrf.mxu0
      %v3503 = vadd.f32 0.0, %v3502
      %v3504 = vpop.f32.mrf.mxu0
      %3505 = vmatprep.mubr.f32.mxu0 0.0
      %3506 = vmatmul.mubr.f32.gmra.mxu0 %v3178
      %v3507 = vpop.f32.mrf.mxu0
      %v3508 = vadd.f32 0.0, %v3507
      %v3509 = vpop.f32.mrf.mxu0
      %3510 = vmatprep.mubr.f32.mxu0 0.0
      %3511 = vmatmul.mubr.f32.gmra.mxu0 %v3181
      %v3512 = vpop.f32.mrf.mxu0
      %v3513 = vadd.f32 0.0, %v3512
      %v3514 = vpop.f32.mrf.mxu0
      %3515 = vdwg.mxu0
      %s3516 = scalar_lea.vmem %s8, 192
      %v3517 = vld [vmem:[%s3516] sm:$0xff]
      %v3518 = vld [vmem:[%s3516 + $0x8] sm:$0xff]
      %v3519 = vld [vmem:[%s3516 + $0x10] sm:$0xff]
      %v3520 = vld [vmem:[%s3516 + $0x18] sm:$0xff]
      %v3521 = vld [vmem:[%s3516 + $0x20] sm:$0xff]
      %v3522 = vld [vmem:[%s3516 + $0x28] sm:$0xff]
      %v3523 = vld [vmem:[%s3516 + $0x30] sm:$0xff]
      %v3524 = vld [vmem:[%s3516 + $0x38] sm:$0xff]
      %3525 = vmatprep.subr.mxu0 0.0
      %3526 = vmatpush1.msra.mxu0 0.0
      %3527 = vmatprep.subr.mxu0 0.0
      %3528 = vmatpush1.msra.mxu0 0.0
      %3529 = vmatprep.subr.mxu0 0.0
      %3530 = vmatpush1.msra.mxu0 0.0
      %3531 = vmatprep.subr.mxu0 0.0
      %3532 = vmatpush1.msra.mxu0 0.0
      %3533 = vmatprep.subr.mxu0 0.0
      %3534 = vmatpush1.msra.mxu0 0.0
      %3535 = vmatprep.subr.mxu0 0.0
      %3536 = vmatpush1.msra.mxu0 0.0
      %3537 = vmatprep.subr.mxu0 0.0
      %3538 = vmatpush1.msra.mxu0 0.0
      %3539 = vmatprep.subr.mxu0 0.0
      %3540 = vmatpush1.msra.mxu0 0.0
      %3541 = vmatprep.subr.mxu0 0.0
      %3542 = vmatpush1.msra.mxu0 %v3524
      %3543 = vmatprep.subr.mxu0 0.0
      %3544 = vmatpush1.msra.mxu0 %v3523
      %3545 = vmatprep.subr.mxu0 0.0
      %3546 = vmatpush1.msra.mxu0 %v3522
      %3547 = vmatprep.subr.mxu0 0.0
      %3548 = vmatpush1.msra.mxu0 %v3521
      %3549 = vmatprep.subr.mxu0 0.0
      %3550 = vmatpush1.msra.mxu0 %v3520
      %3551 = vmatprep.subr.mxu0 0.0
      %3552 = vmatpush1.msra.mxu0 %v3519
      %3553 = vmatprep.subr.mxu0 0.0
      %3554 = vmatpush1.msra.mxu0 %v3518
      %3555 = vmatprep.subr.mxu0 0.0
      %3556 = vmatpush1.msra.mxu0 %v3517
      %3557 = vmatprep.subr.mxu0 0.0
      %3558 = vmatpush2.msra.mxu0 0.0
      %3559 = vmatprep.subr.mxu0 0.0
      %3560 = vmatpush2.msra.mxu0 0.0
      %3561 = vmatprep.subr.mxu0 0.0
      %3562 = vmatpush2.msra.mxu0 0.0
      %3563 = vmatprep.subr.mxu0 0.0
      %3564 = vmatpush2.msra.mxu0 0.0
      %3565 = vmatprep.subr.mxu0 0.0
      %3566 = vmatpush2.msra.mxu0 0.0
      %3567 = vmatprep.subr.mxu0 0.0
      %3568 = vmatpush2.msra.mxu0 0.0
      %3569 = vmatprep.subr.mxu0 0.0
      %3570 = vmatpush2.msra.mxu0 0.0
      %3571 = vmatprep.subr.mxu0 0.0
      %3572 = vmatpush2.msra.mxu0 0.0
      %3573 = vmatprep.subr.mxu0 0.0
      %3574 = vmatpush2.msra.mxu0 0.0
      %3575 = vmatprep.subr.mxu0 0.0
      %3576 = vmatpush2.msra.mxu0 0.0
      %3577 = vmatprep.subr.mxu0 0.0
      %3578 = vmatpush2.msra.mxu0 0.0
      %3579 = vmatprep.subr.mxu0 0.0
      %3580 = vmatpush2.msra.mxu0 0.0
      %3581 = vmatprep.subr.mxu0 0.0
      %3582 = vmatpush2.msra.mxu0 0.0
      %3583 = vmatprep.subr.mxu0 0.0
      %3584 = vmatpush2.msra.mxu0 0.0
      %3585 = vmatprep.subr.mxu0 0.0
      %3586 = vmatpush2.msra.mxu0 0.0
      %3587 = vmatprep.subr.mxu0 0.0
      %3588 = vmatpush2.msra.mxu0 0.0
      %3589 = vmatprep.mubr.f32.mxu0 0.0
      %3590 = vmatmul.mubr.f32.gmra.mxu0 %v3160
      %v3591 = vpop.f32.mrf.mxu0
      %v3592 = vadd.f32 0.0, %v3591
      %v3593 = vpop.f32.mrf.mxu0
      %3594 = vmatprep.mubr.f32.mxu0 0.0
      %3595 = vmatmul.mubr.f32.gmra.mxu0 %v3163
      %v3596 = vpop.f32.mrf.mxu0
      %v3597 = vadd.f32 0.0, %v3596
      %v3598 = vpop.f32.mrf.mxu0
      %3599 = vmatprep.mubr.f32.mxu0 0.0
      %3600 = vmatmul.mubr.f32.gmra.mxu0 %v3166
      %v3601 = vpop.f32.mrf.mxu0
      %v3602 = vadd.f32 0.0, %v3601
      %v3603 = vpop.f32.mrf.mxu0
      %3604 = vmatprep.mubr.f32.mxu0 0.0
      %3605 = vmatmul.mubr.f32.gmra.mxu0 %v3169
      %v3606 = vpop.f32.mrf.mxu0
      %v3607 = vadd.f32 0.0, %v3606
      %v3608 = vpop.f32.mrf.mxu0
      %3609 = vmatprep.mubr.f32.mxu0 0.0
      %3610 = vmatmul.mubr.f32.gmra.mxu0 %v3172
      %v3611 = vpop.f32.mrf.mxu0
      %v3612 = vadd.f32 0.0, %v3611
      %v3613 = vpop.f32.mrf.mxu0
      %3614 = vmatprep.mubr.f32.mxu0 0.0
      %3615 = vmatmul.mubr.f32.gmra.mxu0 %v3175
      %v3616 = vpop.f32.mrf.mxu0
      %v3617 = vadd.f32 0.0, %v3616
      %v3618 = vpop.f32.mrf.mxu0
      %3619 = vmatprep.mubr.f32.mxu0 0.0
      %3620 = vmatmul.mubr.f32.gmra.mxu0 %v3178
      %v3621 = vpop.f32.mrf.mxu0
      %v3622 = vadd.f32 0.0, %v3621
      %v3623 = vpop.f32.mrf.mxu0
      %3624 = vmatprep.mubr.f32.mxu0 0.0
      %3625 = vmatmul.mubr.f32.gmra.mxu0 %v3181
      %v3626 = vpop.f32.mrf.mxu0
      %v3627 = vadd.f32 0.0, %v3626
      %v3628 = vpop.f32.mrf.mxu0
      %3629 = vdwg.mxu0
      %s3630 = scalar_lea.vmem %s8, 256
      %v3631 = vld [vmem:[%s3630] sm:$0xff]
      %v3632 = vld [vmem:[%s3630 + $0x8] sm:$0xff]
      %v3633 = vld [vmem:[%s3630 + $0x10] sm:$0xff]
      %v3634 = vld [vmem:[%s3630 + $0x18] sm:$0xff]
      %v3635 = vld [vmem:[%s3630 + $0x20] sm:$0xff]
      %v3636 = vld [vmem:[%s3630 + $0x28] sm:$0xff]
      %v3637 = vld [vmem:[%s3630 + $0x30] sm:$0xff]
      %v3638 = vld [vmem:[%s3630 + $0x38] sm:$0xff]
      %3639 = vmatprep.subr.mxu0 0.0
      %3640 = vmatpush1.msra.mxu0 0.0
      %3641 = vmatprep.subr.mxu0 0.0
      %3642 = vmatpush1.msra.mxu0 0.0
      %3643 = vmatprep.subr.mxu0 0.0
      %3644 = vmatpush1.msra.mxu0 0.0
      %3645 = vmatprep.subr.mxu0 0.0
      %3646 = vmatpush1.msra.mxu0 0.0
      %3647 = vmatprep.subr.mxu0 0.0
      %3648 = vmatpush1.msra.mxu0 0.0
      %3649 = vmatprep.subr.mxu0 0.0
      %3650 = vmatpush1.msra.mxu0 0.0
      %3651 = vmatprep.subr.mxu0 0.0
      %3652 = vmatpush1.msra.mxu0 0.0
      %3653 = vmatprep.subr.mxu0 0.0
      %3654 = vmatpush1.msra.mxu0 0.0
      %3655 = vmatprep.subr.mxu0 0.0
      %3656 = vmatpush1.msra.mxu0 %v3638
      %3657 = vmatprep.subr.mxu0 0.0
      %3658 = vmatpush1.msra.mxu0 %v3637
      %3659 = vmatprep.subr.mxu0 0.0
      %3660 = vmatpush1.msra.mxu0 %v3636
      %3661 = vmatprep.subr.mxu0 0.0
      %3662 = vmatpush1.msra.mxu0 %v3635
      %3663 = vmatprep.subr.mxu0 0.0
      %3664 = vmatpush1.msra.mxu0 %v3634
      %3665 = vmatprep.subr.mxu0 0.0
      %3666 = vmatpush1.msra.mxu0 %v3633
      %3667 = vmatprep.subr.mxu0 0.0
      %3668 = vmatpush1.msra.mxu0 %v3632
      %3669 = vmatprep.subr.mxu0 0.0
      %3670 = vmatpush1.msra.mxu0 %v3631
      %3671 = vmatprep.subr.mxu0 0.0
      %3672 = vmatpush2.msra.mxu0 0.0
      %3673 = vmatprep.subr.mxu0 0.0
      %3674 = vmatpush2.msra.mxu0 0.0
      %3675 = vmatprep.subr.mxu0 0.0
      %3676 = vmatpush2.msra.mxu0 0.0
      %3677 = vmatprep.subr.mxu0 0.0
      %3678 = vmatpush2.msra.mxu0 0.0
      %3679 = vmatprep.subr.mxu0 0.0
      %3680 = vmatpush2.msra.mxu0 0.0
      %3681 = vmatprep.subr.mxu0 0.0
      %3682 = vmatpush2.msra.mxu0 0.0
      %3683 = vmatprep.subr.mxu0 0.0
      %3684 = vmatpush2.msra.mxu0 0.0
      %3685 = vmatprep.subr.mxu0 0.0
      %3686 = vmatpush2.msra.mxu0 0.0
      %3687 = vmatprep.subr.mxu0 0.0
      %3688 = vmatpush2.msra.mxu0 0.0
      %3689 = vmatprep.subr.mxu0 0.0
      %3690 = vmatpush2.msra.mxu0 0.0
      %3691 = vmatprep.subr.mxu0 0.0
      %3692 = vmatpush2.msra.mxu0 0.0
      %3693 = vmatprep.subr.mxu0 0.0
      %3694 = vmatpush2.msra.mxu0 0.0
      %3695 = vmatprep.subr.mxu0 0.0
      %3696 = vmatpush2.msra.mxu0 0.0
      %3697 = vmatprep.subr.mxu0 0.0
      %3698 = vmatpush2.msra.mxu0 0.0
      %3699 = vmatprep.subr.mxu0 0.0
      %3700 = vmatpush2.msra.mxu0 0.0
      %3701 = vmatprep.subr.mxu0 0.0
      %3702 = vmatpush2.msra.mxu0 0.0
      %3703 = vmatprep.mubr.f32.mxu0 0.0
      %3704 = vmatmul.mubr.f32.gmra.mxu0 %v3160
      %v3705 = vpop.f32.mrf.mxu0
      %v3706 = vadd.f32 0.0, %v3705
      %v3707 = vpop.f32.mrf.mxu0
      %3708 = vmatprep.mubr.f32.mxu0 0.0
      %3709 = vmatmul.mubr.f32.gmra.mxu0 %v3163
      %v3710 = vpop.f32.mrf.mxu0
      %v3711 = vadd.f32 0.0, %v3710
      %v3712 = vpop.f32.mrf.mxu0
      %3713 = vmatprep.mubr.f32.mxu0 0.0
      %3714 = vmatmul.mubr.f32.gmra.mxu0 %v3166
      %v3715 = vpop.f32.mrf.mxu0
      %v3716 = vadd.f32 0.0, %v3715
      %v3717 = vpop.f32.mrf.mxu0
      %3718 = vmatprep.mubr.f32.mxu0 0.0
      %3719 = vmatmul.mubr.f32.gmra.mxu0 %v3169
      %v3720 = vpop.f32.mrf.mxu0
      %v3721 = vadd.f32 0.0, %v3720
      %v3722 = vpop.f32.mrf.mxu0
      %3723 = vmatprep.mubr.f32.mxu0 0.0
      %3724 = vmatmul.mubr.f32.gmra.mxu0 %v3172
      %v3725 = vpop.f32.mrf.mxu0
      %v3726 = vadd.f32 0.0, %v3725
      %v3727 = vpop.f32.mrf.mxu0
      %3728 = vmatprep.mubr.f32.mxu0 0.0
      %3729 = vmatmul.mubr.f32.gmra.mxu0 %v3175
      %v3730 = vpop.f32.mrf.mxu0
      %v3731 = vadd.f32 0.0, %v3730
      %v3732 = vpop.f32.mrf.mxu0
      %3733 = vmatprep.mubr.f32.mxu0 0.0
      %3734 = vmatmul.mubr.f32.gmra.mxu0 %v3178
      %v3735 = vpop.f32.mrf.mxu0
      %v3736 = vadd.f32 0.0, %v3735
      %v3737 = vpop.f32.mrf.mxu0
      %3738 = vmatprep.mubr.f32.mxu0 0.0
      %3739 = vmatmul.mubr.f32.gmra.mxu0 %v3181
      %v3740 = vpop.f32.mrf.mxu0
      %v3741 = vadd.f32 0.0, %v3740
      %v3742 = vpop.f32.mrf.mxu0
      %3743 = vdwg.mxu0
      %s3744 = scalar_lea.vmem %s8, 320
      %v3745 = vld [vmem:[%s3744] sm:$0xff]
      %v3746 = vld [vmem:[%s3744 + $0x8] sm:$0xff]
      %v3747 = vld [vmem:[%s3744 + $0x10] sm:$0xff]
      %v3748 = vld [vmem:[%s3744 + $0x18] sm:$0xff]
      %v3749 = vld [vmem:[%s3744 + $0x20] sm:$0xff]
      %v3750 = vld [vmem:[%s3744 + $0x28] sm:$0xff]
      %v3751 = vld [vmem:[%s3744 + $0x30] sm:$0xff]
      %v3752 = vld [vmem:[%s3744 + $0x38] sm:$0xff]
      %3753 = vmatprep.subr.mxu0 0.0
      %3754 = vmatpush1.msra.mxu0 0.0
      %3755 = vmatprep.subr.mxu0 0.0
      %3756 = vmatpush1.msra.mxu0 0.0
      %3757 = vmatprep.subr.mxu0 0.0
      %3758 = vmatpush1.msra.mxu0 0.0
      %3759 = vmatprep.subr.mxu0 0.0
      %3760 = vmatpush1.msra.mxu0 0.0
      %3761 = vmatprep.subr.mxu0 0.0
      %3762 = vmatpush1.msra.mxu0 0.0
      %3763 = vmatprep.subr.mxu0 0.0
      %3764 = vmatpush1.msra.mxu0 0.0
      %3765 = vmatprep.subr.mxu0 0.0
      %3766 = vmatpush1.msra.mxu0 0.0
      %3767 = vmatprep.subr.mxu0 0.0
      %3768 = vmatpush1.msra.mxu0 0.0
      %3769 = vmatprep.subr.mxu0 0.0
      %3770 = vmatpush1.msra.mxu0 %v3752
      %3771 = vmatprep.subr.mxu0 0.0
      %3772 = vmatpush1.msra.mxu0 %v3751
      %3773 = vmatprep.subr.mxu0 0.0
      %3774 = vmatpush1.msra.mxu0 %v3750
      %3775 = vmatprep.subr.mxu0 0.0
      %3776 = vmatpush1.msra.mxu0 %v3749
      %3777 = vmatprep.subr.mxu0 0.0
      %3778 = vmatpush1.msra.mxu0 %v3748
      %3779 = vmatprep.subr.mxu0 0.0
      %3780 = vmatpush1.msra.mxu0 %v3747
      %3781 = vmatprep.subr.mxu0 0.0
      %3782 = vmatpush1.msra.mxu0 %v3746
      %3783 = vmatprep.subr.mxu0 0.0
      %3784 = vmatpush1.msra.mxu0 %v3745
      %3785 = vmatprep.subr.mxu0 0.0
      %3786 = vmatpush2.msra.mxu0 0.0
      %3787 = vmatprep.subr.mxu0 0.0
      %3788 = vmatpush2.msra.mxu0 0.0
      %3789 = vmatprep.subr.mxu0 0.0
      %3790 = vmatpush2.msra.mxu0 0.0
      %3791 = vmatprep.subr.mxu0 0.0
      %3792 = vmatpush2.msra.mxu0 0.0
      %3793 = vmatprep.subr.mxu0 0.0
      %3794 = vmatpush2.msra.mxu0 0.0
      %3795 = vmatprep.subr.mxu0 0.0
      %3796 = vmatpush2.msra.mxu0 0.0
      %3797 = vmatprep.subr.mxu0 0.0
      %3798 = vmatpush2.msra.mxu0 0.0
      %3799 = vmatprep.subr.mxu0 0.0
      %3800 = vmatpush2.msra.mxu0 0.0
      %3801 = vmatprep.subr.mxu0 0.0
      %3802 = vmatpush2.msra.mxu0 0.0
      %3803 = vmatprep.subr.mxu0 0.0
      %3804 = vmatpush2.msra.mxu0 0.0
      %3805 = vmatprep.subr.mxu0 0.0
      %3806 = vmatpush2.msra.mxu0 0.0
      %3807 = vmatprep.subr.mxu0 0.0
      %3808 = vmatpush2.msra.mxu0 0.0
      %3809 = vmatprep.subr.mxu0 0.0
      %3810 = vmatpush2.msra.mxu0 0.0
      %3811 = vmatprep.subr.mxu0 0.0
      %3812 = vmatpush2.msra.mxu0 0.0
      %3813 = vmatprep.subr.mxu0 0.0
      %3814 = vmatpush2.msra.mxu0 0.0
      %3815 = vmatprep.subr.mxu0 0.0
      %3816 = vmatpush2.msra.mxu0 0.0
      %3817 = vmatprep.mubr.f32.mxu0 0.0
      %3818 = vmatmul.mubr.f32.gmra.mxu0 %v3160
      %v3819 = vpop.f32.mrf.mxu0
      %v3820 = vadd.f32 0.0, %v3819
      %v3821 = vpop.f32.mrf.mxu0
      %3822 = vmatprep.mubr.f32.mxu0 0.0
      %3823 = vmatmul.mubr.f32.gmra.mxu0 %v3163
      %v3824 = vpop.f32.mrf.mxu0
      %v3825 = vadd.f32 0.0, %v3824
      %v3826 = vpop.f32.mrf.mxu0
      %3827 = vmatprep.mubr.f32.mxu0 0.0
      %3828 = vmatmul.mubr.f32.gmra.mxu0 %v3166
      %v3829 = vpop.f32.mrf.mxu0
      %v3830 = vadd.f32 0.0, %v3829
      %v3831 = vpop.f32.mrf.mxu0
      %3832 = vmatprep.mubr.f32.mxu0 0.0
      %3833 = vmatmul.mubr.f32.gmra.mxu0 %v3169
      %v3834 = vpop.f32.mrf.mxu0
      %v3835 = vadd.f32 0.0, %v3834
      %v3836 = vpop.f32.mrf.mxu0
      %3837 = vmatprep.mubr.f32.mxu0 0.0
      %3838 = vmatmul.mubr.f32.gmra.mxu0 %v3172
      %v3839 = vpop.f32.mrf.mxu0
      %v3840 = vadd.f32 0.0, %v3839
      %v3841 = vpop.f32.mrf.mxu0
      %3842 = vmatprep.mubr.f32.mxu0 0.0
      %3843 = vmatmul.mubr.f32.gmra.mxu0 %v3175
      %v3844 = vpop.f32.mrf.mxu0
      %v3845 = vadd.f32 0.0, %v3844
      %v3846 = vpop.f32.mrf.mxu0
      %3847 = vmatprep.mubr.f32.mxu0 0.0
      %3848 = vmatmul.mubr.f32.gmra.mxu0 %v3178
      %v3849 = vpop.f32.mrf.mxu0
      %v3850 = vadd.f32 0.0, %v3849
      %v3851 = vpop.f32.mrf.mxu0
      %3852 = vmatprep.mubr.f32.mxu0 0.0
      %3853 = vmatmul.mubr.f32.gmra.mxu0 %v3181
      %v3854 = vpop.f32.mrf.mxu0
      %v3855 = vadd.f32 0.0, %v3854
      %v3856 = vpop.f32.mrf.mxu0
      %3857 = vdwg.mxu0
      %s3858 = scalar_lea.vmem %s8, 384
      %v3859 = vld [vmem:[%s3858] sm:$0xff]
      %v3860 = vld [vmem:[%s3858 + $0x8] sm:$0xff]
      %v3861 = vld [vmem:[%s3858 + $0x10] sm:$0xff]
      %v3862 = vld [vmem:[%s3858 + $0x18] sm:$0xff]
      %v3863 = vld [vmem:[%s3858 + $0x20] sm:$0xff]
      %v3864 = vld [vmem:[%s3858 + $0x28] sm:$0xff]
      %v3865 = vld [vmem:[%s3858 + $0x30] sm:$0xff]
      %v3866 = vld [vmem:[%s3858 + $0x38] sm:$0xff]
      %3867 = vmatprep.subr.mxu0 0.0
      %3868 = vmatpush1.msra.mxu0 0.0
      %3869 = vmatprep.subr.mxu0 0.0
      %3870 = vmatpush1.msra.mxu0 0.0
      %3871 = vmatprep.subr.mxu0 0.0
      %3872 = vmatpush1.msra.mxu0 0.0
      %3873 = vmatprep.subr.mxu0 0.0
      %3874 = vmatpush1.msra.mxu0 0.0
      %3875 = vmatprep.subr.mxu0 0.0
      %3876 = vmatpush1.msra.mxu0 0.0
      %3877 = vmatprep.subr.mxu0 0.0
      %3878 = vmatpush1.msra.mxu0 0.0
      %3879 = vmatprep.subr.mxu0 0.0
      %3880 = vmatpush1.msra.mxu0 0.0
      %3881 = vmatprep.subr.mxu0 0.0
      %3882 = vmatpush1.msra.mxu0 0.0
      %3883 = vmatprep.subr.mxu0 0.0
      %3884 = vmatpush1.msra.mxu0 %v3866
      %3885 = vmatprep.subr.mxu0 0.0
      %3886 = vmatpush1.msra.mxu0 %v3865
      %3887 = vmatprep.subr.mxu0 0.0
      %3888 = vmatpush1.msra.mxu0 %v3864
      %3889 = vmatprep.subr.mxu0 0.0
      %3890 = vmatpush1.msra.mxu0 %v3863
      %3891 = vmatprep.subr.mxu0 0.0
      %3892 = vmatpush1.msra.mxu0 %v3862
      %3893 = vmatprep.subr.mxu0 0.0
      %3894 = vmatpush1.msra.mxu0 %v3861
      %3895 = vmatprep.subr.mxu0 0.0
      %3896 = vmatpush1.msra.mxu0 %v3860
      %3897 = vmatprep.subr.mxu0 0.0
      %3898 = vmatpush1.msra.mxu0 %v3859
      %3899 = vmatprep.subr.mxu0 0.0
      %3900 = vmatpush2.msra.mxu0 0.0
      %3901 = vmatprep.subr.mxu0 0.0
      %3902 = vmatpush2.msra.mxu0 0.0
      %3903 = vmatprep.subr.mxu0 0.0
      %3904 = vmatpush2.msra.mxu0 0.0
      %3905 = vmatprep.subr.mxu0 0.0
      %3906 = vmatpush2.msra.mxu0 0.0
      %3907 = vmatprep.subr.mxu0 0.0
      %3908 = vmatpush2.msra.mxu0 0.0
      %3909 = vmatprep.subr.mxu0 0.0
      %3910 = vmatpush2.msra.mxu0 0.0
      %3911 = vmatprep.subr.mxu0 0.0
      %3912 = vmatpush2.msra.mxu0 0.0
      %3913 = vmatprep.subr.mxu0 0.0
      %3914 = vmatpush2.msra.mxu0 0.0
      %3915 = vmatprep.subr.mxu0 0.0
      %3916 = vmatpush2.msra.mxu0 0.0
      %3917 = vmatprep.subr.mxu0 0.0
      %3918 = vmatpush2.msra.mxu0 0.0
      %3919 = vmatprep.subr.mxu0 0.0
      %3920 = vmatpush2.msra.mxu0 0.0
      %3921 = vmatprep.subr.mxu0 0.0
      %3922 = vmatpush2.msra.mxu0 0.0
      %3923 = vmatprep.subr.mxu0 0.0
      %3924 = vmatpush2.msra.mxu0 0.0
      %3925 = vmatprep.subr.mxu0 0.0
      %3926 = vmatpush2.msra.mxu0 0.0
      %3927 = vmatprep.subr.mxu0 0.0
      %3928 = vmatpush2.msra.mxu0 0.0
      %3929 = vmatprep.subr.mxu0 0.0
      %3930 = vmatpush2.msra.mxu0 0.0
      %3931 = vmatprep.mubr.f32.mxu0 0.0
      %3932 = vmatmul.mubr.f32.gmra.mxu0 %v3160
      %v3933 = vpop.f32.mrf.mxu0
      %v3934 = vadd.f32 0.0, %v3933
      %v3935 = vpop.f32.mrf.mxu0
      %3936 = vmatprep.mubr.f32.mxu0 0.0
      %3937 = vmatmul.mubr.f32.gmra.mxu0 %v3163
      %v3938 = vpop.f32.mrf.mxu0
      %v3939 = vadd.f32 0.0, %v3938
      %v3940 = vpop.f32.mrf.mxu0
      %3941 = vmatprep.mubr.f32.mxu0 0.0
      %3942 = vmatmul.mubr.f32.gmra.mxu0 %v3166
      %v3943 = vpop.f32.mrf.mxu0
      %v3944 = vadd.f32 0.0, %v3943
      %v3945 = vpop.f32.mrf.mxu0
      %3946 = vmatprep.mubr.f32.mxu0 0.0
      %3947 = vmatmul.mubr.f32.gmra.mxu0 %v3169
      %v3948 = vpop.f32.mrf.mxu0
      %v3949 = vadd.f32 0.0, %v3948
      %v3950 = vpop.f32.mrf.mxu0
      %3951 = vmatprep.mubr.f32.mxu0 0.0
      %3952 = vmatmul.mubr.f32.gmra.mxu0 %v3172
      %v3953 = vpop.f32.mrf.mxu0
      %v3954 = vadd.f32 0.0, %v3953
      %v3955 = vpop.f32.mrf.mxu0
      %3956 = vmatprep.mubr.f32.mxu0 0.0
      %3957 = vmatmul.mubr.f32.gmra.mxu0 %v3175
      %v3958 = vpop.f32.mrf.mxu0
      %v3959 = vadd.f32 0.0, %v3958
      %v3960 = vpop.f32.mrf.mxu0
      %3961 = vmatprep.mubr.f32.mxu0 0.0
      %3962 = vmatmul.mubr.f32.gmra.mxu0 %v3178
      %v3963 = vpop.f32.mrf.mxu0
      %v3964 = vadd.f32 0.0, %v3963
      %v3965 = vpop.f32.mrf.mxu0
      %3966 = vmatprep.mubr.f32.mxu0 0.0
      %3967 = vmatmul.mubr.f32.gmra.mxu0 %v3181
      %v3968 = vpop.f32.mrf.mxu0
      %v3969 = vadd.f32 0.0, %v3968
      %v3970 = vpop.f32.mrf.mxu0
      %3971 = vdwg.mxu0
      %s3972 = scalar_lea.vmem %s8, 448
      %v3973 = vld [vmem:[%s3972] sm:$0xff]
      %v3974 = vld [vmem:[%s3972 + $0x8] sm:$0xff]
      %v3975 = vld [vmem:[%s3972 + $0x10] sm:$0xff]
      %v3976 = vld [vmem:[%s3972 + $0x18] sm:$0xff]
      %v3977 = vld [vmem:[%s3972 + $0x20] sm:$0xff]
      %v3978 = vld [vmem:[%s3972 + $0x28] sm:$0xff]
      %v3979 = vld [vmem:[%s3972 + $0x30] sm:$0xff]
      %v3980 = vld [vmem:[%s3972 + $0x38] sm:$0xff]
      %3981 = vmatprep.subr.mxu0 0.0
      %3982 = vmatpush1.msra.mxu0 0.0
      %3983 = vmatprep.subr.mxu0 0.0
      %3984 = vmatpush1.msra.mxu0 0.0
      %3985 = vmatprep.subr.mxu0 0.0
      %3986 = vmatpush1.msra.mxu0 0.0
      %3987 = vmatprep.subr.mxu0 0.0
      %3988 = vmatpush1.msra.mxu0 0.0
      %3989 = vmatprep.subr.mxu0 0.0
      %3990 = vmatpush1.msra.mxu0 0.0
      %3991 = vmatprep.subr.mxu0 0.0
      %3992 = vmatpush1.msra.mxu0 0.0
      %3993 = vmatprep.subr.mxu0 0.0
      %3994 = vmatpush1.msra.mxu0 0.0
      %3995 = vmatprep.subr.mxu0 0.0
      %3996 = vmatpush1.msra.mxu0 0.0
      %3997 = vmatprep.subr.mxu0 0.0
      %3998 = vmatpush1.msra.mxu0 %v3980
      %3999 = vmatprep.subr.mxu0 0.0
      %4000 = vmatpush1.msra.mxu0 %v3979
      %4001 = vmatprep.subr.mxu0 0.0
      %4002 = vmatpush1.msra.mxu0 %v3978
      %4003 = vmatprep.subr.mxu0 0.0
      %4004 = vmatpush1.msra.mxu0 %v3977
      %4005 = vmatprep.subr.mxu0 0.0
      %4006 = vmatpush1.msra.mxu0 %v3976
      %4007 = vmatprep.subr.mxu0 0.0
      %4008 = vmatpush1.msra.mxu0 %v3975
      %4009 = vmatprep.subr.mxu0 0.0
      %4010 = vmatpush1.msra.mxu0 %v3974
      %4011 = vmatprep.subr.mxu0 0.0
      %4012 = vmatpush1.msra.mxu0 %v3973
      %4013 = vmatprep.subr.mxu0 0.0
      %4014 = vmatpush2.msra.mxu0 0.0
      %4015 = vmatprep.subr.mxu0 0.0
      %4016 = vmatpush2.msra.mxu0 0.0
      %4017 = vmatprep.subr.mxu0 0.0
      %4018 = vmatpush2.msra.mxu0 0.0
      %4019 = vmatprep.subr.mxu0 0.0
      %4020 = vmatpush2.msra.mxu0 0.0
      %4021 = vmatprep.subr.mxu0 0.0
      %4022 = vmatpush2.msra.mxu0 0.0
      %4023 = vmatprep.subr.mxu0 0.0
      %4024 = vmatpush2.msra.mxu0 0.0
      %4025 = vmatprep.subr.mxu0 0.0
      %4026 = vmatpush2.msra.mxu0 0.0
      %4027 = vmatprep.subr.mxu0 0.0
      %4028 = vmatpush2.msra.mxu0 0.0
      %4029 = vmatprep.subr.mxu0 0.0
      %4030 = vmatpush2.msra.mxu0 0.0
      %4031 = vmatprep.subr.mxu0 0.0
      %4032 = vmatpush2.msra.mxu0 0.0
      %4033 = vmatprep.subr.mxu0 0.0
      %4034 = vmatpush2.msra.mxu0 0.0
      %4035 = vmatprep.subr.mxu0 0.0
      %4036 = vmatpush2.msra.mxu0 0.0
      %4037 = vmatprep.subr.mxu0 0.0
      %4038 = vmatpush2.msra.mxu0 0.0
      %4039 = vmatprep.subr.mxu0 0.0
      %4040 = vmatpush2.msra.mxu0 0.0
      %4041 = vmatprep.subr.mxu0 0.0
      %4042 = vmatpush2.msra.mxu0 0.0
      %4043 = vmatprep.subr.mxu0 0.0
      %4044 = vmatpush2.msra.mxu0 0.0
      %4045 = vmatprep.mubr.f32.mxu0 0.0
      %4046 = vmatmul.mubr.f32.gmra.mxu0 %v3160
      %v4047 = vpop.f32.mrf.mxu0
      %v4048 = vadd.f32 0.0, %v4047
      %v4049 = vpop.f32.mrf.mxu0
      %4050 = vmatprep.mubr.f32.mxu0 0.0
      %4051 = vmatmul.mubr.f32.gmra.mxu0 %v3163
      %v4052 = vpop.f32.mrf.mxu0
      %v4053 = vadd.f32 0.0, %v4052
      %v4054 = vpop.f32.mrf.mxu0
      %4055 = vmatprep.mubr.f32.mxu0 0.0
      %4056 = vmatmul.mubr.f32.gmra.mxu0 %v3166
      %v4057 = vpop.f32.mrf.mxu0
      %v4058 = vadd.f32 0.0, %v4057
      %v4059 = vpop.f32.mrf.mxu0
      %4060 = vmatprep.mubr.f32.mxu0 0.0
      %4061 = vmatmul.mubr.f32.gmra.mxu0 %v3169
      %v4062 = vpop.f32.mrf.mxu0
      %v4063 = vadd.f32 0.0, %v4062
      %v4064 = vpop.f32.mrf.mxu0
      %4065 = vmatprep.mubr.f32.mxu0 0.0
      %4066 = vmatmul.mubr.f32.gmra.mxu0 %v3172
      %v4067 = vpop.f32.mrf.mxu0
      %v4068 = vadd.f32 0.0, %v4067
      %v4069 = vpop.f32.mrf.mxu0
      %4070 = vmatprep.mubr.f32.mxu0 0.0
      %4071 = vmatmul.mubr.f32.gmra.mxu0 %v3175
      %v4072 = vpop.f32.mrf.mxu0
      %v4073 = vadd.f32 0.0, %v4072
      %v4074 = vpop.f32.mrf.mxu0
      %4075 = vmatprep.mubr.f32.mxu0 0.0
      %4076 = vmatmul.mubr.f32.gmra.mxu0 %v3178
      %v4077 = vpop.f32.mrf.mxu0
      %v4078 = vadd.f32 0.0, %v4077
      %v4079 = vpop.f32.mrf.mxu0
      %4080 = vmatprep.mubr.f32.mxu0 0.0
      %4081 = vmatmul.mubr.f32.gmra.mxu0 %v3181
      %v4082 = vpop.f32.mrf.mxu0
      %v4083 = vadd.f32 0.0, %v4082
      %v4084 = vpop.f32.mrf.mxu0
      %4085 = vdwg.mxu0
      %s4086 = scalar_lea.vmem %s8, 512
      %v4087 = vld [vmem:[%s4086] sm:$0xff]
      %v4088 = vld [vmem:[%s4086 + $0x8] sm:$0xff]
      %v4089 = vld [vmem:[%s4086 + $0x10] sm:$0xff]
      %v4090 = vld [vmem:[%s4086 + $0x18] sm:$0xff]
      %v4091 = vld [vmem:[%s4086 + $0x20] sm:$0xff]
      %v4092 = vld [vmem:[%s4086 + $0x28] sm:$0xff]
      %v4093 = vld [vmem:[%s4086 + $0x30] sm:$0xff]
      %v4094 = vld [vmem:[%s4086 + $0x38] sm:$0xff]
      %4095 = vmatprep.subr.mxu0 0.0
      %4096 = vmatpush1.msra.mxu0 0.0
      %4097 = vmatprep.subr.mxu0 0.0
      %4098 = vmatpush1.msra.mxu0 0.0
      %4099 = vmatprep.subr.mxu0 0.0
      %4100 = vmatpush1.msra.mxu0 0.0
      %4101 = vmatprep.subr.mxu0 0.0
      %4102 = vmatpush1.msra.mxu0 0.0
      %4103 = vmatprep.subr.mxu0 0.0
      %4104 = vmatpush1.msra.mxu0 0.0
      %4105 = vmatprep.subr.mxu0 0.0
      %4106 = vmatpush1.msra.mxu0 0.0
      %4107 = vmatprep.subr.mxu0 0.0
      %4108 = vmatpush1.msra.mxu0 0.0
      %4109 = vmatprep.subr.mxu0 0.0
      %4110 = vmatpush1.msra.mxu0 0.0
      %4111 = vmatprep.subr.mxu0 0.0
      %4112 = vmatpush1.msra.mxu0 %v4094
      %4113 = vmatprep.subr.mxu0 0.0
      %4114 = vmatpush1.msra.mxu0 %v4093
      %4115 = vmatprep.subr.mxu0 0.0
      %4116 = vmatpush1.msra.mxu0 %v4092
      %4117 = vmatprep.subr.mxu0 0.0
      %4118 = vmatpush1.msra.mxu0 %v4091
      %4119 = vmatprep.subr.mxu0 0.0
      %4120 = vmatpush1.msra.mxu0 %v4090
      %4121 = vmatprep.subr.mxu0 0.0
      %4122 = vmatpush1.msra.mxu0 %v4089
      %4123 = vmatprep.subr.mxu0 0.0
      %4124 = vmatpush1.msra.mxu0 %v4088
      %4125 = vmatprep.subr.mxu0 0.0
      %4126 = vmatpush1.msra.mxu0 %v4087
      %4127 = vmatprep.subr.mxu0 0.0
      %4128 = vmatpush2.msra.mxu0 0.0
      %4129 = vmatprep.subr.mxu0 0.0
      %4130 = vmatpush2.msra.mxu0 0.0
      %4131 = vmatprep.subr.mxu0 0.0
      %4132 = vmatpush2.msra.mxu0 0.0
      %4133 = vmatprep.subr.mxu0 0.0
      %4134 = vmatpush2.msra.mxu0 0.0
      %4135 = vmatprep.subr.mxu0 0.0
      %4136 = vmatpush2.msra.mxu0 0.0
      %4137 = vmatprep.subr.mxu0 0.0
      %4138 = vmatpush2.msra.mxu0 0.0
      %4139 = vmatprep.subr.mxu0 0.0
      %4140 = vmatpush2.msra.mxu0 0.0
      %4141 = vmatprep.subr.mxu0 0.0
      %4142 = vmatpush2.msra.mxu0 0.0
      %4143 = vmatprep.subr.mxu0 0.0
      %4144 = vmatpush2.msra.mxu0 0.0
      %4145 = vmatprep.subr.mxu0 0.0
      %4146 = vmatpush2.msra.mxu0 0.0
      %4147 = vmatprep.subr.mxu0 0.0
      %4148 = vmatpush2.msra.mxu0 0.0
      %4149 = vmatprep.subr.mxu0 0.0
      %4150 = vmatpush2.msra.mxu0 0.0
      %4151 = vmatprep.subr.mxu0 0.0
      %4152 = vmatpush2.msra.mxu0 0.0
      %4153 = vmatprep.subr.mxu0 0.0
      %4154 = vmatpush2.msra.mxu0 0.0
      %4155 = vmatprep.subr.mxu0 0.0
      %4156 = vmatpush2.msra.mxu0 0.0
      %4157 = vmatprep.subr.mxu0 0.0
      %4158 = vmatpush2.msra.mxu0 0.0
      %4159 = vmatprep.mubr.f32.mxu0 0.0
      %4160 = vmatmul.mubr.f32.gmra.mxu0 %v3160
      %v4161 = vpop.f32.mrf.mxu0
      %v4162 = vadd.f32 0.0, %v4161
      %v4163 = vpop.f32.mrf.mxu0
      %4164 = vmatprep.mubr.f32.mxu0 0.0
      %4165 = vmatmul.mubr.f32.gmra.mxu0 %v3163
      %v4166 = vpop.f32.mrf.mxu0
      %v4167 = vadd.f32 0.0, %v4166
      %v4168 = vpop.f32.mrf.mxu0
      %4169 = vmatprep.mubr.f32.mxu0 0.0
      %4170 = vmatmul.mubr.f32.gmra.mxu0 %v3166
      %v4171 = vpop.f32.mrf.mxu0
      %v4172 = vadd.f32 0.0, %v4171
      %v4173 = vpop.f32.mrf.mxu0
      %4174 = vmatprep.mubr.f32.mxu0 0.0
      %4175 = vmatmul.mubr.f32.gmra.mxu0 %v3169
      %v4176 = vpop.f32.mrf.mxu0
      %v4177 = vadd.f32 0.0, %v4176
      %v4178 = vpop.f32.mrf.mxu0
      %4179 = vmatprep.mubr.f32.mxu0 0.0
      %4180 = vmatmul.mubr.f32.gmra.mxu0 %v3172
      %v4181 = vpop.f32.mrf.mxu0
      %v4182 = vadd.f32 0.0, %v4181
      %v4183 = vpop.f32.mrf.mxu0
      %4184 = vmatprep.mubr.f32.mxu0 0.0
      %4185 = vmatmul.mubr.f32.gmra.mxu0 %v3175
      %v4186 = vpop.f32.mrf.mxu0
      %v4187 = vadd.f32 0.0, %v4186
      %v4188 = vpop.f32.mrf.mxu0
      %4189 = vmatprep.mubr.f32.mxu0 0.0
      %4190 = vmatmul.mubr.f32.gmra.mxu0 %v3178
      %v4191 = vpop.f32.mrf.mxu0
      %v4192 = vadd.f32 0.0, %v4191
      %v4193 = vpop.f32.mrf.mxu0
      %4194 = vmatprep.mubr.f32.mxu0 0.0
      %4195 = vmatmul.mubr.f32.gmra.mxu0 %v3181
      %v4196 = vpop.f32.mrf.mxu0
      %v4197 = vadd.f32 0.0, %v4196
      %v4198 = vpop.f32.mrf.mxu0
      %4199 = vdwg.mxu0
      %s4200 = scalar_lea.vmem %s8, 576
      %v4201 = vld [vmem:[%s4200] sm:$0xff]
      %v4202 = vld [vmem:[%s4200 + $0x8] sm:$0xff]
      %v4203 = vld [vmem:[%s4200 + $0x10] sm:$0xff]
      %v4204 = vld [vmem:[%s4200 + $0x18] sm:$0xff]
      %v4205 = vld [vmem:[%s4200 + $0x20] sm:$0xff]
      %v4206 = vld [vmem:[%s4200 + $0x28] sm:$0xff]
      %v4207 = vld [vmem:[%s4200 + $0x30] sm:$0xff]
      %v4208 = vld [vmem:[%s4200 + $0x38] sm:$0xff]
      %4209 = vmatprep.subr.mxu0 0.0
      %4210 = vmatpush1.msra.mxu0 0.0
      %4211 = vmatprep.subr.mxu0 0.0
      %4212 = vmatpush1.msra.mxu0 0.0
      %4213 = vmatprep.subr.mxu0 0.0
      %4214 = vmatpush1.msra.mxu0 0.0
      %4215 = vmatprep.subr.mxu0 0.0
      %4216 = vmatpush1.msra.mxu0 0.0
      %4217 = vmatprep.subr.mxu0 0.0
      %4218 = vmatpush1.msra.mxu0 0.0
      %4219 = vmatprep.subr.mxu0 0.0
      %4220 = vmatpush1.msra.mxu0 0.0
      %4221 = vmatprep.subr.mxu0 0.0
      %4222 = vmatpush1.msra.mxu0 0.0
      %4223 = vmatprep.subr.mxu0 0.0
      %4224 = vmatpush1.msra.mxu0 0.0
      %4225 = vmatprep.subr.mxu0 0.0
      %4226 = vmatpush1.msra.mxu0 %v4208
      %4227 = vmatprep.subr.mxu0 0.0
      %4228 = vmatpush1.msra.mxu0 %v4207
      %4229 = vmatprep.subr.mxu0 0.0
      %4230 = vmatpush1.msra.mxu0 %v4206
      %4231 = vmatprep.subr.mxu0 0.0
      %4232 = vmatpush1.msra.mxu0 %v4205
      %4233 = vmatprep.subr.mxu0 0.0
      %4234 = vmatpush1.msra.mxu0 %v4204
      %4235 = vmatprep.subr.mxu0 0.0
      %4236 = vmatpush1.msra.mxu0 %v4203
      %4237 = vmatprep.subr.mxu0 0.0
      %4238 = vmatpush1.msra.mxu0 %v4202
      %4239 = vmatprep.subr.mxu0 0.0
      %4240 = vmatpush1.msra.mxu0 %v4201
      %4241 = vmatprep.subr.mxu0 0.0
      %4242 = vmatpush2.msra.mxu0 0.0
      %4243 = vmatprep.subr.mxu0 0.0
      %4244 = vmatpush2.msra.mxu0 0.0
      %4245 = vmatprep.subr.mxu0 0.0
      %4246 = vmatpush2.msra.mxu0 0.0
      %4247 = vmatprep.subr.mxu0 0.0
      %4248 = vmatpush2.msra.mxu0 0.0
      %4249 = vmatprep.subr.mxu0 0.0
      %4250 = vmatpush2.msra.mxu0 0.0
      %4251 = vmatprep.subr.mxu0 0.0
      %4252 = vmatpush2.msra.mxu0 0.0
      %4253 = vmatprep.subr.mxu0 0.0
      %4254 = vmatpush2.msra.mxu0 0.0
      %4255 = vmatprep.subr.mxu0 0.0
      %4256 = vmatpush2.msra.mxu0 0.0
      %4257 = vmatprep.subr.mxu0 0.0
      %4258 = vmatpush2.msra.mxu0 0.0
      %4259 = vmatprep.subr.mxu0 0.0
      %4260 = vmatpush2.msra.mxu0 0.0
      %4261 = vmatprep.subr.mxu0 0.0
      %4262 = vmatpush2.msra.mxu0 0.0
      %4263 = vmatprep.subr.mxu0 0.0
      %4264 = vmatpush2.msra.mxu0 0.0
      %4265 = vmatprep.subr.mxu0 0.0
      %4266 = vmatpush2.msra.mxu0 0.0
      %4267 = vmatprep.subr.mxu0 0.0
      %4268 = vmatpush2.msra.mxu0 0.0
      %4269 = vmatprep.subr.mxu0 0.0
      %4270 = vmatpush2.msra.mxu0 0.0
      %4271 = vmatprep.subr.mxu0 0.0
      %4272 = vmatpush2.msra.mxu0 0.0
      %4273 = vmatprep.mubr.f32.mxu0 0.0
      %4274 = vmatmul.mubr.f32.gmra.mxu0 %v3160
      %v4275 = vpop.f32.mrf.mxu0
      %v4276 = vadd.f32 0.0, %v4275
      %v4277 = vpop.f32.mrf.mxu0
      %4278 = vmatprep.mubr.f32.mxu0 0.0
      %4279 = vmatmul.mubr.f32.gmra.mxu0 %v3163
      %v4280 = vpop.f32.mrf.mxu0
      %v4281 = vadd.f32 0.0, %v4280
      %v4282 = vpop.f32.mrf.mxu0
      %4283 = vmatprep.mubr.f32.mxu0 0.0
      %4284 = vmatmul.mubr.f32.gmra.mxu0 %v3166
      %v4285 = vpop.f32.mrf.mxu0
      %v4286 = vadd.f32 0.0, %v4285
      %v4287 = vpop.f32.mrf.mxu0
      %4288 = vmatprep.mubr.f32.mxu0 0.0
      %4289 = vmatmul.mubr.f32.gmra.mxu0 %v3169
      %v4290 = vpop.f32.mrf.mxu0
      %v4291 = vadd.f32 0.0, %v4290
      %v4292 = vpop.f32.mrf.mxu0
      %4293 = vmatprep.mubr.f32.mxu0 0.0
      %4294 = vmatmul.mubr.f32.gmra.mxu0 %v3172
      %v4295 = vpop.f32.mrf.mxu0
      %v4296 = vadd.f32 0.0, %v4295
      %v4297 = vpop.f32.mrf.mxu0
      %4298 = vmatprep.mubr.f32.mxu0 0.0
      %4299 = vmatmul.mubr.f32.gmra.mxu0 %v3175
      %v4300 = vpop.f32.mrf.mxu0
      %v4301 = vadd.f32 0.0, %v4300
      %v4302 = vpop.f32.mrf.mxu0
      %4303 = vmatprep.mubr.f32.mxu0 0.0
      %4304 = vmatmul.mubr.f32.gmra.mxu0 %v3178
      %v4305 = vpop.f32.mrf.mxu0
      %v4306 = vadd.f32 0.0, %v4305
      %v4307 = vpop.f32.mrf.mxu0
      %4308 = vmatprep.mubr.f32.mxu0 0.0
      %4309 = vmatmul.mubr.f32.gmra.mxu0 %v3181
      %v4310 = vpop.f32.mrf.mxu0
      %v4311 = vadd.f32 0.0, %v4310
      %v4312 = vpop.f32.mrf.mxu0
      %4313 = vdwg.mxu0
      %s4314 = scalar_lea.vmem %s8, 640
      %v4315 = vld [vmem:[%s4314] sm:$0xff]
      %v4316 = vld [vmem:[%s4314 + $0x8] sm:$0xff]
      %v4317 = vld [vmem:[%s4314 + $0x10] sm:$0xff]
      %v4318 = vld [vmem:[%s4314 + $0x18] sm:$0xff]
      %v4319 = vld [vmem:[%s4314 + $0x20] sm:$0xff]
      %v4320 = vld [vmem:[%s4314 + $0x28] sm:$0xff]
      %v4321 = vld [vmem:[%s4314 + $0x30] sm:$0xff]
      %v4322 = vld [vmem:[%s4314 + $0x38] sm:$0xff]
      %4323 = vmatprep.subr.mxu0 0.0
      %4324 = vmatpush1.msra.mxu0 0.0
      %4325 = vmatprep.subr.mxu0 0.0
      %4326 = vmatpush1.msra.mxu0 0.0
      %4327 = vmatprep.subr.mxu0 0.0
      %4328 = vmatpush1.msra.mxu0 0.0
      %4329 = vmatprep.subr.mxu0 0.0
      %4330 = vmatpush1.msra.mxu0 0.0
      %4331 = vmatprep.subr.mxu0 0.0
      %4332 = vmatpush1.msra.mxu0 0.0
      %4333 = vmatprep.subr.mxu0 0.0
      %4334 = vmatpush1.msra.mxu0 0.0
      %4335 = vmatprep.subr.mxu0 0.0
      %4336 = vmatpush1.msra.mxu0 0.0
      %4337 = vmatprep.subr.mxu0 0.0
      %4338 = vmatpush1.msra.mxu0 0.0
      %4339 = vmatprep.subr.mxu0 0.0
      %4340 = vmatpush1.msra.mxu0 %v4322
      %4341 = vmatprep.subr.mxu0 0.0
      %4342 = vmatpush1.msra.mxu0 %v4321
      %4343 = vmatprep.subr.mxu0 0.0
      %4344 = vmatpush1.msra.mxu0 %v4320
      %4345 = vmatprep.subr.mxu0 0.0
      %4346 = vmatpush1.msra.mxu0 %v4319
      %4347 = vmatprep.subr.mxu0 0.0
      %4348 = vmatpush1.msra.mxu0 %v4318
      %4349 = vmatprep.subr.mxu0 0.0
      %4350 = vmatpush1.msra.mxu0 %v4317
      %4351 = vmatprep.subr.mxu0 0.0
      %4352 = vmatpush1.msra.mxu0 %v4316
      %4353 = vmatprep.subr.mxu0 0.0
      %4354 = vmatpush1.msra.mxu0 %v4315
      %4355 = vmatprep.subr.mxu0 0.0
      %4356 = vmatpush2.msra.mxu0 0.0
      %4357 = vmatprep.subr.mxu0 0.0
      %4358 = vmatpush2.msra.mxu0 0.0
      %4359 = vmatprep.subr.mxu0 0.0
      %4360 = vmatpush2.msra.mxu0 0.0
      %4361 = vmatprep.subr.mxu0 0.0
      %4362 = vmatpush2.msra.mxu0 0.0
      %4363 = vmatprep.subr.mxu0 0.0
      %4364 = vmatpush2.msra.mxu0 0.0
      %4365 = vmatprep.subr.mxu0 0.0
      %4366 = vmatpush2.msra.mxu0 0.0
      %4367 = vmatprep.subr.mxu0 0.0
      %4368 = vmatpush2.msra.mxu0 0.0
      %4369 = vmatprep.subr.mxu0 0.0
      %4370 = vmatpush2.msra.mxu0 0.0
      %4371 = vmatprep.subr.mxu0 0.0
      %4372 = vmatpush2.msra.mxu0 0.0
      %4373 = vmatprep.subr.mxu0 0.0
      %4374 = vmatpush2.msra.mxu0 0.0
      %4375 = vmatprep.subr.mxu0 0.0
      %4376 = vmatpush2.msra.mxu0 0.0
      %4377 = vmatprep.subr.mxu0 0.0
      %4378 = vmatpush2.msra.mxu0 0.0
      %4379 = vmatprep.subr.mxu0 0.0
      %4380 = vmatpush2.msra.mxu0 0.0
      %4381 = vmatprep.subr.mxu0 0.0
      %4382 = vmatpush2.msra.mxu0 0.0
      %4383 = vmatprep.subr.mxu0 0.0
      %4384 = vmatpush2.msra.mxu0 0.0
      %4385 = vmatprep.subr.mxu0 0.0
      %4386 = vmatpush2.msra.mxu0 0.0
      %4387 = vmatprep.mubr.f32.mxu0 0.0
      %4388 = vmatmul.mubr.f32.gmra.mxu0 %v3160
      %v4389 = vpop.f32.mrf.mxu0
      %v4390 = vadd.f32 0.0, %v4389
      %v4391 = vpop.f32.mrf.mxu0
      %4392 = vmatprep.mubr.f32.mxu0 0.0
      %4393 = vmatmul.mubr.f32.gmra.mxu0 %v3163
      %v4394 = vpop.f32.mrf.mxu0
      %v4395 = vadd.f32 0.0, %v4394
      %v4396 = vpop.f32.mrf.mxu0
      %4397 = vmatprep.mubr.f32.mxu0 0.0
      %4398 = vmatmul.mubr.f32.gmra.mxu0 %v3166
      %v4399 = vpop.f32.mrf.mxu0
      %v4400 = vadd.f32 0.0, %v4399
      %v4401 = vpop.f32.mrf.mxu0
      %4402 = vmatprep.mubr.f32.mxu0 0.0
      %4403 = vmatmul.mubr.f32.gmra.mxu0 %v3169
      %v4404 = vpop.f32.mrf.mxu0
      %v4405 = vadd.f32 0.0, %v4404
      %v4406 = vpop.f32.mrf.mxu0
      %4407 = vmatprep.mubr.f32.mxu0 0.0
      %4408 = vmatmul.mubr.f32.gmra.mxu0 %v3172
      %v4409 = vpop.f32.mrf.mxu0
      %v4410 = vadd.f32 0.0, %v4409
      %v4411 = vpop.f32.mrf.mxu0
      %4412 = vmatprep.mubr.f32.mxu0 0.0
      %4413 = vmatmul.mubr.f32.gmra.mxu0 %v3175
      %v4414 = vpop.f32.mrf.mxu0
      %v4415 = vadd.f32 0.0, %v4414
      %v4416 = vpop.f32.mrf.mxu0
      %4417 = vmatprep.mubr.f32.mxu0 0.0
      %4418 = vmatmul.mubr.f32.gmra.mxu0 %v3178
      %v4419 = vpop.f32.mrf.mxu0
      %v4420 = vadd.f32 0.0, %v4419
      %v4421 = vpop.f32.mrf.mxu0
      %4422 = vmatprep.mubr.f32.mxu0 0.0
      %4423 = vmatmul.mubr.f32.gmra.mxu0 %v3181
      %v4424 = vpop.f32.mrf.mxu0
      %v4425 = vadd.f32 0.0, %v4424
      %v4426 = vpop.f32.mrf.mxu0
      %4427 = vdwg.mxu0
      %s4428 = scalar_lea.vmem %s8, 704
      %v4429 = vld [vmem:[%s4428] sm:$0xff]
      %v4430 = vld [vmem:[%s4428 + $0x8] sm:$0xff]
      %v4431 = vld [vmem:[%s4428 + $0x10] sm:$0xff]
      %v4432 = vld [vmem:[%s4428 + $0x18] sm:$0xff]
      %v4433 = vld [vmem:[%s4428 + $0x20] sm:$0xff]
      %v4434 = vld [vmem:[%s4428 + $0x28] sm:$0xff]
      %v4435 = vld [vmem:[%s4428 + $0x30] sm:$0xff]
      %v4436 = vld [vmem:[%s4428 + $0x38] sm:$0xff]
      %4437 = vmatprep.subr.mxu0 0.0
      %4438 = vmatpush1.msra.mxu0 0.0
      %4439 = vmatprep.subr.mxu0 0.0
      %4440 = vmatpush1.msra.mxu0 0.0
      %4441 = vmatprep.subr.mxu0 0.0
      %4442 = vmatpush1.msra.mxu0 0.0
      %4443 = vmatprep.subr.mxu0 0.0
      %4444 = vmatpush1.msra.mxu0 0.0
      %4445 = vmatprep.subr.mxu0 0.0
      %4446 = vmatpush1.msra.mxu0 0.0
      %4447 = vmatprep.subr.mxu0 0.0
      %4448 = vmatpush1.msra.mxu0 0.0
      %4449 = vmatprep.subr.mxu0 0.0
      %4450 = vmatpush1.msra.mxu0 0.0
      %4451 = vmatprep.subr.mxu0 0.0
      %4452 = vmatpush1.msra.mxu0 0.0
      %4453 = vmatprep.subr.mxu0 0.0
      %4454 = vmatpush1.msra.mxu0 %v4436
      %4455 = vmatprep.subr.mxu0 0.0
      %4456 = vmatpush1.msra.mxu0 %v4435
      %4457 = vmatprep.subr.mxu0 0.0
      %4458 = vmatpush1.msra.mxu0 %v4434
      %4459 = vmatprep.subr.mxu0 0.0
      %4460 = vmatpush1.msra.mxu0 %v4433
      %4461 = vmatprep.subr.mxu0 0.0
      %4462 = vmatpush1.msra.mxu0 %v4432
      %4463 = vmatprep.subr.mxu0 0.0
      %4464 = vmatpush1.msra.mxu0 %v4431
      %4465 = vmatprep.subr.mxu0 0.0
      %4466 = vmatpush1.msra.mxu0 %v4430
      %4467 = vmatprep.subr.mxu0 0.0
      %4468 = vmatpush1.msra.mxu0 %v4429
      %4469 = vmatprep.subr.mxu0 0.0
      %4470 = vmatpush2.msra.mxu0 0.0
      %4471 = vmatprep.subr.mxu0 0.0
      %4472 = vmatpush2.msra.mxu0 0.0
      %4473 = vmatprep.subr.mxu0 0.0
      %4474 = vmatpush2.msra.mxu0 0.0
      %4475 = vmatprep.subr.mxu0 0.0
      %4476 = vmatpush2.msra.mxu0 0.0
      %4477 = vmatprep.subr.mxu0 0.0
      %4478 = vmatpush2.msra.mxu0 0.0
      %4479 = vmatprep.subr.mxu0 0.0
      %4480 = vmatpush2.msra.mxu0 0.0
      %4481 = vmatprep.subr.mxu0 0.0
      %4482 = vmatpush2.msra.mxu0 0.0
      %4483 = vmatprep.subr.mxu0 0.0
      %4484 = vmatpush2.msra.mxu0 0.0
      %4485 = vmatprep.subr.mxu0 0.0
      %4486 = vmatpush2.msra.mxu0 0.0
      %4487 = vmatprep.subr.mxu0 0.0
      %4488 = vmatpush2.msra.mxu0 0.0
      %4489 = vmatprep.subr.mxu0 0.0
      %4490 = vmatpush2.msra.mxu0 0.0
      %4491 = vmatprep.subr.mxu0 0.0
      %4492 = vmatpush2.msra.mxu0 0.0
      %4493 = vmatprep.subr.mxu0 0.0
      %4494 = vmatpush2.msra.mxu0 0.0
      %4495 = vmatprep.subr.mxu0 0.0
      %4496 = vmatpush2.msra.mxu0 0.0
      %4497 = vmatprep.subr.mxu0 0.0
      %4498 = vmatpush2.msra.mxu0 0.0
      %4499 = vmatprep.subr.mxu0 0.0
      %4500 = vmatpush2.msra.mxu0 0.0
      %4501 = vmatprep.mubr.f32.mxu0 0.0
      %4502 = vmatmul.mubr.f32.gmra.mxu0 %v3160
      %v4503 = vpop.f32.mrf.mxu0
      %v4504 = vadd.f32 0.0, %v4503
      %v4505 = vpop.f32.mrf.mxu0
      %4506 = vmatprep.mubr.f32.mxu0 0.0
      %4507 = vmatmul.mubr.f32.gmra.mxu0 %v3163
      %v4508 = vpop.f32.mrf.mxu0
      %v4509 = vadd.f32 0.0, %v4508
      %v4510 = vpop.f32.mrf.mxu0
      %4511 = vmatprep.mubr.f32.mxu0 0.0
      %4512 = vmatmul.mubr.f32.gmra.mxu0 %v3166
      %v4513 = vpop.f32.mrf.mxu0
      %v4514 = vadd.f32 0.0, %v4513
      %v4515 = vpop.f32.mrf.mxu0
      %4516 = vmatprep.mubr.f32.mxu0 0.0
      %4517 = vmatmul.mubr.f32.gmra.mxu0 %v3169
      %v4518 = vpop.f32.mrf.mxu0
      %v4519 = vadd.f32 0.0, %v4518
      %v4520 = vpop.f32.mrf.mxu0
      %4521 = vmatprep.mubr.f32.mxu0 0.0
      %4522 = vmatmul.mubr.f32.gmra.mxu0 %v3172
      %v4523 = vpop.f32.mrf.mxu0
      %v4524 = vadd.f32 0.0, %v4523
      %v4525 = vpop.f32.mrf.mxu0
      %4526 = vmatprep.mubr.f32.mxu0 0.0
      %4527 = vmatmul.mubr.f32.gmra.mxu0 %v3175
      %v4528 = vpop.f32.mrf.mxu0
      %v4529 = vadd.f32 0.0, %v4528
      %v4530 = vpop.f32.mrf.mxu0
      %4531 = vmatprep.mubr.f32.mxu0 0.0
      %4532 = vmatmul.mubr.f32.gmra.mxu0 %v3178
      %v4533 = vpop.f32.mrf.mxu0
      %v4534 = vadd.f32 0.0, %v4533
      %v4535 = vpop.f32.mrf.mxu0
      %4536 = vmatprep.mubr.f32.mxu0 0.0
      %4537 = vmatmul.mubr.f32.gmra.mxu0 %v3181
      %v4538 = vpop.f32.mrf.mxu0
      %v4539 = vadd.f32 0.0, %v4538
      %v4540 = vpop.f32.mrf.mxu0
      %4541 = vdwg.mxu0
      %s4542 = scalar_lea.vmem %s8, 768
      %v4543 = vld [vmem:[%s4542] sm:$0xff]
      %v4544 = vld [vmem:[%s4542 + $0x8] sm:$0xff]
      %v4545 = vld [vmem:[%s4542 + $0x10] sm:$0xff]
      %v4546 = vld [vmem:[%s4542 + $0x18] sm:$0xff]
      %v4547 = vld [vmem:[%s4542 + $0x20] sm:$0xff]
      %v4548 = vld [vmem:[%s4542 + $0x28] sm:$0xff]
      %v4549 = vld [vmem:[%s4542 + $0x30] sm:$0xff]
      %v4550 = vld [vmem:[%s4542 + $0x38] sm:$0xff]
      %4551 = vmatprep.subr.mxu0 0.0
      %4552 = vmatpush1.msra.mxu0 0.0
      %4553 = vmatprep.subr.mxu0 0.0
      %4554 = vmatpush1.msra.mxu0 0.0
      %4555 = vmatprep.subr.mxu0 0.0
      %4556 = vmatpush1.msra.mxu0 0.0
      %4557 = vmatprep.subr.mxu0 0.0
      %4558 = vmatpush1.msra.mxu0 0.0
      %4559 = vmatprep.subr.mxu0 0.0
      %4560 = vmatpush1.msra.mxu0 0.0
      %4561 = vmatprep.subr.mxu0 0.0
      %4562 = vmatpush1.msra.mxu0 0.0
      %4563 = vmatprep.subr.mxu0 0.0
      %4564 = vmatpush1.msra.mxu0 0.0
      %4565 = vmatprep.subr.mxu0 0.0
      %4566 = vmatpush1.msra.mxu0 0.0
      %4567 = vmatprep.subr.mxu0 0.0
      %4568 = vmatpush1.msra.mxu0 %v4550
      %4569 = vmatprep.subr.mxu0 0.0
      %4570 = vmatpush1.msra.mxu0 %v4549
      %4571 = vmatprep.subr.mxu0 0.0
      %4572 = vmatpush1.msra.mxu0 %v4548
      %4573 = vmatprep.subr.mxu0 0.0
      %4574 = vmatpush1.msra.mxu0 %v4547
      %4575 = vmatprep.subr.mxu0 0.0
      %4576 = vmatpush1.msra.mxu0 %v4546
      %4577 = vmatprep.subr.mxu0 0.0
      %4578 = vmatpush1.msra.mxu0 %v4545
      %4579 = vmatprep.subr.mxu0 0.0
      %4580 = vmatpush1.msra.mxu0 %v4544
      %4581 = vmatprep.subr.mxu0 0.0
      %4582 = vmatpush1.msra.mxu0 %v4543
      %4583 = vmatprep.subr.mxu0 0.0
      %4584 = vmatpush2.msra.mxu0 0.0
      %4585 = vmatprep.subr.mxu0 0.0
      %4586 = vmatpush2.msra.mxu0 0.0
      %4587 = vmatprep.subr.mxu0 0.0
      %4588 = vmatpush2.msra.mxu0 0.0
      %4589 = vmatprep.subr.mxu0 0.0
      %4590 = vmatpush2.msra.mxu0 0.0
      %4591 = vmatprep.subr.mxu0 0.0
      %4592 = vmatpush2.msra.mxu0 0.0
      %4593 = vmatprep.subr.mxu0 0.0
      %4594 = vmatpush2.msra.mxu0 0.0
      %4595 = vmatprep.subr.mxu0 0.0
      %4596 = vmatpush2.msra.mxu0 0.0
      %4597 = vmatprep.subr.mxu0 0.0
      %4598 = vmatpush2.msra.mxu0 0.0
      %4599 = vmatprep.subr.mxu0 0.0
      %4600 = vmatpush2.msra.mxu0 0.0
      %4601 = vmatprep.subr.mxu0 0.0
      %4602 = vmatpush2.msra.mxu0 0.0
      %4603 = vmatprep.subr.mxu0 0.0
      %4604 = vmatpush2.msra.mxu0 0.0
      %4605 = vmatprep.subr.mxu0 0.0
      %4606 = vmatpush2.msra.mxu0 0.0
      %4607 = vmatprep.subr.mxu0 0.0
      %4608 = vmatpush2.msra.mxu0 0.0
      %4609 = vmatprep.subr.mxu0 0.0
      %4610 = vmatpush2.msra.mxu0 0.0
      %4611 = vmatprep.subr.mxu0 0.0
      %4612 = vmatpush2.msra.mxu0 0.0
      %4613 = vmatprep.subr.mxu0 0.0
      %4614 = vmatpush2.msra.mxu0 0.0
      %4615 = vmatprep.mubr.f32.mxu0 0.0
      %4616 = vmatmul.mubr.f32.gmra.mxu0 %v3160
      %v4617 = vpop.f32.mrf.mxu0
      %v4618 = vadd.f32 0.0, %v4617
      %v4619 = vpop.f32.mrf.mxu0
      %4620 = vmatprep.mubr.f32.mxu0 0.0
      %4621 = vmatmul.mubr.f32.gmra.mxu0 %v3163
      %v4622 = vpop.f32.mrf.mxu0
      %v4623 = vadd.f32 0.0, %v4622
      %v4624 = vpop.f32.mrf.mxu0
      %4625 = vmatprep.mubr.f32.mxu0 0.0
      %4626 = vmatmul.mubr.f32.gmra.mxu0 %v3166
      %v4627 = vpop.f32.mrf.mxu0
      %v4628 = vadd.f32 0.0, %v4627
      %v4629 = vpop.f32.mrf.mxu0
      %4630 = vmatprep.mubr.f32.mxu0 0.0
      %4631 = vmatmul.mubr.f32.gmra.mxu0 %v3169
      %v4632 = vpop.f32.mrf.mxu0
      %v4633 = vadd.f32 0.0, %v4632
      %v4634 = vpop.f32.mrf.mxu0
      %4635 = vmatprep.mubr.f32.mxu0 0.0
      %4636 = vmatmul.mubr.f32.gmra.mxu0 %v3172
      %v4637 = vpop.f32.mrf.mxu0
      %v4638 = vadd.f32 0.0, %v4637
      %v4639 = vpop.f32.mrf.mxu0
      %4640 = vmatprep.mubr.f32.mxu0 0.0
      %4641 = vmatmul.mubr.f32.gmra.mxu0 %v3175
      %v4642 = vpop.f32.mrf.mxu0
      %v4643 = vadd.f32 0.0, %v4642
      %v4644 = vpop.f32.mrf.mxu0
      %4645 = vmatprep.mubr.f32.mxu0 0.0
      %4646 = vmatmul.mubr.f32.gmra.mxu0 %v3178
      %v4647 = vpop.f32.mrf.mxu0
      %v4648 = vadd.f32 0.0, %v4647
      %v4649 = vpop.f32.mrf.mxu0
      %4650 = vmatprep.mubr.f32.mxu0 0.0
      %4651 = vmatmul.mubr.f32.gmra.mxu0 %v3181
      %v4652 = vpop.f32.mrf.mxu0
      %v4653 = vadd.f32 0.0, %v4652
      %v4654 = vpop.f32.mrf.mxu0
      %4655 = vdwg.mxu0
      %s4656 = scalar_lea.vmem %s8, 832
      %v4657 = vld [vmem:[%s4656] sm:$0xff]
      %v4658 = vld [vmem:[%s4656 + $0x8] sm:$0xff]
      %v4659 = vld [vmem:[%s4656 + $0x10] sm:$0xff]
      %v4660 = vld [vmem:[%s4656 + $0x18] sm:$0xff]
      %v4661 = vld [vmem:[%s4656 + $0x20] sm:$0xff]
      %v4662 = vld [vmem:[%s4656 + $0x28] sm:$0xff]
      %v4663 = vld [vmem:[%s4656 + $0x30] sm:$0xff]
      %v4664 = vld [vmem:[%s4656 + $0x38] sm:$0xff]
      %4665 = vmatprep.subr.mxu0 0.0
      %4666 = vmatpush1.msra.mxu0 0.0
      %4667 = vmatprep.subr.mxu0 0.0
      %4668 = vmatpush1.msra.mxu0 0.0
      %4669 = vmatprep.subr.mxu0 0.0
      %4670 = vmatpush1.msra.mxu0 0.0
      %4671 = vmatprep.subr.mxu0 0.0
      %4672 = vmatpush1.msra.mxu0 0.0
      %4673 = vmatprep.subr.mxu0 0.0
      %4674 = vmatpush1.msra.mxu0 0.0
      %4675 = vmatprep.subr.mxu0 0.0
      %4676 = vmatpush1.msra.mxu0 0.0
      %4677 = vmatprep.subr.mxu0 0.0
      %4678 = vmatpush1.msra.mxu0 0.0
      %4679 = vmatprep.subr.mxu0 0.0
      %4680 = vmatpush1.msra.mxu0 0.0
      %4681 = vmatprep.subr.mxu0 0.0
      %4682 = vmatpush1.msra.mxu0 %v4664
      %4683 = vmatprep.subr.mxu0 0.0
      %4684 = vmatpush1.msra.mxu0 %v4663
      %4685 = vmatprep.subr.mxu0 0.0
      %4686 = vmatpush1.msra.mxu0 %v4662
      %4687 = vmatprep.subr.mxu0 0.0
      %4688 = vmatpush1.msra.mxu0 %v4661
      %4689 = vmatprep.subr.mxu0 0.0
      %4690 = vmatpush1.msra.mxu0 %v4660
      %4691 = vmatprep.subr.mxu0 0.0
      %4692 = vmatpush1.msra.mxu0 %v4659
      %4693 = vmatprep.subr.mxu0 0.0
      %4694 = vmatpush1.msra.mxu0 %v4658
      %4695 = vmatprep.subr.mxu0 0.0
      %4696 = vmatpush1.msra.mxu0 %v4657
      %4697 = vmatprep.subr.mxu0 0.0
      %4698 = vmatpush2.msra.mxu0 0.0
      %4699 = vmatprep.subr.mxu0 0.0
      %4700 = vmatpush2.msra.mxu0 0.0
      %4701 = vmatprep.subr.mxu0 0.0
      %4702 = vmatpush2.msra.mxu0 0.0
      %4703 = vmatprep.subr.mxu0 0.0
      %4704 = vmatpush2.msra.mxu0 0.0
      %4705 = vmatprep.subr.mxu0 0.0
      %4706 = vmatpush2.msra.mxu0 0.0
      %4707 = vmatprep.subr.mxu0 0.0
      %4708 = vmatpush2.msra.mxu0 0.0
      %4709 = vmatprep.subr.mxu0 0.0
      %4710 = vmatpush2.msra.mxu0 0.0
      %4711 = vmatprep.subr.mxu0 0.0
      %4712 = vmatpush2.msra.mxu0 0.0
      %4713 = vmatprep.subr.mxu0 0.0
      %4714 = vmatpush2.msra.mxu0 0.0
      %4715 = vmatprep.subr.mxu0 0.0
      %4716 = vmatpush2.msra.mxu0 0.0
      %4717 = vmatprep.subr.mxu0 0.0
      %4718 = vmatpush2.msra.mxu0 0.0
      %4719 = vmatprep.subr.mxu0 0.0
      %4720 = vmatpush2.msra.mxu0 0.0
      %4721 = vmatprep.subr.mxu0 0.0
      %4722 = vmatpush2.msra.mxu0 0.0
      %4723 = vmatprep.subr.mxu0 0.0
      %4724 = vmatpush2.msra.mxu0 0.0
      %4725 = vmatprep.subr.mxu0 0.0
      %4726 = vmatpush2.msra.mxu0 0.0
      %4727 = vmatprep.subr.mxu0 0.0
      %4728 = vmatpush2.msra.mxu0 0.0
      %4729 = vmatprep.mubr.f32.mxu0 0.0
      %4730 = vmatmul.mubr.f32.gmra.mxu0 %v3160
      %v4731 = vpop.f32.mrf.mxu0
      %v4732 = vadd.f32 0.0, %v4731
      %v4733 = vpop.f32.mrf.mxu0
      %4734 = vmatprep.mubr.f32.mxu0 0.0
      %4735 = vmatmul.mubr.f32.gmra.mxu0 %v3163
      %v4736 = vpop.f32.mrf.mxu0
      %v4737 = vadd.f32 0.0, %v4736
      %v4738 = vpop.f32.mrf.mxu0
      %4739 = vmatprep.mubr.f32.mxu0 0.0
      %4740 = vmatmul.mubr.f32.gmra.mxu0 %v3166
      %v4741 = vpop.f32.mrf.mxu0
      %v4742 = vadd.f32 0.0, %v4741
      %v4743 = vpop.f32.mrf.mxu0
      %4744 = vmatprep.mubr.f32.mxu0 0.0
      %4745 = vmatmul.mubr.f32.gmra.mxu0 %v3169
      %v4746 = vpop.f32.mrf.mxu0
      %v4747 = vadd.f32 0.0, %v4746
      %v4748 = vpop.f32.mrf.mxu0
      %4749 = vmatprep.mubr.f32.mxu0 0.0
      %4750 = vmatmul.mubr.f32.gmra.mxu0 %v3172
      %v4751 = vpop.f32.mrf.mxu0
      %v4752 = vadd.f32 0.0, %v4751
      %v4753 = vpop.f32.mrf.mxu0
      %4754 = vmatprep.mubr.f32.mxu0 0.0
      %4755 = vmatmul.mubr.f32.gmra.mxu0 %v3175
      %v4756 = vpop.f32.mrf.mxu0
      %v4757 = vadd.f32 0.0, %v4756
      %v4758 = vpop.f32.mrf.mxu0
      %4759 = vmatprep.mubr.f32.mxu0 0.0
      %4760 = vmatmul.mubr.f32.gmra.mxu0 %v3178
      %v4761 = vpop.f32.mrf.mxu0
      %v4762 = vadd.f32 0.0, %v4761
      %v4763 = vpop.f32.mrf.mxu0
      %4764 = vmatprep.mubr.f32.mxu0 0.0
      %4765 = vmatmul.mubr.f32.gmra.mxu0 %v3181
      %v4766 = vpop.f32.mrf.mxu0
      %v4767 = vadd.f32 0.0, %v4766
      %v4768 = vpop.f32.mrf.mxu0
      %4769 = vdwg.mxu0
      %s4770 = scalar_lea.vmem %s8, 896
      %v4771 = vld [vmem:[%s4770] sm:$0xff]
      %v4772 = vld [vmem:[%s4770 + $0x8] sm:$0xff]
      %v4773 = vld [vmem:[%s4770 + $0x10] sm:$0xff]
      %v4774 = vld [vmem:[%s4770 + $0x18] sm:$0xff]
      %v4775 = vld [vmem:[%s4770 + $0x20] sm:$0xff]
      %v4776 = vld [vmem:[%s4770 + $0x28] sm:$0xff]
      %v4777 = vld [vmem:[%s4770 + $0x30] sm:$0xff]
      %v4778 = vld [vmem:[%s4770 + $0x38] sm:$0xff]
      %4779 = vmatprep.subr.mxu0 0.0
      %4780 = vmatpush1.msra.mxu0 0.0
      %4781 = vmatprep.subr.mxu0 0.0
      %4782 = vmatpush1.msra.mxu0 0.0
      %4783 = vmatprep.subr.mxu0 0.0
      %4784 = vmatpush1.msra.mxu0 0.0
      %4785 = vmatprep.subr.mxu0 0.0
      %4786 = vmatpush1.msra.mxu0 0.0
      %4787 = vmatprep.subr.mxu0 0.0
      %4788 = vmatpush1.msra.mxu0 0.0
      %4789 = vmatprep.subr.mxu0 0.0
      %4790 = vmatpush1.msra.mxu0 0.0
      %4791 = vmatprep.subr.mxu0 0.0
      %4792 = vmatpush1.msra.mxu0 0.0
      %4793 = vmatprep.subr.mxu0 0.0
      %4794 = vmatpush1.msra.mxu0 0.0
      %4795 = vmatprep.subr.mxu0 0.0
      %4796 = vmatpush1.msra.mxu0 %v4778
      %4797 = vmatprep.subr.mxu0 0.0
      %4798 = vmatpush1.msra.mxu0 %v4777
      %4799 = vmatprep.subr.mxu0 0.0
      %4800 = vmatpush1.msra.mxu0 %v4776
      %4801 = vmatprep.subr.mxu0 0.0
      %4802 = vmatpush1.msra.mxu0 %v4775
      %4803 = vmatprep.subr.mxu0 0.0
      %4804 = vmatpush1.msra.mxu0 %v4774
      %4805 = vmatprep.subr.mxu0 0.0
      %4806 = vmatpush1.msra.mxu0 %v4773
      %4807 = vmatprep.subr.mxu0 0.0
      %4808 = vmatpush1.msra.mxu0 %v4772
      %4809 = vmatprep.subr.mxu0 0.0
      %4810 = vmatpush1.msra.mxu0 %v4771
      %4811 = vmatprep.subr.mxu0 0.0
      %4812 = vmatpush2.msra.mxu0 0.0
      %4813 = vmatprep.subr.mxu0 0.0
      %4814 = vmatpush2.msra.mxu0 0.0
      %4815 = vmatprep.subr.mxu0 0.0
      %4816 = vmatpush2.msra.mxu0 0.0
      %4817 = vmatprep.subr.mxu0 0.0
      %4818 = vmatpush2.msra.mxu0 0.0
      %4819 = vmatprep.subr.mxu0 0.0
      %4820 = vmatpush2.msra.mxu0 0.0
      %4821 = vmatprep.subr.mxu0 0.0
      %4822 = vmatpush2.msra.mxu0 0.0
      %4823 = vmatprep.subr.mxu0 0.0
      %4824 = vmatpush2.msra.mxu0 0.0
      %4825 = vmatprep.subr.mxu0 0.0
      %4826 = vmatpush2.msra.mxu0 0.0
      %4827 = vmatprep.subr.mxu0 0.0
      %4828 = vmatpush2.msra.mxu0 0.0
      %4829 = vmatprep.subr.mxu0 0.0
      %4830 = vmatpush2.msra.mxu0 0.0
      %4831 = vmatprep.subr.mxu0 0.0
      %4832 = vmatpush2.msra.mxu0 0.0
      %4833 = vmatprep.subr.mxu0 0.0
      %4834 = vmatpush2.msra.mxu0 0.0
      %4835 = vmatprep.subr.mxu0 0.0
      %4836 = vmatpush2.msra.mxu0 0.0
      %4837 = vmatprep.subr.mxu0 0.0
      %4838 = vmatpush2.msra.mxu0 0.0
      %4839 = vmatprep.subr.mxu0 0.0
      %4840 = vmatpush2.msra.mxu0 0.0
      %4841 = vmatprep.subr.mxu0 0.0
      %4842 = vmatpush2.msra.mxu0 0.0
      %4843 = vmatprep.mubr.f32.mxu0 0.0
      %4844 = vmatmul.mubr.f32.gmra.mxu0 %v3160
      %v4845 = vpop.f32.mrf.mxu0
      %v4846 = vadd.f32 0.0, %v4845
      %v4847 = vpop.f32.mrf.mxu0
      %4848 = vmatprep.mubr.f32.mxu0 0.0
      %4849 = vmatmul.mubr.f32.gmra.mxu0 %v3163
      %v4850 = vpop.f32.mrf.mxu0
      %v4851 = vadd.f32 0.0, %v4850
      %v4852 = vpop.f32.mrf.mxu0
      %4853 = vmatprep.mubr.f32.mxu0 0.0
      %4854 = vmatmul.mubr.f32.gmra.mxu0 %v3166
      %v4855 = vpop.f32.mrf.mxu0
      %v4856 = vadd.f32 0.0, %v4855
      %v4857 = vpop.f32.mrf.mxu0
      %4858 = vmatprep.mubr.f32.mxu0 0.0
      %4859 = vmatmul.mubr.f32.gmra.mxu0 %v3169
      %v4860 = vpop.f32.mrf.mxu0
      %v4861 = vadd.f32 0.0, %v4860
      %v4862 = vpop.f32.mrf.mxu0
      %4863 = vmatprep.mubr.f32.mxu0 0.0
      %4864 = vmatmul.mubr.f32.gmra.mxu0 %v3172
      %v4865 = vpop.f32.mrf.mxu0
      %v4866 = vadd.f32 0.0, %v4865
      %v4867 = vpop.f32.mrf.mxu0
      %4868 = vmatprep.mubr.f32.mxu0 0.0
      %4869 = vmatmul.mubr.f32.gmra.mxu0 %v3175
      %v4870 = vpop.f32.mrf.mxu0
      %v4871 = vadd.f32 0.0, %v4870
      %v4872 = vpop.f32.mrf.mxu0
      %4873 = vmatprep.mubr.f32.mxu0 0.0
      %4874 = vmatmul.mubr.f32.gmra.mxu0 %v3178
      %v4875 = vpop.f32.mrf.mxu0
      %v4876 = vadd.f32 0.0, %v4875
      %v4877 = vpop.f32.mrf.mxu0
      %4878 = vmatprep.mubr.f32.mxu0 0.0
      %4879 = vmatmul.mubr.f32.gmra.mxu0 %v3181
      %v4880 = vpop.f32.mrf.mxu0
      %v4881 = vadd.f32 0.0, %v4880
      %v4882 = vpop.f32.mrf.mxu0
      %4883 = vdwg.mxu0
      %s4884 = scalar_lea.vmem %s8, 960
      %v4885 = vld [vmem:[%s4884] sm:$0xff]
      %v4886 = vld [vmem:[%s4884 + $0x8] sm:$0xff]
      %v4887 = vld [vmem:[%s4884 + $0x10] sm:$0xff]
      %v4888 = vld [vmem:[%s4884 + $0x18] sm:$0xff]
      %v4889 = vld [vmem:[%s4884 + $0x20] sm:$0xff]
      %v4890 = vld [vmem:[%s4884 + $0x28] sm:$0xff]
      %v4891 = vld [vmem:[%s4884 + $0x30] sm:$0xff]
      %v4892 = vld [vmem:[%s4884 + $0x38] sm:$0xff]
      %4893 = vmatprep.subr.mxu0 0.0
      %4894 = vmatpush1.msra.mxu0 0.0
      %4895 = vmatprep.subr.mxu0 0.0
      %4896 = vmatpush1.msra.mxu0 0.0
      %4897 = vmatprep.subr.mxu0 0.0
      %4898 = vmatpush1.msra.mxu0 0.0
      %4899 = vmatprep.subr.mxu0 0.0
      %4900 = vmatpush1.msra.mxu0 0.0
      %4901 = vmatprep.subr.mxu0 0.0
      %4902 = vmatpush1.msra.mxu0 0.0
      %4903 = vmatprep.subr.mxu0 0.0
      %4904 = vmatpush1.msra.mxu0 0.0
      %4905 = vmatprep.subr.mxu0 0.0
      %4906 = vmatpush1.msra.mxu0 0.0
      %4907 = vmatprep.subr.mxu0 0.0
      %4908 = vmatpush1.msra.mxu0 0.0
      %4909 = vmatprep.subr.mxu0 0.0
      %4910 = vmatpush1.msra.mxu0 %v4892
      %4911 = vmatprep.subr.mxu0 0.0
      %4912 = vmatpush1.msra.mxu0 %v4891
      %4913 = vmatprep.subr.mxu0 0.0
      %4914 = vmatpush1.msra.mxu0 %v4890
      %4915 = vmatprep.subr.mxu0 0.0
      %4916 = vmatpush1.msra.mxu0 %v4889
      %4917 = vmatprep.subr.mxu0 0.0
      %4918 = vmatpush1.msra.mxu0 %v4888
      %4919 = vmatprep.subr.mxu0 0.0
      %4920 = vmatpush1.msra.mxu0 %v4887
      %4921 = vmatprep.subr.mxu0 0.0
      %4922 = vmatpush1.msra.mxu0 %v4886
      %4923 = vmatprep.subr.mxu0 0.0
      %4924 = vmatpush1.msra.mxu0 %v4885
      %4925 = vmatprep.subr.mxu0 0.0
      %4926 = vmatpush2.msra.mxu0 0.0
      %4927 = vmatprep.subr.mxu0 0.0
      %4928 = vmatpush2.msra.mxu0 0.0
      %4929 = vmatprep.subr.mxu0 0.0
      %4930 = vmatpush2.msra.mxu0 0.0
      %4931 = vmatprep.subr.mxu0 0.0
      %4932 = vmatpush2.msra.mxu0 0.0
      %4933 = vmatprep.subr.mxu0 0.0
      %4934 = vmatpush2.msra.mxu0 0.0
      %4935 = vmatprep.subr.mxu0 0.0
      %4936 = vmatpush2.msra.mxu0 0.0
      %4937 = vmatprep.subr.mxu0 0.0
      %4938 = vmatpush2.msra.mxu0 0.0
      %4939 = vmatprep.subr.mxu0 0.0
      %4940 = vmatpush2.msra.mxu0 0.0
      %4941 = vmatprep.subr.mxu0 0.0
      %4942 = vmatpush2.msra.mxu0 0.0
      %4943 = vmatprep.subr.mxu0 0.0
      %4944 = vmatpush2.msra.mxu0 0.0
      %4945 = vmatprep.subr.mxu0 0.0
      %4946 = vmatpush2.msra.mxu0 0.0
      %4947 = vmatprep.subr.mxu0 0.0
      %4948 = vmatpush2.msra.mxu0 0.0
      %4949 = vmatprep.subr.mxu0 0.0
      %4950 = vmatpush2.msra.mxu0 0.0
      %4951 = vmatprep.subr.mxu0 0.0
      %4952 = vmatpush2.msra.mxu0 0.0
      %4953 = vmatprep.subr.mxu0 0.0
      %4954 = vmatpush2.msra.mxu0 0.0
      %4955 = vmatprep.subr.mxu0 0.0
      %4956 = vmatpush2.msra.mxu0 0.0
      %4957 = vmatprep.mubr.f32.mxu0 0.0
      %4958 = vmatmul.mubr.f32.gmra.mxu0 %v3160
      %v4959 = vpop.f32.mrf.mxu0
      %v4960 = vadd.f32 0.0, %v4959
      %v4961 = vpop.f32.mrf.mxu0
      %4962 = vmatprep.mubr.f32.mxu0 0.0
      %4963 = vmatmul.mubr.f32.gmra.mxu0 %v3163
      %v4964 = vpop.f32.mrf.mxu0
      %v4965 = vadd.f32 0.0, %v4964
      %v4966 = vpop.f32.mrf.mxu0
      %4967 = vmatprep.mubr.f32.mxu0 0.0
      %4968 = vmatmul.mubr.f32.gmra.mxu0 %v3166
      %v4969 = vpop.f32.mrf.mxu0
      %v4970 = vadd.f32 0.0, %v4969
      %v4971 = vpop.f32.mrf.mxu0
      %4972 = vmatprep.mubr.f32.mxu0 0.0
      %4973 = vmatmul.mubr.f32.gmra.mxu0 %v3169
      %v4974 = vpop.f32.mrf.mxu0
      %v4975 = vadd.f32 0.0, %v4974
      %v4976 = vpop.f32.mrf.mxu0
      %4977 = vmatprep.mubr.f32.mxu0 0.0
      %4978 = vmatmul.mubr.f32.gmra.mxu0 %v3172
      %v4979 = vpop.f32.mrf.mxu0
      %v4980 = vadd.f32 0.0, %v4979
      %v4981 = vpop.f32.mrf.mxu0
      %4982 = vmatprep.mubr.f32.mxu0 0.0
      %4983 = vmatmul.mubr.f32.gmra.mxu0 %v3175
      %v4984 = vpop.f32.mrf.mxu0
      %v4985 = vadd.f32 0.0, %v4984
      %v4986 = vpop.f32.mrf.mxu0
      %4987 = vmatprep.mubr.f32.mxu0 0.0
      %4988 = vmatmul.mubr.f32.gmra.mxu0 %v3178
      %v4989 = vpop.f32.mrf.mxu0
      %v4990 = vadd.f32 0.0, %v4989
      %v4991 = vpop.f32.mrf.mxu0
      %4992 = vmatprep.mubr.f32.mxu0 0.0
      %4993 = vmatmul.mubr.f32.gmra.mxu0 %v3181
      %v4994 = vpop.f32.mrf.mxu0
      %v4995 = vadd.f32 0.0, %v4994
      %v4996 = vpop.f32.mrf.mxu0
      %4997 = vdwg.mxu0
      %v4998 = vld [vmem:[%s9] sm:$0xff]
      %v4999 = vld [vmem:[%s9 + $0x8] sm:$0xff]
      %v5000 = vld [vmem:[%s9 + $0x10] sm:$0xff]
      %v5001 = vld [vmem:[%s9 + $0x18] sm:$0xff]
      %v5002 = vld [vmem:[%s9 + $0x20] sm:$0xff]
      %v5003 = vld [vmem:[%s9 + $0x28] sm:$0xff]
      %v5004 = vld [vmem:[%s9 + $0x30] sm:$0xff]
      %v5005 = vld [vmem:[%s9 + $0x38] sm:$0xff]
      %v5006 = vld [vmem:[%s9 + $0x40] sm:$0xff]
      %v5007 = vld [vmem:[%s9 + $0x48] sm:$0xff]
      %v5008 = vld [vmem:[%s9 + $0x50] sm:$0xff]
      %v5009 = vld [vmem:[%s9 + $0x58] sm:$0xff]
      %v5010 = vld [vmem:[%s9 + $0x60] sm:$0xff]
      %v5011 = vld [vmem:[%s9 + $0x68] sm:$0xff]
      %v5012 = vld [vmem:[%s9 + $0x70] sm:$0xff]
      %v5013 = vld [vmem:[%s9 + $0x78] sm:$0xff]
      %v5014 = vld [vmem:[%s9 + $0x80] sm:$0xff]
      %v5015 = vld [vmem:[%s9 + $0x88] sm:$0xff]
      %v5016 = vld [vmem:[%s9 + $0x90] sm:$0xff]
      %v5017 = vld [vmem:[%s9 + $0x98] sm:$0xff]
      %v5018 = vld [vmem:[%s9 + $0xa0] sm:$0xff]
      %v5019 = vld [vmem:[%s9 + $0xa8] sm:$0xff]
      %v5020 = vld [vmem:[%s9 + $0xb0] sm:$0xff]
      %v5021 = vld [vmem:[%s9 + $0xb8] sm:$0xff]
      %v5022 = vld [vmem:[%s9 + $0xc0] sm:$0xff]
      %v5023 = vld [vmem:[%s9 + $0xc8] sm:$0xff]
      %v5024 = vld [vmem:[%s9 + $0xd0] sm:$0xff]
      %v5025 = vld [vmem:[%s9 + $0xd8] sm:$0xff]
      %v5026 = vld [vmem:[%s9 + $0xe0] sm:$0xff]
      %v5027 = vld [vmem:[%s9 + $0xe8] sm:$0xff]
      %v5028 = vld [vmem:[%s9 + $0xf0] sm:$0xff]
      %v5029 = vld [vmem:[%s9 + $0xf8] sm:$0xff]
      %v5030 = vld [vmem:[%s9 + $0x100] sm:$0xff]
      %v5031 = vld [vmem:[%s9 + $0x108] sm:$0xff]
      %v5032 = vld [vmem:[%s9 + $0x110] sm:$0xff]
      %v5033 = vld [vmem:[%s9 + $0x118] sm:$0xff]
      %v5034 = vld [vmem:[%s9 + $0x120] sm:$0xff]
      %v5035 = vld [vmem:[%s9 + $0x128] sm:$0xff]
      %v5036 = vld [vmem:[%s9 + $0x130] sm:$0xff]
      %v5037 = vld [vmem:[%s9 + $0x138] sm:$0xff]
      %v5038 = vld [vmem:[%s9 + $0x140] sm:$0xff]
      %v5039 = vld [vmem:[%s9 + $0x148] sm:$0xff]
      %v5040 = vld [vmem:[%s9 + $0x150] sm:$0xff]
      %v5041 = vld [vmem:[%s9 + $0x158] sm:$0xff]
      %v5042 = vld [vmem:[%s9 + $0x160] sm:$0xff]
      %v5043 = vld [vmem:[%s9 + $0x168] sm:$0xff]
      %v5044 = vld [vmem:[%s9 + $0x170] sm:$0xff]
      %v5045 = vld [vmem:[%s9 + $0x178] sm:$0xff]
      %v5046 = vld [vmem:[%s9 + $0x180] sm:$0xff]
      %v5047 = vld [vmem:[%s9 + $0x188] sm:$0xff]
      %v5048 = vld [vmem:[%s9 + $0x190] sm:$0xff]
      %v5049 = vld [vmem:[%s9 + $0x198] sm:$0xff]
      %v5050 = vld [vmem:[%s9 + $0x1a0] sm:$0xff]
      %v5051 = vld [vmem:[%s9 + $0x1a8] sm:$0xff]
      %v5052 = vld [vmem:[%s9 + $0x1b0] sm:$0xff]
      %v5053 = vld [vmem:[%s9 + $0x1b8] sm:$0xff]
      %v5054 = vld [vmem:[%s9 + $0x1c0] sm:$0xff]
      %v5055 = vld [vmem:[%s9 + $0x1c8] sm:$0xff]
      %v5056 = vld [vmem:[%s9 + $0x1d0] sm:$0xff]
      %v5057 = vld [vmem:[%s9 + $0x1d8] sm:$0xff]
      %v5058 = vld [vmem:[%s9 + $0x1e0] sm:$0xff]
      %v5059 = vld [vmem:[%s9 + $0x1e8] sm:$0xff]
      %v5060 = vld [vmem:[%s9 + $0x1f0] sm:$0xff]
      %v5061 = vld [vmem:[%s9 + $0x1f8] sm:$0xff]
      %v5062 = vld [vmem:[%s9 + $0x200] sm:$0xff]
      %v5063 = vld [vmem:[%s9 + $0x208] sm:$0xff]
      %v5064 = vld [vmem:[%s9 + $0x210] sm:$0xff]
      %v5065 = vld [vmem:[%s9 + $0x218] sm:$0xff]
      %v5066 = vld [vmem:[%s9 + $0x220] sm:$0xff]
      %v5067 = vld [vmem:[%s9 + $0x228] sm:$0xff]
      %v5068 = vld [vmem:[%s9 + $0x230] sm:$0xff]
      %v5069 = vld [vmem:[%s9 + $0x238] sm:$0xff]
      %v5070 = vld [vmem:[%s9 + $0x240] sm:$0xff]
      %v5071 = vld [vmem:[%s9 + $0x248] sm:$0xff]
      %v5072 = vld [vmem:[%s9 + $0x250] sm:$0xff]
      %v5073 = vld [vmem:[%s9 + $0x258] sm:$0xff]
      %v5074 = vld [vmem:[%s9 + $0x260] sm:$0xff]
      %v5075 = vld [vmem:[%s9 + $0x268] sm:$0xff]
      %v5076 = vld [vmem:[%s9 + $0x270] sm:$0xff]
      %v5077 = vld [vmem:[%s9 + $0x278] sm:$0xff]
      %v5078 = vld [vmem:[%s9 + $0x280] sm:$0xff]
      %v5079 = vld [vmem:[%s9 + $0x288] sm:$0xff]
      %v5080 = vld [vmem:[%s9 + $0x290] sm:$0xff]
      %v5081 = vld [vmem:[%s9 + $0x298] sm:$0xff]
      %v5082 = vld [vmem:[%s9 + $0x2a0] sm:$0xff]
      %v5083 = vld [vmem:[%s9 + $0x2a8] sm:$0xff]
      %v5084 = vld [vmem:[%s9 + $0x2b0] sm:$0xff]
      %v5085 = vld [vmem:[%s9 + $0x2b8] sm:$0xff]
      %v5086 = vld [vmem:[%s9 + $0x2c0] sm:$0xff]
      %v5087 = vld [vmem:[%s9 + $0x2c8] sm:$0xff]
      %v5088 = vld [vmem:[%s9 + $0x2d0] sm:$0xff]
      %v5089 = vld [vmem:[%s9 + $0x2d8] sm:$0xff]
      %v5090 = vld [vmem:[%s9 + $0x2e0] sm:$0xff]
      %v5091 = vld [vmem:[%s9 + $0x2e8] sm:$0xff]
      %v5092 = vld [vmem:[%s9 + $0x2f0] sm:$0xff]
      %v5093 = vld [vmem:[%s9 + $0x2f8] sm:$0xff]
      %v5094 = vld [vmem:[%s9 + $0x300] sm:$0xff]
      %v5095 = vld [vmem:[%s9 + $0x308] sm:$0xff]
      %v5096 = vld [vmem:[%s9 + $0x310] sm:$0xff]
      %v5097 = vld [vmem:[%s9 + $0x318] sm:$0xff]
      %v5098 = vld [vmem:[%s9 + $0x320] sm:$0xff]
      %v5099 = vld [vmem:[%s9 + $0x328] sm:$0xff]
      %v5100 = vld [vmem:[%s9 + $0x330] sm:$0xff]
      %v5101 = vld [vmem:[%s9 + $0x338] sm:$0xff]
      %v5102 = vld [vmem:[%s9 + $0x340] sm:$0xff]
      %v5103 = vld [vmem:[%s9 + $0x348] sm:$0xff]
      %v5104 = vld [vmem:[%s9 + $0x350] sm:$0xff]
      %v5105 = vld [vmem:[%s9 + $0x358] sm:$0xff]
      %v5106 = vld [vmem:[%s9 + $0x360] sm:$0xff]
      %v5107 = vld [vmem:[%s9 + $0x368] sm:$0xff]
      %v5108 = vld [vmem:[%s9 + $0x370] sm:$0xff]
      %v5109 = vld [vmem:[%s9 + $0x378] sm:$0xff]
      %v5110 = vld [vmem:[%s9 + $0x380] sm:$0xff]
      %v5111 = vld [vmem:[%s9 + $0x388] sm:$0xff]
      %v5112 = vld [vmem:[%s9 + $0x390] sm:$0xff]
      %v5113 = vld [vmem:[%s9 + $0x398] sm:$0xff]
      %v5114 = vld [vmem:[%s9 + $0x3a0] sm:$0xff]
      %v5115 = vld [vmem:[%s9 + $0x3a8] sm:$0xff]
      %v5116 = vld [vmem:[%s9 + $0x3b0] sm:$0xff]
      %v5117 = vld [vmem:[%s9 + $0x3b8] sm:$0xff]
      %v5118 = vld [vmem:[%s9 + $0x3c0] sm:$0xff]
      %v5119 = vld [vmem:[%s9 + $0x3c8] sm:$0xff]
      %v5120 = vld [vmem:[%s9 + $0x3d0] sm:$0xff]
      %v5121 = vld [vmem:[%s9 + $0x3d8] sm:$0xff]
      %v5122 = vld [vmem:[%s9 + $0x3e0] sm:$0xff]
      %v5123 = vld [vmem:[%s9 + $0x3e8] sm:$0xff]
      %v5124 = vld [vmem:[%s9 + $0x3f0] sm:$0xff]
      %v5125 = vld [vmem:[%s9 + $0x3f8] sm:$0xff]
      %5126 = vmatprep.subr.mxu0 0.0
      %5127 = vmatpush1.msra.mxu0 %v3399
      %5128 = vmatprep.subr.mxu0 0.0
      %5129 = vmatpush1.msra.mxu0 %v3394
      %5130 = vmatprep.subr.mxu0 0.0
      %5131 = vmatpush1.msra.mxu0 %v3389
      %5132 = vmatprep.subr.mxu0 0.0
      %5133 = vmatpush1.msra.mxu0 %v3384
      %5134 = vmatprep.subr.mxu0 0.0
      %5135 = vmatpush1.msra.mxu0 %v3379
      %5136 = vmatprep.subr.mxu0 0.0
      %5137 = vmatpush1.msra.mxu0 %v3374
      %5138 = vmatprep.subr.mxu0 0.0
      %5139 = vmatpush1.msra.mxu0 %v3369
      %5140 = vmatprep.subr.mxu0 0.0
      %5141 = vmatpush1.msra.mxu0 %v3364
      %5142 = vmatprep.subr.mxu0 0.0
      %5143 = vmatpush1.msra.mxu0 %v3285
      %5144 = vmatprep.subr.mxu0 0.0
      %5145 = vmatpush1.msra.mxu0 %v3280
      %5146 = vmatprep.subr.mxu0 0.0
      %5147 = vmatpush1.msra.mxu0 %v3275
      %5148 = vmatprep.subr.mxu0 0.0
      %5149 = vmatpush1.msra.mxu0 %v3270
      %5150 = vmatprep.subr.mxu0 0.0
      %5151 = vmatpush1.msra.mxu0 %v3265
      %5152 = vmatprep.subr.mxu0 0.0
      %5153 = vmatpush1.msra.mxu0 %v3260
      %5154 = vmatprep.subr.mxu0 0.0
      %5155 = vmatpush1.msra.mxu0 %v3255
      %5156 = vmatprep.subr.mxu0 0.0
      %5157 = vmatpush1.msra.mxu0 %v3250
      %5158 = vmatprep.subr.mxu0 0.0
      %5159 = vmatpush2.msra.mxu0 %v3627
      %5160 = vmatprep.subr.mxu0 0.0
      %5161 = vmatpush2.msra.mxu0 %v3622
      %5162 = vmatprep.subr.mxu0 0.0
      %5163 = vmatpush2.msra.mxu0 %v3617
      %5164 = vmatprep.subr.mxu0 0.0
      %5165 = vmatpush2.msra.mxu0 %v3612
      %5166 = vmatprep.subr.mxu0 0.0
      %5167 = vmatpush2.msra.mxu0 %v3607
      %5168 = vmatprep.subr.mxu0 0.0
      %5169 = vmatpush2.msra.mxu0 %v3602
      %5170 = vmatprep.subr.mxu0 0.0
      %5171 = vmatpush2.msra.mxu0 %v3597
      %5172 = vmatprep.subr.mxu0 0.0
      %5173 = vmatpush2.msra.mxu0 %v3592
      %5174 = vmatprep.subr.mxu0 0.0
      %5175 = vmatpush2.msra.mxu0 %v3513
      %5176 = vmatprep.subr.mxu0 0.0
      %5177 = vmatpush2.msra.mxu0 %v3508
      %5178 = vmatprep.subr.mxu0 0.0
      %5179 = vmatpush2.msra.mxu0 %v3503
      %5180 = vmatprep.subr.mxu0 0.0
      %5181 = vmatpush2.msra.mxu0 %v3498
      %5182 = vmatprep.subr.mxu0 0.0
      %5183 = vmatpush2.msra.mxu0 %v3493
      %5184 = vmatprep.subr.mxu0 0.0
      %5185 = vmatpush2.msra.mxu0 %v3488
      %5186 = vmatprep.subr.mxu0 0.0
      %5187 = vmatpush2.msra.mxu0 %v3483
      %5188 = vmatprep.subr.mxu0 0.0
      %5189 = vmatpush2.msra.mxu0 %v3478
      %5190 = vmatprep.mubr.f32.mxu0 %v4999
      %5191 = vmatmul.mubr.f32.gmra.mxu0 %v4998
      %v5192 = vpop.f32.mrf.mxu0
      %v5193 = vadd.f32 0.0, %v5192
      %v5194 = vpop.f32.mrf.mxu0
      %5195 = vmatprep.mubr.f32.mxu0 %v5007
      %5196 = vmatmul.mubr.f32.gmra.mxu0 %v5006
      %v5197 = vpop.f32.mrf.mxu0
      %v5198 = vadd.f32 0.0, %v5197
      %v5199 = vpop.f32.mrf.mxu0
      %5200 = vmatprep.mubr.f32.mxu0 %v5015
      %5201 = vmatmul.mubr.f32.gmra.mxu0 %v5014
      %v5202 = vpop.f32.mrf.mxu0
      %v5203 = vadd.f32 0.0, %v5202
      %v5204 = vpop.f32.mrf.mxu0
      %5205 = vmatprep.mubr.f32.mxu0 %v5023
      %5206 = vmatmul.mubr.f32.gmra.mxu0 %v5022
      %v5207 = vpop.f32.mrf.mxu0
      %v5208 = vadd.f32 0.0, %v5207
      %v5209 = vpop.f32.mrf.mxu0
      %5210 = vmatprep.mubr.f32.mxu0 %v5031
      %5211 = vmatmul.mubr.f32.gmra.mxu0 %v5030
      %v5212 = vpop.f32.mrf.mxu0
      %v5213 = vadd.f32 0.0, %v5212
      %v5214 = vpop.f32.mrf.mxu0
      %5215 = vmatprep.mubr.f32.mxu0 %v5039
      %5216 = vmatmul.mubr.f32.gmra.mxu0 %v5038
      %v5217 = vpop.f32.mrf.mxu0
      %v5218 = vadd.f32 0.0, %v5217
      %v5219 = vpop.f32.mrf.mxu0
      %5220 = vmatprep.mubr.f32.mxu0 %v5047
      %5221 = vmatmul.mubr.f32.gmra.mxu0 %v5046
      %v5222 = vpop.f32.mrf.mxu0
      %v5223 = vadd.f32 0.0, %v5222
      %v5224 = vpop.f32.mrf.mxu0
      %5225 = vmatprep.mubr.f32.mxu0 %v5055
      %5226 = vmatmul.mubr.f32.gmra.mxu0 %v5054
      %v5227 = vpop.f32.mrf.mxu0
      %v5228 = vadd.f32 0.0, %v5227
      %v5229 = vpop.f32.mrf.mxu0
      %5230 = vmatprep.mubr.f32.mxu0 %v5063
      %5231 = vmatmul.mubr.f32.gmra.mxu0 %v5062
      %v5232 = vpop.f32.mrf.mxu0
      %v5233 = vadd.f32 0.0, %v5232
      %v5234 = vpop.f32.mrf.mxu0
      %5235 = vmatprep.mubr.f32.mxu0 %v5071
      %5236 = vmatmul.mubr.f32.gmra.mxu0 %v5070
      %v5237 = vpop.f32.mrf.mxu0
      %v5238 = vadd.f32 0.0, %v5237
      %v5239 = vpop.f32.mrf.mxu0
      %5240 = vmatprep.mubr.f32.mxu0 %v5079
      %5241 = vmatmul.mubr.f32.gmra.mxu0 %v5078
      %v5242 = vpop.f32.mrf.mxu0
      %v5243 = vadd.f32 0.0, %v5242
      %v5244 = vpop.f32.mrf.mxu0
      %5245 = vmatprep.mubr.f32.mxu0 %v5087
      %5246 = vmatmul.mubr.f32.gmra.mxu0 %v5086
      %v5247 = vpop.f32.mrf.mxu0
      %v5248 = vadd.f32 0.0, %v5247
      %v5249 = vpop.f32.mrf.mxu0
      %5250 = vmatprep.mubr.f32.mxu0 %v5095
      %5251 = vmatmul.mubr.f32.gmra.mxu0 %v5094
      %v5252 = vpop.f32.mrf.mxu0
      %v5253 = vadd.f32 0.0, %v5252
      %v5254 = vpop.f32.mrf.mxu0
      %5255 = vmatprep.mubr.f32.mxu0 %v5103
      %5256 = vmatmul.mubr.f32.gmra.mxu0 %v5102
      %v5257 = vpop.f32.mrf.mxu0
      %v5258 = vadd.f32 0.0, %v5257
      %v5259 = vpop.f32.mrf.mxu0
      %5260 = vmatprep.mubr.f32.mxu0 %v5111
      %5261 = vmatmul.mubr.f32.gmra.mxu0 %v5110
      %v5262 = vpop.f32.mrf.mxu0
      %v5263 = vadd.f32 0.0, %v5262
      %v5264 = vpop.f32.mrf.mxu0
      %5265 = vmatprep.mubr.f32.mxu0 %v5119
      %5266 = vmatmul.mubr.f32.gmra.mxu0 %v5118
      %v5267 = vpop.f32.mrf.mxu0
      %v5268 = vadd.f32 0.0, %v5267
      %v5269 = vpop.f32.mrf.mxu0
      %5270 = vdwg.mxu0
      %5271 = vmatprep.subr.mxu0 0.0
      %5272 = vmatpush1.msra.mxu0 %v3855
      %5273 = vmatprep.subr.mxu0 0.0
      %5274 = vmatpush1.msra.mxu0 %v3850
      %5275 = vmatprep.subr.mxu0 0.0
      %5276 = vmatpush1.msra.mxu0 %v3845
      %5277 = vmatprep.subr.mxu0 0.0
      %5278 = vmatpush1.msra.mxu0 %v3840
      %5279 = vmatprep.subr.mxu0 0.0
      %5280 = vmatpush1.msra.mxu0 %v3835
      %5281 = vmatprep.subr.mxu0 0.0
      %5282 = vmatpush1.msra.mxu0 %v3830
      %5283 = vmatprep.subr.mxu0 0.0
      %5284 = vmatpush1.msra.mxu0 %v3825
      %5285 = vmatprep.subr.mxu0 0.0
      %5286 = vmatpush1.msra.mxu0 %v3820
      %5287 = vmatprep.subr.mxu0 0.0
      %5288 = vmatpush1.msra.mxu0 %v3741
      %5289 = vmatprep.subr.mxu0 0.0
      %5290 = vmatpush1.msra.mxu0 %v3736
      %5291 = vmatprep.subr.mxu0 0.0
      %5292 = vmatpush1.msra.mxu0 %v3731
      %5293 = vmatprep.subr.mxu0 0.0
      %5294 = vmatpush1.msra.mxu0 %v3726
      %5295 = vmatprep.subr.mxu0 0.0
      %5296 = vmatpush1.msra.mxu0 %v3721
      %5297 = vmatprep.subr.mxu0 0.0
      %5298 = vmatpush1.msra.mxu0 %v3716
      %5299 = vmatprep.subr.mxu0 0.0
      %5300 = vmatpush1.msra.mxu0 %v3711
      %5301 = vmatprep.subr.mxu0 0.0
      %5302 = vmatpush1.msra.mxu0 %v3706
      %5303 = vmatprep.subr.mxu0 0.0
      %5304 = vmatpush2.msra.mxu0 %v4083
      %5305 = vmatprep.subr.mxu0 0.0
      %5306 = vmatpush2.msra.mxu0 %v4078
      %5307 = vmatprep.subr.mxu0 0.0
      %5308 = vmatpush2.msra.mxu0 %v4073
      %5309 = vmatprep.subr.mxu0 0.0
      %5310 = vmatpush2.msra.mxu0 %v4068
      %5311 = vmatprep.subr.mxu0 0.0
      %5312 = vmatpush2.msra.mxu0 %v4063
      %5313 = vmatprep.subr.mxu0 0.0
      %5314 = vmatpush2.msra.mxu0 %v4058
      %5315 = vmatprep.subr.mxu0 0.0
      %5316 = vmatpush2.msra.mxu0 %v4053
      %5317 = vmatprep.subr.mxu0 0.0
      %5318 = vmatpush2.msra.mxu0 %v4048
      %5319 = vmatprep.subr.mxu0 0.0
      %5320 = vmatpush2.msra.mxu0 %v3969
      %5321 = vmatprep.subr.mxu0 0.0
      %5322 = vmatpush2.msra.mxu0 %v3964
      %5323 = vmatprep.subr.mxu0 0.0
      %5324 = vmatpush2.msra.mxu0 %v3959
      %5325 = vmatprep.subr.mxu0 0.0
      %5326 = vmatpush2.msra.mxu0 %v3954
      %5327 = vmatprep.subr.mxu0 0.0
      %5328 = vmatpush2.msra.mxu0 %v3949
      %5329 = vmatprep.subr.mxu0 0.0
      %5330 = vmatpush2.msra.mxu0 %v3944
      %5331 = vmatprep.subr.mxu0 0.0
      %5332 = vmatpush2.msra.mxu0 %v3939
      %5333 = vmatprep.subr.mxu0 0.0
      %5334 = vmatpush2.msra.mxu0 %v3934
      %5335 = vmatprep.mubr.f32.mxu0 %v5001
      %5336 = vmatmul.mubr.f32.gmra.mxu0 %v5000
      %v5337 = vpop.f32.mrf.mxu0
      %v5338 = vadd.f32 %v5193, %v5337
      %v5339 = vpop.f32.mrf.mxu0
      %5340 = vmatprep.mubr.f32.mxu0 %v5009
      %5341 = vmatmul.mubr.f32.gmra.mxu0 %v5008
      %v5342 = vpop.f32.mrf.mxu0
      %v5343 = vadd.f32 %v5198, %v5342
      %v5344 = vpop.f32.mrf.mxu0
      %5345 = vmatprep.mubr.f32.mxu0 %v5017
      %5346 = vmatmul.mubr.f32.gmra.mxu0 %v5016
      %v5347 = vpop.f32.mrf.mxu0
      %v5348 = vadd.f32 %v5203, %v5347
      %v5349 = vpop.f32.mrf.mxu0
      %5350 = vmatprep.mubr.f32.mxu0 %v5025
      %5351 = vmatmul.mubr.f32.gmra.mxu0 %v5024
      %v5352 = vpop.f32.mrf.mxu0
      %v5353 = vadd.f32 %v5208, %v5352
      %v5354 = vpop.f32.mrf.mxu0
      %5355 = vmatprep.mubr.f32.mxu0 %v5033
      %5356 = vmatmul.mubr.f32.gmra.mxu0 %v5032
      %v5357 = vpop.f32.mrf.mxu0
      %v5358 = vadd.f32 %v5213, %v5357
      %v5359 = vpop.f32.mrf.mxu0
      %5360 = vmatprep.mubr.f32.mxu0 %v5041
      %5361 = vmatmul.mubr.f32.gmra.mxu0 %v5040
      %v5362 = vpop.f32.mrf.mxu0
      %v5363 = vadd.f32 %v5218, %v5362
      %v5364 = vpop.f32.mrf.mxu0
      %5365 = vmatprep.mubr.f32.mxu0 %v5049
      %5366 = vmatmul.mubr.f32.gmra.mxu0 %v5048
      %v5367 = vpop.f32.mrf.mxu0
      %v5368 = vadd.f32 %v5223, %v5367
      %v5369 = vpop.f32.mrf.mxu0
      %5370 = vmatprep.mubr.f32.mxu0 %v5057
      %5371 = vmatmul.mubr.f32.gmra.mxu0 %v5056
      %v5372 = vpop.f32.mrf.mxu0
      %v5373 = vadd.f32 %v5228, %v5372
      %v5374 = vpop.f32.mrf.mxu0
      %5375 = vmatprep.mubr.f32.mxu0 %v5065
      %5376 = vmatmul.mubr.f32.gmra.mxu0 %v5064
      %v5377 = vpop.f32.mrf.mxu0
      %v5378 = vadd.f32 %v5233, %v5377
      %v5379 = vpop.f32.mrf.mxu0
      %5380 = vmatprep.mubr.f32.mxu0 %v5073
      %5381 = vmatmul.mubr.f32.gmra.mxu0 %v5072
      %v5382 = vpop.f32.mrf.mxu0
      %v5383 = vadd.f32 %v5238, %v5382
      %v5384 = vpop.f32.mrf.mxu0
      %5385 = vmatprep.mubr.f32.mxu0 %v5081
      %5386 = vmatmul.mubr.f32.gmra.mxu0 %v5080
      %v5387 = vpop.f32.mrf.mxu0
      %v5388 = vadd.f32 %v5243, %v5387
      %v5389 = vpop.f32.mrf.mxu0
      %5390 = vmatprep.mubr.f32.mxu0 %v5089
      %5391 = vmatmul.mubr.f32.gmra.mxu0 %v5088
      %v5392 = vpop.f32.mrf.mxu0
      %v5393 = vadd.f32 %v5248, %v5392
      %v5394 = vpop.f32.mrf.mxu0
      %5395 = vmatprep.mubr.f32.mxu0 %v5097
      %5396 = vmatmul.mubr.f32.gmra.mxu0 %v5096
      %v5397 = vpop.f32.mrf.mxu0
      %v5398 = vadd.f32 %v5253, %v5397
      %v5399 = vpop.f32.mrf.mxu0
      %5400 = vmatprep.mubr.f32.mxu0 %v5105
      %5401 = vmatmul.mubr.f32.gmra.mxu0 %v5104
      %v5402 = vpop.f32.mrf.mxu0
      %v5403 = vadd.f32 %v5258, %v5402
      %v5404 = vpop.f32.mrf.mxu0
      %5405 = vmatprep.mubr.f32.mxu0 %v5113
      %5406 = vmatmul.mubr.f32.gmra.mxu0 %v5112
      %v5407 = vpop.f32.mrf.mxu0
      %v5408 = vadd.f32 %v5263, %v5407
      %v5409 = vpop.f32.mrf.mxu0
      %5410 = vmatprep.mubr.f32.mxu0 %v5121
      %5411 = vmatmul.mubr.f32.gmra.mxu0 %v5120
      %v5412 = vpop.f32.mrf.mxu0
      %v5413 = vadd.f32 %v5268, %v5412
      %v5414 = vpop.f32.mrf.mxu0
      %5415 = vdwg.mxu0
      %5416 = vmatprep.subr.mxu0 0.0
      %5417 = vmatpush1.msra.mxu0 %v4311
      %5418 = vmatprep.subr.mxu0 0.0
      %5419 = vmatpush1.msra.mxu0 %v4306
      %5420 = vmatprep.subr.mxu0 0.0
      %5421 = vmatpush1.msra.mxu0 %v4301
      %5422 = vmatprep.subr.mxu0 0.0
      %5423 = vmatpush1.msra.mxu0 %v4296
      %5424 = vmatprep.subr.mxu0 0.0
      %5425 = vmatpush1.msra.mxu0 %v4291
      %5426 = vmatprep.subr.mxu0 0.0
      %5427 = vmatpush1.msra.mxu0 %v4286
      %5428 = vmatprep.subr.mxu0 0.0
      %5429 = vmatpush1.msra.mxu0 %v4281
      %5430 = vmatprep.subr.mxu0 0.0
      %5431 = vmatpush1.msra.mxu0 %v4276
      %5432 = vmatprep.subr.mxu0 0.0
      %5433 = vmatpush1.msra.mxu0 %v4197
      %5434 = vmatprep.subr.mxu0 0.0
      %5435 = vmatpush1.msra.mxu0 %v4192
      %5436 = vmatprep.subr.mxu0 0.0
      %5437 = vmatpush1.msra.mxu0 %v4187
      %5438 = vmatprep.subr.mxu0 0.0
      %5439 = vmatpush1.msra.mxu0 %v4182
      %5440 = vmatprep.subr.mxu0 0.0
      %5441 = vmatpush1.msra.mxu0 %v4177
      %5442 = vmatprep.subr.mxu0 0.0
      %5443 = vmatpush1.msra.mxu0 %v4172
      %5444 = vmatprep.subr.mxu0 0.0
      %5445 = vmatpush1.msra.mxu0 %v4167
      %5446 = vmatprep.subr.mxu0 0.0
      %5447 = vmatpush1.msra.mxu0 %v4162
      %5448 = vmatprep.subr.mxu0 0.0
      %5449 = vmatpush2.msra.mxu0 %v4539
      %5450 = vmatprep.subr.mxu0 0.0
      %5451 = vmatpush2.msra.mxu0 %v4534
      %5452 = vmatprep.subr.mxu0 0.0
      %5453 = vmatpush2.msra.mxu0 %v4529
      %5454 = vmatprep.subr.mxu0 0.0
      %5455 = vmatpush2.msra.mxu0 %v4524
      %5456 = vmatprep.subr.mxu0 0.0
      %5457 = vmatpush2.msra.mxu0 %v4519
      %5458 = vmatprep.subr.mxu0 0.0
      %5459 = vmatpush2.msra.mxu0 %v4514
      %5460 = vmatprep.subr.mxu0 0.0
      %5461 = vmatpush2.msra.mxu0 %v4509
      %5462 = vmatprep.subr.mxu0 0.0
      %5463 = vmatpush2.msra.mxu0 %v4504
      %5464 = vmatprep.subr.mxu0 0.0
      %5465 = vmatpush2.msra.mxu0 %v4425
      %5466 = vmatprep.subr.mxu0 0.0
      %5467 = vmatpush2.msra.mxu0 %v4420
      %5468 = vmatprep.subr.mxu0 0.0
      %5469 = vmatpush2.msra.mxu0 %v4415
      %5470 = vmatprep.subr.mxu0 0.0
      %5471 = vmatpush2.msra.mxu0 %v4410
      %5472 = vmatprep.subr.mxu0 0.0
      %5473 = vmatpush2.msra.mxu0 %v4405
      %5474 = vmatprep.subr.mxu0 0.0
      %5475 = vmatpush2.msra.mxu0 %v4400
      %5476 = vmatprep.subr.mxu0 0.0
      %5477 = vmatpush2.msra.mxu0 %v4395
      %5478 = vmatprep.subr.mxu0 0.0
      %5479 = vmatpush2.msra.mxu0 %v4390
      %5480 = vmatprep.mubr.f32.mxu0 %v5003
      %5481 = vmatmul.mubr.f32.gmra.mxu0 %v5002
      %v5482 = vpop.f32.mrf.mxu0
      %v5483 = vadd.f32 %v5338, %v5482
      %v5484 = vpop.f32.mrf.mxu0
      %5485 = vmatprep.mubr.f32.mxu0 %v5011
      %5486 = vmatmul.mubr.f32.gmra.mxu0 %v5010
      %v5487 = vpop.f32.mrf.mxu0
      %v5488 = vadd.f32 %v5343, %v5487
      %v5489 = vpop.f32.mrf.mxu0
      %5490 = vmatprep.mubr.f32.mxu0 %v5019
      %5491 = vmatmul.mubr.f32.gmra.mxu0 %v5018
      %v5492 = vpop.f32.mrf.mxu0
      %v5493 = vadd.f32 %v5348, %v5492
      %v5494 = vpop.f32.mrf.mxu0
      %5495 = vmatprep.mubr.f32.mxu0 %v5027
      %5496 = vmatmul.mubr.f32.gmra.mxu0 %v5026
      %v5497 = vpop.f32.mrf.mxu0
      %v5498 = vadd.f32 %v5353, %v5497
      %v5499 = vpop.f32.mrf.mxu0
      %5500 = vmatprep.mubr.f32.mxu0 %v5035
      %5501 = vmatmul.mubr.f32.gmra.mxu0 %v5034
      %v5502 = vpop.f32.mrf.mxu0
      %v5503 = vadd.f32 %v5358, %v5502
      %v5504 = vpop.f32.mrf.mxu0
      %5505 = vmatprep.mubr.f32.mxu0 %v5043
      %5506 = vmatmul.mubr.f32.gmra.mxu0 %v5042
      %v5507 = vpop.f32.mrf.mxu0
      %v5508 = vadd.f32 %v5363, %v5507
      %v5509 = vpop.f32.mrf.mxu0
      %5510 = vmatprep.mubr.f32.mxu0 %v5051
      %5511 = vmatmul.mubr.f32.gmra.mxu0 %v5050
      %v5512 = vpop.f32.mrf.mxu0
      %v5513 = vadd.f32 %v5368, %v5512
      %v5514 = vpop.f32.mrf.mxu0
      %5515 = vmatprep.mubr.f32.mxu0 %v5059
      %5516 = vmatmul.mubr.f32.gmra.mxu0 %v5058
      %v5517 = vpop.f32.mrf.mxu0
      %v5518 = vadd.f32 %v5373, %v5517
      %v5519 = vpop.f32.mrf.mxu0
      %5520 = vmatprep.mubr.f32.mxu0 %v5067
      %5521 = vmatmul.mubr.f32.gmra.mxu0 %v5066
      %v5522 = vpop.f32.mrf.mxu0
      %v5523 = vadd.f32 %v5378, %v5522
      %v5524 = vpop.f32.mrf.mxu0
      %5525 = vmatprep.mubr.f32.mxu0 %v5075
      %5526 = vmatmul.mubr.f32.gmra.mxu0 %v5074
      %v5527 = vpop.f32.mrf.mxu0
      %v5528 = vadd.f32 %v5383, %v5527
      %v5529 = vpop.f32.mrf.mxu0
      %5530 = vmatprep.mubr.f32.mxu0 %v5083
      %5531 = vmatmul.mubr.f32.gmra.mxu0 %v5082
      %v5532 = vpop.f32.mrf.mxu0
      %v5533 = vadd.f32 %v5388, %v5532
      %v5534 = vpop.f32.mrf.mxu0
      %5535 = vmatprep.mubr.f32.mxu0 %v5091
      %5536 = vmatmul.mubr.f32.gmra.mxu0 %v5090
      %v5537 = vpop.f32.mrf.mxu0
      %v5538 = vadd.f32 %v5393, %v5537
      %v5539 = vpop.f32.mrf.mxu0
      %5540 = vmatprep.mubr.f32.mxu0 %v5099
      %5541 = vmatmul.mubr.f32.gmra.mxu0 %v5098
      %v5542 = vpop.f32.mrf.mxu0
      %v5543 = vadd.f32 %v5398, %v5542
      %v5544 = vpop.f32.mrf.mxu0
      %5545 = vmatprep.mubr.f32.mxu0 %v5107
      %5546 = vmatmul.mubr.f32.gmra.mxu0 %v5106
      %v5547 = vpop.f32.mrf.mxu0
      %v5548 = vadd.f32 %v5403, %v5547
      %v5549 = vpop.f32.mrf.mxu0
      %5550 = vmatprep.mubr.f32.mxu0 %v5115
      %5551 = vmatmul.mubr.f32.gmra.mxu0 %v5114
      %v5552 = vpop.f32.mrf.mxu0
      %v5553 = vadd.f32 %v5408, %v5552
      %v5554 = vpop.f32.mrf.mxu0
      %5555 = vmatprep.mubr.f32.mxu0 %v5123
      %5556 = vmatmul.mubr.f32.gmra.mxu0 %v5122
      %v5557 = vpop.f32.mrf.mxu0
      %v5558 = vadd.f32 %v5413, %v5557
      %v5559 = vpop.f32.mrf.mxu0
      %5560 = vdwg.mxu0
      %5561 = vmatprep.subr.mxu0 0.0
      %5562 = vmatpush1.msra.mxu0 %v4767
      %5563 = vmatprep.subr.mxu0 0.0
      %5564 = vmatpush1.msra.mxu0 %v4762
      %5565 = vmatprep.subr.mxu0 0.0
      %5566 = vmatpush1.msra.mxu0 %v4757
      %5567 = vmatprep.subr.mxu0 0.0
      %5568 = vmatpush1.msra.mxu0 %v4752
      %5569 = vmatprep.subr.mxu0 0.0
      %5570 = vmatpush1.msra.mxu0 %v4747
      %5571 = vmatprep.subr.mxu0 0.0
      %5572 = vmatpush1.msra.mxu0 %v4742
      %5573 = vmatprep.subr.mxu0 0.0
      %5574 = vmatpush1.msra.mxu0 %v4737
      %5575 = vmatprep.subr.mxu0 0.0
      %5576 = vmatpush1.msra.mxu0 %v4732
      %5577 = vmatprep.subr.mxu0 0.0
      %5578 = vmatpush1.msra.mxu0 %v4653
      %5579 = vmatprep.subr.mxu0 0.0
      %5580 = vmatpush1.msra.mxu0 %v4648
      %5581 = vmatprep.subr.mxu0 0.0
      %5582 = vmatpush1.msra.mxu0 %v4643
      %5583 = vmatprep.subr.mxu0 0.0
      %5584 = vmatpush1.msra.mxu0 %v4638
      %5585 = vmatprep.subr.mxu0 0.0
      %5586 = vmatpush1.msra.mxu0 %v4633
      %5587 = vmatprep.subr.mxu0 0.0
      %5588 = vmatpush1.msra.mxu0 %v4628
      %5589 = vmatprep.subr.mxu0 0.0
      %5590 = vmatpush1.msra.mxu0 %v4623
      %5591 = vmatprep.subr.mxu0 0.0
      %5592 = vmatpush1.msra.mxu0 %v4618
      %5593 = vmatprep.subr.mxu0 0.0
      %5594 = vmatpush2.msra.mxu0 %v4995
      %5595 = vmatprep.subr.mxu0 0.0
      %5596 = vmatpush2.msra.mxu0 %v4990
      %5597 = vmatprep.subr.mxu0 0.0
      %5598 = vmatpush2.msra.mxu0 %v4985
      %5599 = vmatprep.subr.mxu0 0.0
      %5600 = vmatpush2.msra.mxu0 %v4980
      %5601 = vmatprep.subr.mxu0 0.0
      %5602 = vmatpush2.msra.mxu0 %v4975
      %5603 = vmatprep.subr.mxu0 0.0
      %5604 = vmatpush2.msra.mxu0 %v4970
      %5605 = vmatprep.subr.mxu0 0.0
      %5606 = vmatpush2.msra.mxu0 %v4965
      %5607 = vmatprep.subr.mxu0 0.0
      %5608 = vmatpush2.msra.mxu0 %v4960
      %5609 = vmatprep.subr.mxu0 0.0
      %5610 = vmatpush2.msra.mxu0 %v4881
      %5611 = vmatprep.subr.mxu0 0.0
      %5612 = vmatpush2.msra.mxu0 %v4876
      %5613 = vmatprep.subr.mxu0 0.0
      %5614 = vmatpush2.msra.mxu0 %v4871
      %5615 = vmatprep.subr.mxu0 0.0
      %5616 = vmatpush2.msra.mxu0 %v4866
      %5617 = vmatprep.subr.mxu0 0.0
      %5618 = vmatpush2.msra.mxu0 %v4861
      %5619 = vmatprep.subr.mxu0 0.0
      %5620 = vmatpush2.msra.mxu0 %v4856
      %5621 = vmatprep.subr.mxu0 0.0
      %5622 = vmatpush2.msra.mxu0 %v4851
      %5623 = vmatprep.subr.mxu0 0.0
      %5624 = vmatpush2.msra.mxu0 %v4846
      %5625 = vmatprep.mubr.f32.mxu0 %v5005
      %5626 = vmatmul.mubr.f32.gmra.mxu0 %v5004
      %v5627 = vpop.f32.mrf.mxu0
      %v5628 = vadd.f32 %v5483, %v5627
      %v5629 = vpop.f32.mrf.mxu0
      %5630 = vmatprep.mubr.f32.mxu0 %v5013
      %5631 = vmatmul.mubr.f32.gmra.mxu0 %v5012
      %v5632 = vpop.f32.mrf.mxu0
      %v5633 = vadd.f32 %v5488, %v5632
      %v5634 = vpop.f32.mrf.mxu0
      %5635 = vmatprep.mubr.f32.mxu0 %v5021
      %5636 = vmatmul.mubr.f32.gmra.mxu0 %v5020
      %v5637 = vpop.f32.mrf.mxu0
      %v5638 = vadd.f32 %v5493, %v5637
      %v5639 = vpop.f32.mrf.mxu0
      %5640 = vmatprep.mubr.f32.mxu0 %v5029
      %5641 = vmatmul.mubr.f32.gmra.mxu0 %v5028
      %v5642 = vpop.f32.mrf.mxu0
      %v5643 = vadd.f32 %v5498, %v5642
      %v5644 = vpop.f32.mrf.mxu0
      %5645 = vmatprep.mubr.f32.mxu0 %v5037
      %5646 = vmatmul.mubr.f32.gmra.mxu0 %v5036
      %v5647 = vpop.f32.mrf.mxu0
      %v5648 = vadd.f32 %v5503, %v5647
      %v5649 = vpop.f32.mrf.mxu0
      %5650 = vmatprep.mubr.f32.mxu0 %v5045
      %5651 = vmatmul.mubr.f32.gmra.mxu0 %v5044
      %v5652 = vpop.f32.mrf.mxu0
      %v5653 = vadd.f32 %v5508, %v5652
      %v5654 = vpop.f32.mrf.mxu0
      %5655 = vmatprep.mubr.f32.mxu0 %v5053
      %5656 = vmatmul.mubr.f32.gmra.mxu0 %v5052
      %v5657 = vpop.f32.mrf.mxu0
      %v5658 = vadd.f32 %v5513, %v5657
      %v5659 = vpop.f32.mrf.mxu0
      %5660 = vmatprep.mubr.f32.mxu0 %v5061
      %5661 = vmatmul.mubr.f32.gmra.mxu0 %v5060
      %v5662 = vpop.f32.mrf.mxu0
      %v5663 = vadd.f32 %v5518, %v5662
      %v5664 = vpop.f32.mrf.mxu0
      %5665 = vmatprep.mubr.f32.mxu0 %v5069
      %5666 = vmatmul.mubr.f32.gmra.mxu0 %v5068
      %v5667 = vpop.f32.mrf.mxu0
      %v5668 = vadd.f32 %v5523, %v5667
      %v5669 = vpop.f32.mrf.mxu0
      %5670 = vmatprep.mubr.f32.mxu0 %v5077
      %5671 = vmatmul.mubr.f32.gmra.mxu0 %v5076
      %v5672 = vpop.f32.mrf.mxu0
      %v5673 = vadd.f32 %v5528, %v5672
      %v5674 = vpop.f32.mrf.mxu0
      %5675 = vmatprep.mubr.f32.mxu0 %v5085
      %5676 = vmatmul.mubr.f32.gmra.mxu0 %v5084
      %v5677 = vpop.f32.mrf.mxu0
      %v5678 = vadd.f32 %v5533, %v5677
      %v5679 = vpop.f32.mrf.mxu0
      %5680 = vmatprep.mubr.f32.mxu0 %v5093
      %5681 = vmatmul.mubr.f32.gmra.mxu0 %v5092
      %v5682 = vpop.f32.mrf.mxu0
      %v5683 = vadd.f32 %v5538, %v5682
      %v5684 = vpop.f32.mrf.mxu0
      %5685 = vmatprep.mubr.f32.mxu0 %v5101
      %5686 = vmatmul.mubr.f32.gmra.mxu0 %v5100
      %v5687 = vpop.f32.mrf.mxu0
      %v5688 = vadd.f32 %v5543, %v5687
      %v5689 = vpop.f32.mrf.mxu0
      %5690 = vmatprep.mubr.f32.mxu0 %v5109
      %5691 = vmatmul.mubr.f32.gmra.mxu0 %v5108
      %v5692 = vpop.f32.mrf.mxu0
      %v5693 = vadd.f32 %v5548, %v5692
      %v5694 = vpop.f32.mrf.mxu0
      %5695 = vmatprep.mubr.f32.mxu0 %v5117
      %5696 = vmatmul.mubr.f32.gmra.mxu0 %v5116
      %v5697 = vpop.f32.mrf.mxu0
      %v5698 = vadd.f32 %v5553, %v5697
      %v5699 = vpop.f32.mrf.mxu0
      %5700 = vmatprep.mubr.f32.mxu0 %v5125
      %5701 = vmatmul.mubr.f32.gmra.mxu0 %v5124
      %v5702 = vpop.f32.mrf.mxu0
      %v5703 = vadd.f32 %v5558, %v5702
      %v5704 = vpop.f32.mrf.mxu0
      %5705 = vdwg.mxu0
      %vm5706 = vcmask 130048
      %v5707 = vsel %vm5706, %v5628, 0.0
      %5708 = vadd.xlane.f32.xlu0 %v5707
      %v5709 = vpop.xlane.xlu0 %5708
      %v5710 = vsel %vm5706, %v5633, 0.0
      %5711 = vadd.xlane.f32.xlu0 %v5710
      %v5712 = vpop.xlane.xlu0 %5711
      %v5713 = vsel %vm5706, %v5638, 0.0
      %5714 = vadd.xlane.f32.xlu0 %v5713
      %v5715 = vpop.xlane.xlu0 %5714
      %v5716 = vsel %vm5706, %v5643, 0.0
      %5717 = vadd.xlane.f32.xlu0 %v5716
      %v5718 = vpop.xlane.xlu0 %5717
      %v5719 = vsel %vm5706, %v5648, 0.0
      %5720 = vadd.xlane.f32.xlu0 %v5719
      %v5721 = vpop.xlane.xlu0 %5720
      %v5722 = vsel %vm5706, %v5653, 0.0
      %5723 = vadd.xlane.f32.xlu0 %v5722
      %v5724 = vpop.xlane.xlu0 %5723
      %v5725 = vsel %vm5706, %v5658, 0.0
      %5726 = vadd.xlane.f32.xlu0 %v5725
      %v5727 = vpop.xlane.xlu0 %5726
      %v5728 = vsel %vm5706, %v5663, 0.0
      %5729 = vadd.xlane.f32.xlu0 %v5728
      %v5730 = vpop.xlane.xlu0 %5729
      %v5731 = vsel %vm5706, %v5668, 0.0
      %5732 = vadd.xlane.f32.xlu0 %v5731
      %v5733 = vpop.xlane.xlu0 %5732
      %v5734 = vsel %vm5706, %v5673, 0.0
      %5735 = vadd.xlane.f32.xlu0 %v5734
      %v5736 = vpop.xlane.xlu0 %5735
      %v5737 = vsel %vm5706, %v5678, 0.0
      %5738 = vadd.xlane.f32.xlu0 %v5737
      %v5739 = vpop.xlane.xlu0 %5738
      %v5740 = vsel %vm5706, %v5683, 0.0
      %5741 = vadd.xlane.f32.xlu0 %v5740
      %v5742 = vpop.xlane.xlu0 %5741
      %v5743 = vsel %vm5706, %v5688, 0.0
      %5744 = vadd.xlane.f32.xlu0 %v5743
      %v5745 = vpop.xlane.xlu0 %5744
      %v5746 = vsel %vm5706, %v5693, 0.0
      %5747 = vadd.xlane.f32.xlu0 %v5746
      %v5748 = vpop.xlane.xlu0 %5747
      %v5749 = vsel %vm5706, %v5698, 0.0
      %5750 = vadd.xlane.f32.xlu0 %v5749
      %v5751 = vpop.xlane.xlu0 %5750
      %v5752 = vsel %vm5706, %v5703, 0.0
      %5753 = vadd.xlane.f32.xlu0 %v5752
      %v5754 = vpop.xlane.xlu0 %5753
      %v5755 = vrcp.pop 16.0
      %v5756 = vmul.f32 %v5709, %v5755
      %v5757 = vmul.f32 %v5712, %v5755
      %v5758 = vmul.f32 %v5715, %v5755
      %v5759 = vmul.f32 %v5718, %v5755
      %v5760 = vmul.f32 %v5721, %v5755
      %v5761 = vmul.f32 %v5724, %v5755
      %v5762 = vmul.f32 %v5727, %v5755
      %v5763 = vmul.f32 %v5730, %v5755
      %v5764 = vmul.f32 %v5733, %v5755
      %v5765 = vmul.f32 %v5736, %v5755
      %v5766 = vmul.f32 %v5739, %v5755
      %v5767 = vmul.f32 %v5742, %v5755
      %v5768 = vmul.f32 %v5745, %v5755
      %v5769 = vmul.f32 %v5748, %v5755
      %v5770 = vmul.f32 %v5751, %v5755
      %v5771 = vmul.f32 %v5754, %v5755
      %v5772 = vsub.f32 %v5628, %v5756
      %v5773 = vsub.f32 %v5633, %v5757
      %v5774 = vsub.f32 %v5638, %v5758
      %v5775 = vsub.f32 %v5643, %v5759
      %v5776 = vsub.f32 %v5648, %v5760
      %v5777 = vsub.f32 %v5653, %v5761
      %v5778 = vsub.f32 %v5658, %v5762
      %v5779 = vsub.f32 %v5663, %v5763
      %v5780 = vsub.f32 %v5668, %v5764
      %v5781 = vsub.f32 %v5673, %v5765
      %v5782 = vsub.f32 %v5678, %v5766
      %v5783 = vsub.f32 %v5683, %v5767
      %v5784 = vsub.f32 %v5688, %v5768
      %v5785 = vsub.f32 %v5693, %v5769
      %v5786 = vsub.f32 %v5698, %v5770
      %v5787 = vsub.f32 %v5703, %v5771
      %v5788 = vmul.f32 %v5772, %v5772
      %v5789 = vmul.f32 %v5773, %v5773
      %v5790 = vmul.f32 %v5774, %v5774
      %v5791 = vmul.f32 %v5775, %v5775
      %v5792 = vmul.f32 %v5776, %v5776
      %v5793 = vmul.f32 %v5777, %v5777
      %v5794 = vmul.f32 %v5778, %v5778
      %v5795 = vmul.f32 %v5779, %v5779
      %v5796 = vmul.f32 %v5780, %v5780
      %v5797 = vmul.f32 %v5781, %v5781
      %v5798 = vmul.f32 %v5782, %v5782
      %v5799 = vmul.f32 %v5783, %v5783
      %v5800 = vmul.f32 %v5784, %v5784
      %v5801 = vmul.f32 %v5785, %v5785
      %v5802 = vmul.f32 %v5786, %v5786
      %v5803 = vmul.f32 %v5787, %v5787
      %v5804 = vsel %vm5706, %v5788, 0.0
      %5805 = vadd.xlane.f32.xlu0 %v5804
      %v5806 = vpop.xlane.xlu0 %5805
      %v5807 = vsel %vm5706, %v5789, 0.0
      %5808 = vadd.xlane.f32.xlu0 %v5807
      %v5809 = vpop.xlane.xlu0 %5808
      %v5810 = vsel %vm5706, %v5790, 0.0
      %5811 = vadd.xlane.f32.xlu0 %v5810
      %v5812 = vpop.xlane.xlu0 %5811
      %v5813 = vsel %vm5706, %v5791, 0.0
      %5814 = vadd.xlane.f32.xlu0 %v5813
      %v5815 = vpop.xlane.xlu0 %5814
      %v5816 = vsel %vm5706, %v5792, 0.0
      %5817 = vadd.xlane.f32.xlu0 %v5816
      %v5818 = vpop.xlane.xlu0 %5817
      %v5819 = vsel %vm5706, %v5793, 0.0
      %5820 = vadd.xlane.f32.xlu0 %v5819
      %v5821 = vpop.xlane.xlu0 %5820
      %v5822 = vsel %vm5706, %v5794, 0.0
      %5823 = vadd.xlane.f32.xlu0 %v5822
      %v5824 = vpop.xlane.xlu0 %5823
      %v5825 = vsel %vm5706, %v5795, 0.0
      %5826 = vadd.xlane.f32.xlu0 %v5825
      %v5827 = vpop.xlane.xlu0 %5826
      %v5828 = vsel %vm5706, %v5796, 0.0
      %5829 = vadd.xlane.f32.xlu0 %v5828
      %v5830 = vpop.xlane.xlu0 %5829
      %v5831 = vsel %vm5706, %v5797, 0.0
      %5832 = vadd.xlane.f32.xlu0 %v5831
      %v5833 = vpop.xlane.xlu0 %5832
      %v5834 = vsel %vm5706, %v5798, 0.0
      %5835 = vadd.xlane.f32.xlu0 %v5834
      %v5836 = vpop.xlane.xlu0 %5835
      %v5837 = vsel %vm5706, %v5799, 0.0
      %5838 = vadd.xlane.f32.xlu0 %v5837
      %v5839 = vpop.xlane.xlu0 %5838
      %v5840 = vsel %vm5706, %v5800, 0.0
      %5841 = vadd.xlane.f32.xlu0 %v5840
      %v5842 = vpop.xlane.xlu0 %5841
      %v5843 = vsel %vm5706, %v5801, 0.0
      %5844 = vadd.xlane.f32.xlu0 %v5843
      %v5845 = vpop.xlane.xlu0 %5844
      %v5846 = vsel %vm5706, %v5802, 0.0
      %5847 = vadd.xlane.f32.xlu0 %v5846
      %v5848 = vpop.xlane.xlu0 %5847
      %v5849 = vsel %vm5706, %v5803, 0.0
      %5850 = vadd.xlane.f32.xlu0 %v5849
      %v5851 = vpop.xlane.xlu0 %5850
      %v5852 = vmul.f32 %v5806, %v5755
      %v5853 = vmul.f32 %v5809, %v5755
      %v5854 = vmul.f32 %v5812, %v5755
      %v5855 = vmul.f32 %v5815, %v5755
      %v5856 = vmul.f32 %v5818, %v5755
      %v5857 = vmul.f32 %v5821, %v5755
      %v5858 = vmul.f32 %v5824, %v5755
      %v5859 = vmul.f32 %v5827, %v5755
      %v5860 = vmul.f32 %v5830, %v5755
      %v5861 = vmul.f32 %v5833, %v5755
      %v5862 = vmul.f32 %v5836, %v5755
      %v5863 = vmul.f32 %v5839, %v5755
      %v5864 = vmul.f32 %v5842, %v5755
      %v5865 = vmul.f32 %v5845, %v5755
      %v5866 = vmul.f32 %v5848, %v5755
      %v5867 = vmul.f32 %v5851, %v5755
      %v5868 = vadd.f32 %v5852, 1e-05
      %v5869 = vadd.f32 %v5853, 1e-05
      %v5870 = vadd.f32 %v5854, 1e-05
      %v5871 = vadd.f32 %v5855, 1e-05
      %v5872 = vadd.f32 %v5856, 1e-05
      %v5873 = vadd.f32 %v5857, 1e-05
      %v5874 = vadd.f32 %v5858, 1e-05
      %v5875 = vadd.f32 %v5859, 1e-05
      %v5876 = vadd.f32 %v5860, 1e-05
      %v5877 = vadd.f32 %v5861, 1e-05
      %v5878 = vadd.f32 %v5862, 1e-05
      %v5879 = vadd.f32 %v5863, 1e-05
      %v5880 = vadd.f32 %v5864, 1e-05
      %v5881 = vadd.f32 %v5865, 1e-05
      %v5882 = vadd.f32 %v5866, 1e-05
      %v5883 = vadd.f32 %v5867, 1e-05
      %v5884 = vrsqrt.pop %v5868
      %v5885 = vrsqrt.pop %v5869
      %v5886 = vrsqrt.pop %v5870
      %v5887 = vrsqrt.pop %v5871
      %v5888 = vrsqrt.pop %v5872
      %v5889 = vrsqrt.pop %v5873
      %v5890 = vrsqrt.pop %v5874
      %v5891 = vrsqrt.pop %v5875
      %v5892 = vrsqrt.pop %v5876
      %v5893 = vrsqrt.pop %v5877
      %v5894 = vrsqrt.pop %v5878
      %v5895 = vrsqrt.pop %v5879
      %v5896 = vrsqrt.pop %v5880
      %v5897 = vrsqrt.pop %v5881
      %v5898 = vrsqrt.pop %v5882
      %v5899 = vrsqrt.pop %v5883
      %v5900 = vmul.f32 %v5772, %v5884
      %v5901 = vmul.f32 %v5773, %v5885
      %v5902 = vmul.f32 %v5774, %v5886
      %v5903 = vmul.f32 %v5775, %v5887
      %v5904 = vmul.f32 %v5776, %v5888
      %v5905 = vmul.f32 %v5777, %v5889
      %v5906 = vmul.f32 %v5778, %v5890
      %v5907 = vmul.f32 %v5779, %v5891
      %v5908 = vmul.f32 %v5780, %v5892
      %v5909 = vmul.f32 %v5781, %v5893
      %v5910 = vmul.f32 %v5782, %v5894
      %v5911 = vmul.f32 %v5783, %v5895
      %v5912 = vmul.f32 %v5784, %v5896
      %v5913 = vmul.f32 %v5785, %v5897
      %v5914 = vmul.f32 %v5786, %v5898
      %v5915 = vmul.f32 %v5787, %v5899
      %v5916 = vld [vmem:[%s10] sm:$0xff]
      %v5917 = vld [vmem:[%s10 + $0x8] sm:$0xff]
      %v5918 = vld [vmem:[%s10 + $0x10] sm:$0xff]
      %v5919 = vld [vmem:[%s10 + $0x18] sm:$0xff]
      %v5920 = vld [vmem:[%s10 + $0x20] sm:$0xff]
      %v5921 = vld [vmem:[%s10 + $0x28] sm:$0xff]
      %v5922 = vld [vmem:[%s10 + $0x30] sm:$0xff]
      %v5923 = vld [vmem:[%s10 + $0x38] sm:$0xff]
      %v5924 = vld [vmem:[%s10 + $0x40] sm:$0xff]
      %v5925 = vld [vmem:[%s10 + $0x48] sm:$0xff]
      %v5926 = vld [vmem:[%s10 + $0x50] sm:$0xff]
      %v5927 = vld [vmem:[%s10 + $0x58] sm:$0xff]
      %v5928 = vld [vmem:[%s10 + $0x60] sm:$0xff]
      %v5929 = vld [vmem:[%s10 + $0x68] sm:$0xff]
      %v5930 = vld [vmem:[%s10 + $0x70] sm:$0xff]
      %v5931 = vld [vmem:[%s10 + $0x78] sm:$0xff]
      %5933 = vset.pattern.permute.xlu0 0
      %5934 = vperm.xlu0 %5933, %v5916
      %v5935 = vpop.permute.xlu0 %5934
      %5938 = vset.pattern.permute.xlu0 0
      %5939 = vperm.xlu0 %5938, %v5917
      %v5940 = vpop.permute.xlu0 %5939
      %5943 = vset.pattern.permute.xlu0 0
      %5944 = vperm.xlu0 %5943, %v5918
      %v5945 = vpop.permute.xlu0 %5944
      %5948 = vset.pattern.permute.xlu0 0
      %5949 = vperm.xlu0 %5948, %v5919
      %v5950 = vpop.permute.xlu0 %5949
      %5953 = vset.pattern.permute.xlu0 0
      %5954 = vperm.xlu0 %5953, %v5920
      %v5955 = vpop.permute.xlu0 %5954
      %5958 = vset.pattern.permute.xlu0 0
      %5959 = vperm.xlu0 %5958, %v5921
      %v5960 = vpop.permute.xlu0 %5959
      %5963 = vset.pattern.permute.xlu0 0
      %5964 = vperm.xlu0 %5963, %v5922
      %v5965 = vpop.permute.xlu0 %5964
      %5968 = vset.pattern.permute.xlu0 0
      %5969 = vperm.xlu0 %5968, %v5923
      %v5970 = vpop.permute.xlu0 %5969
      %5973 = vset.pattern.permute.xlu0 0
      %5974 = vperm.xlu0 %5973, %v5924
      %v5975 = vpop.permute.xlu0 %5974
      %5978 = vset.pattern.permute.xlu0 0
      %5979 = vperm.xlu0 %5978, %v5925
      %v5980 = vpop.permute.xlu0 %5979
      %5983 = vset.pattern.permute.xlu0 0
      %5984 = vperm.xlu0 %5983, %v5926
      %v5985 = vpop.permute.xlu0 %5984
      %5988 = vset.pattern.permute.xlu0 0
      %5989 = vperm.xlu0 %5988, %v5927
      %v5990 = vpop.permute.xlu0 %5989
      %5993 = vset.pattern.permute.xlu0 0
      %5994 = vperm.xlu0 %5993, %v5928
      %v5995 = vpop.permute.xlu0 %5994
      %5998 = vset.pattern.permute.xlu0 0
      %5999 = vperm.xlu0 %5998, %v5929
      %v6000 = vpop.permute.xlu0 %5999
      %6003 = vset.pattern.permute.xlu0 0
      %6004 = vperm.xlu0 %6003, %v5930
      %v6005 = vpop.permute.xlu0 %6004
      %6008 = vset.pattern.permute.xlu0 0
      %6009 = vperm.xlu0 %6008, %v5931
      %v6010 = vpop.permute.xlu0 %6009
      %v6012 = vmul.f32 %v5900, %v5935
      %v6013 = vmul.f32 %v5901, %v5940
      %v6014 = vmul.f32 %v5902, %v5945
      %v6015 = vmul.f32 %v5903, %v5950
      %v6016 = vmul.f32 %v5904, %v5955
      %v6017 = vmul.f32 %v5905, %v5960
      %v6018 = vmul.f32 %v5906, %v5965
      %v6019 = vmul.f32 %v5907, %v5970
      %v6020 = vmul.f32 %v5908, %v5975
      %v6021 = vmul.f32 %v5909, %v5980
      %v6022 = vmul.f32 %v5910, %v5985
      %v6023 = vmul.f32 %v5911, %v5990
      %v6024 = vmul.f32 %v5912, %v5995
      %v6025 = vmul.f32 %v5913, %v6000
      %v6026 = vmul.f32 %v5914, %v6005
      %v6027 = vmul.f32 %v5915, %v6010
      %v6028 = vld [vmem:[%s11] sm:$0xff]
      %v6029 = vld [vmem:[%s11 + $0x8] sm:$0xff]
      %v6030 = vld [vmem:[%s11 + $0x10] sm:$0xff]
      %v6031 = vld [vmem:[%s11 + $0x18] sm:$0xff]
      %v6032 = vld [vmem:[%s11 + $0x20] sm:$0xff]
      %v6033 = vld [vmem:[%s11 + $0x28] sm:$0xff]
      %v6034 = vld [vmem:[%s11 + $0x30] sm:$0xff]
      %v6035 = vld [vmem:[%s11 + $0x38] sm:$0xff]
      %v6036 = vld [vmem:[%s11 + $0x40] sm:$0xff]
      %v6037 = vld [vmem:[%s11 + $0x48] sm:$0xff]
      %v6038 = vld [vmem:[%s11 + $0x50] sm:$0xff]
      %v6039 = vld [vmem:[%s11 + $0x58] sm:$0xff]
      %v6040 = vld [vmem:[%s11 + $0x60] sm:$0xff]
      %v6041 = vld [vmem:[%s11 + $0x68] sm:$0xff]
      %v6042 = vld [vmem:[%s11 + $0x70] sm:$0xff]
      %v6043 = vld [vmem:[%s11 + $0x78] sm:$0xff]
      %6045 = vset.pattern.permute.xlu0 0
      %6046 = vperm.xlu0 %6045, %v6028
      %v6047 = vpop.permute.xlu0 %6046
      %6050 = vset.pattern.permute.xlu0 0
      %6051 = vperm.xlu0 %6050, %v6029
      %v6052 = vpop.permute.xlu0 %6051
      %6055 = vset.pattern.permute.xlu0 0
      %6056 = vperm.xlu0 %6055, %v6030
      %v6057 = vpop.permute.xlu0 %6056
      %6060 = vset.pattern.permute.xlu0 0
      %6061 = vperm.xlu0 %6060, %v6031
      %v6062 = vpop.permute.xlu0 %6061
      %6065 = vset.pattern.permute.xlu0 0
      %6066 = vperm.xlu0 %6065, %v6032
      %v6067 = vpop.permute.xlu0 %6066
      %6070 = vset.pattern.permute.xlu0 0
      %6071 = vperm.xlu0 %6070, %v6033
      %v6072 = vpop.permute.xlu0 %6071
      %6075 = vset.pattern.permute.xlu0 0
      %6076 = vperm.xlu0 %6075, %v6034
      %v6077 = vpop.permute.xlu0 %6076
      %6080 = vset.pattern.permute.xlu0 0
      %6081 = vperm.xlu0 %6080, %v6035
      %v6082 = vpop.permute.xlu0 %6081
      %6085 = vset.pattern.permute.xlu0 0
      %6086 = vperm.xlu0 %6085, %v6036
      %v6087 = vpop.permute.xlu0 %6086
      %6090 = vset.pattern.permute.xlu0 0
      %6091 = vperm.xlu0 %6090, %v6037
      %v6092 = vpop.permute.xlu0 %6091
      %6095 = vset.pattern.permute.xlu0 0
      %6096 = vperm.xlu0 %6095, %v6038
      %v6097 = vpop.permute.xlu0 %6096
      %6100 = vset.pattern.permute.xlu0 0
      %6101 = vperm.xlu0 %6100, %v6039
      %v6102 = vpop.permute.xlu0 %6101
      %6105 = vset.pattern.permute.xlu0 0
      %6106 = vperm.xlu0 %6105, %v6040
      %v6107 = vpop.permute.xlu0 %6106
      %6110 = vset.pattern.permute.xlu0 0
      %6111 = vperm.xlu0 %6110, %v6041
      %v6112 = vpop.permute.xlu0 %6111
      %6115 = vset.pattern.permute.xlu0 0
      %6116 = vperm.xlu0 %6115, %v6042
      %v6117 = vpop.permute.xlu0 %6116
      %6120 = vset.pattern.permute.xlu0 0
      %6121 = vperm.xlu0 %6120, %v6043
      %v6122 = vpop.permute.xlu0 %6121
      %v6124 = vadd.f32 %v6012, %v6047
      %v6125 = vadd.f32 %v6013, %v6052
      %v6126 = vadd.f32 %v6014, %v6057
      %v6127 = vadd.f32 %v6015, %v6062
      %v6128 = vadd.f32 %v6016, %v6067
      %v6129 = vadd.f32 %v6017, %v6072
      %v6130 = vadd.f32 %v6018, %v6077
      %v6131 = vadd.f32 %v6019, %v6082
      %v6132 = vadd.f32 %v6020, %v6087
      %v6133 = vadd.f32 %v6021, %v6092
      %v6134 = vadd.f32 %v6022, %v6097
      %v6135 = vadd.f32 %v6023, %v6102
      %v6136 = vadd.f32 %v6024, %v6107
      %v6137 = vadd.f32 %v6025, %v6112
      %v6138 = vadd.f32 %v6026, %v6117
      %v6139 = vadd.f32 %v6027, %v6122
      %vm6140 = vcmp.gt.f32.partialorder %v6124, 0.0
      %vm6141 = vcmp.gt.f32.partialorder %v6125, 0.0
      %vm6142 = vcmp.gt.f32.partialorder %v6126, 0.0
      %vm6143 = vcmp.gt.f32.partialorder %v6127, 0.0
      %vm6144 = vcmp.gt.f32.partialorder %v6128, 0.0
      %vm6145 = vcmp.gt.f32.partialorder %v6129, 0.0
      %vm6146 = vcmp.gt.f32.partialorder %v6130, 0.0
      %vm6147 = vcmp.gt.f32.partialorder %v6131, 0.0
      %vm6148 = vcmp.gt.f32.partialorder %v6132, 0.0
      %vm6149 = vcmp.gt.f32.partialorder %v6133, 0.0
      %vm6150 = vcmp.gt.f32.partialorder %v6134, 0.0
      %vm6151 = vcmp.gt.f32.partialorder %v6135, 0.0
      %vm6152 = vcmp.gt.f32.partialorder %v6136, 0.0
      %vm6153 = vcmp.gt.f32.partialorder %v6137, 0.0
      %vm6154 = vcmp.gt.f32.partialorder %v6138, 0.0
      %vm6155 = vcmp.gt.f32.partialorder %v6139, 0.0
      %v6156 = vmul.f32 %v6124, 0.2
      %v6157 = vmul.f32 %v6125, 0.2
      %v6158 = vmul.f32 %v6126, 0.2
      %v6159 = vmul.f32 %v6127, 0.2
      %v6160 = vmul.f32 %v6128, 0.2
      %v6161 = vmul.f32 %v6129, 0.2
      %v6162 = vmul.f32 %v6130, 0.2
      %v6163 = vmul.f32 %v6131, 0.2
      %v6164 = vmul.f32 %v6132, 0.2
      %v6165 = vmul.f32 %v6133, 0.2
      %v6166 = vmul.f32 %v6134, 0.2
      %v6167 = vmul.f32 %v6135, 0.2
      %v6168 = vmul.f32 %v6136, 0.2
      %v6169 = vmul.f32 %v6137, 0.2
      %v6170 = vmul.f32 %v6138, 0.2
      %v6171 = vmul.f32 %v6139, 0.2
      %v6172 = vsel %vm6140, %v6124, %v6156
      %v6173 = vsel %vm6141, %v6125, %v6157
      %v6174 = vsel %vm6142, %v6126, %v6158
      %v6175 = vsel %vm6143, %v6127, %v6159
      %v6176 = vsel %vm6144, %v6128, %v6160
      %v6177 = vsel %vm6145, %v6129, %v6161
      %v6178 = vsel %vm6146, %v6130, %v6162
      %v6179 = vsel %vm6147, %v6131, %v6163
      %v6180 = vsel %vm6148, %v6132, %v6164
      %v6181 = vsel %vm6149, %v6133, %v6165
      %v6182 = vsel %vm6150, %v6134, %v6166
      %v6183 = vsel %vm6151, %v6135, %v6167
      %v6184 = vsel %vm6152, %v6136, %v6168
      %v6185 = vsel %vm6153, %v6137, %v6169
      %v6186 = vsel %vm6154, %v6138, %v6170
      %v6187 = vsel %vm6155, %v6139, %v6171
      %v6188 = vld [vmem:[%s12] sm:$0xff]
      %v6189 = vld [vmem:[%s12 + $0x8] sm:$0xff]
      %v6190 = vld [vmem:[%s12 + $0x10] sm:$0xff]
      %v6191 = vld [vmem:[%s12 + $0x18] sm:$0xff]
      %v6192 = vld [vmem:[%s12 + $0x20] sm:$0xff]
      %v6193 = vld [vmem:[%s12 + $0x28] sm:$0xff]
      %v6194 = vld [vmem:[%s12 + $0x30] sm:$0xff]
      %v6195 = vld [vmem:[%s12 + $0x38] sm:$0xff]
      %v6196 = vld [vmem:[%s12 + $0x40] sm:$0xff]
      %v6197 = vld [vmem:[%s12 + $0x48] sm:$0xff]
      %v6198 = vld [vmem:[%s12 + $0x50] sm:$0xff]
      %v6199 = vld [vmem:[%s12 + $0x58] sm:$0xff]
      %v6200 = vld [vmem:[%s12 + $0x60] sm:$0xff]
      %v6201 = vld [vmem:[%s12 + $0x68] sm:$0xff]
      %v6202 = vld [vmem:[%s12 + $0x70] sm:$0xff]
      %v6203 = vld [vmem:[%s12 + $0x78] sm:$0xff]
      %v6204 = vmul.f32 %v6172, %v6188
      %v6205 = vmul.f32 %v6173, %v6189
      %v6206 = vmul.f32 %v6174, %v6190
      %v6207 = vmul.f32 %v6175, %v6191
      %v6208 = vmul.f32 %v6176, %v6192
      %v6209 = vmul.f32 %v6177, %v6193
      %v6210 = vmul.f32 %v6178, %v6194
      %v6211 = vmul.f32 %v6179, %v6195
      %v6212 = vmul.f32 %v6180, %v6196
      %v6213 = vmul.f32 %v6181, %v6197
      %v6214 = vmul.f32 %v6182, %v6198
      %v6215 = vmul.f32 %v6183, %v6199
      %v6216 = vmul.f32 %v6184, %v6200
      %v6217 = vmul.f32 %v6185, %v6201
      %v6218 = vmul.f32 %v6186, %v6202
      %v6219 = vmul.f32 %v6187, %v6203
      %v6220 = vsel %vm5706, %v6204, 0.0
      %6221 = vadd.xlane.f32.xlu0 %v6220
      %v6222 = vpop.xlane.xlu0 %6221
      %v6223 = vsel %vm5706, %v6205, 0.0
      %6224 = vadd.xlane.f32.xlu0 %v6223
      %v6225 = vpop.xlane.xlu0 %6224
      %v6226 = vsel %vm5706, %v6206, 0.0
      %6227 = vadd.xlane.f32.xlu0 %v6226
      %v6228 = vpop.xlane.xlu0 %6227
      %v6229 = vsel %vm5706, %v6207, 0.0
      %6230 = vadd.xlane.f32.xlu0 %v6229
      %v6231 = vpop.xlane.xlu0 %6230
      %v6232 = vsel %vm5706, %v6208, 0.0
      %6233 = vadd.xlane.f32.xlu0 %v6232
      %v6234 = vpop.xlane.xlu0 %6233
      %v6235 = vsel %vm5706, %v6209, 0.0
      %6236 = vadd.xlane.f32.xlu0 %v6235
      %v6237 = vpop.xlane.xlu0 %6236
      %v6238 = vsel %vm5706, %v6210, 0.0
      %6239 = vadd.xlane.f32.xlu0 %v6238
      %v6240 = vpop.xlane.xlu0 %6239
      %v6241 = vsel %vm5706, %v6211, 0.0
      %6242 = vadd.xlane.f32.xlu0 %v6241
      %v6243 = vpop.xlane.xlu0 %6242
      %v6244 = vsel %vm5706, %v6212, 0.0
      %6245 = vadd.xlane.f32.xlu0 %v6244
      %v6246 = vpop.xlane.xlu0 %6245
      %v6247 = vsel %vm5706, %v6213, 0.0
      %6248 = vadd.xlane.f32.xlu0 %v6247
      %v6249 = vpop.xlane.xlu0 %6248
      %v6250 = vsel %vm5706, %v6214, 0.0
      %6251 = vadd.xlane.f32.xlu0 %v6250
      %v6252 = vpop.xlane.xlu0 %6251
      %v6253 = vsel %vm5706, %v6215, 0.0
      %6254 = vadd.xlane.f32.xlu0 %v6253
      %v6255 = vpop.xlane.xlu0 %6254
      %v6256 = vsel %vm5706, %v6216, 0.0
      %6257 = vadd.xlane.f32.xlu0 %v6256
      %v6258 = vpop.xlane.xlu0 %6257
      %v6259 = vsel %vm5706, %v6217, 0.0
      %6260 = vadd.xlane.f32.xlu0 %v6259
      %v6261 = vpop.xlane.xlu0 %6260
      %v6262 = vsel %vm5706, %v6218, 0.0
      %6263 = vadd.xlane.f32.xlu0 %v6262
      %v6264 = vpop.xlane.xlu0 %6263
      %v6265 = vsel %vm5706, %v6219, 0.0
      %6266 = vadd.xlane.f32.xlu0 %v6265
      %v6267 = vpop.xlane.xlu0 %6266
      %v6268 = vadd.f32 %v6222, %v6225
      %v6269 = vadd.f32 %v6268, %v6228
      %v6270 = vadd.f32 %v6269, %v6231
      %v6271 = vadd.f32 %v6270, %v6234
      %v6272 = vadd.f32 %v6271, %v6237
      %v6273 = vadd.f32 %v6272, %v6240
      %v6274 = vadd.f32 %v6273, %v6243
      %v6275 = vadd.f32 %v6274, %v6246
      %v6276 = vadd.f32 %v6275, %v6249
      %v6277 = vadd.f32 %v6276, %v6252
      %v6278 = vadd.f32 %v6277, %v6255
      %v6279 = vadd.f32 %v6278, %v6258
      %v6280 = vadd.f32 %v6279, %v6261
      %v6281 = vadd.f32 %v6280, %v6264
      %v6282 = vadd.f32 %v6281, %v6267
      %v6283 = vrot.slane %v6282, 4
      %v6284 = vadd.f32 %v6282, %v6283
      %v6285 = vrot.slane %v6284, 2
      %v6286 = vadd.f32 %v6284, %v6285
      %v6287 = vrot.slane %v6286, 1
      %v6288 = vadd.f32 %v6286, %v6287
      %v6289 = vld [vmem:[#allocation2] sm:$0x1]
      %v6290 = vadd.f32 %v6288, %v6289
      %v6291 = vxor.u32 %v6290, 2147483648
      %v6292 = vmul.f32 %v6291, 1.442695
      %v6293 = vpow.pop %v6292
      %v6294 = vadd.f32 %v6293, 1.0
      %v6295 = vrcp.pop %v6294
      %v6296 = vmul.f32 1.0, %v6295
      %vm6297 = vcmask 0
      %6298 = vst.msk [vmem:[%s465] sm:$0x1] %vm6297, %v6296
      %p6299 = scmp.lt.s32.totalorder %s27, 1
      %s6300 = scalar_select %p6299, %s27, 1
      %s6301 = scalar_lea.vmem %s14, %s6300
      // Predicated region
      $region77: #{discriminator_forward.3} parent=75 // pred_check
        %p6302 = pneg %p344
      $region78: #{discriminator_forward.3} parent=75 // pred_check_branch
        %6304 = sbr.rel (%p6302) target = $region80
      $region79: #{discriminator_forward.3} parent=75 // pred_region
        _
      $region80: #{discriminator_forward.3} parent=75 // pred_fallthru
        _
    $region76: #{discriminator_forward.3} parent=5 // pred_fallthru
      _
    %p6305 = scmp.le.s32.totalorder 2, %s22
    // Predicated region
    $region81: #{discriminator_forward.3} parent=5 // pred_check
      %p6306 = pneg %p6305
    $region82: #{discriminator_forward.3} parent=5 // pred_check_branch
      %6308 = sbr.rel (%p6306) target = $region84
    $region83: #{discriminator_forward.3} parent=5 // pred_region
      %s6309 = ssub.s32 %s22, 2
      // Predicated region
      $region85: #{discriminator_forward.3} parent=83 // pred_check
        %p6310 = pneg %p350
      $region86: #{discriminator_forward.3} parent=83 // pred_check_branch
        %6312 = sbr.rel (%p6310) target = $region88
      $region87: #{discriminator_forward.3} parent=83 // pred_region
        %p6313 = scmp.lt.s32.totalorder %s28, 1
        %s6314 = scalar_select %p6313, %s28, 1
        %s6315 = scalar_lea.vmem %s14, %s6314
      $region88: #{discriminator_forward.3} parent=83 // pred_fallthru
        _
    $region84: #{discriminator_forward.3} parent=5 // pred_fallthru
      _
  $region6: #{discriminator_forward.3} parent=0 // loop_footer
    %s26 = sadd.s32 1, %s22
  $region7: #{discriminator_forward.3} parent=0 // loop_footer_branch
    %21 = sbr.rel target = $region3
  $region8: #{discriminator_forward.3} parent=0 // loop_exit
    _

</llo_original>
